<compile_context>
chip_gen: v7x
topology: tpu7x:2x2x1
jax: 0.10.0
libtpu: 0.0.40
codegen_flags: <defaults>
</compile_context>

<pallas_src>
import jax
import jax.numpy as jnp
from jax.experimental import pallas as pl
from jax.experimental.pallas import tpu as pltpu


_VMEM_LIMIT = 48 * 1024 * 1024  # explicit scoped-VMEM budget with headroom under v7x's 64 MiB


def _round_up(x, m):
    return (x + m - 1) // m * m


def _row_tile(p):
    """Largest 16-aligned tile (<=512) that divides p, else the full extent."""
    for t in (512, 256, 128, 64, 32, 16):
        if p % t == 0:
            return t
    return p


# ----------------------------- Pallas kernels ---------------------------------

def _conv3x3_relu_maxpool_kernel(p_ref, w_ref, b_ref, o_ref):
    """Fused 3x3 conv (im2col matmul) + shared bias + ReLU + 2x2 max-pool.

    p_ref: (1, 4, TP, K) bf16   4 = positions inside each 2x2 pooling window,
                                TP = row tile of pooled output pixels, K = padded 9*Cin
    w_ref: (K, Cout) bf16;  b_ref: (1, Cout) f32;  o_ref: (1, TP, Cout) bf16
    """
    tp = p_ref.shape[2]
    w = w_ref[...]
    if tp % 16 == 0:
        # One MXU push with M = 4*TP instead of four pushes with M = TP.
        y = jnp.dot(p_ref[...].reshape(4 * tp, p_ref.shape[3]), w,
                    preferred_element_type=jnp.float32)
        m = jnp.maximum(jnp.maximum(y[0:tp], y[tp:2 * tp]),
                        jnp.maximum(y[2 * tp:3 * tp], y[3 * tp:4 * tp]))
    else:
        # Layout-safe fallback for tiles that are not bf16-sublane aligned.
        m = None
        for k in range(4):
            y = jnp.dot(p_ref[0, k], w, preferred_element_type=jnp.float32)
            m = y if m is None else jnp.maximum(m, y)
    # Bias + ReLU after the max (bias shared by the 4 positions, ReLU monotone).
    o_ref[0] = jnp.maximum(m + b_ref[...], 0.0).astype(o_ref.dtype)


def _conv3x3_relu_gap_kernel(p_ref, w_ref, b_ref, a_ref, o_ref):
    """3x3 conv + bias + ReLU + AdaptiveAvgPool2d((1,1)) for the WHOLE batch in one call.

    p_ref: (NB*P, K) bf16;  w_ref: (K, Cout) bf16;  b_ref: (1, Cout) f32
    a_ref: (NB, NB*P) f32 block-diagonal averaging matrix;  o_ref: (NB, Cout) f32
    """
    y = jnp.dot(p_ref[...], w_ref[...], preferred_element_type=jnp.float32)
    y = jnp.maximum(y + b_ref[...], 0.0)
    # Per-image spatial mean done on the MXU -> one lane-dense (NB, Cout) store.
    o_ref[...] = jnp.dot(a_ref[...], y, preferred_element_type=jnp.float32).astype(o_ref.dtype)


def _mlp_head_kernel(t_ref, b_ref, s_ref, w1_ref, b1_ref, w2_ref, b2_ref, o_ref):
    """cat([t,b,s]) -> Linear(3*128, 512) -> ReLU -> Dropout(eval) -> Linear(512, C).

    The concat is folded into three partial matmuls against 128-aligned row blocks of w1.
    """
    f = t_ref.shape[1]  # 128
    h = (jnp.dot(t_ref[...], w1_ref[0:f], preferred_element_type=jnp.float32)
         + jnp.dot(b_ref[...], w1_ref[f:2 * f], preferred_element_type=jnp.float32)
         + jnp.dot(s_ref[...], w1_ref[2 * f:3 * f], preferred_element_type=jnp.float32)
         + b1_ref[...])
    h = jnp.maximum(h, 0.0)
    # TODO(synk): Dropout(p=0.5) is identity at inference; training-mode PRNG mask not implemented.
    o_ref[...] = (jnp.dot(h, w2_ref[...], preferred_element_type=jnp.float32)
                  + b2_ref[...]).astype(o_ref.dtype)


# ----------------------------- Pallas wrappers ---------------------------------

def conv3x3_relu_maxpool(x, w_hwio, bias):
    """x: [N, H, W, Cin] (H, W even); w_hwio: [3,3,Cin,Cout] -> bf16 [N, H//2, W//2, Cout]."""
    N, H, W, Cin = x.shape
    Cout = w_hwio.shape[-1]
    Ho, Wo = H // 2, W // 2
    P, K = Ho * Wo, 9 * Cin
    Kp = _round_up(K, 16)  # pad contraction width for bf16 sublane packing

    xb = x.astype(jnp.bfloat16)
    xpad = jnp.pad(xb, ((0, 0), (1, 1), (1, 1), (0, 0)))
    # Parity-grouped im2col (pure glue, bf16): output pixel (2p+pa, 2q+pb), tap (dy,dx)
    # reads padded pixel (2p+pa+dy, 2q+pb+dx).
    parts = []
    for pa in range(2):
        for pb in range(2):
            taps = []
            for dy in range(3):
                for dx in range(3):
                    r0, c0 = pa + dy, pb + dx
                    taps.append(xpad[:, r0:r0 + 2 * Ho - 1:2, c0:c0 + 2 * Wo - 1:2, :])
            parts.append(jnp.concatenate(taps, axis=-1).reshape(N, P, K))
    patches = jnp.stack(parts, axis=1)                       # [N, 4, P, K] bf16
    if Kp != K:
        patches = jnp.pad(patches, ((0, 0), (0, 0), (0, 0), (0, Kp - K)))

    wmat = w_hwio.reshape(K, Cout).astype(jnp.bfloat16)
    if Kp != K:
        wmat = jnp.pad(wmat, ((0, Kp - K), (0, 0)))
    b2 = bias.reshape(1, Cout).astype(jnp.float32)

    TP = _row_tile(P)
    out = pl.pallas_call(
        _conv3x3_relu_maxpool_kernel,
        out_shape=jax.ShapeDtypeStruct((N, P, Cout), jnp.bfloat16),
        grid=(N, P // TP),
        in_specs=[
            pl.BlockSpec((1, 4, TP, Kp), lambda n, t: (n, 0, t, 0)),
            pl.BlockSpec((Kp, Cout), lambda n, t: (0, 0)),
            pl.BlockSpec((1, Cout), lambda n, t: (0, 0)),
        ],
        out_specs=pl.BlockSpec((1, TP, Cout), lambda n, t: (n, t, 0)),
        compiler_params=pltpu.CompilerParams(
            dimension_semantics=("parallel", "parallel"),
            vmem_limit_bytes=_VMEM_LIMIT),
    )(patches, wmat, b2)
    return out.reshape(N, Ho, Wo, Cout)


def conv3x3_relu_gap(x, w_hwio, bias):
    """x: [N, H, W, Cin]; w_hwio: [3,3,Cin,Cout] -> f32 features [N, Cout] (one call per batch)."""
    N, H, W, Cin = x.shape
    Cout = w_hwio.shape[-1]
    P, K = H * W, 9 * Cin
    Kp = _round_up(K, 16)

    xb = x.astype(jnp.bfloat16)
    xpad = jnp.pad(xb, ((0, 0), (1, 1), (1, 1), (0, 0)))
    taps = [xpad[:, dy:dy + H, dx:dx + W, :] for dy in range(3) for dx in range(3)]
    patches = jnp.concatenate(taps, axis=-1).reshape(N * P, K)
    if Kp != K:
        patches = jnp.pad(patches, ((0, 0), (0, Kp - K)))

    wmat = w_hwio.reshape(K, Cout).astype(jnp.bfloat16)
    if Kp != K:
        wmat = jnp.pad(wmat, ((0, Kp - K), (0, 0)))
    b2 = bias.reshape(1, Cout).astype(jnp.float32)

    # Block-diagonal averaging matrix: row n averages rows [n*P, (n+1)*P) of the conv output.
    A = ((jnp.arange(N * P) // P)[None, :] == jnp.arange(N)[:, None]).astype(jnp.float32) / P

    vmem = pl.BlockSpec(memory_space=pltpu.MemorySpace.VMEM)
    return pl.pallas_call(
        _conv3x3_relu_gap_kernel,
        out_shape=jax.ShapeDtypeStruct((N, Cout), jnp.float32),
        in_specs=[vmem, vmem, vmem, vmem],
        out_specs=vmem,
        compiler_params=pltpu.CompilerParams(vmem_limit_bytes=_VMEM_LIMIT),
    )(patches, wmat, b2, A)


def mlp_head(t_feat, b_feat, s_feat, fc):
    N = t_feat.shape[0]
    C = fc["w2"].shape[1]
    vmem = pl.BlockSpec(memory_space=pltpu.MemorySpace.VMEM)
    return pl.pallas_call(
        _mlp_head_kernel,
        out_shape=jax.ShapeDtypeStruct((N, C), jnp.float32),
        in_specs=[vmem] * 7,
        out_specs=vmem,
        compiler_params=pltpu.CompilerParams(vmem_limit_bytes=_VMEM_LIMIT),
    )(t_feat, b_feat, s_feat, fc["w1"], fc["b1"], fc["w2"], fc["b2"])


# ----------------------------- Model ---------------------------------

def init_params(key, filter_num_base=16, num_classes=11):
    F = filter_num_base

    def conv(key, cin, cout):
        kw, kb = jax.random.split(key)
        scale = 1.0 / (9.0 * cin) ** 0.5
        return (jax.random.normal(kw, (3, 3, cin, cout), jnp.float32) * scale,
                jax.random.normal(kb, (cout,), jnp.float32) * scale)

    def linear(key, din, dout):
        kw, kb = jax.random.split(key)
        scale = 1.0 / din ** 0.5
        return (jax.random.normal(kw, (din, dout), jnp.float32) * scale,
                jax.random.normal(kb, (1, dout), jnp.float32) * scale)

    ks = jax.random.split(key, 10)
    rgb, binary = {}, {}
    rgb["w1"], rgb["b1"] = conv(ks[0], 3, F)
    rgb["w2"], rgb["b2"] = conv(ks[1], F, 2 * F)
    rgb["w3"], rgb["b3"] = conv(ks[2], 2 * F, 4 * F)
    rgb["w4"], rgb["b4"] = conv(ks[3], 4 * F, 8 * F)
    binary["w1"], binary["b1"] = conv(ks[4], 1, F)
    binary["w2"], binary["b2"] = conv(ks[5], F, 2 * F)
    binary["w3"], binary["b3"] = conv(ks[6], 2 * F, 4 * F)
    binary["w4"], binary["b4"] = conv(ks[7], 4 * F, 8 * F)
    fc = {}
    fc["w1"], fc["b1"] = linear(ks[8], 8 * F * 2 + 8 * F, 512)
    fc["w2"], fc["b2"] = linear(ks[9], 512, num_classes)
    return {"rgb": rgb, "binary": binary, "fc": fc}


def backbone(x_nhwc, p):
    x = conv3x3_relu_maxpool(x_nhwc, p["w1"], p["b1"])
    x = conv3x3_relu_maxpool(x, p["w2"], p["b2"])
    x = conv3x3_relu_maxpool(x, p["w3"], p["b3"])
    return conv3x3_relu_gap(x, p["w4"], p["b4"])   # [N, 8*F] f32


@jax.jit
def forward(params, t_image, b_image, s_image):
    # PyTorch NCHW inputs -> NHWC for the kernels.
    t = jnp.transpose(t_image, (0, 2, 3, 1))
    b = jnp.transpose(b_image, (0, 2, 3, 1))
    s = jnp.transpose(s_image, (0, 2, 3, 1))
    n = t.shape[0]
    # Shared-weight RGB tower: run once on the 2N batch (t stacked over b).
    rgb_feat = backbone(jnp.concatenate([t, b], axis=0), params["rgb"])   # [2N, 128]
    t_feat, b_feat = rgb_feat[:n], rgb_feat[n:]
    s_feat = backbone(s, params["binary"])                                # [N, 128]
    return mlp_head(t_feat, b_feat, s_feat, params["fc"])


# ----------------------------- Main ---------------------------------

if __name__ == "__main__":
    key = jax.random.PRNGKey(0)
    kp, kt, kb, ks = jax.random.split(key, 4)

    params = init_params(kp, filter_num_base=16, num_classes=11)

    # Small shapes consistent with the module's (80, 224) non-square convention.
    N, H, W = 2, 16, 32
    t_image = jax.random.normal(kt, (N, 3, H, W), jnp.float32)
    b_image = jax.random.normal(kb, (N, 3, H, W), jnp.float32)
    s_image = jax.random.normal(ks, (N, 1, H, W), jnp.float32)

    out = forward(params, t_image, b_image, s_image)
    out = jax.block_until_ready(out)
    assert out.shape == (N, 11) and out.dtype == jnp.float32
    print("KERNEL_OK")
</pallas_src>

<mosaic_0001>
module attributes {stable_mosaic.version = 11 : i64} {
  func.func @_conv3x3_relu_maxpool_kernel(%arg0: i32, %arg1: i32, %arg2: memref<1x4x128x32xbf16, #tpu.memory_space<vmem>>, %arg3: memref<32x16xbf16, #tpu.memory_space<vmem>>, %arg4: memref<1x16xf32, #tpu.memory_space<vmem>>, %arg5: memref<1x128x16xbf16, #tpu.memory_space<vmem>>) attributes {dimension_semantics = [#tpu.dimension_semantics<parallel>, #tpu.dimension_semantics<parallel>], iteration_bounds = array<i64: 4, 1>, scalar_prefetch = 0 : i64, scratch_operands = 0 : i64, tpu.core_type = #tpu.core_type<tc>, window_params = [{transform_indices = @transform_0, window_bounds = array<i64: 1, 4, 128, 32>}, {pipeline_mode = #tpu.pipeline_mode<synchronous>, transform_indices = @transform_1, window_bounds = array<i64: 32, 16>}, {pipeline_mode = #tpu.pipeline_mode<synchronous>, transform_indices = @transform_2, window_bounds = array<i64: 1, 16>}, {transform_indices = @transform_3, window_bounds = array<i64: 1, 128, 16>}]} {
    %c0 = arith.constant 0 : index
    %c0_0 = arith.constant 0 : index
    %0 = vector.load %arg3[%c0, %c0_0] : memref<32x16xbf16, #tpu.memory_space<vmem>>, vector<32x16xbf16>
    %c0_1 = arith.constant 0 : index
    %c0_2 = arith.constant 0 : index
    %c0_3 = arith.constant 0 : index
    %c0_4 = arith.constant 0 : index
    %1 = vector.load %arg2[%c0_1, %c0_2, %c0_3, %c0_4] : memref<1x4x128x32xbf16, #tpu.memory_space<vmem>>, vector<1x4x128x32xbf16>
    %2 = vector.shape_cast %1 : vector<1x4x128x32xbf16> to vector<512x32xbf16>
    %cst = arith.constant dense<0.000000e+00> : vector<512x16xf32>
    %3 = tpu.matmul %2, %0, %cst {dimension_numbers = #tpu.dot_dimension_numbers<[1], [0], [0], [1], [0, 0, 1, 1], [], []>} : vector<512x32xbf16>, vector<32x16xbf16>, vector<512x16xf32> -> vector<512x16xf32>
    %4 = vector.extract_strided_slice %3 {offsets = [0, 0], sizes = [128, 16], strides = [1, 1]} : vector<512x16xf32> to vector<128x16xf32>
    %5 = vector.extract_strided_slice %3 {offsets = [128, 0], sizes = [128, 16], strides = [1, 1]} : vector<512x16xf32> to vector<128x16xf32>
    %6 = arith.maximumf %4, %5 : vector<128x16xf32>
    %7 = vector.extract_strided_slice %3 {offsets = [256, 0], sizes = [128, 16], strides = [1, 1]} : vector<512x16xf32> to vector<128x16xf32>
    %8 = vector.extract_strided_slice %3 {offsets = [384, 0], sizes = [128, 16], strides = [1, 1]} : vector<512x16xf32> to vector<128x16xf32>
    %9 = arith.maximumf %7, %8 : vector<128x16xf32>
    %10 = arith.maximumf %6, %9 : vector<128x16xf32>
    %c0_5 = arith.constant 0 : index
    %c0_6 = arith.constant 0 : index
    %11 = vector.load %arg4[%c0_5, %c0_6] : memref<1x16xf32, #tpu.memory_space<vmem>>, vector<1x16xf32>
    %12 = vector.broadcast %11 : vector<1x16xf32> to vector<128x16xf32>
    %13 = arith.addf %10, %12 : vector<128x16xf32>
    %cst_7 = arith.constant 0.000000e+00 : f32
    %14 = vector.broadcast %cst_7 : f32 to vector<128x16xf32>
    %15 = arith.maximumf %13, %14 : vector<128x16xf32>
    %16 = arith.truncf %15 : vector<128x16xf32> to vector<128x16xbf16>
    %c0_8 = arith.constant 0 : index
    %c0_9 = arith.constant 0 : index
    %c0_10 = arith.constant 0 : index
    %17 = vector.load %arg5[%c0_8, %c0_9, %c0_10] : memref<1x128x16xbf16, #tpu.memory_space<vmem>>, vector<1x128x16xbf16>
    %18 = vector.shape_cast %17 : vector<1x128x16xbf16> to vector<128x16xbf16>
    %19 = vector.shape_cast %16 : vector<128x16xbf16> to vector<1x128x16xbf16>
    tpu.vector_store %arg5[%c0_8, %c0_9, %c0_10], %19 {strides = array<i32>} : memref<1x128x16xbf16, #tpu.memory_space<vmem>>, vector<1x128x16xbf16>,
    return
  }
  func.func @transform_0(%arg0: i32, %arg1: i32) -> (i32, i32, i32, i32) {
    %c0_i32 = arith.constant 0 : i32
    %c0_i32_0 = arith.constant 0 : i32
    %c0_i32_1 = arith.constant 0 : i32
    return %arg0, %c0_i32, %arg1, %c0_i32_0 : i32, i32, i32, i32
  }
  func.func @transform_1(%arg0: i32, %arg1: i32) -> (i32, i32) {
    %c0_i32 = arith.constant 0 : i32
    %c0_i32_0 = arith.constant 0 : i32
    %c0_i32_1 = arith.constant 0 : i32
    return %c0_i32, %c0_i32_0 : i32, i32
  }
  func.func @transform_2(%arg0: i32, %arg1: i32) -> (i32, i32) {
    %c0_i32 = arith.constant 0 : i32
    %c0_i32_0 = arith.constant 0 : i32
    %c0_i32_1 = arith.constant 0 : i32
    return %c0_i32, %c0_i32_0 : i32, i32
  }
  func.func @transform_3(%arg0: i32, %arg1: i32) -> (i32, i32, i32) {
    %c0_i32 = arith.constant 0 : i32
    %c0_i32_0 = arith.constant 0 : i32
    return %arg0, %arg1, %c0_i32 : i32, i32, i32
  }
}

module attributes {stable_mosaic.version = 11 : i64} {
  func.func @_conv3x3_relu_maxpool_kernel(%arg0: i32, %arg1: i32, %arg2: memref<1x4x32x144xbf16, #tpu.memory_space<vmem>>, %arg3: memref<144x32xbf16, #tpu.memory_space<vmem>>, %arg4: memref<1x32xf32, #tpu.memory_space<vmem>>, %arg5: memref<1x32x32xbf16, #tpu.memory_space<vmem>>) attributes {dimension_semantics = [#tpu.dimension_semantics<parallel>, #tpu.dimension_semantics<parallel>], iteration_bounds = array<i64: 4, 1>, scalar_prefetch = 0 : i64, scratch_operands = 0 : i64, tpu.core_type = #tpu.core_type<tc>, window_params = [{transform_indices = @transform_0, window_bounds = array<i64: 1, 4, 32, 144>}, {pipeline_mode = #tpu.pipeline_mode<synchronous>, transform_indices = @transform_1, window_bounds = array<i64: 144, 32>}, {pipeline_mode = #tpu.pipeline_mode<synchronous>, transform_indices = @transform_2, window_bounds = array<i64: 1, 32>}, {transform_indices = @transform_3, window_bounds = array<i64: 1, 32, 32>}]} {
    %c0 = arith.constant 0 : index
    %c0_0 = arith.constant 0 : index
    %0 = vector.load %arg3[%c0, %c0_0] : memref<144x32xbf16, #tpu.memory_space<vmem>>, vector<144x32xbf16>
    %c0_1 = arith.constant 0 : index
    %c0_2 = arith.constant 0 : index
    %c0_3 = arith.constant 0 : index
    %c0_4 = arith.constant 0 : index
    %1 = vector.load %arg2[%c0_1, %c0_2, %c0_3, %c0_4] : memref<1x4x32x144xbf16, #tpu.memory_space<vmem>>, vector<1x4x32x144xbf16>
    %2 = vector.shape_cast %1 : vector<1x4x32x144xbf16> to vector<128x144xbf16>
    %cst = arith.constant dense<0.000000e+00> : vector<128x32xf32>
    %3 = tpu.matmul %2, %0, %cst {dimension_numbers = #tpu.dot_dimension_numbers<[1], [0], [0], [1], [0, 0, 1, 1], [], []>} : vector<128x144xbf16>, vector<144x32xbf16>, vector<128x32xf32> -> vector<128x32xf32>
    %4 = vector.extract_strided_slice %3 {offsets = [0, 0], sizes = [32, 32], strides = [1, 1]} : vector<128x32xf32> to vector<32x32xf32>
    %5 = vector.extract_strided_slice %3 {offsets = [32, 0], sizes = [32, 32], strides = [1, 1]} : vector<128x32xf32> to vector<32x32xf32>
    %6 = arith.maximumf %4, %5 : vector<32x32xf32>
    %7 = vector.extract_strided_slice %3 {offsets = [64, 0], sizes = [32, 32], strides = [1, 1]} : vector<128x32xf32> to vector<32x32xf32>
    %8 = vector.extract_strided_slice %3 {offsets = [96, 0], sizes = [32, 32], strides = [1, 1]} : vector<128x32xf32> to vector<32x32xf32>
    %9 = arith.maximumf %7, %8 : vector<32x32xf32>
    %10 = arith.maximumf %6, %9 : vector<32x32xf32>
    %c0_5 = arith.constant 0 : index
    %c0_6 = arith.constant 0 : index
    %11 = vector.load %arg4[%c0_5, %c0_6] : memref<1x32xf32, #tpu.memory_space<vmem>>, vector<1x32xf32>
    %12 = vector.broadcast %11 : vector<1x32xf32> to vector<32x32xf32>
    %13 = arith.addf %10, %12 : vector<32x32xf32>
    %cst_7 = arith.constant 0.000000e+00 : f32
    %14 = vector.broadcast %cst_7 : f32 to vector<32x32xf32>
    %15 = arith.maximumf %13, %14 : vector<32x32xf32>
    %16 = arith.truncf %15 : vector<32x32xf32> to vector<32x32xbf16>
    %c0_8 = arith.constant 0 : index
    %c0_9 = arith.constant 0 : index
    %c0_10 = arith.constant 0 : index
    %17 = vector.load %arg5[%c0_8, %c0_9, %c0_10] : memref<1x32x32xbf16, #tpu.memory_space<vmem>>, vector<1x32x32xbf16>
    %18 = vector.shape_cast %17 : vector<1x32x32xbf16> to vector<32x32xbf16>
    %19 = vector.shape_cast %16 : vector<32x32xbf16> to vector<1x32x32xbf16>
    tpu.vector_store %arg5[%c0_8, %c0_9, %c0_10], %19 {strides = array<i32>} : memref<1x32x32xbf16, #tpu.memory_space<vmem>>, vector<1x32x32xbf16>,
    return
  }
  func.func @transform_0(%arg0: i32, %arg1: i32) -> (i32, i32, i32, i32) {
    %c0_i32 = arith.constant 0 : i32
    %c0_i32_0 = arith.constant 0 : i32
    %c0_i32_1 = arith.constant 0 : i32
    return %arg0, %c0_i32, %arg1, %c0_i32_0 : i32, i32, i32, i32
  }
  func.func @transform_1(%arg0: i32, %arg1: i32) -> (i32, i32) {
    %c0_i32 = arith.constant 0 : i32
    %c0_i32_0 = arith.constant 0 : i32
    %c0_i32_1 = arith.constant 0 : i32
    return %c0_i32, %c0_i32_0 : i32, i32
  }
  func.func @transform_2(%arg0: i32, %arg1: i32) -> (i32, i32) {
    %c0_i32 = arith.constant 0 : i32
    %c0_i32_0 = arith.constant 0 : i32
    %c0_i32_1 = arith.constant 0 : i32
    return %c0_i32, %c0_i32_0 : i32, i32
  }
  func.func @transform_3(%arg0: i32, %arg1: i32) -> (i32, i32, i32) {
    %c0_i32 = arith.constant 0 : i32
    %c0_i32_0 = arith.constant 0 : i32
    return %arg0, %arg1, %c0_i32 : i32, i32, i32
  }
}

module attributes {stable_mosaic.version = 11 : i64} {
  func.func @_conv3x3_relu_maxpool_kernel(%arg0: i32, %arg1: i32, %arg2: memref<1x4x8x288xbf16, #tpu.memory_space<vmem>>, %arg3: memref<288x64xbf16, #tpu.memory_space<vmem>>, %arg4: memref<1x64xf32, #tpu.memory_space<vmem>>, %arg5: memref<1x8x64xbf16, #tpu.memory_space<vmem>>) attributes {dimension_semantics = [#tpu.dimension_semantics<parallel>, #tpu.dimension_semantics<parallel>], iteration_bounds = array<i64: 4, 1>, scalar_prefetch = 0 : i64, scratch_operands = 0 : i64, tpu.core_type = #tpu.core_type<tc>, window_params = [{transform_indices = @transform_0, window_bounds = array<i64: 1, 4, 8, 288>}, {pipeline_mode = #tpu.pipeline_mode<synchronous>, transform_indices = @transform_1, window_bounds = array<i64: 288, 64>}, {pipeline_mode = #tpu.pipeline_mode<synchronous>, transform_indices = @transform_2, window_bounds = array<i64: 1, 64>}, {transform_indices = @transform_3, window_bounds = array<i64: 1, 8, 64>}]} {
    %c0 = arith.constant 0 : index
    %c0_0 = arith.constant 0 : index
    %0 = vector.load %arg3[%c0, %c0_0] : memref<288x64xbf16, #tpu.memory_space<vmem>>, vector<288x64xbf16>
    %c0_1 = arith.constant 0 : index
    %c0_2 = arith.constant 0 : index
    %c0_3 = arith.constant 0 : index
    %c0_4 = arith.constant 0 : index
    %1 = vector.load %arg2[%c0_1, %c0_2, %c0_3, %c0_4] : memref<1x4x8x288xbf16, #tpu.memory_space<vmem>>, vector<1x1x8x288xbf16>
    %2 = vector.shape_cast %1 : vector<1x1x8x288xbf16> to vector<8x288xbf16>
    %cst = arith.constant dense<0.000000e+00> : vector<8x64xf32>
    %3 = tpu.matmul %2, %0, %cst {dimension_numbers = #tpu.dot_dimension_numbers<[1], [0], [0], [1], [0, 0, 1, 1], [], []>} : vector<8x288xbf16>, vector<288x64xbf16>, vector<8x64xf32> -> vector<8x64xf32>
    %c0_5 = arith.constant 0 : index
    %c1 = arith.constant 1 : index
    %c0_6 = arith.constant 0 : index
    %c0_7 = arith.constant 0 : index
    %4 = vector.load %arg2[%c0_5, %c1, %c0_6, %c0_7] : memref<1x4x8x288xbf16, #tpu.memory_space<vmem>>, vector<1x1x8x288xbf16>
    %5 = vector.shape_cast %4 : vector<1x1x8x288xbf16> to vector<8x288xbf16>
    %cst_8 = arith.constant dense<0.000000e+00> : vector<8x64xf32>
    %6 = tpu.matmul %5, %0, %cst_8 {dimension_numbers = #tpu.dot_dimension_numbers<[1], [0], [0], [1], [0, 0, 1, 1], [], []>} : vector<8x288xbf16>, vector<288x64xbf16>, vector<8x64xf32> -> vector<8x64xf32>
    %7 = arith.maximumf %3, %6 : vector<8x64xf32>
    %c0_9 = arith.constant 0 : index
    %c2 = arith.constant 2 : index
    %c0_10 = arith.constant 0 : index
    %c0_11 = arith.constant 0 : index
    %8 = vector.load %arg2[%c0_9, %c2, %c0_10, %c0_11] : memref<1x4x8x288xbf16, #tpu.memory_space<vmem>>, vector<1x1x8x288xbf16>
    %9 = vector.shape_cast %8 : vector<1x1x8x288xbf16> to vector<8x288xbf16>
    %cst_12 = arith.constant dense<0.000000e+00> : vector<8x64xf32>
    %10 = tpu.matmul %9, %0, %cst_12 {dimension_numbers = #tpu.dot_dimension_numbers<[1], [0], [0], [1], [0, 0, 1, 1], [], []>} : vector<8x288xbf16>, vector<288x64xbf16>, vector<8x64xf32> -> vector<8x64xf32>
    %11 = arith.maximumf %7, %10 : vector<8x64xf32>
    %c0_13 = arith.constant 0 : index
    %c3 = arith.constant 3 : index
    %c0_14 = arith.constant 0 : index
    %c0_15 = arith.constant 0 : index
    %12 = vector.load %arg2[%c0_13, %c3, %c0_14, %c0_15] : memref<1x4x8x288xbf16, #tpu.memory_space<vmem>>, vector<1x1x8x288xbf16>
    %13 = vector.shape_cast %12 : vector<1x1x8x288xbf16> to vector<8x288xbf16>
    %cst_16 = arith.constant dense<0.000000e+00> : vector<8x64xf32>
    %14 = tpu.matmul %13, %0, %cst_16 {dimension_numbers = #tpu.dot_dimension_numbers<[1], [0], [0], [1], [0, 0, 1, 1], [], []>} : vector<8x288xbf16>, vector<288x64xbf16>, vector<8x64xf32> -> vector<8x64xf32>
    %15 = arith.maximumf %11, %14 : vector<8x64xf32>
    %c0_17 = arith.constant 0 : index
    %c0_18 = arith.constant 0 : index
    %16 = vector.load %arg4[%c0_17, %c0_18] : memref<1x64xf32, #tpu.memory_space<vmem>>, vector<1x64xf32>
    %17 = vector.broadcast %16 : vector<1x64xf32> to vector<8x64xf32>
    %18 = arith.addf %15, %17 : vector<8x64xf32>
    %cst_19 = arith.constant 0.000000e+00 : f32
    %19 = vector.broadcast %cst_19 : f32 to vector<8x64xf32>
    %20 = arith.maximumf %18, %19 : vector<8x64xf32>
    %21 = arith.truncf %20 : vector<8x64xf32> to vector<8x64xbf16>
    %c0_20 = arith.constant 0 : index
    %c0_21 = arith.constant 0 : index
    %c0_22 = arith.constant 0 : index
    %22 = vector.load %arg5[%c0_20, %c0_21, %c0_22] : memref<1x8x64xbf16, #tpu.memory_space<vmem>>, vector<1x8x64xbf16>
    %23 = vector.shape_cast %22 : vector<1x8x64xbf16> to vector<8x64xbf16>
    %24 = vector.shape_cast %21 : vector<8x64xbf16> to vector<1x8x64xbf16>
    tpu.vector_store %arg5[%c0_20, %c0_21, %c0_22], %24 {strides = array<i32>} : memref<1x8x64xbf16, #tpu.memory_space<vmem>>, vector<1x8x64xbf16>,
    return
  }
  func.func @transform_0(%arg0: i32, %arg1: i32) -> (i32, i32, i32, i32) {
    %c0_i32 = arith.constant 0 : i32
    %c0_i32_0 = arith.constant 0 : i32
    %c0_i32_1 = arith.constant 0 : i32
    return %arg0, %c0_i32, %arg1, %c0_i32_0 : i32, i32, i32, i32
  }
  func.func @transform_1(%arg0: i32, %arg1: i32) -> (i32, i32) {
    %c0_i32 = arith.constant 0 : i32
    %c0_i32_0 = arith.constant 0 : i32
    %c0_i32_1 = arith.constant 0 : i32
    return %c0_i32, %c0_i32_0 : i32, i32
  }
  func.func @transform_2(%arg0: i32, %arg1: i32) -> (i32, i32) {
    %c0_i32 = arith.constant 0 : i32
    %c0_i32_0 = arith.constant 0 : i32
    %c0_i32_1 = arith.constant 0 : i32
    return %c0_i32, %c0_i32_0 : i32, i32
  }
  func.func @transform_3(%arg0: i32, %arg1: i32) -> (i32, i32, i32) {
    %c0_i32 = arith.constant 0 : i32
    %c0_i32_0 = arith.constant 0 : i32
    return %arg0, %arg1, %c0_i32 : i32, i32, i32
  }
}

module attributes {stable_mosaic.version = 11 : i64} {
  func.func @_conv3x3_relu_gap_kernel(%arg0: memref<32x576xbf16, #tpu.memory_space<vmem>>, %arg1: memref<576x128xbf16, #tpu.memory_space<vmem>>, %arg2: memref<1x128xf32, #tpu.memory_space<vmem>>, %arg3: memref<4x32xf32, #tpu.memory_space<vmem>>, %arg4: memref<4x128xf32, #tpu.memory_space<vmem>>) attributes {dimension_semantics = [], scalar_prefetch = 0 : i64, scratch_operands = 0 : i64, tpu.core_type = #tpu.core_type<tc>} {
    %c0 = arith.constant 0 : index
    %c0_0 = arith.constant 0 : index
    %0 = vector.load %arg0[%c0, %c0_0] : memref<32x576xbf16, #tpu.memory_space<vmem>>, vector<32x576xbf16>
    %c0_1 = arith.constant 0 : index
    %c0_2 = arith.constant 0 : index
    %1 = vector.load %arg1[%c0_1, %c0_2] : memref<576x128xbf16, #tpu.memory_space<vmem>>, vector<576x128xbf16>
    %cst = arith.constant dense<0.000000e+00> : vector<32x128xf32>
    %2 = tpu.matmul %0, %1, %cst {dimension_numbers = #tpu.dot_dimension_numbers<[1], [0], [0], [1], [0, 0, 1, 1], [], []>} : vector<32x576xbf16>, vector<576x128xbf16>, vector<32x128xf32> -> vector<32x128xf32>
    %c0_3 = arith.constant 0 : index
    %c0_4 = arith.constant 0 : index
    %3 = vector.load %arg2[%c0_3, %c0_4] : memref<1x128xf32, #tpu.memory_space<vmem>>, vector<1x128xf32>
    %4 = vector.broadcast %3 : vector<1x128xf32> to vector<32x128xf32>
    %5 = arith.addf %2, %4 : vector<32x128xf32>
    %cst_5 = arith.constant 0.000000e+00 : f32
    %6 = vector.broadcast %cst_5 : f32 to vector<32x128xf32>
    %7 = arith.maximumf %5, %6 : vector<32x128xf32>
    %c0_6 = arith.constant 0 : index
    %c0_7 = arith.constant 0 : index
    %8 = vector.load %arg3[%c0_6, %c0_7] : memref<4x32xf32, #tpu.memory_space<vmem>>, vector<4x32xf32>
    %cst_8 = arith.constant dense<0.000000e+00> : vector<4x128xf32>
    %9 = tpu.matmul %8, %7, %cst_8 {dimension_numbers = #tpu.dot_dimension_numbers<[1], [0], [0], [1], [0, 0, 1, 1], [], []>} : vector<4x32xf32>, vector<32x128xf32>, vector<4x128xf32> -> vector<4x128xf32>
    %c0_9 = arith.constant 0 : index
    %c0_10 = arith.constant 0 : index
    %10 = vector.load %arg4[%c0_9, %c0_10] : memref<4x128xf32, #tpu.memory_space<vmem>>, vector<4x128xf32>
    tpu.vector_store %arg4[%c0_9, %c0_10], %9 {strides = array<i32>} : memref<4x128xf32, #tpu.memory_space<vmem>>, vector<4x128xf32>,
    return
  }
}

module attributes {stable_mosaic.version = 11 : i64} {
  func.func @_conv3x3_relu_maxpool_kernel(%arg0: i32, %arg1: i32, %arg2: memref<1x4x128x16xbf16, #tpu.memory_space<vmem>>, %arg3: memref<16x16xbf16, #tpu.memory_space<vmem>>, %arg4: memref<1x16xf32, #tpu.memory_space<vmem>>, %arg5: memref<1x128x16xbf16, #tpu.memory_space<vmem>>) attributes {dimension_semantics = [#tpu.dimension_semantics<parallel>, #tpu.dimension_semantics<parallel>], iteration_bounds = array<i64: 2, 1>, scalar_prefetch = 0 : i64, scratch_operands = 0 : i64, tpu.core_type = #tpu.core_type<tc>, window_params = [{transform_indices = @transform_0, window_bounds = array<i64: 1, 4, 128, 16>}, {pipeline_mode = #tpu.pipeline_mode<synchronous>, transform_indices = @transform_1, window_bounds = array<i64: 16, 16>}, {pipeline_mode = #tpu.pipeline_mode<synchronous>, transform_indices = @transform_2, window_bounds = array<i64: 1, 16>}, {transform_indices = @transform_3, window_bounds = array<i64: 1, 128, 16>}]} {
    %c0 = arith.constant 0 : index
    %c0_0 = arith.constant 0 : index
    %0 = vector.load %arg3[%c0, %c0_0] : memref<16x16xbf16, #tpu.memory_space<vmem>>, vector<16x16xbf16>
    %c0_1 = arith.constant 0 : index
    %c0_2 = arith.constant 0 : index
    %c0_3 = arith.constant 0 : index
    %c0_4 = arith.constant 0 : index
    %1 = vector.load %arg2[%c0_1, %c0_2, %c0_3, %c0_4] : memref<1x4x128x16xbf16, #tpu.memory_space<vmem>>, vector<1x4x128x16xbf16>
    %2 = vector.shape_cast %1 : vector<1x4x128x16xbf16> to vector<512x16xbf16>
    %cst = arith.constant dense<0.000000e+00> : vector<512x16xf32>
    %3 = tpu.matmul %2, %0, %cst {dimension_numbers = #tpu.dot_dimension_numbers<[1], [0], [0], [1], [0, 0, 1, 1], [], []>} : vector<512x16xbf16>, vector<16x16xbf16>, vector<512x16xf32> -> vector<512x16xf32>
    %4 = vector.extract_strided_slice %3 {offsets = [0, 0], sizes = [128, 16], strides = [1, 1]} : vector<512x16xf32> to vector<128x16xf32>
    %5 = vector.extract_strided_slice %3 {offsets = [128, 0], sizes = [128, 16], strides = [1, 1]} : vector<512x16xf32> to vector<128x16xf32>
    %6 = arith.maximumf %4, %5 : vector<128x16xf32>
    %7 = vector.extract_strided_slice %3 {offsets = [256, 0], sizes = [128, 16], strides = [1, 1]} : vector<512x16xf32> to vector<128x16xf32>
    %8 = vector.extract_strided_slice %3 {offsets = [384, 0], sizes = [128, 16], strides = [1, 1]} : vector<512x16xf32> to vector<128x16xf32>
    %9 = arith.maximumf %7, %8 : vector<128x16xf32>
    %10 = arith.maximumf %6, %9 : vector<128x16xf32>
    %c0_5 = arith.constant 0 : index
    %c0_6 = arith.constant 0 : index
    %11 = vector.load %arg4[%c0_5, %c0_6] : memref<1x16xf32, #tpu.memory_space<vmem>>, vector<1x16xf32>
    %12 = vector.broadcast %11 : vector<1x16xf32> to vector<128x16xf32>
    %13 = arith.addf %10, %12 : vector<128x16xf32>
    %cst_7 = arith.constant 0.000000e+00 : f32
    %14 = vector.broadcast %cst_7 : f32 to vector<128x16xf32>
    %15 = arith.maximumf %13, %14 : vector<128x16xf32>
    %16 = arith.truncf %15 : vector<128x16xf32> to vector<128x16xbf16>
    %c0_8 = arith.constant 0 : index
    %c0_9 = arith.constant 0 : index
    %c0_10 = arith.constant 0 : index
    %17 = vector.load %arg5[%c0_8, %c0_9, %c0_10] : memref<1x128x16xbf16, #tpu.memory_space<vmem>>, vector<1x128x16xbf16>
    %18 = vector.shape_cast %17 : vector<1x128x16xbf16> to vector<128x16xbf16>
    %19 = vector.shape_cast %16 : vector<128x16xbf16> to vector<1x128x16xbf16>
    tpu.vector_store %arg5[%c0_8, %c0_9, %c0_10], %19 {strides = array<i32>} : memref<1x128x16xbf16, #tpu.memory_space<vmem>>, vector<1x128x16xbf16>,
    return
  }
  func.func @transform_0(%arg0: i32, %arg1: i32) -> (i32, i32, i32, i32) {
    %c0_i32 = arith.constant 0 : i32
    %c0_i32_0 = arith.constant 0 : i32
    %c0_i32_1 = arith.constant 0 : i32
    return %arg0, %c0_i32, %arg1, %c0_i32_0 : i32, i32, i32, i32
  }
  func.func @transform_1(%arg0: i32, %arg1: i32) -> (i32, i32) {
    %c0_i32 = arith.constant 0 : i32
    %c0_i32_0 = arith.constant 0 : i32
    %c0_i32_1 = arith.constant 0 : i32
    return %c0_i32, %c0_i32_0 : i32, i32
  }
  func.func @transform_2(%arg0: i32, %arg1: i32) -> (i32, i32) {
    %c0_i32 = arith.constant 0 : i32
    %c0_i32_0 = arith.constant 0 : i32
    %c0_i32_1 = arith.constant 0 : i32
    return %c0_i32, %c0_i32_0 : i32, i32
  }
  func.func @transform_3(%arg0: i32, %arg1: i32) -> (i32, i32, i32) {
    %c0_i32 = arith.constant 0 : i32
    %c0_i32_0 = arith.constant 0 : i32
    return %arg0, %arg1, %c0_i32 : i32, i32, i32
  }
}

module attributes {stable_mosaic.version = 11 : i64} {
  func.func @_conv3x3_relu_maxpool_kernel(%arg0: i32, %arg1: i32, %arg2: memref<1x4x32x144xbf16, #tpu.memory_space<vmem>>, %arg3: memref<144x32xbf16, #tpu.memory_space<vmem>>, %arg4: memref<1x32xf32, #tpu.memory_space<vmem>>, %arg5: memref<1x32x32xbf16, #tpu.memory_space<vmem>>) attributes {dimension_semantics = [#tpu.dimension_semantics<parallel>, #tpu.dimension_semantics<parallel>], iteration_bounds = array<i64: 2, 1>, scalar_prefetch = 0 : i64, scratch_operands = 0 : i64, tpu.core_type = #tpu.core_type<tc>, window_params = [{transform_indices = @transform_0, window_bounds = array<i64: 1, 4, 32, 144>}, {pipeline_mode = #tpu.pipeline_mode<synchronous>, transform_indices = @transform_1, window_bounds = array<i64: 144, 32>}, {pipeline_mode = #tpu.pipeline_mode<synchronous>, transform_indices = @transform_2, window_bounds = array<i64: 1, 32>}, {transform_indices = @transform_3, window_bounds = array<i64: 1, 32, 32>}]} {
    %c0 = arith.constant 0 : index
    %c0_0 = arith.constant 0 : index
    %0 = vector.load %arg3[%c0, %c0_0] : memref<144x32xbf16, #tpu.memory_space<vmem>>, vector<144x32xbf16>
    %c0_1 = arith.constant 0 : index
    %c0_2 = arith.constant 0 : index
    %c0_3 = arith.constant 0 : index
    %c0_4 = arith.constant 0 : index
    %1 = vector.load %arg2[%c0_1, %c0_2, %c0_3, %c0_4] : memref<1x4x32x144xbf16, #tpu.memory_space<vmem>>, vector<1x4x32x144xbf16>
    %2 = vector.shape_cast %1 : vector<1x4x32x144xbf16> to vector<128x144xbf16>
    %cst = arith.constant dense<0.000000e+00> : vector<128x32xf32>
    %3 = tpu.matmul %2, %0, %cst {dimension_numbers = #tpu.dot_dimension_numbers<[1], [0], [0], [1], [0, 0, 1, 1], [], []>} : vector<128x144xbf16>, vector<144x32xbf16>, vector<128x32xf32> -> vector<128x32xf32>
    %4 = vector.extract_strided_slice %3 {offsets = [0, 0], sizes = [32, 32], strides = [1, 1]} : vector<128x32xf32> to vector<32x32xf32>
    %5 = vector.extract_strided_slice %3 {offsets = [32, 0], sizes = [32, 32], strides = [1, 1]} : vector<128x32xf32> to vector<32x32xf32>
    %6 = arith.maximumf %4, %5 : vector<32x32xf32>
    %7 = vector.extract_strided_slice %3 {offsets = [64, 0], sizes = [32, 32], strides = [1, 1]} : vector<128x32xf32> to vector<32x32xf32>
    %8 = vector.extract_strided_slice %3 {offsets = [96, 0], sizes = [32, 32], strides = [1, 1]} : vector<128x32xf32> to vector<32x32xf32>
    %9 = arith.maximumf %7, %8 : vector<32x32xf32>
    %10 = arith.maximumf %6, %9 : vector<32x32xf32>
    %c0_5 = arith.constant 0 : index
    %c0_6 = arith.constant 0 : index
    %11 = vector.load %arg4[%c0_5, %c0_6] : memref<1x32xf32, #tpu.memory_space<vmem>>, vector<1x32xf32>
    %12 = vector.broadcast %11 : vector<1x32xf32> to vector<32x32xf32>
    %13 = arith.addf %10, %12 : vector<32x32xf32>
    %cst_7 = arith.constant 0.000000e+00 : f32
    %14 = vector.broadcast %cst_7 : f32 to vector<32x32xf32>
    %15 = arith.maximumf %13, %14 : vector<32x32xf32>
    %16 = arith.truncf %15 : vector<32x32xf32> to vector<32x32xbf16>
    %c0_8 = arith.constant 0 : index
    %c0_9 = arith.constant 0 : index
    %c0_10 = arith.constant 0 : index
    %17 = vector.load %arg5[%c0_8, %c0_9, %c0_10] : memref<1x32x32xbf16, #tpu.memory_space<vmem>>, vector<1x32x32xbf16>
    %18 = vector.shape_cast %17 : vector<1x32x32xbf16> to vector<32x32xbf16>
    %19 = vector.shape_cast %16 : vector<32x32xbf16> to vector<1x32x32xbf16>
    tpu.vector_store %arg5[%c0_8, %c0_9, %c0_10], %19 {strides = array<i32>} : memref<1x32x32xbf16, #tpu.memory_space<vmem>>, vector<1x32x32xbf16>,
    return
  }
  func.func @transform_0(%arg0: i32, %arg1: i32) -> (i32, i32, i32, i32) {
    %c0_i32 = arith.constant 0 : i32
    %c0_i32_0 = arith.constant 0 : i32
    %c0_i32_1 = arith.constant 0 : i32
    return %arg0, %c0_i32, %arg1, %c0_i32_0 : i32, i32, i32, i32
  }
  func.func @transform_1(%arg0: i32, %arg1: i32) -> (i32, i32) {
    %c0_i32 = arith.constant 0 : i32
    %c0_i32_0 = arith.constant 0 : i32
    %c0_i32_1 = arith.constant 0 : i32
    return %c0_i32, %c0_i32_0 : i32, i32
  }
  func.func @transform_2(%arg0: i32, %arg1: i32) -> (i32, i32) {
    %c0_i32 = arith.constant 0 : i32
    %c0_i32_0 = arith.constant 0 : i32
    %c0_i32_1 = arith.constant 0 : i32
    return %c0_i32, %c0_i32_0 : i32, i32
  }
  func.func @transform_3(%arg0: i32, %arg1: i32) -> (i32, i32, i32) {
    %c0_i32 = arith.constant 0 : i32
    %c0_i32_0 = arith.constant 0 : i32
    return %arg0, %arg1, %c0_i32 : i32, i32, i32
  }
}

module attributes {stable_mosaic.version = 11 : i64} {
  func.func @_conv3x3_relu_maxpool_kernel(%arg0: i32, %arg1: i32, %arg2: memref<1x4x8x288xbf16, #tpu.memory_space<vmem>>, %arg3: memref<288x64xbf16, #tpu.memory_space<vmem>>, %arg4: memref<1x64xf32, #tpu.memory_space<vmem>>, %arg5: memref<1x8x64xbf16, #tpu.memory_space<vmem>>) attributes {dimension_semantics = [#tpu.dimension_semantics<parallel>, #tpu.dimension_semantics<parallel>], iteration_bounds = array<i64: 2, 1>, scalar_prefetch = 0 : i64, scratch_operands = 0 : i64, tpu.core_type = #tpu.core_type<tc>, window_params = [{transform_indices = @transform_0, window_bounds = array<i64: 1, 4, 8, 288>}, {pipeline_mode = #tpu.pipeline_mode<synchronous>, transform_indices = @transform_1, window_bounds = array<i64: 288, 64>}, {pipeline_mode = #tpu.pipeline_mode<synchronous>, transform_indices = @transform_2, window_bounds = array<i64: 1, 64>}, {transform_indices = @transform_3, window_bounds = array<i64: 1, 8, 64>}]} {
    %c0 = arith.constant 0 : index
    %c0_0 = arith.constant 0 : index
    %0 = vector.load %arg3[%c0, %c0_0] : memref<288x64xbf16, #tpu.memory_space<vmem>>, vector<288x64xbf16>
    %c0_1 = arith.constant 0 : index
    %c0_2 = arith.constant 0 : index
    %c0_3 = arith.constant 0 : index
    %c0_4 = arith.constant 0 : index
    %1 = vector.load %arg2[%c0_1, %c0_2, %c0_3, %c0_4] : memref<1x4x8x288xbf16, #tpu.memory_space<vmem>>, vector<1x1x8x288xbf16>
    %2 = vector.shape_cast %1 : vector<1x1x8x288xbf16> to vector<8x288xbf16>
    %cst = arith.constant dense<0.000000e+00> : vector<8x64xf32>
    %3 = tpu.matmul %2, %0, %cst {dimension_numbers = #tpu.dot_dimension_numbers<[1], [0], [0], [1], [0, 0, 1, 1], [], []>} : vector<8x288xbf16>, vector<288x64xbf16>, vector<8x64xf32> -> vector<8x64xf32>
    %c0_5 = arith.constant 0 : index
    %c1 = arith.constant 1 : index
    %c0_6 = arith.constant 0 : index
    %c0_7 = arith.constant 0 : index
    %4 = vector.load %arg2[%c0_5, %c1, %c0_6, %c0_7] : memref<1x4x8x288xbf16, #tpu.memory_space<vmem>>, vector<1x1x8x288xbf16>
    %5 = vector.shape_cast %4 : vector<1x1x8x288xbf16> to vector<8x288xbf16>
    %cst_8 = arith.constant dense<0.000000e+00> : vector<8x64xf32>
    %6 = tpu.matmul %5, %0, %cst_8 {dimension_numbers = #tpu.dot_dimension_numbers<[1], [0], [0], [1], [0, 0, 1, 1], [], []>} : vector<8x288xbf16>, vector<288x64xbf16>, vector<8x64xf32> -> vector<8x64xf32>
    %7 = arith.maximumf %3, %6 : vector<8x64xf32>
    %c0_9 = arith.constant 0 : index
    %c2 = arith.constant 2 : index
    %c0_10 = arith.constant 0 : index
    %c0_11 = arith.constant 0 : index
    %8 = vector.load %arg2[%c0_9, %c2, %c0_10, %c0_11] : memref<1x4x8x288xbf16, #tpu.memory_space<vmem>>, vector<1x1x8x288xbf16>
    %9 = vector.shape_cast %8 : vector<1x1x8x288xbf16> to vector<8x288xbf16>
    %cst_12 = arith.constant dense<0.000000e+00> : vector<8x64xf32>
    %10 = tpu.matmul %9, %0, %cst_12 {dimension_numbers = #tpu.dot_dimension_numbers<[1], [0], [0], [1], [0, 0, 1, 1], [], []>} : vector<8x288xbf16>, vector<288x64xbf16>, vector<8x64xf32> -> vector<8x64xf32>
    %11 = arith.maximumf %7, %10 : vector<8x64xf32>
    %c0_13 = arith.constant 0 : index
    %c3 = arith.constant 3 : index
    %c0_14 = arith.constant 0 : index
    %c0_15 = arith.constant 0 : index
    %12 = vector.load %arg2[%c0_13, %c3, %c0_14, %c0_15] : memref<1x4x8x288xbf16, #tpu.memory_space<vmem>>, vector<1x1x8x288xbf16>
    %13 = vector.shape_cast %12 : vector<1x1x8x288xbf16> to vector<8x288xbf16>
    %cst_16 = arith.constant dense<0.000000e+00> : vector<8x64xf32>
    %14 = tpu.matmul %13, %0, %cst_16 {dimension_numbers = #tpu.dot_dimension_numbers<[1], [0], [0], [1], [0, 0, 1, 1], [], []>} : vector<8x288xbf16>, vector<288x64xbf16>, vector<8x64xf32> -> vector<8x64xf32>
    %15 = arith.maximumf %11, %14 : vector<8x64xf32>
    %c0_17 = arith.constant 0 : index
    %c0_18 = arith.constant 0 : index
    %16 = vector.load %arg4[%c0_17, %c0_18] : memref<1x64xf32, #tpu.memory_space<vmem>>, vector<1x64xf32>
    %17 = vector.broadcast %16 : vector<1x64xf32> to vector<8x64xf32>
    %18 = arith.addf %15, %17 : vector<8x64xf32>
    %cst_19 = arith.constant 0.000000e+00 : f32
    %19 = vector.broadcast %cst_19 : f32 to vector<8x64xf32>
    %20 = arith.maximumf %18, %19 : vector<8x64xf32>
    %21 = arith.truncf %20 : vector<8x64xf32> to vector<8x64xbf16>
    %c0_20 = arith.constant 0 : index
    %c0_21 = arith.constant 0 : index
    %c0_22 = arith.constant 0 : index
    %22 = vector.load %arg5[%c0_20, %c0_21, %c0_22] : memref<1x8x64xbf16, #tpu.memory_space<vmem>>, vector<1x8x64xbf16>
    %23 = vector.shape_cast %22 : vector<1x8x64xbf16> to vector<8x64xbf16>
    %24 = vector.shape_cast %21 : vector<8x64xbf16> to vector<1x8x64xbf16>
    tpu.vector_store %arg5[%c0_20, %c0_21, %c0_22], %24 {strides = array<i32>} : memref<1x8x64xbf16, #tpu.memory_space<vmem>>, vector<1x8x64xbf16>,
    return
  }
  func.func @transform_0(%arg0: i32, %arg1: i32) -> (i32, i32, i32, i32) {
    %c0_i32 = arith.constant 0 : i32
    %c0_i32_0 = arith.constant 0 : i32
    %c0_i32_1 = arith.constant 0 : i32
    return %arg0, %c0_i32, %arg1, %c0_i32_0 : i32, i32, i32, i32
  }
  func.func @transform_1(%arg0: i32, %arg1: i32) -> (i32, i32) {
    %c0_i32 = arith.constant 0 : i32
    %c0_i32_0 = arith.constant 0 : i32
    %c0_i32_1 = arith.constant 0 : i32
    return %c0_i32, %c0_i32_0 : i32, i32
  }
  func.func @transform_2(%arg0: i32, %arg1: i32) -> (i32, i32) {
    %c0_i32 = arith.constant 0 : i32
    %c0_i32_0 = arith.constant 0 : i32
    %c0_i32_1 = arith.constant 0 : i32
    return %c0_i32, %c0_i32_0 : i32, i32
  }
  func.func @transform_3(%arg0: i32, %arg1: i32) -> (i32, i32, i32) {
    %c0_i32 = arith.constant 0 : i32
    %c0_i32_0 = arith.constant 0 : i32
    return %arg0, %arg1, %c0_i32 : i32, i32, i32
  }
}

module attributes {stable_mosaic.version = 11 : i64} {
  func.func @_conv3x3_relu_gap_kernel(%arg0: memref<16x576xbf16, #tpu.memory_space<vmem>>, %arg1: memref<576x128xbf16, #tpu.memory_space<vmem>>, %arg2: memref<1x128xf32, #tpu.memory_space<vmem>>, %arg3: memref<2x16xf32, #tpu.memory_space<vmem>>, %arg4: memref<2x128xf32, #tpu.memory_space<vmem>>) attributes {dimension_semantics = [], scalar_prefetch = 0 : i64, scratch_operands = 0 : i64, tpu.core_type = #tpu.core_type<tc>} {
    %c0 = arith.constant 0 : index
    %c0_0 = arith.constant 0 : index
    %0 = vector.load %arg0[%c0, %c0_0] : memref<16x576xbf16, #tpu.memory_space<vmem>>, vector<16x576xbf16>
    %c0_1 = arith.constant 0 : index
    %c0_2 = arith.constant 0 : index
    %1 = vector.load %arg1[%c0_1, %c0_2] : memref<576x128xbf16, #tpu.memory_space<vmem>>, vector<576x128xbf16>
    %cst = arith.constant dense<0.000000e+00> : vector<16x128xf32>
    %2 = tpu.matmul %0, %1, %cst {dimension_numbers = #tpu.dot_dimension_numbers<[1], [0], [0], [1], [0, 0, 1, 1], [], []>} : vector<16x576xbf16>, vector<576x128xbf16>, vector<16x128xf32> -> vector<16x128xf32>
    %c0_3 = arith.constant 0 : index
    %c0_4 = arith.constant 0 : index
    %3 = vector.load %arg2[%c0_3, %c0_4] : memref<1x128xf32, #tpu.memory_space<vmem>>, vector<1x128xf32>
    %4 = vector.broadcast %3 : vector<1x128xf32> to vector<16x128xf32>
    %5 = arith.addf %2, %4 : vector<16x128xf32>
    %cst_5 = arith.constant 0.000000e+00 : f32
    %6 = vector.broadcast %cst_5 : f32 to vector<16x128xf32>
    %7 = arith.maximumf %5, %6 : vector<16x128xf32>
    %c0_6 = arith.constant 0 : index
    %c0_7 = arith.constant 0 : index
    %8 = vector.load %arg3[%c0_6, %c0_7] : memref<2x16xf32, #tpu.memory_space<vmem>>, vector<2x16xf32>
    %cst_8 = arith.constant dense<0.000000e+00> : vector<2x128xf32>
    %9 = tpu.matmul %8, %7, %cst_8 {dimension_numbers = #tpu.dot_dimension_numbers<[1], [0], [0], [1], [0, 0, 1, 1], [], []>} : vector<2x16xf32>, vector<16x128xf32>, vector<2x128xf32> -> vector<2x128xf32>
    %c0_9 = arith.constant 0 : index
    %c0_10 = arith.constant 0 : index
    %10 = vector.load %arg4[%c0_9, %c0_10] : memref<2x128xf32, #tpu.memory_space<vmem>>, vector<2x128xf32>
    tpu.vector_store %arg4[%c0_9, %c0_10], %9 {strides = array<i32>} : memref<2x128xf32, #tpu.memory_space<vmem>>, vector<2x128xf32>,
    return
  }
}

module attributes {stable_mosaic.version = 11 : i64} {
  func.func @_mlp_head_kernel(%arg0: memref<2x128xf32, #tpu.memory_space<vmem>>, %arg1: memref<2x128xf32, #tpu.memory_space<vmem>>, %arg2: memref<2x128xf32, #tpu.memory_space<vmem>>, %arg3: memref<384x512xf32, #tpu.memory_space<vmem>>, %arg4: memref<1x512xf32, #tpu.memory_space<vmem>>, %arg5: memref<512x11xf32, #tpu.memory_space<vmem>>, %arg6: memref<1x11xf32, #tpu.memory_space<vmem>>, %arg7: memref<2x11xf32, #tpu.memory_space<vmem>>) attributes {dimension_semantics = [], scalar_prefetch = 0 : i64, scratch_operands = 0 : i64, tpu.core_type = #tpu.core_type<tc>} {
    %c0 = arith.constant 0 : index
    %c0_0 = arith.constant 0 : index
    %0 = vector.load %arg0[%c0, %c0_0] : memref<2x128xf32, #tpu.memory_space<vmem>>, vector<2x128xf32>
    %c0_1 = arith.constant 0 : index
    %c0_2 = arith.constant 0 : index
    %1 = vector.load %arg3[%c0_1, %c0_2] : memref<384x512xf32, #tpu.memory_space<vmem>>, vector<128x512xf32>
    %cst = arith.constant dense<0.000000e+00> : vector<2x512xf32>
    %2 = tpu.matmul %0, %1, %cst {dimension_numbers = #tpu.dot_dimension_numbers<[1], [0], [0], [1], [0, 0, 1, 1], [], []>} : vector<2x128xf32>, vector<128x512xf32>, vector<2x512xf32> -> vector<2x512xf32>
    %c0_3 = arith.constant 0 : index
    %c0_4 = arith.constant 0 : index
    %3 = vector.load %arg1[%c0_3, %c0_4] : memref<2x128xf32, #tpu.memory_space<vmem>>, vector<2x128xf32>
    %c128 = arith.constant 128 : index
    %c0_5 = arith.constant 0 : index
    %4 = vector.load %arg3[%c128, %c0_5] : memref<384x512xf32, #tpu.memory_space<vmem>>, vector<128x512xf32>
    %cst_6 = arith.constant dense<0.000000e+00> : vector<2x512xf32>
    %5 = tpu.matmul %3, %4, %cst_6 {dimension_numbers = #tpu.dot_dimension_numbers<[1], [0], [0], [1], [0, 0, 1, 1], [], []>} : vector<2x128xf32>, vector<128x512xf32>, vector<2x512xf32> -> vector<2x512xf32>
    %6 = arith.addf %2, %5 : vector<2x512xf32>
    %c0_7 = arith.constant 0 : index
    %c0_8 = arith.constant 0 : index
    %7 = vector.load %arg2[%c0_7, %c0_8] : memref<2x128xf32, #tpu.memory_space<vmem>>, vector<2x128xf32>
    %c256 = arith.constant 256 : index
    %c0_9 = arith.constant 0 : index
    %8 = vector.load %arg3[%c256, %c0_9] : memref<384x512xf32, #tpu.memory_space<vmem>>, vector<128x512xf32>
    %cst_10 = arith.constant dense<0.000000e+00> : vector<2x512xf32>
    %9 = tpu.matmul %7, %8, %cst_10 {dimension_numbers = #tpu.dot_dimension_numbers<[1], [0], [0], [1], [0, 0, 1, 1], [], []>} : vector<2x128xf32>, vector<128x512xf32>, vector<2x512xf32> -> vector<2x512xf32>
    %10 = arith.addf %6, %9 : vector<2x512xf32>
    %c0_11 = arith.constant 0 : index
    %c0_12 = arith.constant 0 : index
    %11 = vector.load %arg4[%c0_11, %c0_12] : memref<1x512xf32, #tpu.memory_space<vmem>>, vector<1x512xf32>
    %12 = vector.broadcast %11 : vector<1x512xf32> to vector<2x512xf32>
    %13 = arith.addf %10, %12 : vector<2x512xf32>
    %cst_13 = arith.constant 0.000000e+00 : f32
    %14 = vector.broadcast %cst_13 : f32 to vector<2x512xf32>
    %15 = arith.maximumf %13, %14 : vector<2x512xf32>
    %c0_14 = arith.constant 0 : index
    %c0_15 = arith.constant 0 : index
    %16 = vector.load %arg5[%c0_14, %c0_15] : memref<512x11xf32, #tpu.memory_space<vmem>>, vector<512x11xf32>
    %cst_16 = arith.constant dense<0.000000e+00> : vector<2x11xf32>
    %17 = tpu.matmul %15, %16, %cst_16 {dimension_numbers = #tpu.dot_dimension_numbers<[1], [0], [0], [1], [0, 0, 1, 1], [], []>} : vector<2x512xf32>, vector<512x11xf32>, vector<2x11xf32> -> vector<2x11xf32>
    %c0_17 = arith.constant 0 : index
    %c0_18 = arith.constant 0 : index
    %18 = vector.load %arg6[%c0_17, %c0_18] : memref<1x11xf32, #tpu.memory_space<vmem>>, vector<1x11xf32>
    %19 = vector.broadcast %18 : vector<1x11xf32> to vector<2x11xf32>
    %20 = arith.addf %17, %19 : vector<2x11xf32>
    %c0_19 = arith.constant 0 : index
    %c0_20 = arith.constant 0 : index
    %21 = vector.load %arg7[%c0_19, %c0_20] : memref<2x11xf32, #tpu.memory_space<vmem>>, vector<2x11xf32>
    tpu.vector_store %arg7[%c0_19, %c0_20], %20 {strides = array<i32>} : memref<2x11xf32, #tpu.memory_space<vmem>>, vector<2x11xf32>,
    return
  }
}

</mosaic_0001>

<llo_original>
// kernel: forward.9
$region0: #{forward.9}
  #allocation0 [shape = 'u32[]', space=smem, size = 0x4, offset = 0x4, fixed_abs, tag = 'smem constant byte address 0x4 - core index']
  #allocation1 [shape = 'u32[144,128]{1,0:T(1,128)}', space=vmem, size = 0x12000, scoped, tag = 'internal scratch']
  %s0 = inlined_call_operand.vmem [shape: bf16[4,4,128,32], index: 0, kind: input, shape index: {}]
  %s1 = inlined_call_operand.vmem [shape: bf16[32,16], index: 1, kind: input, shape index: {}]
  %s2 = inlined_call_operand.vmem [shape: f32[1,16], index: 2, kind: input, shape index: {}]
  %s3 = inlined_call_operand.vmem [shape: bf16[4,128,16], index: 3, kind: output, shape index: {}]
  %s4 = sld [smem:[#allocation0]]
  $region45: #{forward.9} parent=0
    _
  %s6 = ssub.s32 1, %s4
  %s7 = scalar_select 0, %s6, %s4
  loop: start=0, step=1, limit=6
  $region2: #{forward.9} parent=0 // loop_pre_header
    _
  $region3: #{forward.9} parent=0 // loop_header
    %s9 = sphi 0, %s13
    %p10 = scmp.ge.s32.totalorder %s9, 6
    %s16 = sphi 0, %s28
    %s17 = sphi 0, %s24
    %s18 = sphi 0, %s16
    %s19 = sphi 0, %s17
    %s20 = sphi 0, %s18
    %s21 = sphi 0, %s19
    %s33 = sphi 0, %s35
    %s36 = sphi 0, %s33
    %s37 = sphi 0, %s36
    %s53 = sphi 0, %s37
    %s57 = sphi 0, %s57
    %s59 = sphi 0, %s57
    %s60 = sphi 0, %s59
    %s74 = sphi 0, %s60
    %s78 = sphi 0, %s78
    %s80 = sphi 0, %s78
    %s81 = sphi 0, %s80
    %s95 = sphi 0, %s81
    %s103 = sphi 0, %s105
    %s106 = sphi 0, %s103
    %s107 = sphi 0, %s106
    %s123 = sphi 0, %s107
  $region4: #{forward.9} parent=0 // loop_header_branch
    %12 = sbr.rel (%p10) target = $region8
  $region5: #{forward.9} parent=0 // loop_body
    %s14 = ssub.s32 %s9, 1
    %s15 = ssub.s32 %s9, 2
    %s22 = sadd.s32 1, %s17
    %p23 = scmp.ge.s32.totalorder %s22, 1
    %s24 = scalar_select %p23, 0, %s22
    %s25 = sadd.s32 1, %s16
    %s26 = scalar_select %p23, %s25, %s16
    %p27 = scmp.ge.s32.totalorder %s26, 4
    %s28 = scalar_select %p27, 0, %s26
    %s29 = ssub.s32 %s16, %s28
    %s30 = ssub.s32 %s17, %s24
    %s31 = sor.u32 %s29, %s30
    %p32 = scmp.eq.s32.totalorder %s31, 0
    %s34 = sadd.s32 %s33, 1
    %s35 = scalar_select %p32, %s33, %s34
    %p38 = pneg %p32
    %p39 = scmp.eq.s32.totalorder %s9, 3
    %p40 = por %p38, %p39
    %p41 = scmp.ne.s32.totalorder %s33, %s36
    %p42 = scmp.eq.s32.totalorder %s9, 0
    %p43 = por %p41, %p42
    %p44 = scmp.ne.s32.totalorder %s33, %s36
    %p45 = scmp.eq.s32.totalorder %s14, 3
    %p46 = por %p44, %p45
    %p47 = scmp.ne.s32.totalorder %s36, %s37
    %p48 = scmp.eq.s32.totalorder %s14, 0
    %p49 = por %p47, %p48
    %p50 = scmp.ne.s32.totalorder %s36, %s37
    %p51 = scmp.eq.s32.totalorder %s15, 3
    %p52 = por %p50, %p51
    %p54 = scmp.ne.s32.totalorder %s37, %s53
    %p55 = scmp.eq.s32.totalorder %s15, 0
    %p56 = por %p54, %p55
    %s58 = sadd.s32 %s57, 1
    %p61 = scmp.eq.s32.totalorder %s9, 3
    %p62 = scmp.ne.s32.totalorder %s57, %s59
    %p63 = scmp.eq.s32.totalorder %s9, 0
    %p64 = por %p62, %p63
    %p65 = scmp.ne.s32.totalorder %s57, %s59
    %p66 = scmp.eq.s32.totalorder %s14, 3
    %p67 = por %p65, %p66
    %p68 = scmp.ne.s32.totalorder %s59, %s60
    %p69 = scmp.eq.s32.totalorder %s14, 0
    %p70 = por %p68, %p69
    %p71 = scmp.ne.s32.totalorder %s59, %s60
    %p72 = scmp.eq.s32.totalorder %s15, 3
    %p73 = por %p71, %p72
    %p75 = scmp.ne.s32.totalorder %s60, %s74
    %p76 = scmp.eq.s32.totalorder %s15, 0
    %p77 = por %p75, %p76
    %s79 = sadd.s32 %s78, 1
    %p82 = scmp.eq.s32.totalorder %s9, 3
    %p83 = scmp.ne.s32.totalorder %s78, %s80
    %p84 = scmp.eq.s32.totalorder %s9, 0
    %p85 = por %p83, %p84
    %p86 = scmp.ne.s32.totalorder %s78, %s80
    %p87 = scmp.eq.s32.totalorder %s14, 3
    %p88 = por %p86, %p87
    %p89 = scmp.ne.s32.totalorder %s80, %s81
    %p90 = scmp.eq.s32.totalorder %s14, 0
    %p91 = por %p89, %p90
    %p92 = scmp.ne.s32.totalorder %s80, %s81
    %p93 = scmp.eq.s32.totalorder %s15, 3
    %p94 = por %p92, %p93
    %p96 = scmp.ne.s32.totalorder %s81, %s95
    %p97 = scmp.eq.s32.totalorder %s15, 0
    %p98 = por %p96, %p97
    %s99 = ssub.s32 %s16, %s28
    %s100 = ssub.s32 %s17, %s24
    %s101 = sor.u32 %s99, %s100
    %p102 = scmp.eq.s32.totalorder %s101, 0
    %s104 = sadd.s32 %s103, 1
    %s105 = scalar_select %p102, %s103, %s104
    %p108 = pneg %p102
    %p109 = scmp.eq.s32.totalorder %s9, 3
    %p110 = por %p108, %p109
    %p111 = scmp.ne.s32.totalorder %s103, %s106
    %p112 = scmp.eq.s32.totalorder %s9, 0
    %p113 = por %p111, %p112
    %p114 = scmp.ne.s32.totalorder %s103, %s106
    %p115 = scmp.eq.s32.totalorder %s14, 3
    %p116 = por %p114, %p115
    %p117 = scmp.ne.s32.totalorder %s106, %s107
    %p118 = scmp.eq.s32.totalorder %s14, 0
    %p119 = por %p117, %p118
    %p120 = scmp.ne.s32.totalorder %s106, %s107
    %p121 = scmp.eq.s32.totalorder %s15, 3
    %p122 = por %p120, %p121
    %p124 = scmp.ne.s32.totalorder %s107, %s123
    %p125 = scmp.eq.s32.totalorder %s15, 0
    %p126 = por %p124, %p125
    %p127 = scmp.le.s32.totalorder 1, %s9
    %p128 = scmp.lt.s32.totalorder %s9, 5
    %p129 = pnand %p127, %p128
    %p130 = pneg %p129
    // Predicated region
    $region9: #{forward.9} parent=5 // pred_check
      _
    $region10: #{forward.9} parent=5 // pred_check_branch
      %132 = sbr.rel (%p129) target = $region12
    $region11: #{forward.9} parent=5 // pred_region
      %s133 = ssub.s32 %s9, 1
      // Predicated region
      $region13: #{forward.9} parent=11 // pred_check
        %p134 = pneg %p70
      $region14: #{forward.9} parent=11 // pred_check_branch
        %136 = sbr.rel (%p134) target = $region16
      $region15: #{forward.9} parent=11 // pred_region
        _
      $region16: #{forward.9} parent=11 // pred_fallthru
        _
      // Predicated region
      $region17: #{forward.9} parent=11 // pred_check
        %p137 = pneg %p91
      $region18: #{forward.9} parent=11 // pred_check_branch
        %139 = sbr.rel (%p137) target = $region20
      $region19: #{forward.9} parent=11 // pred_region
        _
      $region20: #{forward.9} parent=11 // pred_fallthru
        _
    $region12: #{forward.9} parent=5 // pred_fallthru
      _
    %p140 = scmp.lt.s32.totalorder %s9, 4
    // Predicated region
    $region21: #{forward.9} parent=5 // pred_check
      %p141 = pneg %p140
    $region22: #{forward.9} parent=5 // pred_check_branch
      %143 = sbr.rel (%p141) target = $region24
    $region23: #{forward.9} parent=5 // pred_region
      // Predicated region
      $region25: #{forward.9} parent=23 // pred_check
        %p144 = pneg %p43
      $region26: #{forward.9} parent=23 // pred_check_branch
        %146 = sbr.rel (%p144) target = $region28
      $region27: #{forward.9} parent=23 // pred_region
        %s147 = smul.u32 16, %s17
        %p148 = scmp.lt.s32.totalorder %s16, 3
        %s149 = scalar_select %p148, %s16, 3
        %p150 = scmp.lt.s32.totalorder %s147, 15
        %s151 = scalar_select %p150, %s147, 15
        %s152 = smul.addr %s149, 64
        %s153 = sadd.s32 %s151, %s152
        %s154 = smul.addr %s153, 4
        %s155 = scalar_lea.vmem %s0, %s154
        %s156 = smul.u32 16, %s17
      $region28: #{forward.9} parent=23 // pred_fallthru
        _
    $region24: #{forward.9} parent=5 // pred_fallthru
      _
    %p157 = scmp.le.s32.totalorder 1, %s9
    %p158 = scmp.lt.s32.totalorder %s9, 5
    %p159 = pnand %p157, %p158
    %p160 = pneg %p159
    // Predicated region
    $region29: #{forward.9} parent=5 // pred_check
      _
    $region30: #{forward.9} parent=5 // pred_check_branch
      %162 = sbr.rel (%p159) target = $region32
    $region31: #{forward.9} parent=5 // pred_region
      %s163 = ssub.s32 %s9, 1
      %s164 = smul.u32 16, %s19
      %p165 = scmp.lt.s32.totalorder %s18, 3
      %s166 = scalar_select %p165, %s18, 3
      %p167 = scmp.lt.s32.totalorder %s164, 15
      %s168 = scalar_select %p167, %s164, 15
      %s169 = smul.addr %s166, 64
      %s170 = sadd.s32 %s168, %s169
      %s171 = smul.addr %s170, 4
      %s172 = scalar_lea.vmem %s0, %s171
      %p173 = pneg %p49
      %p174 = pneg %p46
      %p175 = pneg %p70
      %p176 = pneg %p67
      %p177 = pneg %p91
      %p178 = pneg %p88
      %p179 = pneg %p119
      %p180 = pneg %p116
      %s181 = smul.u32 16, %s19
      %p182 = scmp.lt.s32.totalorder %s18, 3
      %s183 = scalar_select %p182, %s18, 3
      %p184 = scmp.lt.s32.totalorder %s181, 15
      %s185 = scalar_select %p184, %s181, 15
      %s186 = smul.addr %s183, 16
      %s187 = sadd.s32 %s185, %s186
      %s188 = smul.addr %s187, 4
      %s189 = scalar_lea.vmem %s3, %s188
      %s190 = smul.u32 16, %s19
      %p191 = scmp.lt.s32.totalorder %s18, 3
      %s192 = scalar_select %p191, %s18, 3
      %p193 = scmp.lt.s32.totalorder %s190, 15
      %s194 = scalar_select %p193, %s190, 15
      %s195 = smul.addr %s192, 64
      %s196 = sadd.s32 %s194, %s195
      %s197 = smul.addr %s196, 4
      %s198 = scalar_lea.vmem %s0, %s197
      %s199 = smul.u32 16, %s19
      %s200 = smul.u32 16, %s19
      %p201 = scmp.lt.s32.totalorder %s18, 3
      %s202 = scalar_select %p201, %s18, 3
      %p203 = scmp.lt.s32.totalorder %s200, 15
      %s204 = scalar_select %p203, %s200, 15
      %s205 = smul.addr %s202, 16
      %s206 = sadd.s32 %s204, %s205
      %s207 = smul.addr %s206, 4
      %s208 = scalar_lea.vmem %s3, %s207
      %s209 = smul.u32 16, %s19
      %v211 = vld [vmem:[%s1] sm:$0xf]
      %v212 = vld [vmem:[%s1 + $0x4] sm:$0xf]
      %v213 = vld [vmem:[%s1 + $0x8] sm:$0xf]
      %v214 = vld [vmem:[%s1 + $0xc] sm:$0xf]
      %v215 = vld [vmem:[%s198] sm:$0xf]
      %v216 = vld [vmem:[%s198 + $0x4] sm:$0xf]
      %v217 = vld [vmem:[%s198 + $0x8] sm:$0xf]
      %v218 = vld [vmem:[%s198 + $0xc] sm:$0xf]
      %v219 = vld [vmem:[%s198 + $0x10] sm:$0xf]
      %v220 = vld [vmem:[%s198 + $0x14] sm:$0xf]
      %v221 = vld [vmem:[%s198 + $0x18] sm:$0xf]
      %v222 = vld [vmem:[%s198 + $0x1c] sm:$0xf]
      %v223 = vld [vmem:[%s198 + $0x20] sm:$0xf]
      %v224 = vld [vmem:[%s198 + $0x24] sm:$0xf]
      %v225 = vld [vmem:[%s198 + $0x28] sm:$0xf]
      %v226 = vld [vmem:[%s198 + $0x2c] sm:$0xf]
      %v227 = vld [vmem:[%s198 + $0x30] sm:$0xf]
      %v228 = vld [vmem:[%s198 + $0x34] sm:$0xf]
      %v229 = vld [vmem:[%s198 + $0x38] sm:$0xf]
      %v230 = vld [vmem:[%s198 + $0x3c] sm:$0xf]
      %v231 = vld [vmem:[%s198 + $0x40] sm:$0xf]
      %v232 = vld [vmem:[%s198 + $0x44] sm:$0xf]
      %v233 = vld [vmem:[%s198 + $0x48] sm:$0xf]
      %v234 = vld [vmem:[%s198 + $0x4c] sm:$0xf]
      %v235 = vld [vmem:[%s198 + $0x50] sm:$0xf]
      %v236 = vld [vmem:[%s198 + $0x54] sm:$0xf]
      %v237 = vld [vmem:[%s198 + $0x58] sm:$0xf]
      %v238 = vld [vmem:[%s198 + $0x5c] sm:$0xf]
      %v239 = vld [vmem:[%s198 + $0x60] sm:$0xf]
      %v240 = vld [vmem:[%s198 + $0x64] sm:$0xf]
      %v241 = vld [vmem:[%s198 + $0x68] sm:$0xf]
      %v242 = vld [vmem:[%s198 + $0x6c] sm:$0xf]
      %v243 = vld [vmem:[%s198 + $0x70] sm:$0xf]
      %v244 = vld [vmem:[%s198 + $0x74] sm:$0xf]
      %v245 = vld [vmem:[%s198 + $0x78] sm:$0xf]
      %v246 = vld [vmem:[%s198 + $0x7c] sm:$0xf]
      %v247 = vld [vmem:[%s198 + $0x80] sm:$0xf]
      %v248 = vld [vmem:[%s198 + $0x84] sm:$0xf]
      %v249 = vld [vmem:[%s198 + $0x88] sm:$0xf]
      %v250 = vld [vmem:[%s198 + $0x8c] sm:$0xf]
      %v251 = vld [vmem:[%s198 + $0x90] sm:$0xf]
      %v252 = vld [vmem:[%s198 + $0x94] sm:$0xf]
      %v253 = vld [vmem:[%s198 + $0x98] sm:$0xf]
      %v254 = vld [vmem:[%s198 + $0x9c] sm:$0xf]
      %v255 = vld [vmem:[%s198 + $0xa0] sm:$0xf]
      %v256 = vld [vmem:[%s198 + $0xa4] sm:$0xf]
      %v257 = vld [vmem:[%s198 + $0xa8] sm:$0xf]
      %v258 = vld [vmem:[%s198 + $0xac] sm:$0xf]
      %v259 = vld [vmem:[%s198 + $0xb0] sm:$0xf]
      %v260 = vld [vmem:[%s198 + $0xb4] sm:$0xf]
      %v261 = vld [vmem:[%s198 + $0xb8] sm:$0xf]
      %v262 = vld [vmem:[%s198 + $0xbc] sm:$0xf]
      %v263 = vld [vmem:[%s198 + $0xc0] sm:$0xf]
      %v264 = vld [vmem:[%s198 + $0xc4] sm:$0xf]
      %v265 = vld [vmem:[%s198 + $0xc8] sm:$0xf]
      %v266 = vld [vmem:[%s198 + $0xcc] sm:$0xf]
      %v267 = vld [vmem:[%s198 + $0xd0] sm:$0xf]
      %v268 = vld [vmem:[%s198 + $0xd4] sm:$0xf]
      %v269 = vld [vmem:[%s198 + $0xd8] sm:$0xf]
      %v270 = vld [vmem:[%s198 + $0xdc] sm:$0xf]
      %v271 = vld [vmem:[%s198 + $0xe0] sm:$0xf]
      %v272 = vld [vmem:[%s198 + $0xe4] sm:$0xf]
      %v273 = vld [vmem:[%s198 + $0xe8] sm:$0xf]
      %v274 = vld [vmem:[%s198 + $0xec] sm:$0xf]
      %v275 = vld [vmem:[%s198 + $0xf0] sm:$0xf]
      %v276 = vld [vmem:[%s198 + $0xf4] sm:$0xf]
      %v277 = vld [vmem:[%s198 + $0xf8] sm:$0xf]
      %v278 = vld [vmem:[%s198 + $0xfc] sm:$0xf]
      %v343 = vunpack.c.l.b16 %v215
      %v344 = vunpack.c.l.b16 %v216
      %v345 = vunpack.c.l.b16 %v217
      %v346 = vunpack.c.l.b16 %v218
      %v347 = vunpack.c.l.b16 %v219
      %v348 = vunpack.c.l.b16 %v220
      %v349 = vunpack.c.l.b16 %v221
      %v350 = vunpack.c.l.b16 %v222
      %v351 = vunpack.c.l.b16 %v223
      %v352 = vunpack.c.l.b16 %v224
      %v353 = vunpack.c.l.b16 %v225
      %v354 = vunpack.c.l.b16 %v226
      %v355 = vunpack.c.l.b16 %v227
      %v356 = vunpack.c.l.b16 %v228
      %v357 = vunpack.c.l.b16 %v229
      %v358 = vunpack.c.l.b16 %v230
      %v359 = vunpack.c.l.b16 %v231
      %v360 = vunpack.c.l.b16 %v232
      %v361 = vunpack.c.l.b16 %v233
      %v362 = vunpack.c.l.b16 %v234
      %v363 = vunpack.c.l.b16 %v235
      %v364 = vunpack.c.l.b16 %v236
      %v365 = vunpack.c.l.b16 %v237
      %v366 = vunpack.c.l.b16 %v238
      %v367 = vunpack.c.l.b16 %v239
      %v368 = vunpack.c.l.b16 %v240
      %v369 = vunpack.c.l.b16 %v241
      %v370 = vunpack.c.l.b16 %v242
      %v371 = vunpack.c.l.b16 %v243
      %v372 = vunpack.c.l.b16 %v244
      %v373 = vunpack.c.l.b16 %v245
      %v374 = vunpack.c.l.b16 %v246
      %v375 = vunpack.c.l.b16 %v247
      %v376 = vunpack.c.l.b16 %v248
      %v377 = vunpack.c.l.b16 %v249
      %v378 = vunpack.c.l.b16 %v250
      %v379 = vunpack.c.l.b16 %v251
      %v380 = vunpack.c.l.b16 %v252
      %v381 = vunpack.c.l.b16 %v253
      %v382 = vunpack.c.l.b16 %v254
      %v383 = vunpack.c.l.b16 %v255
      %v384 = vunpack.c.l.b16 %v256
      %v385 = vunpack.c.l.b16 %v257
      %v386 = vunpack.c.l.b16 %v258
      %v387 = vunpack.c.l.b16 %v259
      %v388 = vunpack.c.l.b16 %v260
      %v389 = vunpack.c.l.b16 %v261
      %v390 = vunpack.c.l.b16 %v262
      %v391 = vunpack.c.l.b16 %v263
      %v392 = vunpack.c.l.b16 %v264
      %v393 = vunpack.c.l.b16 %v265
      %v394 = vunpack.c.l.b16 %v266
      %v395 = vunpack.c.l.b16 %v267
      %v396 = vunpack.c.l.b16 %v268
      %v397 = vunpack.c.l.b16 %v269
      %v398 = vunpack.c.l.b16 %v270
      %v399 = vunpack.c.l.b16 %v271
      %v400 = vunpack.c.l.b16 %v272
      %v401 = vunpack.c.l.b16 %v273
      %v402 = vunpack.c.l.b16 %v274
      %v403 = vunpack.c.l.b16 %v275
      %v404 = vunpack.c.l.b16 %v276
      %v405 = vunpack.c.l.b16 %v277
      %v406 = vunpack.c.l.b16 %v278
      %v407 = vpack.c.b16 %v344, %v343
      %v408 = vpack.c.b16 %v346, %v345
      %v409 = vpack.c.b16 %v348, %v347
      %v410 = vpack.c.b16 %v350, %v349
      %v411 = vpack.c.b16 %v352, %v351
      %v412 = vpack.c.b16 %v354, %v353
      %v413 = vpack.c.b16 %v356, %v355
      %v414 = vpack.c.b16 %v358, %v357
      %v415 = vpack.c.b16 %v360, %v359
      %v416 = vpack.c.b16 %v362, %v361
      %v417 = vpack.c.b16 %v364, %v363
      %v418 = vpack.c.b16 %v366, %v365
      %v419 = vpack.c.b16 %v368, %v367
      %v420 = vpack.c.b16 %v370, %v369
      %v421 = vpack.c.b16 %v372, %v371
      %v422 = vpack.c.b16 %v374, %v373
      %v423 = vpack.c.b16 %v376, %v375
      %v424 = vpack.c.b16 %v378, %v377
      %v425 = vpack.c.b16 %v380, %v379
      %v426 = vpack.c.b16 %v382, %v381
      %v427 = vpack.c.b16 %v384, %v383
      %v428 = vpack.c.b16 %v386, %v385
      %v429 = vpack.c.b16 %v388, %v387
      %v430 = vpack.c.b16 %v390, %v389
      %v431 = vpack.c.b16 %v392, %v391
      %v432 = vpack.c.b16 %v394, %v393
      %v433 = vpack.c.b16 %v396, %v395
      %v434 = vpack.c.b16 %v398, %v397
      %v435 = vpack.c.b16 %v400, %v399
      %v436 = vpack.c.b16 %v402, %v401
      %v437 = vpack.c.b16 %v404, %v403
      %v438 = vpack.c.b16 %v406, %v405
      %v443 = vunpack.c.l.b16 %v211
      %v444 = vunpack.c.l.b16 %v212
      %v445 = vunpack.c.l.b16 %v213
      %v446 = vunpack.c.l.b16 %v214
      %v447 = vpack.c.b16 %v444, %v443
      %v448 = vpack.c.b16 %v446, %v445
      %vm451 = vcmask 261120
      %v453 = vsel %vm451, %v407, 0
      %v456 = vsel %vm451, %v408, 0
      %v459 = vsel %vm451, %v409, 0
      %v462 = vsel %vm451, %v410, 0
      %v465 = vsel %vm451, %v411, 0
      %v468 = vsel %vm451, %v412, 0
      %v471 = vsel %vm451, %v413, 0
      %v474 = vsel %vm451, %v414, 0
      %v477 = vsel %vm451, %v415, 0
      %v480 = vsel %vm451, %v416, 0
      %v483 = vsel %vm451, %v417, 0
      %v486 = vsel %vm451, %v418, 0
      %v489 = vsel %vm451, %v419, 0
      %v492 = vsel %vm451, %v420, 0
      %v495 = vsel %vm451, %v421, 0
      %v498 = vsel %vm451, %v422, 0
      %v501 = vsel %vm451, %v423, 0
      %v504 = vsel %vm451, %v424, 0
      %v507 = vsel %vm451, %v425, 0
      %v510 = vsel %vm451, %v426, 0
      %v513 = vsel %vm451, %v427, 0
      %v516 = vsel %vm451, %v428, 0
      %v519 = vsel %vm451, %v429, 0
      %v522 = vsel %vm451, %v430, 0
      %v525 = vsel %vm451, %v431, 0
      %v528 = vsel %vm451, %v432, 0
      %v531 = vsel %vm451, %v433, 0
      %v534 = vsel %vm451, %v434, 0
      %v537 = vsel %vm451, %v435, 0
      %v540 = vsel %vm451, %v436, 0
      %v543 = vsel %vm451, %v437, 0
      %v546 = vsel %vm451, %v438, 0
      %548 = vmatprep.subr.bf16.mxu0 0
      %549 = vmatpush1.bf16.msra.mxu0 %v447
      %550 = vmatprep.subr.bf16.mxu0 0
      %551 = vmatpush1.bf16.msra.mxu0 %v448
      %552 = vmatprep.subr.bf16.mxu0 0
      %553 = vmatpush1.bf16.msra.mxu0 0
      %554 = vmatprep.subr.bf16.mxu0 0
      %555 = vmatpush1.bf16.msra.mxu0 0
      %556 = vmatprep.subr.bf16.mxu0 0
      %557 = vmatpush1.bf16.msra.mxu0 0
      %558 = vmatprep.subr.bf16.mxu0 0
      %559 = vmatpush1.bf16.msra.mxu0 0
      %560 = vmatprep.subr.bf16.mxu0 0
      %561 = vmatpush1.bf16.msra.mxu0 0
      %562 = vmatprep.subr.bf16.mxu0 0
      %563 = vmatpush1.bf16.msra.mxu0 0
      %564 = vmatprep.subr.bf16.mxu0 0
      %565 = vmatpush1.bf16.msra.mxu0 0
      %566 = vmatprep.subr.bf16.mxu0 0
      %567 = vmatpush1.bf16.msra.mxu0 0
      %568 = vmatprep.subr.bf16.mxu0 0
      %569 = vmatpush1.bf16.msra.mxu0 0
      %570 = vmatprep.subr.bf16.mxu0 0
      %571 = vmatpush1.bf16.msra.mxu0 0
      %572 = vmatprep.subr.bf16.mxu0 0
      %573 = vmatpush1.bf16.msra.mxu0 0
      %574 = vmatprep.subr.bf16.mxu0 0
      %575 = vmatpush1.bf16.msra.mxu0 0
      %576 = vmatprep.subr.bf16.mxu0 0
      %577 = vmatpush1.bf16.msra.mxu0 0
      %578 = vmatprep.subr.bf16.mxu0 0
      %579 = vmatpush1.bf16.msra.mxu0 0
      %580 = vmatprep.mubr.bf16.mxu0 0
      %581 = vmatmul.mubr.bf16.gmra.mrb[0].mxu0 %v453
      %v582 = vpop.f32.mrb[0].mxu0
      %v583 = vadd.f32 0.0, %v582
      %v584 = vpop.f32.mrb[0].mxu0
      %v585 = vpop.f32.mrb[0].mxu0
      %v586 = vadd.f32 0.0, %v585
      %v587 = vpop.f32.mrb[0].mxu0
      %588 = vmatprep.mubr.bf16.mxu0 0
      %589 = vmatmul.mubr.bf16.gmra.mrb[0].mxu0 %v456
      %v590 = vpop.f32.mrb[0].mxu0
      %v591 = vadd.f32 0.0, %v590
      %v592 = vpop.f32.mrb[0].mxu0
      %v593 = vpop.f32.mrb[0].mxu0
      %v594 = vadd.f32 0.0, %v593
      %v595 = vpop.f32.mrb[0].mxu0
      %596 = vmatprep.mubr.bf16.mxu0 0
      %597 = vmatmul.mubr.bf16.gmra.mrb[0].mxu0 %v459
      %v598 = vpop.f32.mrb[0].mxu0
      %v599 = vadd.f32 0.0, %v598
      %v600 = vpop.f32.mrb[0].mxu0
      %v601 = vpop.f32.mrb[0].mxu0
      %v602 = vadd.f32 0.0, %v601
      %v603 = vpop.f32.mrb[0].mxu0
      %604 = vmatprep.mubr.bf16.mxu0 0
      %605 = vmatmul.mubr.bf16.gmra.mrb[0].mxu0 %v462
      %v606 = vpop.f32.mrb[0].mxu0
      %v607 = vadd.f32 0.0, %v606
      %v608 = vpop.f32.mrb[0].mxu0
      %v609 = vpop.f32.mrb[0].mxu0
      %v610 = vadd.f32 0.0, %v609
      %v611 = vpop.f32.mrb[0].mxu0
      %612 = vmatprep.mubr.bf16.mxu0 0
      %613 = vmatmul.mubr.bf16.gmra.mrb[0].mxu0 %v465
      %v614 = vpop.f32.mrb[0].mxu0
      %v615 = vadd.f32 0.0, %v614
      %v616 = vpop.f32.mrb[0].mxu0
      %v617 = vpop.f32.mrb[0].mxu0
      %v618 = vadd.f32 0.0, %v617
      %v619 = vpop.f32.mrb[0].mxu0
      %620 = vmatprep.mubr.bf16.mxu0 0
      %621 = vmatmul.mubr.bf16.gmra.mrb[0].mxu0 %v468
      %v622 = vpop.f32.mrb[0].mxu0
      %v623 = vadd.f32 0.0, %v622
      %v624 = vpop.f32.mrb[0].mxu0
      %v625 = vpop.f32.mrb[0].mxu0
      %v626 = vadd.f32 0.0, %v625
      %v627 = vpop.f32.mrb[0].mxu0
      %628 = vmatprep.mubr.bf16.mxu0 0
      %629 = vmatmul.mubr.bf16.gmra.mrb[0].mxu0 %v471
      %v630 = vpop.f32.mrb[0].mxu0
      %v631 = vadd.f32 0.0, %v630
      %v632 = vpop.f32.mrb[0].mxu0
      %v633 = vpop.f32.mrb[0].mxu0
      %v634 = vadd.f32 0.0, %v633
      %v635 = vpop.f32.mrb[0].mxu0
      %636 = vmatprep.mubr.bf16.mxu0 0
      %637 = vmatmul.mubr.bf16.gmra.mrb[0].mxu0 %v474
      %v638 = vpop.f32.mrb[0].mxu0
      %v639 = vadd.f32 0.0, %v638
      %v640 = vpop.f32.mrb[0].mxu0
      %v641 = vpop.f32.mrb[0].mxu0
      %v642 = vadd.f32 0.0, %v641
      %v643 = vpop.f32.mrb[0].mxu0
      %644 = vmatprep.mubr.bf16.mxu0 0
      %645 = vmatmul.mubr.bf16.gmra.mrb[0].mxu0 %v477
      %v646 = vpop.f32.mrb[0].mxu0
      %v647 = vadd.f32 0.0, %v646
      %v648 = vpop.f32.mrb[0].mxu0
      %v649 = vpop.f32.mrb[0].mxu0
      %v650 = vadd.f32 0.0, %v649
      %v651 = vpop.f32.mrb[0].mxu0
      %652 = vmatprep.mubr.bf16.mxu0 0
      %653 = vmatmul.mubr.bf16.gmra.mrb[0].mxu0 %v480
      %v654 = vpop.f32.mrb[0].mxu0
      %v655 = vadd.f32 0.0, %v654
      %v656 = vpop.f32.mrb[0].mxu0
      %v657 = vpop.f32.mrb[0].mxu0
      %v658 = vadd.f32 0.0, %v657
      %v659 = vpop.f32.mrb[0].mxu0
      %660 = vmatprep.mubr.bf16.mxu0 0
      %661 = vmatmul.mubr.bf16.gmra.mrb[0].mxu0 %v483
      %v662 = vpop.f32.mrb[0].mxu0
      %v663 = vadd.f32 0.0, %v662
      %v664 = vpop.f32.mrb[0].mxu0
      %v665 = vpop.f32.mrb[0].mxu0
      %v666 = vadd.f32 0.0, %v665
      %v667 = vpop.f32.mrb[0].mxu0
      %668 = vmatprep.mubr.bf16.mxu0 0
      %669 = vmatmul.mubr.bf16.gmra.mrb[0].mxu0 %v486
      %v670 = vpop.f32.mrb[0].mxu0
      %v671 = vadd.f32 0.0, %v670
      %v672 = vpop.f32.mrb[0].mxu0
      %v673 = vpop.f32.mrb[0].mxu0
      %v674 = vadd.f32 0.0, %v673
      %v675 = vpop.f32.mrb[0].mxu0
      %676 = vmatprep.mubr.bf16.mxu0 0
      %677 = vmatmul.mubr.bf16.gmra.mrb[0].mxu0 %v489
      %v678 = vpop.f32.mrb[0].mxu0
      %v679 = vadd.f32 0.0, %v678
      %v680 = vpop.f32.mrb[0].mxu0
      %v681 = vpop.f32.mrb[0].mxu0
      %v682 = vadd.f32 0.0, %v681
      %v683 = vpop.f32.mrb[0].mxu0
      %684 = vmatprep.mubr.bf16.mxu0 0
      %685 = vmatmul.mubr.bf16.gmra.mrb[0].mxu0 %v492
      %v686 = vpop.f32.mrb[0].mxu0
      %v687 = vadd.f32 0.0, %v686
      %v688 = vpop.f32.mrb[0].mxu0
      %v689 = vpop.f32.mrb[0].mxu0
      %v690 = vadd.f32 0.0, %v689
      %v691 = vpop.f32.mrb[0].mxu0
      %692 = vmatprep.mubr.bf16.mxu0 0
      %693 = vmatmul.mubr.bf16.gmra.mrb[0].mxu0 %v495
      %v694 = vpop.f32.mrb[0].mxu0
      %v695 = vadd.f32 0.0, %v694
      %v696 = vpop.f32.mrb[0].mxu0
      %v697 = vpop.f32.mrb[0].mxu0
      %v698 = vadd.f32 0.0, %v697
      %v699 = vpop.f32.mrb[0].mxu0
      %700 = vmatprep.mubr.bf16.mxu0 0
      %701 = vmatmul.mubr.bf16.gmra.mrb[0].mxu0 %v498
      %v702 = vpop.f32.mrb[0].mxu0
      %v703 = vadd.f32 0.0, %v702
      %v704 = vpop.f32.mrb[0].mxu0
      %v705 = vpop.f32.mrb[0].mxu0
      %v706 = vadd.f32 0.0, %v705
      %v707 = vpop.f32.mrb[0].mxu0
      %708 = vmatprep.mubr.bf16.mxu0 0
      %709 = vmatmul.mubr.bf16.gmra.mrb[0].mxu0 %v501
      %v710 = vpop.f32.mrb[0].mxu0
      %v711 = vadd.f32 0.0, %v710
      %v712 = vpop.f32.mrb[0].mxu0
      %v713 = vpop.f32.mrb[0].mxu0
      %v714 = vadd.f32 0.0, %v713
      %v715 = vpop.f32.mrb[0].mxu0
      %716 = vmatprep.mubr.bf16.mxu0 0
      %717 = vmatmul.mubr.bf16.gmra.mrb[0].mxu0 %v504
      %v718 = vpop.f32.mrb[0].mxu0
      %v719 = vadd.f32 0.0, %v718
      %v720 = vpop.f32.mrb[0].mxu0
      %v721 = vpop.f32.mrb[0].mxu0
      %v722 = vadd.f32 0.0, %v721
      %v723 = vpop.f32.mrb[0].mxu0
      %724 = vmatprep.mubr.bf16.mxu0 0
      %725 = vmatmul.mubr.bf16.gmra.mrb[0].mxu0 %v507
      %v726 = vpop.f32.mrb[0].mxu0
      %v727 = vadd.f32 0.0, %v726
      %v728 = vpop.f32.mrb[0].mxu0
      %v729 = vpop.f32.mrb[0].mxu0
      %v730 = vadd.f32 0.0, %v729
      %v731 = vpop.f32.mrb[0].mxu0
      %732 = vmatprep.mubr.bf16.mxu0 0
      %733 = vmatmul.mubr.bf16.gmra.mrb[0].mxu0 %v510
      %v734 = vpop.f32.mrb[0].mxu0
      %v735 = vadd.f32 0.0, %v734
      %v736 = vpop.f32.mrb[0].mxu0
      %v737 = vpop.f32.mrb[0].mxu0
      %v738 = vadd.f32 0.0, %v737
      %v739 = vpop.f32.mrb[0].mxu0
      %740 = vmatprep.mubr.bf16.mxu0 0
      %741 = vmatmul.mubr.bf16.gmra.mrb[0].mxu0 %v513
      %v742 = vpop.f32.mrb[0].mxu0
      %v743 = vadd.f32 0.0, %v742
      %v744 = vpop.f32.mrb[0].mxu0
      %v745 = vpop.f32.mrb[0].mxu0
      %v746 = vadd.f32 0.0, %v745
      %v747 = vpop.f32.mrb[0].mxu0
      %748 = vmatprep.mubr.bf16.mxu0 0
      %749 = vmatmul.mubr.bf16.gmra.mrb[0].mxu0 %v516
      %v750 = vpop.f32.mrb[0].mxu0
      %v751 = vadd.f32 0.0, %v750
      %v752 = vpop.f32.mrb[0].mxu0
      %v753 = vpop.f32.mrb[0].mxu0
      %v754 = vadd.f32 0.0, %v753
      %v755 = vpop.f32.mrb[0].mxu0
      %756 = vmatprep.mubr.bf16.mxu0 0
      %757 = vmatmul.mubr.bf16.gmra.mrb[0].mxu0 %v519
      %v758 = vpop.f32.mrb[0].mxu0
      %v759 = vadd.f32 0.0, %v758
      %v760 = vpop.f32.mrb[0].mxu0
      %v761 = vpop.f32.mrb[0].mxu0
      %v762 = vadd.f32 0.0, %v761
      %v763 = vpop.f32.mrb[0].mxu0
      %764 = vmatprep.mubr.bf16.mxu0 0
      %765 = vmatmul.mubr.bf16.gmra.mrb[0].mxu0 %v522
      %v766 = vpop.f32.mrb[0].mxu0
      %v767 = vadd.f32 0.0, %v766
      %v768 = vpop.f32.mrb[0].mxu0
      %v769 = vpop.f32.mrb[0].mxu0
      %v770 = vadd.f32 0.0, %v769
      %v771 = vpop.f32.mrb[0].mxu0
      %772 = vmatprep.mubr.bf16.mxu0 0
      %773 = vmatmul.mubr.bf16.gmra.mrb[0].mxu0 %v525
      %v774 = vpop.f32.mrb[0].mxu0
      %v775 = vadd.f32 0.0, %v774
      %v776 = vpop.f32.mrb[0].mxu0
      %v777 = vpop.f32.mrb[0].mxu0
      %v778 = vadd.f32 0.0, %v777
      %v779 = vpop.f32.mrb[0].mxu0
      %780 = vmatprep.mubr.bf16.mxu0 0
      %781 = vmatmul.mubr.bf16.gmra.mrb[0].mxu0 %v528
      %v782 = vpop.f32.mrb[0].mxu0
      %v783 = vadd.f32 0.0, %v782
      %v784 = vpop.f32.mrb[0].mxu0
      %v785 = vpop.f32.mrb[0].mxu0
      %v786 = vadd.f32 0.0, %v785
      %v787 = vpop.f32.mrb[0].mxu0
      %788 = vmatprep.mubr.bf16.mxu0 0
      %789 = vmatmul.mubr.bf16.gmra.mrb[0].mxu0 %v531
      %v790 = vpop.f32.mrb[0].mxu0
      %v791 = vadd.f32 0.0, %v790
      %v792 = vpop.f32.mrb[0].mxu0
      %v793 = vpop.f32.mrb[0].mxu0
      %v794 = vadd.f32 0.0, %v793
      %v795 = vpop.f32.mrb[0].mxu0
      %796 = vmatprep.mubr.bf16.mxu0 0
      %797 = vmatmul.mubr.bf16.gmra.mrb[0].mxu0 %v534
      %v798 = vpop.f32.mrb[0].mxu0
      %v799 = vadd.f32 0.0, %v798
      %v800 = vpop.f32.mrb[0].mxu0
      %v801 = vpop.f32.mrb[0].mxu0
      %v802 = vadd.f32 0.0, %v801
      %v803 = vpop.f32.mrb[0].mxu0
      %804 = vmatprep.mubr.bf16.mxu0 0
      %805 = vmatmul.mubr.bf16.gmra.mrb[0].mxu0 %v537
      %v806 = vpop.f32.mrb[0].mxu0
      %v807 = vadd.f32 0.0, %v806
      %v808 = vpop.f32.mrb[0].mxu0
      %v809 = vpop.f32.mrb[0].mxu0
      %v810 = vadd.f32 0.0, %v809
      %v811 = vpop.f32.mrb[0].mxu0
      %812 = vmatprep.mubr.bf16.mxu0 0
      %813 = vmatmul.mubr.bf16.gmra.mrb[0].mxu0 %v540
      %v814 = vpop.f32.mrb[0].mxu0
      %v815 = vadd.f32 0.0, %v814
      %v816 = vpop.f32.mrb[0].mxu0
      %v817 = vpop.f32.mrb[0].mxu0
      %v818 = vadd.f32 0.0, %v817
      %v819 = vpop.f32.mrb[0].mxu0
      %820 = vmatprep.mubr.bf16.mxu0 0
      %821 = vmatmul.mubr.bf16.gmra.mrb[0].mxu0 %v543
      %v822 = vpop.f32.mrb[0].mxu0
      %v823 = vadd.f32 0.0, %v822
      %v824 = vpop.f32.mrb[0].mxu0
      %v825 = vpop.f32.mrb[0].mxu0
      %v826 = vadd.f32 0.0, %v825
      %v827 = vpop.f32.mrb[0].mxu0
      %828 = vmatprep.mubr.bf16.mxu0 0
      %829 = vmatmul.mubr.bf16.gmra.mrb[0].mxu0 %v546
      %v830 = vpop.f32.mrb[0].mxu0
      %v831 = vadd.f32 0.0, %v830
      %v832 = vpop.f32.mrb[0].mxu0
      %v833 = vpop.f32.mrb[0].mxu0
      %v834 = vadd.f32 0.0, %v833
      %v835 = vpop.f32.mrb[0].mxu0
      %836 = vdwg.mxu0
      %v837 = vmax.f32 %v583, %v647
      %v838 = vmax.f32 %v586, %v650
      %v839 = vmax.f32 %v591, %v655
      %v840 = vmax.f32 %v594, %v658
      %v841 = vmax.f32 %v599, %v663
      %v842 = vmax.f32 %v602, %v666
      %v843 = vmax.f32 %v607, %v671
      %v844 = vmax.f32 %v610, %v674
      %v845 = vmax.f32 %v615, %v679
      %v846 = vmax.f32 %v618, %v682
      %v847 = vmax.f32 %v623, %v687
      %v848 = vmax.f32 %v626, %v690
      %v849 = vmax.f32 %v631, %v695
      %v850 = vmax.f32 %v634, %v698
      %v851 = vmax.f32 %v639, %v703
      %v852 = vmax.f32 %v642, %v706
      %v853 = vmax.f32 %v711, %v775
      %v854 = vmax.f32 %v714, %v778
      %v855 = vmax.f32 %v719, %v783
      %v856 = vmax.f32 %v722, %v786
      %v857 = vmax.f32 %v727, %v791
      %v858 = vmax.f32 %v730, %v794
      %v859 = vmax.f32 %v735, %v799
      %v860 = vmax.f32 %v738, %v802
      %v861 = vmax.f32 %v743, %v807
      %v862 = vmax.f32 %v746, %v810
      %v863 = vmax.f32 %v751, %v815
      %v864 = vmax.f32 %v754, %v818
      %v865 = vmax.f32 %v759, %v823
      %v866 = vmax.f32 %v762, %v826
      %v867 = vmax.f32 %v767, %v831
      %v868 = vmax.f32 %v770, %v834
      %v869 = vmax.f32 %v837, %v853
      %v870 = vmax.f32 %v838, %v854
      %v871 = vmax.f32 %v839, %v855
      %v872 = vmax.f32 %v840, %v856
      %v873 = vmax.f32 %v841, %v857
      %v874 = vmax.f32 %v842, %v858
      %v875 = vmax.f32 %v843, %v859
      %v876 = vmax.f32 %v844, %v860
      %v877 = vmax.f32 %v845, %v861
      %v878 = vmax.f32 %v846, %v862
      %v879 = vmax.f32 %v847, %v863
      %v880 = vmax.f32 %v848, %v864
      %v881 = vmax.f32 %v849, %v865
      %v882 = vmax.f32 %v850, %v866
      %v883 = vmax.f32 %v851, %v867
      %v884 = vmax.f32 %v852, %v868
      %v885 = vld [vmem:[%s2] sm:$0x1]
      %v887 = vlaneseq
      %v888 = vshrl.u32 %v887, 7
      %v889 = vsub.s32 0, %v888
      %v890 = vrot.slane %v885, %v889
      %v892 = vadd.f32 %v869, %v890
      %v893 = vadd.f32 %v870, %v890
      %v894 = vadd.f32 %v871, %v890
      %v895 = vadd.f32 %v872, %v890
      %v896 = vadd.f32 %v873, %v890
      %v897 = vadd.f32 %v874, %v890
      %v898 = vadd.f32 %v875, %v890
      %v899 = vadd.f32 %v876, %v890
      %v900 = vadd.f32 %v877, %v890
      %v901 = vadd.f32 %v878, %v890
      %v902 = vadd.f32 %v879, %v890
      %v903 = vadd.f32 %v880, %v890
      %v904 = vadd.f32 %v881, %v890
      %v905 = vadd.f32 %v882, %v890
      %v906 = vadd.f32 %v883, %v890
      %v907 = vadd.f32 %v884, %v890
      %v908 = vmax.f32 %v892, 0.0
      %v909 = vmax.f32 %v893, 0.0
      %v910 = vmax.f32 %v894, 0.0
      %v911 = vmax.f32 %v895, 0.0
      %v912 = vmax.f32 %v896, 0.0
      %v913 = vmax.f32 %v897, 0.0
      %v914 = vmax.f32 %v898, 0.0
      %v915 = vmax.f32 %v899, 0.0
      %v916 = vmax.f32 %v900, 0.0
      %v917 = vmax.f32 %v901, 0.0
      %v918 = vmax.f32 %v902, 0.0
      %v919 = vmax.f32 %v903, 0.0
      %v920 = vmax.f32 %v904, 0.0
      %v921 = vmax.f32 %v905, 0.0
      %v922 = vmax.f32 %v906, 0.0
      %v923 = vmax.f32 %v907, 0.0
      %v924 = vpack.c.bf16 %v909, %v908
      %v925 = vpack.c.bf16 %v911, %v910
      %v926 = vpack.c.bf16 %v913, %v912
      %v927 = vpack.c.bf16 %v915, %v914
      %v928 = vpack.c.bf16 %v917, %v916
      %v929 = vpack.c.bf16 %v919, %v918
      %v930 = vpack.c.bf16 %v921, %v920
      %v931 = vpack.c.bf16 %v923, %v922
      %v940 = vunpack.c.l.b16 %v924
      %v941 = vunpack.c.h.b16 %v924
      %v942 = vunpack.c.l.b16 %v925
      %v943 = vunpack.c.h.b16 %v925
      %v944 = vunpack.c.l.b16 %v926
      %v945 = vunpack.c.h.b16 %v926
      %v946 = vunpack.c.l.b16 %v927
      %v947 = vunpack.c.h.b16 %v927
      %v948 = vunpack.c.l.b16 %v928
      %v949 = vunpack.c.h.b16 %v928
      %v950 = vunpack.c.l.b16 %v929
      %v951 = vunpack.c.h.b16 %v929
      %v952 = vunpack.c.l.b16 %v930
      %v953 = vunpack.c.h.b16 %v930
      %v954 = vunpack.c.l.b16 %v931
      %v955 = vunpack.c.h.b16 %v931
      %v956 = vpack.c.b16 %v940, %v940
      %v957 = vpack.c.b16 %v941, %v941
      %v958 = vpack.c.b16 %v942, %v942
      %v959 = vpack.c.b16 %v943, %v943
      %v960 = vpack.c.b16 %v944, %v944
      %v961 = vpack.c.b16 %v945, %v945
      %v962 = vpack.c.b16 %v946, %v946
      %v963 = vpack.c.b16 %v947, %v947
      %v964 = vpack.c.b16 %v948, %v948
      %v965 = vpack.c.b16 %v949, %v949
      %v966 = vpack.c.b16 %v950, %v950
      %v967 = vpack.c.b16 %v951, %v951
      %v968 = vpack.c.b16 %v952, %v952
      %v969 = vpack.c.b16 %v953, %v953
      %v970 = vpack.c.b16 %v954, %v954
      %v971 = vpack.c.b16 %v955, %v955
      %vm988 = vcmask 125952
      %989 = vst.msk [vmem:[%s208] sm:$0xf] %vm988, %v956
      %990 = vst.msk [vmem:[%s208 + $0x4] sm:$0xf] %vm988, %v957
      %991 = vst.msk [vmem:[%s208 + $0x8] sm:$0xf] %vm988, %v958
      %992 = vst.msk [vmem:[%s208 + $0xc] sm:$0xf] %vm988, %v959
      %993 = vst.msk [vmem:[%s208 + $0x10] sm:$0xf] %vm988, %v960
      %994 = vst.msk [vmem:[%s208 + $0x14] sm:$0xf] %vm988, %v961
      %995 = vst.msk [vmem:[%s208 + $0x18] sm:$0xf] %vm988, %v962
      %996 = vst.msk [vmem:[%s208 + $0x1c] sm:$0xf] %vm988, %v963
      %997 = vst.msk [vmem:[%s208 + $0x20] sm:$0xf] %vm988, %v964
      %998 = vst.msk [vmem:[%s208 + $0x24] sm:$0xf] %vm988, %v965
      %999 = vst.msk [vmem:[%s208 + $0x28] sm:$0xf] %vm988, %v966
      %1000 = vst.msk [vmem:[%s208 + $0x2c] sm:$0xf] %vm988, %v967
      %1001 = vst.msk [vmem:[%s208 + $0x30] sm:$0xf] %vm988, %v968
      %1002 = vst.msk [vmem:[%s208 + $0x34] sm:$0xf] %vm988, %v969
      %1003 = vst.msk [vmem:[%s208 + $0x38] sm:$0xf] %vm988, %v970
      %1004 = vst.msk [vmem:[%s208 + $0x3c] sm:$0xf] %vm988, %v971
      %s1005 = smul.u32 16, %s19
      %p1006 = scmp.lt.s32.totalorder %s18, 3
      %s1007 = scalar_select %p1006, %s18, 3
      %p1008 = scmp.lt.s32.totalorder %s1005, 15
      %s1009 = scalar_select %p1008, %s1005, 15
      %s1010 = smul.addr %s1007, 16
      %s1011 = sadd.s32 %s1009, %s1010
      %s1012 = smul.addr %s1011, 4
      %s1013 = scalar_lea.vmem %s3, %s1012
      // Predicated region
      $region33: #{forward.9} parent=31 // pred_check
        %p1014 = pneg %p116
      $region34: #{forward.9} parent=31 // pred_check_branch
        %1016 = sbr.rel (%p1014) target = $region36
      $region35: #{forward.9} parent=31 // pred_region
        %s1017 = smul.u32 16, %s19
      $region36: #{forward.9} parent=31 // pred_fallthru
        _
    $region32: #{forward.9} parent=5 // pred_fallthru
      _
    %p1018 = scmp.le.s32.totalorder 2, %s9
    // Predicated region
    $region37: #{forward.9} parent=5 // pred_check
      %p1019 = pneg %p1018
    $region38: #{forward.9} parent=5 // pred_check_branch
      %1021 = sbr.rel (%p1019) target = $region40
    $region39: #{forward.9} parent=5 // pred_region
      %s1022 = ssub.s32 %s9, 2
      // Predicated region
      $region41: #{forward.9} parent=39 // pred_check
        %p1023 = pneg %p122
      $region42: #{forward.9} parent=39 // pred_check_branch
        %1025 = sbr.rel (%p1023) target = $region44
      $region43: #{forward.9} parent=39 // pred_region
        %s1026 = smul.u32 16, %s21
        %p1027 = scmp.lt.s32.totalorder %s20, 3
        %s1028 = scalar_select %p1027, %s20, 3
        %p1029 = scmp.lt.s32.totalorder %s1026, 15
        %s1030 = scalar_select %p1029, %s1026, 15
        %s1031 = smul.addr %s1028, 16
        %s1032 = sadd.s32 %s1030, %s1031
        %s1033 = smul.addr %s1032, 4
        %s1034 = scalar_lea.vmem %s3, %s1033
      $region44: #{forward.9} parent=39 // pred_fallthru
        _
    $region40: #{forward.9} parent=5 // pred_fallthru
      _
  $region6: #{forward.9} parent=0 // loop_footer
    %s13 = sadd.s32 1, %s9
  $region7: #{forward.9} parent=0 // loop_footer_branch
    %8 = sbr.rel target = $region3
  $region8: #{forward.9} parent=0 // loop_exit
    _

// kernel: forward.10
$region0: #{forward.10}
  #allocation0 [shape = 'u32[]', space=smem, size = 0x4, offset = 0x4, fixed_abs, tag = 'smem constant byte address 0x4 - core index']
  #allocation1 [shape = 'u32[144,128]{1,0:T(1,128)}', space=vmem, size = 0x12000, scoped, tag = 'internal scratch']
  %s0 = inlined_call_operand.vmem [shape: bf16[4,4,32,144], index: 0, kind: input, shape index: {}]
  %s1 = inlined_call_operand.vmem [shape: bf16[144,32], index: 1, kind: input, shape index: {}]
  %s2 = inlined_call_operand.vmem [shape: f32[1,32], index: 2, kind: input, shape index: {}]
  %s3 = inlined_call_operand.vmem [shape: bf16[4,32,32], index: 3, kind: output, shape index: {}]
  %s4 = sld [smem:[#allocation0]]
  $region45: #{forward.10} parent=0
    _
  %s6 = ssub.s32 1, %s4
  %s7 = scalar_select 0, %s6, %s4
  loop: start=0, step=1, limit=6
  $region2: #{forward.10} parent=0 // loop_pre_header
    _
  $region3: #{forward.10} parent=0 // loop_header
    %s9 = sphi 0, %s13
    %p10 = scmp.ge.s32.totalorder %s9, 6
    %s16 = sphi 0, %s28
    %s17 = sphi 0, %s24
    %s18 = sphi 0, %s16
    %s19 = sphi 0, %s17
    %s20 = sphi 0, %s18
    %s21 = sphi 0, %s19
    %s33 = sphi 0, %s35
    %s36 = sphi 0, %s33
    %s37 = sphi 0, %s36
    %s53 = sphi 0, %s37
    %s57 = sphi 0, %s57
    %s59 = sphi 0, %s57
    %s60 = sphi 0, %s59
    %s74 = sphi 0, %s60
    %s78 = sphi 0, %s78
    %s80 = sphi 0, %s78
    %s81 = sphi 0, %s80
    %s95 = sphi 0, %s81
    %s103 = sphi 0, %s105
    %s106 = sphi 0, %s103
    %s107 = sphi 0, %s106
    %s123 = sphi 0, %s107
  $region4: #{forward.10} parent=0 // loop_header_branch
    %12 = sbr.rel (%p10) target = $region8
  $region5: #{forward.10} parent=0 // loop_body
    %s14 = ssub.s32 %s9, 1
    %s15 = ssub.s32 %s9, 2
    %s22 = sadd.s32 1, %s17
    %p23 = scmp.ge.s32.totalorder %s22, 1
    %s24 = scalar_select %p23, 0, %s22
    %s25 = sadd.s32 1, %s16
    %s26 = scalar_select %p23, %s25, %s16
    %p27 = scmp.ge.s32.totalorder %s26, 4
    %s28 = scalar_select %p27, 0, %s26
    %s29 = ssub.s32 %s16, %s28
    %s30 = ssub.s32 %s17, %s24
    %s31 = sor.u32 %s29, %s30
    %p32 = scmp.eq.s32.totalorder %s31, 0
    %s34 = sadd.s32 %s33, 1
    %s35 = scalar_select %p32, %s33, %s34
    %p38 = pneg %p32
    %p39 = scmp.eq.s32.totalorder %s9, 3
    %p40 = por %p38, %p39
    %p41 = scmp.ne.s32.totalorder %s33, %s36
    %p42 = scmp.eq.s32.totalorder %s9, 0
    %p43 = por %p41, %p42
    %p44 = scmp.ne.s32.totalorder %s33, %s36
    %p45 = scmp.eq.s32.totalorder %s14, 3
    %p46 = por %p44, %p45
    %p47 = scmp.ne.s32.totalorder %s36, %s37
    %p48 = scmp.eq.s32.totalorder %s14, 0
    %p49 = por %p47, %p48
    %p50 = scmp.ne.s32.totalorder %s36, %s37
    %p51 = scmp.eq.s32.totalorder %s15, 3
    %p52 = por %p50, %p51
    %p54 = scmp.ne.s32.totalorder %s37, %s53
    %p55 = scmp.eq.s32.totalorder %s15, 0
    %p56 = por %p54, %p55
    %s58 = sadd.s32 %s57, 1
    %p61 = scmp.eq.s32.totalorder %s9, 3
    %p62 = scmp.ne.s32.totalorder %s57, %s59
    %p63 = scmp.eq.s32.totalorder %s9, 0
    %p64 = por %p62, %p63
    %p65 = scmp.ne.s32.totalorder %s57, %s59
    %p66 = scmp.eq.s32.totalorder %s14, 3
    %p67 = por %p65, %p66
    %p68 = scmp.ne.s32.totalorder %s59, %s60
    %p69 = scmp.eq.s32.totalorder %s14, 0
    %p70 = por %p68, %p69
    %p71 = scmp.ne.s32.totalorder %s59, %s60
    %p72 = scmp.eq.s32.totalorder %s15, 3
    %p73 = por %p71, %p72
    %p75 = scmp.ne.s32.totalorder %s60, %s74
    %p76 = scmp.eq.s32.totalorder %s15, 0
    %p77 = por %p75, %p76
    %s79 = sadd.s32 %s78, 1
    %p82 = scmp.eq.s32.totalorder %s9, 3
    %p83 = scmp.ne.s32.totalorder %s78, %s80
    %p84 = scmp.eq.s32.totalorder %s9, 0
    %p85 = por %p83, %p84
    %p86 = scmp.ne.s32.totalorder %s78, %s80
    %p87 = scmp.eq.s32.totalorder %s14, 3
    %p88 = por %p86, %p87
    %p89 = scmp.ne.s32.totalorder %s80, %s81
    %p90 = scmp.eq.s32.totalorder %s14, 0
    %p91 = por %p89, %p90
    %p92 = scmp.ne.s32.totalorder %s80, %s81
    %p93 = scmp.eq.s32.totalorder %s15, 3
    %p94 = por %p92, %p93
    %p96 = scmp.ne.s32.totalorder %s81, %s95
    %p97 = scmp.eq.s32.totalorder %s15, 0
    %p98 = por %p96, %p97
    %s99 = ssub.s32 %s16, %s28
    %s100 = ssub.s32 %s17, %s24
    %s101 = sor.u32 %s99, %s100
    %p102 = scmp.eq.s32.totalorder %s101, 0
    %s104 = sadd.s32 %s103, 1
    %s105 = scalar_select %p102, %s103, %s104
    %p108 = pneg %p102
    %p109 = scmp.eq.s32.totalorder %s9, 3
    %p110 = por %p108, %p109
    %p111 = scmp.ne.s32.totalorder %s103, %s106
    %p112 = scmp.eq.s32.totalorder %s9, 0
    %p113 = por %p111, %p112
    %p114 = scmp.ne.s32.totalorder %s103, %s106
    %p115 = scmp.eq.s32.totalorder %s14, 3
    %p116 = por %p114, %p115
    %p117 = scmp.ne.s32.totalorder %s106, %s107
    %p118 = scmp.eq.s32.totalorder %s14, 0
    %p119 = por %p117, %p118
    %p120 = scmp.ne.s32.totalorder %s106, %s107
    %p121 = scmp.eq.s32.totalorder %s15, 3
    %p122 = por %p120, %p121
    %p124 = scmp.ne.s32.totalorder %s107, %s123
    %p125 = scmp.eq.s32.totalorder %s15, 0
    %p126 = por %p124, %p125
    %p127 = scmp.le.s32.totalorder 1, %s9
    %p128 = scmp.lt.s32.totalorder %s9, 5
    %p129 = pnand %p127, %p128
    %p130 = pneg %p129
    // Predicated region
    $region9: #{forward.10} parent=5 // pred_check
      _
    $region10: #{forward.10} parent=5 // pred_check_branch
      %132 = sbr.rel (%p129) target = $region12
    $region11: #{forward.10} parent=5 // pred_region
      %s133 = ssub.s32 %s9, 1
      // Predicated region
      $region13: #{forward.10} parent=11 // pred_check
        %p134 = pneg %p70
      $region14: #{forward.10} parent=11 // pred_check_branch
        %136 = sbr.rel (%p134) target = $region16
      $region15: #{forward.10} parent=11 // pred_region
        _
      $region16: #{forward.10} parent=11 // pred_fallthru
        _
      // Predicated region
      $region17: #{forward.10} parent=11 // pred_check
        %p137 = pneg %p91
      $region18: #{forward.10} parent=11 // pred_check_branch
        %139 = sbr.rel (%p137) target = $region20
      $region19: #{forward.10} parent=11 // pred_region
        _
      $region20: #{forward.10} parent=11 // pred_fallthru
        _
    $region12: #{forward.10} parent=5 // pred_fallthru
      _
    %p140 = scmp.lt.s32.totalorder %s9, 4
    // Predicated region
    $region21: #{forward.10} parent=5 // pred_check
      %p141 = pneg %p140
    $region22: #{forward.10} parent=5 // pred_check_branch
      %143 = sbr.rel (%p141) target = $region24
    $region23: #{forward.10} parent=5 // pred_region
      // Predicated region
      $region25: #{forward.10} parent=23 // pred_check
        %p144 = pneg %p43
      $region26: #{forward.10} parent=23 // pred_check_branch
        %146 = sbr.rel (%p144) target = $region28
      $region27: #{forward.10} parent=23 // pred_region
        %s147 = smul.u32 4, %s17
        %p148 = scmp.lt.s32.totalorder %s16, 3
        %s149 = scalar_select %p148, %s16, 3
        %p150 = scmp.lt.s32.totalorder %s147, 3
        %s151 = scalar_select %p150, %s147, 3
        %s152 = smul.addr %s151, 2
        %s153 = smul.addr %s149, 32
        %s154 = sadd.s32 %s152, %s153
        %s155 = smul.addr %s154, 4
        %s156 = scalar_lea.vmem %s0, %s155
        %s157 = smul.u32 4, %s17
      $region28: #{forward.10} parent=23 // pred_fallthru
        _
    $region24: #{forward.10} parent=5 // pred_fallthru
      _
    %p158 = scmp.le.s32.totalorder 1, %s9
    %p159 = scmp.lt.s32.totalorder %s9, 5
    %p160 = pnand %p158, %p159
    %p161 = pneg %p160
    // Predicated region
    $region29: #{forward.10} parent=5 // pred_check
      _
    $region30: #{forward.10} parent=5 // pred_check_branch
      %163 = sbr.rel (%p160) target = $region32
    $region31: #{forward.10} parent=5 // pred_region
      %s164 = ssub.s32 %s9, 1
      %s165 = smul.u32 4, %s19
      %p166 = scmp.lt.s32.totalorder %s18, 3
      %s167 = scalar_select %p166, %s18, 3
      %p168 = scmp.lt.s32.totalorder %s165, 3
      %s169 = scalar_select %p168, %s165, 3
      %s170 = smul.addr %s169, 2
      %s171 = smul.addr %s167, 32
      %s172 = sadd.s32 %s170, %s171
      %s173 = smul.addr %s172, 4
      %s174 = scalar_lea.vmem %s0, %s173
      %p175 = pneg %p49
      %p176 = pneg %p46
      %p177 = pneg %p70
      %p178 = pneg %p67
      %p179 = pneg %p91
      %p180 = pneg %p88
      %p181 = pneg %p119
      %p182 = pneg %p116
      %s183 = smul.u32 4, %s19
      %p184 = scmp.lt.s32.totalorder %s18, 3
      %s185 = scalar_select %p184, %s18, 3
      %p186 = scmp.lt.s32.totalorder %s183, 3
      %s187 = scalar_select %p186, %s183, 3
      %s188 = smul.addr %s185, 4
      %s189 = sadd.s32 %s187, %s188
      %s190 = smul.addr %s189, 4
      %s191 = scalar_lea.vmem %s3, %s190
      %s192 = smul.u32 4, %s19
      %p193 = scmp.lt.s32.totalorder %s18, 3
      %s194 = scalar_select %p193, %s18, 3
      %p195 = scmp.lt.s32.totalorder %s192, 3
      %s196 = scalar_select %p195, %s192, 3
      %s197 = smul.addr %s196, 2
      %s198 = smul.addr %s194, 32
      %s199 = sadd.s32 %s197, %s198
      %s200 = smul.addr %s199, 4
      %s201 = scalar_lea.vmem %s0, %s200
      %s202 = smul.u32 4, %s19
      %s203 = smul.u32 4, %s19
      %p204 = scmp.lt.s32.totalorder %s18, 3
      %s205 = scalar_select %p204, %s18, 3
      %p206 = scmp.lt.s32.totalorder %s203, 3
      %s207 = scalar_select %p206, %s203, 3
      %s208 = smul.addr %s205, 4
      %s209 = sadd.s32 %s207, %s208
      %s210 = smul.addr %s209, 4
      %s211 = scalar_lea.vmem %s3, %s210
      %s212 = smul.u32 4, %s19
      %v214 = vld [vmem:[%s1] sm:$0xf]
      %v215 = vld [vmem:[%s1 + $0x4] sm:$0xf]
      %v216 = vld [vmem:[%s1 + $0x8] sm:$0xf]
      %v217 = vld [vmem:[%s1 + $0xc] sm:$0xf]
      %v218 = vld [vmem:[%s1 + $0x10] sm:$0xf]
      %v219 = vld [vmem:[%s1 + $0x14] sm:$0xf]
      %v220 = vld [vmem:[%s1 + $0x18] sm:$0xf]
      %v221 = vld [vmem:[%s1 + $0x1c] sm:$0xf]
      %v222 = vld [vmem:[%s1 + $0x20] sm:$0xf]
      %v223 = vld [vmem:[%s1 + $0x24] sm:$0xf]
      %v224 = vld [vmem:[%s1 + $0x28] sm:$0xf]
      %v225 = vld [vmem:[%s1 + $0x2c] sm:$0xf]
      %v226 = vld [vmem:[%s1 + $0x30] sm:$0xf]
      %v227 = vld [vmem:[%s1 + $0x34] sm:$0xf]
      %v228 = vld [vmem:[%s1 + $0x38] sm:$0xf]
      %v229 = vld [vmem:[%s1 + $0x3c] sm:$0xf]
      %v230 = vld [vmem:[%s1 + $0x40] sm:$0xf]
      %v231 = vld [vmem:[%s1 + $0x44] sm:$0xf]
      %v232 = vld [vmem:[%s201] sm:$0xff]
      %v233 = vld [vmem:[%s201 + $0x8] sm:$0xff]
      %v234 = vld [vmem:[%s201 + $0x10] sm:$0xff]
      %v235 = vld [vmem:[%s201 + $0x18] sm:$0xff]
      %v236 = vld [vmem:[%s201 + $0x20] sm:$0xff]
      %v237 = vld [vmem:[%s201 + $0x28] sm:$0xff]
      %v238 = vld [vmem:[%s201 + $0x30] sm:$0xff]
      %v239 = vld [vmem:[%s201 + $0x38] sm:$0xff]
      %v240 = vld [vmem:[%s201 + $0x40] sm:$0xff]
      %v241 = vld [vmem:[%s201 + $0x48] sm:$0xff]
      %v242 = vld [vmem:[%s201 + $0x50] sm:$0xff]
      %v243 = vld [vmem:[%s201 + $0x58] sm:$0xff]
      %v244 = vld [vmem:[%s201 + $0x60] sm:$0xff]
      %v245 = vld [vmem:[%s201 + $0x68] sm:$0xff]
      %v246 = vld [vmem:[%s201 + $0x70] sm:$0xff]
      %v247 = vld [vmem:[%s201 + $0x78] sm:$0xff]
      %v264 = vunpack.c.l.b16 %v232
      %v265 = vunpack.c.h.b16 %v232
      %v266 = vunpack.c.l.b16 %v233
      %v267 = vunpack.c.h.b16 %v233
      %v268 = vunpack.c.l.b16 %v234
      %v269 = vunpack.c.h.b16 %v234
      %v270 = vunpack.c.l.b16 %v235
      %v271 = vunpack.c.h.b16 %v235
      %v272 = vunpack.c.l.b16 %v236
      %v273 = vunpack.c.h.b16 %v236
      %v274 = vunpack.c.l.b16 %v237
      %v275 = vunpack.c.h.b16 %v237
      %v276 = vunpack.c.l.b16 %v238
      %v277 = vunpack.c.h.b16 %v238
      %v278 = vunpack.c.l.b16 %v239
      %v279 = vunpack.c.h.b16 %v239
      %v280 = vunpack.c.l.b16 %v240
      %v281 = vunpack.c.h.b16 %v240
      %v282 = vunpack.c.l.b16 %v241
      %v283 = vunpack.c.h.b16 %v241
      %v284 = vunpack.c.l.b16 %v242
      %v285 = vunpack.c.h.b16 %v242
      %v286 = vunpack.c.l.b16 %v243
      %v287 = vunpack.c.h.b16 %v243
      %v288 = vunpack.c.l.b16 %v244
      %v289 = vunpack.c.h.b16 %v244
      %v290 = vunpack.c.l.b16 %v245
      %v291 = vunpack.c.h.b16 %v245
      %v292 = vunpack.c.l.b16 %v246
      %v293 = vunpack.c.h.b16 %v246
      %v294 = vunpack.c.l.b16 %v247
      %v295 = vunpack.c.h.b16 %v247
      %v296 = vpack.c.b16 %v266, %v264
      %v297 = vpack.c.b16 %v267, %v265
      %v298 = vpack.c.b16 %v270, %v268
      %v299 = vpack.c.b16 %v271, %v269
      %v300 = vpack.c.b16 %v274, %v272
      %v301 = vpack.c.b16 %v275, %v273
      %v302 = vpack.c.b16 %v278, %v276
      %v303 = vpack.c.b16 %v279, %v277
      %v304 = vpack.c.b16 %v282, %v280
      %v305 = vpack.c.b16 %v283, %v281
      %v306 = vpack.c.b16 %v286, %v284
      %v307 = vpack.c.b16 %v287, %v285
      %v308 = vpack.c.b16 %v290, %v288
      %v309 = vpack.c.b16 %v291, %v289
      %v310 = vpack.c.b16 %v294, %v292
      %v311 = vpack.c.b16 %v295, %v293
      %v338 = vunpack.c.l.b16 %v214
      %v339 = vunpack.c.l.b16 %v215
      %v340 = vunpack.c.l.b16 %v216
      %v341 = vunpack.c.l.b16 %v217
      %v342 = vunpack.c.l.b16 %v218
      %v343 = vunpack.c.l.b16 %v219
      %v344 = vunpack.c.l.b16 %v220
      %v345 = vunpack.c.l.b16 %v221
      %v346 = vunpack.c.l.b16 %v222
      %v347 = vunpack.c.l.b16 %v223
      %v348 = vunpack.c.l.b16 %v224
      %v349 = vunpack.c.l.b16 %v225
      %v350 = vunpack.c.l.b16 %v226
      %v351 = vunpack.c.l.b16 %v227
      %v352 = vunpack.c.l.b16 %v228
      %v353 = vunpack.c.l.b16 %v229
      %v354 = vunpack.c.l.b16 %v230
      %v355 = vunpack.c.l.b16 %v231
      %v356 = vpack.c.b16 %v339, %v338
      %v357 = vpack.c.b16 %v341, %v340
      %v358 = vpack.c.b16 %v343, %v342
      %v359 = vpack.c.b16 %v345, %v344
      %v360 = vpack.c.b16 %v347, %v346
      %v361 = vpack.c.b16 %v349, %v348
      %v362 = vpack.c.b16 %v351, %v350
      %v363 = vpack.c.b16 %v353, %v352
      %v364 = vpack.c.b16 %v355, %v354
      %vm374 = vcmask 130048
      %v376 = vsel %vm374, %v297, 0
      %v379 = vsel %vm374, %v299, 0
      %v382 = vsel %vm374, %v301, 0
      %v385 = vsel %vm374, %v303, 0
      %v388 = vsel %vm374, %v305, 0
      %v391 = vsel %vm374, %v307, 0
      %v394 = vsel %vm374, %v309, 0
      %v397 = vsel %vm374, %v311, 0
      %399 = vmatprep.subr.bf16.mxu0 0
      %400 = vmatpush1.bf16.msra.mxu0 %v356
      %401 = vmatprep.subr.bf16.mxu0 0
      %402 = vmatpush1.bf16.msra.mxu0 %v357
      %403 = vmatprep.subr.bf16.mxu0 0
      %404 = vmatpush1.bf16.msra.mxu0 %v358
      %405 = vmatprep.subr.bf16.mxu0 0
      %406 = vmatpush1.bf16.msra.mxu0 %v359
      %407 = vmatprep.subr.bf16.mxu0 0
      %408 = vmatpush1.bf16.msra.mxu0 %v360
      %409 = vmatprep.subr.bf16.mxu0 0
      %410 = vmatpush1.bf16.msra.mxu0 %v361
      %411 = vmatprep.subr.bf16.mxu0 0
      %412 = vmatpush1.bf16.msra.mxu0 %v362
      %413 = vmatprep.subr.bf16.mxu0 0
      %414 = vmatpush1.bf16.msra.mxu0 %v363
      %415 = vmatprep.subr.bf16.mxu0 0
      %416 = vmatpush1.bf16.msra.mxu0 %v364
      %417 = vmatprep.subr.bf16.mxu0 0
      %418 = vmatpush1.bf16.msra.mxu0 0
      %419 = vmatprep.subr.bf16.mxu0 0
      %420 = vmatpush1.bf16.msra.mxu0 0
      %421 = vmatprep.subr.bf16.mxu0 0
      %422 = vmatpush1.bf16.msra.mxu0 0
      %423 = vmatprep.subr.bf16.mxu0 0
      %424 = vmatpush1.bf16.msra.mxu0 0
      %425 = vmatprep.subr.bf16.mxu0 0
      %426 = vmatpush1.bf16.msra.mxu0 0
      %427 = vmatprep.subr.bf16.mxu0 0
      %428 = vmatpush1.bf16.msra.mxu0 0
      %429 = vmatprep.subr.bf16.mxu0 0
      %430 = vmatpush1.bf16.msra.mxu0 0
      %431 = vmatprep.mubr.bf16.mxu0 %v376
      %432 = vmatmul.mubr.bf16.gmra.mrb[0].mxu0 %v296
      %v433 = vpop.f32.mrb[0].mxu0
      %v434 = vadd.f32 0.0, %v433
      %v435 = vpop.f32.mrb[0].mxu0
      %v436 = vpop.f32.mrb[0].mxu0
      %v437 = vadd.f32 0.0, %v436
      %v438 = vpop.f32.mrb[0].mxu0
      %439 = vmatprep.mubr.bf16.mxu0 %v379
      %440 = vmatmul.mubr.bf16.gmra.mrb[0].mxu0 %v298
      %v441 = vpop.f32.mrb[0].mxu0
      %v442 = vadd.f32 0.0, %v441
      %v443 = vpop.f32.mrb[0].mxu0
      %v444 = vpop.f32.mrb[0].mxu0
      %v445 = vadd.f32 0.0, %v444
      %v446 = vpop.f32.mrb[0].mxu0
      %447 = vmatprep.mubr.bf16.mxu0 %v382
      %448 = vmatmul.mubr.bf16.gmra.mrb[0].mxu0 %v300
      %v449 = vpop.f32.mrb[0].mxu0
      %v450 = vadd.f32 0.0, %v449
      %v451 = vpop.f32.mrb[0].mxu0
      %v452 = vpop.f32.mrb[0].mxu0
      %v453 = vadd.f32 0.0, %v452
      %v454 = vpop.f32.mrb[0].mxu0
      %455 = vmatprep.mubr.bf16.mxu0 %v385
      %456 = vmatmul.mubr.bf16.gmra.mrb[0].mxu0 %v302
      %v457 = vpop.f32.mrb[0].mxu0
      %v458 = vadd.f32 0.0, %v457
      %v459 = vpop.f32.mrb[0].mxu0
      %v460 = vpop.f32.mrb[0].mxu0
      %v461 = vadd.f32 0.0, %v460
      %v462 = vpop.f32.mrb[0].mxu0
      %463 = vmatprep.mubr.bf16.mxu0 %v388
      %464 = vmatmul.mubr.bf16.gmra.mrb[0].mxu0 %v304
      %v465 = vpop.f32.mrb[0].mxu0
      %v466 = vadd.f32 0.0, %v465
      %v467 = vpop.f32.mrb[0].mxu0
      %v468 = vpop.f32.mrb[0].mxu0
      %v469 = vadd.f32 0.0, %v468
      %v470 = vpop.f32.mrb[0].mxu0
      %471 = vmatprep.mubr.bf16.mxu0 %v391
      %472 = vmatmul.mubr.bf16.gmra.mrb[0].mxu0 %v306
      %v473 = vpop.f32.mrb[0].mxu0
      %v474 = vadd.f32 0.0, %v473
      %v475 = vpop.f32.mrb[0].mxu0
      %v476 = vpop.f32.mrb[0].mxu0
      %v477 = vadd.f32 0.0, %v476
      %v478 = vpop.f32.mrb[0].mxu0
      %479 = vmatprep.mubr.bf16.mxu0 %v394
      %480 = vmatmul.mubr.bf16.gmra.mrb[0].mxu0 %v308
      %v481 = vpop.f32.mrb[0].mxu0
      %v482 = vadd.f32 0.0, %v481
      %v483 = vpop.f32.mrb[0].mxu0
      %v484 = vpop.f32.mrb[0].mxu0
      %v485 = vadd.f32 0.0, %v484
      %v486 = vpop.f32.mrb[0].mxu0
      %487 = vmatprep.mubr.bf16.mxu0 %v397
      %488 = vmatmul.mubr.bf16.gmra.mrb[0].mxu0 %v310
      %v489 = vpop.f32.mrb[0].mxu0
      %v490 = vadd.f32 0.0, %v489
      %v491 = vpop.f32.mrb[0].mxu0
      %v492 = vpop.f32.mrb[0].mxu0
      %v493 = vadd.f32 0.0, %v492
      %v494 = vpop.f32.mrb[0].mxu0
      %495 = vdwg.mxu0
      %v496 = vmax.f32 %v434, %v450
      %v497 = vmax.f32 %v437, %v453
      %v498 = vmax.f32 %v442, %v458
      %v499 = vmax.f32 %v445, %v461
      %v500 = vmax.f32 %v466, %v482
      %v501 = vmax.f32 %v469, %v485
      %v502 = vmax.f32 %v474, %v490
      %v503 = vmax.f32 %v477, %v493
      %v504 = vmax.f32 %v496, %v500
      %v505 = vmax.f32 %v497, %v501
      %v506 = vmax.f32 %v498, %v502
      %v507 = vmax.f32 %v499, %v503
      %v508 = vld [vmem:[%s2] sm:$0x1]
      %v510 = vlaneseq
      %v511 = vshrl.u32 %v510, 7
      %v512 = vsub.s32 0, %v511
      %v513 = vrot.slane %v508, %v512
      %v515 = vadd.f32 %v504, %v513
      %v516 = vadd.f32 %v505, %v513
      %v517 = vadd.f32 %v506, %v513
      %v518 = vadd.f32 %v507, %v513
      %v519 = vmax.f32 %v515, 0.0
      %v520 = vmax.f32 %v516, 0.0
      %v521 = vmax.f32 %v517, 0.0
      %v522 = vmax.f32 %v518, 0.0
      %v523 = vpack.c.bf16 %v520, %v519
      %v524 = vpack.c.bf16 %v522, %v521
      %v527 = vunpack.c.l.b16 %v523
      %v528 = vunpack.c.h.b16 %v523
      %v529 = vunpack.c.l.b16 %v524
      %v530 = vunpack.c.h.b16 %v524
      %v531 = vpack.c.b16 %v527, %v527
      %v532 = vpack.c.b16 %v528, %v528
      %v533 = vpack.c.b16 %v529, %v529
      %v534 = vpack.c.b16 %v530, %v530
      %vm539 = vcmask 257024
      %540 = vst.msk [vmem:[%s211] sm:$0xf] %vm539, %v531
      %541 = vst.msk [vmem:[%s211 + $0x4] sm:$0xf] %vm539, %v532
      %542 = vst.msk [vmem:[%s211 + $0x8] sm:$0xf] %vm539, %v533
      %543 = vst.msk [vmem:[%s211 + $0xc] sm:$0xf] %vm539, %v534
      %s544 = smul.u32 4, %s19
      %p545 = scmp.lt.s32.totalorder %s18, 3
      %s546 = scalar_select %p545, %s18, 3
      %p547 = scmp.lt.s32.totalorder %s544, 3
      %s548 = scalar_select %p547, %s544, 3
      %s549 = smul.addr %s546, 4
      %s550 = sadd.s32 %s548, %s549
      %s551 = smul.addr %s550, 4
      %s552 = scalar_lea.vmem %s3, %s551
      // Predicated region
      $region33: #{forward.10} parent=31 // pred_check
        %p553 = pneg %p116
      $region34: #{forward.10} parent=31 // pred_check_branch
        %555 = sbr.rel (%p553) target = $region36
      $region35: #{forward.10} parent=31 // pred_region
        %s556 = smul.u32 4, %s19
      $region36: #{forward.10} parent=31 // pred_fallthru
        _
    $region32: #{forward.10} parent=5 // pred_fallthru
      _
    %p557 = scmp.le.s32.totalorder 2, %s9
    // Predicated region
    $region37: #{forward.10} parent=5 // pred_check
      %p558 = pneg %p557
    $region38: #{forward.10} parent=5 // pred_check_branch
      %560 = sbr.rel (%p558) target = $region40
    $region39: #{forward.10} parent=5 // pred_region
      %s561 = ssub.s32 %s9, 2
      // Predicated region
      $region41: #{forward.10} parent=39 // pred_check
        %p562 = pneg %p122
      $region42: #{forward.10} parent=39 // pred_check_branch
        %564 = sbr.rel (%p562) target = $region44
      $region43: #{forward.10} parent=39 // pred_region
        %s565 = smul.u32 4, %s21
        %p566 = scmp.lt.s32.totalorder %s20, 3
        %s567 = scalar_select %p566, %s20, 3
        %p568 = scmp.lt.s32.totalorder %s565, 3
        %s569 = scalar_select %p568, %s565, 3
        %s570 = smul.addr %s567, 4
        %s571 = sadd.s32 %s569, %s570
        %s572 = smul.addr %s571, 4
        %s573 = scalar_lea.vmem %s3, %s572
      $region44: #{forward.10} parent=39 // pred_fallthru
        _
    $region40: #{forward.10} parent=5 // pred_fallthru
      _
  $region6: #{forward.10} parent=0 // loop_footer
    %s13 = sadd.s32 1, %s9
  $region7: #{forward.10} parent=0 // loop_footer_branch
    %8 = sbr.rel target = $region3
  $region8: #{forward.10} parent=0 // loop_exit
    _

// kernel: forward.11
$region0: #{forward.11}
  #allocation0 [shape = 'u32[]', space=smem, size = 0x4, offset = 0x4, fixed_abs, tag = 'smem constant byte address 0x4 - core index']
  #allocation1 [shape = 'u32[144,128]{1,0:T(1,128)}', space=vmem, size = 0x12000, scoped, tag = 'internal scratch']
  %s0 = inlined_call_operand.vmem [shape: bf16[4,4,8,288], index: 0, kind: input, shape index: {}]
  %s1 = inlined_call_operand.vmem [shape: bf16[288,64], index: 1, kind: input, shape index: {}]
  %s2 = inlined_call_operand.vmem [shape: f32[1,64], index: 2, kind: input, shape index: {}]
  %s3 = inlined_call_operand.vmem [shape: bf16[4,8,64], index: 3, kind: output, shape index: {}]
  %s4 = sld [smem:[#allocation0]]
  $region45: #{forward.11} parent=0
    _
  %s6 = ssub.s32 1, %s4
  %s7 = scalar_select 0, %s6, %s4
  loop: start=0, step=1, limit=6
  $region2: #{forward.11} parent=0 // loop_pre_header
    _
  $region3: #{forward.11} parent=0 // loop_header
    %s9 = sphi 0, %s13
    %p10 = scmp.ge.s32.totalorder %s9, 6
    %s16 = sphi 0, %s28
    %s17 = sphi 0, %s24
    %s18 = sphi 0, %s16
    %s19 = sphi 0, %s17
    %s20 = sphi 0, %s18
    %s21 = sphi 0, %s19
    %s33 = sphi 0, %s35
    %s36 = sphi 0, %s33
    %s37 = sphi 0, %s36
    %s53 = sphi 0, %s37
    %s57 = sphi 0, %s57
    %s59 = sphi 0, %s57
    %s60 = sphi 0, %s59
    %s74 = sphi 0, %s60
    %s78 = sphi 0, %s78
    %s80 = sphi 0, %s78
    %s81 = sphi 0, %s80
    %s95 = sphi 0, %s81
    %s103 = sphi 0, %s105
    %s106 = sphi 0, %s103
    %s107 = sphi 0, %s106
    %s123 = sphi 0, %s107
  $region4: #{forward.11} parent=0 // loop_header_branch
    %12 = sbr.rel (%p10) target = $region8
  $region5: #{forward.11} parent=0 // loop_body
    %s14 = ssub.s32 %s9, 1
    %s15 = ssub.s32 %s9, 2
    %s22 = sadd.s32 1, %s17
    %p23 = scmp.ge.s32.totalorder %s22, 1
    %s24 = scalar_select %p23, 0, %s22
    %s25 = sadd.s32 1, %s16
    %s26 = scalar_select %p23, %s25, %s16
    %p27 = scmp.ge.s32.totalorder %s26, 4
    %s28 = scalar_select %p27, 0, %s26
    %s29 = ssub.s32 %s16, %s28
    %s30 = ssub.s32 %s17, %s24
    %s31 = sor.u32 %s29, %s30
    %p32 = scmp.eq.s32.totalorder %s31, 0
    %s34 = sadd.s32 %s33, 1
    %s35 = scalar_select %p32, %s33, %s34
    %p38 = pneg %p32
    %p39 = scmp.eq.s32.totalorder %s9, 3
    %p40 = por %p38, %p39
    %p41 = scmp.ne.s32.totalorder %s33, %s36
    %p42 = scmp.eq.s32.totalorder %s9, 0
    %p43 = por %p41, %p42
    %p44 = scmp.ne.s32.totalorder %s33, %s36
    %p45 = scmp.eq.s32.totalorder %s14, 3
    %p46 = por %p44, %p45
    %p47 = scmp.ne.s32.totalorder %s36, %s37
    %p48 = scmp.eq.s32.totalorder %s14, 0
    %p49 = por %p47, %p48
    %p50 = scmp.ne.s32.totalorder %s36, %s37
    %p51 = scmp.eq.s32.totalorder %s15, 3
    %p52 = por %p50, %p51
    %p54 = scmp.ne.s32.totalorder %s37, %s53
    %p55 = scmp.eq.s32.totalorder %s15, 0
    %p56 = por %p54, %p55
    %s58 = sadd.s32 %s57, 1
    %p61 = scmp.eq.s32.totalorder %s9, 3
    %p62 = scmp.ne.s32.totalorder %s57, %s59
    %p63 = scmp.eq.s32.totalorder %s9, 0
    %p64 = por %p62, %p63
    %p65 = scmp.ne.s32.totalorder %s57, %s59
    %p66 = scmp.eq.s32.totalorder %s14, 3
    %p67 = por %p65, %p66
    %p68 = scmp.ne.s32.totalorder %s59, %s60
    %p69 = scmp.eq.s32.totalorder %s14, 0
    %p70 = por %p68, %p69
    %p71 = scmp.ne.s32.totalorder %s59, %s60
    %p72 = scmp.eq.s32.totalorder %s15, 3
    %p73 = por %p71, %p72
    %p75 = scmp.ne.s32.totalorder %s60, %s74
    %p76 = scmp.eq.s32.totalorder %s15, 0
    %p77 = por %p75, %p76
    %s79 = sadd.s32 %s78, 1
    %p82 = scmp.eq.s32.totalorder %s9, 3
    %p83 = scmp.ne.s32.totalorder %s78, %s80
    %p84 = scmp.eq.s32.totalorder %s9, 0
    %p85 = por %p83, %p84
    %p86 = scmp.ne.s32.totalorder %s78, %s80
    %p87 = scmp.eq.s32.totalorder %s14, 3
    %p88 = por %p86, %p87
    %p89 = scmp.ne.s32.totalorder %s80, %s81
    %p90 = scmp.eq.s32.totalorder %s14, 0
    %p91 = por %p89, %p90
    %p92 = scmp.ne.s32.totalorder %s80, %s81
    %p93 = scmp.eq.s32.totalorder %s15, 3
    %p94 = por %p92, %p93
    %p96 = scmp.ne.s32.totalorder %s81, %s95
    %p97 = scmp.eq.s32.totalorder %s15, 0
    %p98 = por %p96, %p97
    %s99 = ssub.s32 %s16, %s28
    %s100 = ssub.s32 %s17, %s24
    %s101 = sor.u32 %s99, %s100
    %p102 = scmp.eq.s32.totalorder %s101, 0
    %s104 = sadd.s32 %s103, 1
    %s105 = scalar_select %p102, %s103, %s104
    %p108 = pneg %p102
    %p109 = scmp.eq.s32.totalorder %s9, 3
    %p110 = por %p108, %p109
    %p111 = scmp.ne.s32.totalorder %s103, %s106
    %p112 = scmp.eq.s32.totalorder %s9, 0
    %p113 = por %p111, %p112
    %p114 = scmp.ne.s32.totalorder %s103, %s106
    %p115 = scmp.eq.s32.totalorder %s14, 3
    %p116 = por %p114, %p115
    %p117 = scmp.ne.s32.totalorder %s106, %s107
    %p118 = scmp.eq.s32.totalorder %s14, 0
    %p119 = por %p117, %p118
    %p120 = scmp.ne.s32.totalorder %s106, %s107
    %p121 = scmp.eq.s32.totalorder %s15, 3
    %p122 = por %p120, %p121
    %p124 = scmp.ne.s32.totalorder %s107, %s123
    %p125 = scmp.eq.s32.totalorder %s15, 0
    %p126 = por %p124, %p125
    %p127 = scmp.le.s32.totalorder 1, %s9
    %p128 = scmp.lt.s32.totalorder %s9, 5
    %p129 = pnand %p127, %p128
    %p130 = pneg %p129
    // Predicated region
    $region9: #{forward.11} parent=5 // pred_check
      _
    $region10: #{forward.11} parent=5 // pred_check_branch
      %132 = sbr.rel (%p129) target = $region12
    $region11: #{forward.11} parent=5 // pred_region
      %s133 = ssub.s32 %s9, 1
      // Predicated region
      $region13: #{forward.11} parent=11 // pred_check
        %p134 = pneg %p70
      $region14: #{forward.11} parent=11 // pred_check_branch
        %136 = sbr.rel (%p134) target = $region16
      $region15: #{forward.11} parent=11 // pred_region
        _
      $region16: #{forward.11} parent=11 // pred_fallthru
        _
      // Predicated region
      $region17: #{forward.11} parent=11 // pred_check
        %p137 = pneg %p91
      $region18: #{forward.11} parent=11 // pred_check_branch
        %139 = sbr.rel (%p137) target = $region20
      $region19: #{forward.11} parent=11 // pred_region
        _
      $region20: #{forward.11} parent=11 // pred_fallthru
        _
    $region12: #{forward.11} parent=5 // pred_fallthru
      _
    %p140 = scmp.lt.s32.totalorder %s9, 4
    // Predicated region
    $region21: #{forward.11} parent=5 // pred_check
      %p141 = pneg %p140
    $region22: #{forward.11} parent=5 // pred_check_branch
      %143 = sbr.rel (%p141) target = $region24
    $region23: #{forward.11} parent=5 // pred_region
      // Predicated region
      $region25: #{forward.11} parent=23 // pred_check
        %p144 = pneg %p43
      $region26: #{forward.11} parent=23 // pred_check_branch
        %146 = sbr.rel (%p144) target = $region28
      $region27: #{forward.11} parent=23 // pred_region
        %p147 = scmp.lt.s32.totalorder %s16, 3
        %s148 = scalar_select %p147, %s16, 3
        %p149 = scmp.lt.s32.totalorder %s17, 0
        %s150 = scalar_select %p149, %s17, 0
        %s151 = smul.addr %s150, 3
        %s152 = smul.addr %s148, 12
        %s153 = sadd.s32 %s151, %s152
        %s154 = smul.addr %s153, 4
        %s155 = scalar_lea.vmem %s0, %s154
      $region28: #{forward.11} parent=23 // pred_fallthru
        _
    $region24: #{forward.11} parent=5 // pred_fallthru
      _
    %p156 = scmp.le.s32.totalorder 1, %s9
    %p157 = scmp.lt.s32.totalorder %s9, 5
    %p158 = pnand %p156, %p157
    %p159 = pneg %p158
    // Predicated region
    $region29: #{forward.11} parent=5 // pred_check
      _
    $region30: #{forward.11} parent=5 // pred_check_branch
      %161 = sbr.rel (%p158) target = $region32
    $region31: #{forward.11} parent=5 // pred_region
      %s162 = ssub.s32 %s9, 1
      %p163 = scmp.lt.s32.totalorder %s18, 3
      %s164 = scalar_select %p163, %s18, 3
      %p165 = scmp.lt.s32.totalorder %s19, 0
      %s166 = scalar_select %p165, %s19, 0
      %s167 = smul.addr %s166, 3
      %s168 = smul.addr %s164, 12
      %s169 = sadd.s32 %s167, %s168
      %s170 = smul.addr %s169, 4
      %s171 = scalar_lea.vmem %s0, %s170
      %p172 = pneg %p49
      %p173 = pneg %p46
      %p174 = pneg %p70
      %p175 = pneg %p67
      %p176 = pneg %p91
      %p177 = pneg %p88
      %p178 = pneg %p119
      %p179 = pneg %p116
      %p180 = scmp.lt.s32.totalorder %s18, 3
      %s181 = scalar_select %p180, %s18, 3
      %p182 = scmp.lt.s32.totalorder %s19, 0
      %s183 = scalar_select %p182, %s19, 0
      %s184 = sadd.s32 %s183, %s181
      %s185 = smul.addr %s184, 4
      %s186 = scalar_lea.vmem %s3, %s185
      %p187 = scmp.lt.s32.totalorder %s18, 3
      %s188 = scalar_select %p187, %s18, 3
      %p189 = scmp.lt.s32.totalorder %s19, 0
      %s190 = scalar_select %p189, %s19, 0
      %s191 = smul.addr %s190, 3
      %s192 = smul.addr %s188, 12
      %s193 = sadd.s32 %s191, %s192
      %s194 = smul.addr %s193, 4
      %s195 = scalar_lea.vmem %s0, %s194
      %p196 = scmp.lt.s32.totalorder %s18, 3
      %s197 = scalar_select %p196, %s18, 3
      %p198 = scmp.lt.s32.totalorder %s19, 0
      %s199 = scalar_select %p198, %s19, 0
      %s200 = sadd.s32 %s199, %s197
      %s201 = smul.addr %s200, 4
      %s202 = scalar_lea.vmem %s3, %s201
      %v204 = vld [vmem:[%s1] sm:$0xf]
      %v205 = vld [vmem:[%s1 + $0x4] sm:$0xf]
      %v206 = vld [vmem:[%s1 + $0x8] sm:$0xf]
      %v207 = vld [vmem:[%s1 + $0xc] sm:$0xf]
      %v208 = vld [vmem:[%s1 + $0x10] sm:$0xf]
      %v209 = vld [vmem:[%s1 + $0x14] sm:$0xf]
      %v210 = vld [vmem:[%s1 + $0x18] sm:$0xf]
      %v211 = vld [vmem:[%s1 + $0x1c] sm:$0xf]
      %v212 = vld [vmem:[%s1 + $0x20] sm:$0xf]
      %v213 = vld [vmem:[%s1 + $0x24] sm:$0xf]
      %v214 = vld [vmem:[%s1 + $0x28] sm:$0xf]
      %v215 = vld [vmem:[%s1 + $0x2c] sm:$0xf]
      %v216 = vld [vmem:[%s1 + $0x30] sm:$0xf]
      %v217 = vld [vmem:[%s1 + $0x34] sm:$0xf]
      %v218 = vld [vmem:[%s1 + $0x38] sm:$0xf]
      %v219 = vld [vmem:[%s1 + $0x3c] sm:$0xf]
      %v220 = vld [vmem:[%s1 + $0x40] sm:$0xf]
      %v221 = vld [vmem:[%s1 + $0x44] sm:$0xf]
      %v222 = vld [vmem:[%s1 + $0x48] sm:$0xf]
      %v223 = vld [vmem:[%s1 + $0x4c] sm:$0xf]
      %v224 = vld [vmem:[%s1 + $0x50] sm:$0xf]
      %v225 = vld [vmem:[%s1 + $0x54] sm:$0xf]
      %v226 = vld [vmem:[%s1 + $0x58] sm:$0xf]
      %v227 = vld [vmem:[%s1 + $0x5c] sm:$0xf]
      %v228 = vld [vmem:[%s1 + $0x60] sm:$0xf]
      %v229 = vld [vmem:[%s1 + $0x64] sm:$0xf]
      %v230 = vld [vmem:[%s1 + $0x68] sm:$0xf]
      %v231 = vld [vmem:[%s1 + $0x6c] sm:$0xf]
      %v232 = vld [vmem:[%s1 + $0x70] sm:$0xf]
      %v233 = vld [vmem:[%s1 + $0x74] sm:$0xf]
      %v234 = vld [vmem:[%s1 + $0x78] sm:$0xf]
      %v235 = vld [vmem:[%s1 + $0x7c] sm:$0xf]
      %v236 = vld [vmem:[%s1 + $0x80] sm:$0xf]
      %v237 = vld [vmem:[%s1 + $0x84] sm:$0xf]
      %v238 = vld [vmem:[%s1 + $0x88] sm:$0xf]
      %v239 = vld [vmem:[%s1 + $0x8c] sm:$0xf]
      %v240 = vld [vmem:[%s195] sm:$0xff]
      %v241 = vld [vmem:[%s195 + $0x8] sm:$0xf]
      %v244 = vunpack.c.l.b16 %v240
      %v245 = vunpack.c.h.b16 %v240
      %v246 = vunpack.c.l.b16 %v241
      %v247 = vpack.c.b16 %v244, %v244
      %v248 = vpack.c.b16 %v245, %v245
      %v249 = vpack.c.b16 %v246, %v246
      %v288 = vunpack.c.l.b16 %v204
      %v289 = vunpack.c.l.b16 %v205
      %v290 = vunpack.c.l.b16 %v206
      %v291 = vunpack.c.l.b16 %v207
      %v292 = vunpack.c.l.b16 %v208
      %v293 = vunpack.c.l.b16 %v209
      %v294 = vunpack.c.l.b16 %v210
      %v295 = vunpack.c.l.b16 %v211
      %v296 = vunpack.c.l.b16 %v212
      %v297 = vunpack.c.l.b16 %v213
      %v298 = vunpack.c.l.b16 %v214
      %v299 = vunpack.c.l.b16 %v215
      %v300 = vunpack.c.l.b16 %v216
      %v301 = vunpack.c.l.b16 %v217
      %v302 = vunpack.c.l.b16 %v218
      %v303 = vunpack.c.l.b16 %v219
      %v304 = vunpack.c.l.b16 %v220
      %v305 = vunpack.c.l.b16 %v221
      %v306 = vunpack.c.l.b16 %v222
      %v307 = vunpack.c.l.b16 %v223
      %v308 = vunpack.c.l.b16 %v224
      %v309 = vunpack.c.l.b16 %v225
      %v310 = vunpack.c.l.b16 %v226
      %v311 = vunpack.c.l.b16 %v227
      %v312 = vunpack.c.l.b16 %v228
      %v313 = vunpack.c.l.b16 %v229
      %v314 = vunpack.c.l.b16 %v230
      %v315 = vunpack.c.l.b16 %v231
      %v316 = vunpack.c.l.b16 %v232
      %v317 = vunpack.c.l.b16 %v233
      %v318 = vunpack.c.l.b16 %v234
      %v319 = vunpack.c.l.b16 %v235
      %v320 = vunpack.c.l.b16 %v236
      %v321 = vunpack.c.l.b16 %v237
      %v322 = vunpack.c.l.b16 %v238
      %v323 = vunpack.c.l.b16 %v239
      %v324 = vpack.c.b16 %v289, %v288
      %v325 = vpack.c.b16 %v291, %v290
      %v326 = vpack.c.b16 %v293, %v292
      %v327 = vpack.c.b16 %v295, %v294
      %v328 = vpack.c.b16 %v297, %v296
      %v329 = vpack.c.b16 %v299, %v298
      %v330 = vpack.c.b16 %v301, %v300
      %v331 = vpack.c.b16 %v303, %v302
      %v332 = vpack.c.b16 %v305, %v304
      %v333 = vpack.c.b16 %v307, %v306
      %v334 = vpack.c.b16 %v309, %v308
      %v335 = vpack.c.b16 %v311, %v310
      %v336 = vpack.c.b16 %v313, %v312
      %v337 = vpack.c.b16 %v315, %v314
      %v338 = vpack.c.b16 %v317, %v316
      %v339 = vpack.c.b16 %v319, %v318
      %v340 = vpack.c.b16 %v321, %v320
      %v341 = vpack.c.b16 %v323, %v322
      %vm360 = vcmask 261120
      %v362 = vsel %vm360, %v249, 0
      %364 = vmatprep.subr.bf16.mxu0 0
      %365 = vmatpush1.bf16.msra.mxu0 %v324
      %366 = vmatprep.subr.bf16.mxu0 0
      %367 = vmatpush1.bf16.msra.mxu0 %v325
      %368 = vmatprep.subr.bf16.mxu0 0
      %369 = vmatpush1.bf16.msra.mxu0 %v326
      %370 = vmatprep.subr.bf16.mxu0 0
      %371 = vmatpush1.bf16.msra.mxu0 %v327
      %372 = vmatprep.subr.bf16.mxu0 0
      %373 = vmatpush1.bf16.msra.mxu0 %v328
      %374 = vmatprep.subr.bf16.mxu0 0
      %375 = vmatpush1.bf16.msra.mxu0 %v329
      %376 = vmatprep.subr.bf16.mxu0 0
      %377 = vmatpush1.bf16.msra.mxu0 %v330
      %378 = vmatprep.subr.bf16.mxu0 0
      %379 = vmatpush1.bf16.msra.mxu0 %v331
      %380 = vmatprep.subr.bf16.mxu0 0
      %381 = vmatpush1.bf16.msra.mxu0 %v332
      %382 = vmatprep.subr.bf16.mxu0 0
      %383 = vmatpush1.bf16.msra.mxu0 %v333
      %384 = vmatprep.subr.bf16.mxu0 0
      %385 = vmatpush1.bf16.msra.mxu0 %v334
      %386 = vmatprep.subr.bf16.mxu0 0
      %387 = vmatpush1.bf16.msra.mxu0 %v335
      %388 = vmatprep.subr.bf16.mxu0 0
      %389 = vmatpush1.bf16.msra.mxu0 %v336
      %390 = vmatprep.subr.bf16.mxu0 0
      %391 = vmatpush1.bf16.msra.mxu0 %v337
      %392 = vmatprep.subr.bf16.mxu0 0
      %393 = vmatpush1.bf16.msra.mxu0 %v338
      %394 = vmatprep.subr.bf16.mxu0 0
      %395 = vmatpush1.bf16.msra.mxu0 %v339
      %396 = vmatprep.mubr.bf16.mxu0 %v248
      %397 = vmatmul.mubr.bf16.gmra.mrb[0].mxu0 %v247
      %v398 = vpop.f32.mrb[0].mxu0
      %v399 = vadd.f32 0.0, %v398
      %v400 = vpop.f32.mrb[0].mxu0
      %v401 = vpop.f32.mrb[0].mxu0
      %v402 = vpop.f32.mrb[0].mxu0
      %403 = vdwg.mxu0
      %404 = vmatprep.subr.bf16.mxu0 0
      %405 = vmatpush1.bf16.msra.mxu0 %v340
      %406 = vmatprep.subr.bf16.mxu0 0
      %407 = vmatpush1.bf16.msra.mxu0 %v341
      %408 = vmatprep.subr.bf16.mxu0 0
      %409 = vmatpush1.bf16.msra.mxu0 0
      %410 = vmatprep.subr.bf16.mxu0 0
      %411 = vmatpush1.bf16.msra.mxu0 0
      %412 = vmatprep.subr.bf16.mxu0 0
      %413 = vmatpush1.bf16.msra.mxu0 0
      %414 = vmatprep.subr.bf16.mxu0 0
      %415 = vmatpush1.bf16.msra.mxu0 0
      %416 = vmatprep.subr.bf16.mxu0 0
      %417 = vmatpush1.bf16.msra.mxu0 0
      %418 = vmatprep.subr.bf16.mxu0 0
      %419 = vmatpush1.bf16.msra.mxu0 0
      %420 = vmatprep.subr.bf16.mxu0 0
      %421 = vmatpush1.bf16.msra.mxu0 0
      %422 = vmatprep.subr.bf16.mxu0 0
      %423 = vmatpush1.bf16.msra.mxu0 0
      %424 = vmatprep.subr.bf16.mxu0 0
      %425 = vmatpush1.bf16.msra.mxu0 0
      %426 = vmatprep.subr.bf16.mxu0 0
      %427 = vmatpush1.bf16.msra.mxu0 0
      %428 = vmatprep.subr.bf16.mxu0 0
      %429 = vmatpush1.bf16.msra.mxu0 0
      %430 = vmatprep.subr.bf16.mxu0 0
      %431 = vmatpush1.bf16.msra.mxu0 0
      %432 = vmatprep.subr.bf16.mxu0 0
      %433 = vmatpush1.bf16.msra.mxu0 0
      %434 = vmatprep.subr.bf16.mxu0 0
      %435 = vmatpush1.bf16.msra.mxu0 0
      %436 = vmatprep.mubr.bf16.mxu0 0
      %437 = vmatmul.mubr.bf16.gmra.mrb[0].mxu0 %v362
      %v438 = vpop.f32.mrb[0].mxu0
      %v439 = vadd.f32 %v399, %v438
      %v440 = vpop.f32.mrb[0].mxu0
      %v441 = vpop.f32.mrb[0].mxu0
      %v442 = vpop.f32.mrb[0].mxu0
      %443 = vdwg.mxu0
      %s444 = scalar_lea.vmem %s195, 12
      %v445 = vld [vmem:[%s444] sm:$0xff]
      %v446 = vld [vmem:[%s444 + $0x8] sm:$0xf]
      %v449 = vunpack.c.l.b16 %v445
      %v450 = vunpack.c.h.b16 %v445
      %v451 = vunpack.c.l.b16 %v446
      %v452 = vpack.c.b16 %v449, %v449
      %v453 = vpack.c.b16 %v450, %v450
      %v454 = vpack.c.b16 %v451, %v451
      %v458 = vsel %vm360, %v454, 0
      %460 = vmatprep.subr.bf16.mxu0 0
      %461 = vmatpush1.bf16.msra.mxu0 %v324
      %462 = vmatprep.subr.bf16.mxu0 0
      %463 = vmatpush1.bf16.msra.mxu0 %v325
      %464 = vmatprep.subr.bf16.mxu0 0
      %465 = vmatpush1.bf16.msra.mxu0 %v326
      %466 = vmatprep.subr.bf16.mxu0 0
      %467 = vmatpush1.bf16.msra.mxu0 %v327
      %468 = vmatprep.subr.bf16.mxu0 0
      %469 = vmatpush1.bf16.msra.mxu0 %v328
      %470 = vmatprep.subr.bf16.mxu0 0
      %471 = vmatpush1.bf16.msra.mxu0 %v329
      %472 = vmatprep.subr.bf16.mxu0 0
      %473 = vmatpush1.bf16.msra.mxu0 %v330
      %474 = vmatprep.subr.bf16.mxu0 0
      %475 = vmatpush1.bf16.msra.mxu0 %v331
      %476 = vmatprep.subr.bf16.mxu0 0
      %477 = vmatpush1.bf16.msra.mxu0 %v332
      %478 = vmatprep.subr.bf16.mxu0 0
      %479 = vmatpush1.bf16.msra.mxu0 %v333
      %480 = vmatprep.subr.bf16.mxu0 0
      %481 = vmatpush1.bf16.msra.mxu0 %v334
      %482 = vmatprep.subr.bf16.mxu0 0
      %483 = vmatpush1.bf16.msra.mxu0 %v335
      %484 = vmatprep.subr.bf16.mxu0 0
      %485 = vmatpush1.bf16.msra.mxu0 %v336
      %486 = vmatprep.subr.bf16.mxu0 0
      %487 = vmatpush1.bf16.msra.mxu0 %v337
      %488 = vmatprep.subr.bf16.mxu0 0
      %489 = vmatpush1.bf16.msra.mxu0 %v338
      %490 = vmatprep.subr.bf16.mxu0 0
      %491 = vmatpush1.bf16.msra.mxu0 %v339
      %492 = vmatprep.mubr.bf16.mxu0 %v453
      %493 = vmatmul.mubr.bf16.gmra.mrb[0].mxu0 %v452
      %v494 = vpop.f32.mrb[0].mxu0
      %v495 = vadd.f32 0.0, %v494
      %v496 = vpop.f32.mrb[0].mxu0
      %v497 = vpop.f32.mrb[0].mxu0
      %v498 = vpop.f32.mrb[0].mxu0
      %499 = vdwg.mxu0
      %500 = vmatprep.subr.bf16.mxu0 0
      %501 = vmatpush1.bf16.msra.mxu0 %v340
      %502 = vmatprep.subr.bf16.mxu0 0
      %503 = vmatpush1.bf16.msra.mxu0 %v341
      %504 = vmatprep.subr.bf16.mxu0 0
      %505 = vmatpush1.bf16.msra.mxu0 0
      %506 = vmatprep.subr.bf16.mxu0 0
      %507 = vmatpush1.bf16.msra.mxu0 0
      %508 = vmatprep.subr.bf16.mxu0 0
      %509 = vmatpush1.bf16.msra.mxu0 0
      %510 = vmatprep.subr.bf16.mxu0 0
      %511 = vmatpush1.bf16.msra.mxu0 0
      %512 = vmatprep.subr.bf16.mxu0 0
      %513 = vmatpush1.bf16.msra.mxu0 0
      %514 = vmatprep.subr.bf16.mxu0 0
      %515 = vmatpush1.bf16.msra.mxu0 0
      %516 = vmatprep.subr.bf16.mxu0 0
      %517 = vmatpush1.bf16.msra.mxu0 0
      %518 = vmatprep.subr.bf16.mxu0 0
      %519 = vmatpush1.bf16.msra.mxu0 0
      %520 = vmatprep.subr.bf16.mxu0 0
      %521 = vmatpush1.bf16.msra.mxu0 0
      %522 = vmatprep.subr.bf16.mxu0 0
      %523 = vmatpush1.bf16.msra.mxu0 0
      %524 = vmatprep.subr.bf16.mxu0 0
      %525 = vmatpush1.bf16.msra.mxu0 0
      %526 = vmatprep.subr.bf16.mxu0 0
      %527 = vmatpush1.bf16.msra.mxu0 0
      %528 = vmatprep.subr.bf16.mxu0 0
      %529 = vmatpush1.bf16.msra.mxu0 0
      %530 = vmatprep.subr.bf16.mxu0 0
      %531 = vmatpush1.bf16.msra.mxu0 0
      %532 = vmatprep.mubr.bf16.mxu0 0
      %533 = vmatmul.mubr.bf16.gmra.mrb[0].mxu0 %v458
      %v534 = vpop.f32.mrb[0].mxu0
      %v535 = vadd.f32 %v495, %v534
      %v536 = vpop.f32.mrb[0].mxu0
      %v537 = vpop.f32.mrb[0].mxu0
      %v538 = vpop.f32.mrb[0].mxu0
      %539 = vdwg.mxu0
      %v540 = vmax.f32 %v439, %v535
      %s541 = scalar_lea.vmem %s195, 24
      %v542 = vld [vmem:[%s541] sm:$0xff]
      %v543 = vld [vmem:[%s541 + $0x8] sm:$0xf]
      %v546 = vunpack.c.l.b16 %v542
      %v547 = vunpack.c.h.b16 %v542
      %v548 = vunpack.c.l.b16 %v543
      %v549 = vpack.c.b16 %v546, %v546
      %v550 = vpack.c.b16 %v547, %v547
      %v551 = vpack.c.b16 %v548, %v548
      %v555 = vsel %vm360, %v551, 0
      %557 = vmatprep.subr.bf16.mxu0 0
      %558 = vmatpush1.bf16.msra.mxu0 %v324
      %559 = vmatprep.subr.bf16.mxu0 0
      %560 = vmatpush1.bf16.msra.mxu0 %v325
      %561 = vmatprep.subr.bf16.mxu0 0
      %562 = vmatpush1.bf16.msra.mxu0 %v326
      %563 = vmatprep.subr.bf16.mxu0 0
      %564 = vmatpush1.bf16.msra.mxu0 %v327
      %565 = vmatprep.subr.bf16.mxu0 0
      %566 = vmatpush1.bf16.msra.mxu0 %v328
      %567 = vmatprep.subr.bf16.mxu0 0
      %568 = vmatpush1.bf16.msra.mxu0 %v329
      %569 = vmatprep.subr.bf16.mxu0 0
      %570 = vmatpush1.bf16.msra.mxu0 %v330
      %571 = vmatprep.subr.bf16.mxu0 0
      %572 = vmatpush1.bf16.msra.mxu0 %v331
      %573 = vmatprep.subr.bf16.mxu0 0
      %574 = vmatpush1.bf16.msra.mxu0 %v332
      %575 = vmatprep.subr.bf16.mxu0 0
      %576 = vmatpush1.bf16.msra.mxu0 %v333
      %577 = vmatprep.subr.bf16.mxu0 0
      %578 = vmatpush1.bf16.msra.mxu0 %v334
      %579 = vmatprep.subr.bf16.mxu0 0
      %580 = vmatpush1.bf16.msra.mxu0 %v335
      %581 = vmatprep.subr.bf16.mxu0 0
      %582 = vmatpush1.bf16.msra.mxu0 %v336
      %583 = vmatprep.subr.bf16.mxu0 0
      %584 = vmatpush1.bf16.msra.mxu0 %v337
      %585 = vmatprep.subr.bf16.mxu0 0
      %586 = vmatpush1.bf16.msra.mxu0 %v338
      %587 = vmatprep.subr.bf16.mxu0 0
      %588 = vmatpush1.bf16.msra.mxu0 %v339
      %589 = vmatprep.mubr.bf16.mxu0 %v550
      %590 = vmatmul.mubr.bf16.gmra.mrb[0].mxu0 %v549
      %v591 = vpop.f32.mrb[0].mxu0
      %v592 = vadd.f32 0.0, %v591
      %v593 = vpop.f32.mrb[0].mxu0
      %v594 = vpop.f32.mrb[0].mxu0
      %v595 = vpop.f32.mrb[0].mxu0
      %596 = vdwg.mxu0
      %597 = vmatprep.subr.bf16.mxu0 0
      %598 = vmatpush1.bf16.msra.mxu0 %v340
      %599 = vmatprep.subr.bf16.mxu0 0
      %600 = vmatpush1.bf16.msra.mxu0 %v341
      %601 = vmatprep.subr.bf16.mxu0 0
      %602 = vmatpush1.bf16.msra.mxu0 0
      %603 = vmatprep.subr.bf16.mxu0 0
      %604 = vmatpush1.bf16.msra.mxu0 0
      %605 = vmatprep.subr.bf16.mxu0 0
      %606 = vmatpush1.bf16.msra.mxu0 0
      %607 = vmatprep.subr.bf16.mxu0 0
      %608 = vmatpush1.bf16.msra.mxu0 0
      %609 = vmatprep.subr.bf16.mxu0 0
      %610 = vmatpush1.bf16.msra.mxu0 0
      %611 = vmatprep.subr.bf16.mxu0 0
      %612 = vmatpush1.bf16.msra.mxu0 0
      %613 = vmatprep.subr.bf16.mxu0 0
      %614 = vmatpush1.bf16.msra.mxu0 0
      %615 = vmatprep.subr.bf16.mxu0 0
      %616 = vmatpush1.bf16.msra.mxu0 0
      %617 = vmatprep.subr.bf16.mxu0 0
      %618 = vmatpush1.bf16.msra.mxu0 0
      %619 = vmatprep.subr.bf16.mxu0 0
      %620 = vmatpush1.bf16.msra.mxu0 0
      %621 = vmatprep.subr.bf16.mxu0 0
      %622 = vmatpush1.bf16.msra.mxu0 0
      %623 = vmatprep.subr.bf16.mxu0 0
      %624 = vmatpush1.bf16.msra.mxu0 0
      %625 = vmatprep.subr.bf16.mxu0 0
      %626 = vmatpush1.bf16.msra.mxu0 0
      %627 = vmatprep.subr.bf16.mxu0 0
      %628 = vmatpush1.bf16.msra.mxu0 0
      %629 = vmatprep.mubr.bf16.mxu0 0
      %630 = vmatmul.mubr.bf16.gmra.mrb[0].mxu0 %v555
      %v631 = vpop.f32.mrb[0].mxu0
      %v632 = vadd.f32 %v592, %v631
      %v633 = vpop.f32.mrb[0].mxu0
      %v634 = vpop.f32.mrb[0].mxu0
      %v635 = vpop.f32.mrb[0].mxu0
      %636 = vdwg.mxu0
      %v637 = vmax.f32 %v540, %v632
      %s638 = scalar_lea.vmem %s195, 36
      %v639 = vld [vmem:[%s638] sm:$0xff]
      %v640 = vld [vmem:[%s638 + $0x8] sm:$0xf]
      %v643 = vunpack.c.l.b16 %v639
      %v644 = vunpack.c.h.b16 %v639
      %v645 = vunpack.c.l.b16 %v640
      %v646 = vpack.c.b16 %v643, %v643
      %v647 = vpack.c.b16 %v644, %v644
      %v648 = vpack.c.b16 %v645, %v645
      %v652 = vsel %vm360, %v648, 0
      %654 = vmatprep.subr.bf16.mxu0 0
      %655 = vmatpush1.bf16.msra.mxu0 %v324
      %656 = vmatprep.subr.bf16.mxu0 0
      %657 = vmatpush1.bf16.msra.mxu0 %v325
      %658 = vmatprep.subr.bf16.mxu0 0
      %659 = vmatpush1.bf16.msra.mxu0 %v326
      %660 = vmatprep.subr.bf16.mxu0 0
      %661 = vmatpush1.bf16.msra.mxu0 %v327
      %662 = vmatprep.subr.bf16.mxu0 0
      %663 = vmatpush1.bf16.msra.mxu0 %v328
      %664 = vmatprep.subr.bf16.mxu0 0
      %665 = vmatpush1.bf16.msra.mxu0 %v329
      %666 = vmatprep.subr.bf16.mxu0 0
      %667 = vmatpush1.bf16.msra.mxu0 %v330
      %668 = vmatprep.subr.bf16.mxu0 0
      %669 = vmatpush1.bf16.msra.mxu0 %v331
      %670 = vmatprep.subr.bf16.mxu0 0
      %671 = vmatpush1.bf16.msra.mxu0 %v332
      %672 = vmatprep.subr.bf16.mxu0 0
      %673 = vmatpush1.bf16.msra.mxu0 %v333
      %674 = vmatprep.subr.bf16.mxu0 0
      %675 = vmatpush1.bf16.msra.mxu0 %v334
      %676 = vmatprep.subr.bf16.mxu0 0
      %677 = vmatpush1.bf16.msra.mxu0 %v335
      %678 = vmatprep.subr.bf16.mxu0 0
      %679 = vmatpush1.bf16.msra.mxu0 %v336
      %680 = vmatprep.subr.bf16.mxu0 0
      %681 = vmatpush1.bf16.msra.mxu0 %v337
      %682 = vmatprep.subr.bf16.mxu0 0
      %683 = vmatpush1.bf16.msra.mxu0 %v338
      %684 = vmatprep.subr.bf16.mxu0 0
      %685 = vmatpush1.bf16.msra.mxu0 %v339
      %686 = vmatprep.mubr.bf16.mxu0 %v647
      %687 = vmatmul.mubr.bf16.gmra.mrb[0].mxu0 %v646
      %v688 = vpop.f32.mrb[0].mxu0
      %v689 = vadd.f32 0.0, %v688
      %v690 = vpop.f32.mrb[0].mxu0
      %v691 = vpop.f32.mrb[0].mxu0
      %v692 = vpop.f32.mrb[0].mxu0
      %693 = vdwg.mxu0
      %694 = vmatprep.subr.bf16.mxu0 0
      %695 = vmatpush1.bf16.msra.mxu0 %v340
      %696 = vmatprep.subr.bf16.mxu0 0
      %697 = vmatpush1.bf16.msra.mxu0 %v341
      %698 = vmatprep.subr.bf16.mxu0 0
      %699 = vmatpush1.bf16.msra.mxu0 0
      %700 = vmatprep.subr.bf16.mxu0 0
      %701 = vmatpush1.bf16.msra.mxu0 0
      %702 = vmatprep.subr.bf16.mxu0 0
      %703 = vmatpush1.bf16.msra.mxu0 0
      %704 = vmatprep.subr.bf16.mxu0 0
      %705 = vmatpush1.bf16.msra.mxu0 0
      %706 = vmatprep.subr.bf16.mxu0 0
      %707 = vmatpush1.bf16.msra.mxu0 0
      %708 = vmatprep.subr.bf16.mxu0 0
      %709 = vmatpush1.bf16.msra.mxu0 0
      %710 = vmatprep.subr.bf16.mxu0 0
      %711 = vmatpush1.bf16.msra.mxu0 0
      %712 = vmatprep.subr.bf16.mxu0 0
      %713 = vmatpush1.bf16.msra.mxu0 0
      %714 = vmatprep.subr.bf16.mxu0 0
      %715 = vmatpush1.bf16.msra.mxu0 0
      %716 = vmatprep.subr.bf16.mxu0 0
      %717 = vmatpush1.bf16.msra.mxu0 0
      %718 = vmatprep.subr.bf16.mxu0 0
      %719 = vmatpush1.bf16.msra.mxu0 0
      %720 = vmatprep.subr.bf16.mxu0 0
      %721 = vmatpush1.bf16.msra.mxu0 0
      %722 = vmatprep.subr.bf16.mxu0 0
      %723 = vmatpush1.bf16.msra.mxu0 0
      %724 = vmatprep.subr.bf16.mxu0 0
      %725 = vmatpush1.bf16.msra.mxu0 0
      %726 = vmatprep.mubr.bf16.mxu0 0
      %727 = vmatmul.mubr.bf16.gmra.mrb[0].mxu0 %v652
      %v728 = vpop.f32.mrb[0].mxu0
      %v729 = vadd.f32 %v689, %v728
      %v730 = vpop.f32.mrb[0].mxu0
      %v731 = vpop.f32.mrb[0].mxu0
      %v732 = vpop.f32.mrb[0].mxu0
      %733 = vdwg.mxu0
      %v734 = vmax.f32 %v637, %v729
      %v735 = vld [vmem:[%s2] sm:$0x1]
      %v737 = vlaneseq
      %v738 = vshrl.u32 %v737, 7
      %v739 = vsub.s32 0, %v738
      %v740 = vrot.slane %v735, %v739
      %v742 = vadd.f32 %v734, %v740
      %v743 = vmax.f32 %v742, 0.0
      %v744 = vpack.c.bf16 %v743, %v743
      %vm745 = vcmask 519168
      %746 = vst.msk [vmem:[%s202] sm:$0xf] %vm745, %v744
      %p747 = scmp.lt.s32.totalorder %s18, 3
      %s748 = scalar_select %p747, %s18, 3
      %p749 = scmp.lt.s32.totalorder %s19, 0
      %s750 = scalar_select %p749, %s19, 0
      %s751 = sadd.s32 %s750, %s748
      %s752 = smul.addr %s751, 4
      %s753 = scalar_lea.vmem %s3, %s752
      // Predicated region
      $region33: #{forward.11} parent=31 // pred_check
        %p754 = pneg %p116
      $region34: #{forward.11} parent=31 // pred_check_branch
        %756 = sbr.rel (%p754) target = $region36
      $region35: #{forward.11} parent=31 // pred_region
        _
      $region36: #{forward.11} parent=31 // pred_fallthru
        _
    $region32: #{forward.11} parent=5 // pred_fallthru
      _
    %p757 = scmp.le.s32.totalorder 2, %s9
    // Predicated region
    $region37: #{forward.11} parent=5 // pred_check
      %p758 = pneg %p757
    $region38: #{forward.11} parent=5 // pred_check_branch
      %760 = sbr.rel (%p758) target = $region40
    $region39: #{forward.11} parent=5 // pred_region
      %s761 = ssub.s32 %s9, 2
      // Predicated region
      $region41: #{forward.11} parent=39 // pred_check
        %p762 = pneg %p122
      $region42: #{forward.11} parent=39 // pred_check_branch
        %764 = sbr.rel (%p762) target = $region44
      $region43: #{forward.11} parent=39 // pred_region
        %p765 = scmp.lt.s32.totalorder %s20, 3
        %s766 = scalar_select %p765, %s20, 3
        %p767 = scmp.lt.s32.totalorder %s21, 0
        %s768 = scalar_select %p767, %s21, 0
        %s769 = sadd.s32 %s768, %s766
        %s770 = smul.addr %s769, 4
        %s771 = scalar_lea.vmem %s3, %s770
      $region44: #{forward.11} parent=39 // pred_fallthru
        _
    $region40: #{forward.11} parent=5 // pred_fallthru
      _
  $region6: #{forward.11} parent=0 // loop_footer
    %s13 = sadd.s32 1, %s9
  $region7: #{forward.11} parent=0 // loop_footer_branch
    %8 = sbr.rel target = $region3
  $region8: #{forward.11} parent=0 // loop_exit
    _

// kernel: forward.12
$region0: #{forward.12}
  #allocation0 [shape = 'u32[]', space=smem, size = 0x4, offset = 0x4, fixed_abs, tag = 'smem constant byte address 0x4 - core index']
  #allocation1 [shape = 'u32[144,128]{1,0:T(1,128)}', space=vmem, size = 0x12000, scoped, tag = 'internal scratch']
  %s0 = inlined_call_operand.vmem [shape: bf16[32,576], index: 0, kind: input, shape index: {}]
  %s1 = inlined_call_operand.vmem [shape: bf16[576,128], index: 1, kind: input, shape index: {}]
  %s2 = inlined_call_operand.vmem [shape: f32[1,128], index: 2, kind: input, shape index: {}]
  %s3 = inlined_call_operand.vmem [shape: f32[4,32], index: 3, kind: input, shape index: {}]
  %s4 = inlined_call_operand.vmem [shape: f32[4,128], index: 4, kind: output, shape index: {}]
  %s5 = sld [smem:[#allocation0]]
  $region26: #{forward.12} parent=0
    _
  %s7 = ssub.s32 1, %s5
  %s8 = scalar_select 0, %s7, %s5
  // Predicated region
  $region2: #{forward.12} parent=0 // pred_check
    _
  $region3: #{forward.12} parent=0 // pred_check_branch
    %10 = sbr.rel (0) target = $region5
  $region4: #{forward.12} parent=0 // pred_region
    _
  $region5: #{forward.12} parent=0 // pred_fallthru
    _
  // Predicated region
  $region6: #{forward.12} parent=0 // pred_check
    _
  $region7: #{forward.12} parent=0 // pred_check_branch
    %12 = sbr.rel (0) target = $region9
  $region8: #{forward.12} parent=0 // pred_region
    _
  $region9: #{forward.12} parent=0 // pred_fallthru
    _
  // Predicated region
  $region10: #{forward.12} parent=0 // pred_check
    _
  $region11: #{forward.12} parent=0 // pred_check_branch
    %14 = sbr.rel (0) target = $region13
  $region12: #{forward.12} parent=0 // pred_region
    _
  $region13: #{forward.12} parent=0 // pred_fallthru
    _
  // Predicated region
  $region14: #{forward.12} parent=0 // pred_check
    _
  $region15: #{forward.12} parent=0 // pred_check_branch
    %16 = sbr.rel (0) target = $region17
  $region16: #{forward.12} parent=0 // pred_region
    _
  $region17: #{forward.12} parent=0 // pred_fallthru
    _
  %v18 = vld [vmem:[%s0] sm:$0xff]
  %v19 = vld [vmem:[%s0 + $0x8] sm:$0xff]
  %v20 = vld [vmem:[%s0 + $0x10] sm:$0xf]
  %v21 = vld [vmem:[%s0 + $0x14] sm:$0xff]
  %v22 = vld [vmem:[%s0 + $0x1c] sm:$0xff]
  %v23 = vld [vmem:[%s0 + $0x24] sm:$0xf]
  %v24 = vld [vmem:[%s0 + $0x28] sm:$0xff]
  %v25 = vld [vmem:[%s0 + $0x30] sm:$0xff]
  %v26 = vld [vmem:[%s0 + $0x38] sm:$0xf]
  %v27 = vld [vmem:[%s0 + $0x3c] sm:$0xff]
  %v28 = vld [vmem:[%s0 + $0x44] sm:$0xff]
  %v29 = vld [vmem:[%s0 + $0x4c] sm:$0xf]
  %v30 = vld [vmem:[%s1] sm:$0xf]
  %v31 = vld [vmem:[%s1 + $0x4] sm:$0xf]
  %v32 = vld [vmem:[%s1 + $0x8] sm:$0xf]
  %v33 = vld [vmem:[%s1 + $0xc] sm:$0xf]
  %v34 = vld [vmem:[%s1 + $0x10] sm:$0xf]
  %v35 = vld [vmem:[%s1 + $0x14] sm:$0xf]
  %v36 = vld [vmem:[%s1 + $0x18] sm:$0xf]
  %v37 = vld [vmem:[%s1 + $0x1c] sm:$0xf]
  %v38 = vld [vmem:[%s1 + $0x20] sm:$0xf]
  %v39 = vld [vmem:[%s1 + $0x24] sm:$0xf]
  %v40 = vld [vmem:[%s1 + $0x28] sm:$0xf]
  %v41 = vld [vmem:[%s1 + $0x2c] sm:$0xf]
  %v42 = vld [vmem:[%s1 + $0x30] sm:$0xf]
  %v43 = vld [vmem:[%s1 + $0x34] sm:$0xf]
  %v44 = vld [vmem:[%s1 + $0x38] sm:$0xf]
  %v45 = vld [vmem:[%s1 + $0x3c] sm:$0xf]
  %v46 = vld [vmem:[%s1 + $0x40] sm:$0xf]
  %v47 = vld [vmem:[%s1 + $0x44] sm:$0xf]
  %v48 = vld [vmem:[%s1 + $0x48] sm:$0xf]
  %v49 = vld [vmem:[%s1 + $0x4c] sm:$0xf]
  %v50 = vld [vmem:[%s1 + $0x50] sm:$0xf]
  %v51 = vld [vmem:[%s1 + $0x54] sm:$0xf]
  %v52 = vld [vmem:[%s1 + $0x58] sm:$0xf]
  %v53 = vld [vmem:[%s1 + $0x5c] sm:$0xf]
  %v54 = vld [vmem:[%s1 + $0x60] sm:$0xf]
  %v55 = vld [vmem:[%s1 + $0x64] sm:$0xf]
  %v56 = vld [vmem:[%s1 + $0x68] sm:$0xf]
  %v57 = vld [vmem:[%s1 + $0x6c] sm:$0xf]
  %v58 = vld [vmem:[%s1 + $0x70] sm:$0xf]
  %v59 = vld [vmem:[%s1 + $0x74] sm:$0xf]
  %v60 = vld [vmem:[%s1 + $0x78] sm:$0xf]
  %v61 = vld [vmem:[%s1 + $0x7c] sm:$0xf]
  %v62 = vld [vmem:[%s1 + $0x80] sm:$0xf]
  %v63 = vld [vmem:[%s1 + $0x84] sm:$0xf]
  %v64 = vld [vmem:[%s1 + $0x88] sm:$0xf]
  %v65 = vld [vmem:[%s1 + $0x8c] sm:$0xf]
  %v66 = vld [vmem:[%s1 + $0x90] sm:$0xf]
  %v67 = vld [vmem:[%s1 + $0x94] sm:$0xf]
  %v68 = vld [vmem:[%s1 + $0x98] sm:$0xf]
  %v69 = vld [vmem:[%s1 + $0x9c] sm:$0xf]
  %v70 = vld [vmem:[%s1 + $0xa0] sm:$0xf]
  %v71 = vld [vmem:[%s1 + $0xa4] sm:$0xf]
  %v72 = vld [vmem:[%s1 + $0xa8] sm:$0xf]
  %v73 = vld [vmem:[%s1 + $0xac] sm:$0xf]
  %v74 = vld [vmem:[%s1 + $0xb0] sm:$0xf]
  %v75 = vld [vmem:[%s1 + $0xb4] sm:$0xf]
  %v76 = vld [vmem:[%s1 + $0xb8] sm:$0xf]
  %v77 = vld [vmem:[%s1 + $0xbc] sm:$0xf]
  %v78 = vld [vmem:[%s1 + $0xc0] sm:$0xf]
  %v79 = vld [vmem:[%s1 + $0xc4] sm:$0xf]
  %v80 = vld [vmem:[%s1 + $0xc8] sm:$0xf]
  %v81 = vld [vmem:[%s1 + $0xcc] sm:$0xf]
  %v82 = vld [vmem:[%s1 + $0xd0] sm:$0xf]
  %v83 = vld [vmem:[%s1 + $0xd4] sm:$0xf]
  %v84 = vld [vmem:[%s1 + $0xd8] sm:$0xf]
  %v85 = vld [vmem:[%s1 + $0xdc] sm:$0xf]
  %v86 = vld [vmem:[%s1 + $0xe0] sm:$0xf]
  %v87 = vld [vmem:[%s1 + $0xe4] sm:$0xf]
  %v88 = vld [vmem:[%s1 + $0xe8] sm:$0xf]
  %v89 = vld [vmem:[%s1 + $0xec] sm:$0xf]
  %v90 = vld [vmem:[%s1 + $0xf0] sm:$0xf]
  %v91 = vld [vmem:[%s1 + $0xf4] sm:$0xf]
  %v92 = vld [vmem:[%s1 + $0xf8] sm:$0xf]
  %v93 = vld [vmem:[%s1 + $0xfc] sm:$0xf]
  %v94 = vld [vmem:[%s1 + $0x100] sm:$0xf]
  %v95 = vld [vmem:[%s1 + $0x104] sm:$0xf]
  %v96 = vld [vmem:[%s1 + $0x108] sm:$0xf]
  %v97 = vld [vmem:[%s1 + $0x10c] sm:$0xf]
  %v98 = vld [vmem:[%s1 + $0x110] sm:$0xf]
  %v99 = vld [vmem:[%s1 + $0x114] sm:$0xf]
  %v100 = vld [vmem:[%s1 + $0x118] sm:$0xf]
  %v101 = vld [vmem:[%s1 + $0x11c] sm:$0xf]
  %v102 = vld [vmem:[%s2] sm:$0x1]
  %v104 = vlaneseq
  %v105 = vshrl.u32 %v104, 7
  %v106 = vsub.s32 0, %v105
  %v107 = vrot.slane %v102, %v106
  %v121 = vunpack.c.l.b16 %v18
  %v122 = vunpack.c.h.b16 %v18
  %v123 = vunpack.c.l.b16 %v19
  %v124 = vunpack.c.h.b16 %v19
  %v125 = vunpack.c.l.b16 %v20
  %v126 = vunpack.c.l.b16 %v21
  %v127 = vunpack.c.h.b16 %v21
  %v128 = vunpack.c.l.b16 %v22
  %v129 = vunpack.c.h.b16 %v22
  %v130 = vunpack.c.l.b16 %v23
  %v131 = vunpack.c.l.b16 %v24
  %v132 = vunpack.c.h.b16 %v24
  %v133 = vunpack.c.l.b16 %v25
  %v134 = vunpack.c.h.b16 %v25
  %v135 = vunpack.c.l.b16 %v26
  %v136 = vunpack.c.l.b16 %v27
  %v137 = vunpack.c.h.b16 %v27
  %v138 = vunpack.c.l.b16 %v28
  %v139 = vunpack.c.h.b16 %v28
  %v140 = vunpack.c.l.b16 %v29
  %v141 = vpack.c.b16 %v126, %v121
  %v142 = vpack.c.b16 %v127, %v122
  %v143 = vpack.c.b16 %v128, %v123
  %v144 = vpack.c.b16 %v129, %v124
  %v145 = vpack.c.b16 %v130, %v125
  %v146 = vpack.c.b16 %v136, %v131
  %v147 = vpack.c.b16 %v137, %v132
  %v148 = vpack.c.b16 %v138, %v133
  %v149 = vpack.c.b16 %v139, %v134
  %v150 = vpack.c.b16 %v140, %v135
  %v231 = vunpack.c.l.b16 %v30
  %v232 = vunpack.c.l.b16 %v31
  %v233 = vunpack.c.l.b16 %v32
  %v234 = vunpack.c.l.b16 %v33
  %v235 = vunpack.c.l.b16 %v34
  %v236 = vunpack.c.l.b16 %v35
  %v237 = vunpack.c.l.b16 %v36
  %v238 = vunpack.c.l.b16 %v37
  %v239 = vunpack.c.l.b16 %v38
  %v240 = vunpack.c.l.b16 %v39
  %v241 = vunpack.c.l.b16 %v40
  %v242 = vunpack.c.l.b16 %v41
  %v243 = vunpack.c.l.b16 %v42
  %v244 = vunpack.c.l.b16 %v43
  %v245 = vunpack.c.l.b16 %v44
  %v246 = vunpack.c.l.b16 %v45
  %v247 = vunpack.c.l.b16 %v46
  %v248 = vunpack.c.l.b16 %v47
  %v249 = vunpack.c.l.b16 %v48
  %v250 = vunpack.c.l.b16 %v49
  %v251 = vunpack.c.l.b16 %v50
  %v252 = vunpack.c.l.b16 %v51
  %v253 = vunpack.c.l.b16 %v52
  %v254 = vunpack.c.l.b16 %v53
  %v255 = vunpack.c.l.b16 %v54
  %v256 = vunpack.c.l.b16 %v55
  %v257 = vunpack.c.l.b16 %v56
  %v258 = vunpack.c.l.b16 %v57
  %v259 = vunpack.c.l.b16 %v58
  %v260 = vunpack.c.l.b16 %v59
  %v261 = vunpack.c.l.b16 %v60
  %v262 = vunpack.c.l.b16 %v61
  %v263 = vunpack.c.l.b16 %v62
  %v264 = vunpack.c.l.b16 %v63
  %v265 = vunpack.c.l.b16 %v64
  %v266 = vunpack.c.l.b16 %v65
  %v267 = vunpack.c.l.b16 %v66
  %v268 = vunpack.c.l.b16 %v67
  %v269 = vunpack.c.l.b16 %v68
  %v270 = vunpack.c.l.b16 %v69
  %v271 = vunpack.c.l.b16 %v70
  %v272 = vunpack.c.l.b16 %v71
  %v273 = vunpack.c.l.b16 %v72
  %v274 = vunpack.c.l.b16 %v73
  %v275 = vunpack.c.l.b16 %v74
  %v276 = vunpack.c.l.b16 %v75
  %v277 = vunpack.c.l.b16 %v76
  %v278 = vunpack.c.l.b16 %v77
  %v279 = vunpack.c.l.b16 %v78
  %v280 = vunpack.c.l.b16 %v79
  %v281 = vunpack.c.l.b16 %v80
  %v282 = vunpack.c.l.b16 %v81
  %v283 = vunpack.c.l.b16 %v82
  %v284 = vunpack.c.l.b16 %v83
  %v285 = vunpack.c.l.b16 %v84
  %v286 = vunpack.c.l.b16 %v85
  %v287 = vunpack.c.l.b16 %v86
  %v288 = vunpack.c.l.b16 %v87
  %v289 = vunpack.c.l.b16 %v88
  %v290 = vunpack.c.l.b16 %v89
  %v291 = vunpack.c.l.b16 %v90
  %v292 = vunpack.c.l.b16 %v91
  %v293 = vunpack.c.l.b16 %v92
  %v294 = vunpack.c.l.b16 %v93
  %v295 = vunpack.c.l.b16 %v94
  %v296 = vunpack.c.l.b16 %v95
  %v297 = vunpack.c.l.b16 %v96
  %v298 = vunpack.c.l.b16 %v97
  %v299 = vunpack.c.l.b16 %v98
  %v300 = vunpack.c.l.b16 %v99
  %v301 = vunpack.c.l.b16 %v100
  %v302 = vunpack.c.l.b16 %v101
  %v303 = vpack.c.b16 %v232, %v231
  %v304 = vpack.c.b16 %v234, %v233
  %v305 = vpack.c.b16 %v236, %v235
  %v306 = vpack.c.b16 %v238, %v237
  %v307 = vpack.c.b16 %v240, %v239
  %v308 = vpack.c.b16 %v242, %v241
  %v309 = vpack.c.b16 %v244, %v243
  %v310 = vpack.c.b16 %v246, %v245
  %v311 = vpack.c.b16 %v248, %v247
  %v312 = vpack.c.b16 %v250, %v249
  %v313 = vpack.c.b16 %v252, %v251
  %v314 = vpack.c.b16 %v254, %v253
  %v315 = vpack.c.b16 %v256, %v255
  %v316 = vpack.c.b16 %v258, %v257
  %v317 = vpack.c.b16 %v260, %v259
  %v318 = vpack.c.b16 %v262, %v261
  %v319 = vpack.c.b16 %v264, %v263
  %v320 = vpack.c.b16 %v266, %v265
  %v321 = vpack.c.b16 %v268, %v267
  %v322 = vpack.c.b16 %v270, %v269
  %v323 = vpack.c.b16 %v272, %v271
  %v324 = vpack.c.b16 %v274, %v273
  %v325 = vpack.c.b16 %v276, %v275
  %v326 = vpack.c.b16 %v278, %v277
  %v327 = vpack.c.b16 %v280, %v279
  %v328 = vpack.c.b16 %v282, %v281
  %v329 = vpack.c.b16 %v284, %v283
  %v330 = vpack.c.b16 %v286, %v285
  %v331 = vpack.c.b16 %v288, %v287
  %v332 = vpack.c.b16 %v290, %v289
  %v333 = vpack.c.b16 %v292, %v291
  %v334 = vpack.c.b16 %v294, %v293
  %v335 = vpack.c.b16 %v296, %v295
  %v336 = vpack.c.b16 %v298, %v297
  %v337 = vpack.c.b16 %v300, %v299
  %v338 = vpack.c.b16 %v302, %v301
  %vm375 = vcmask 523264
  %v377 = vsel %vm375, %v145, 0
  %v380 = vsel %vm375, %v150, 0
  %382 = vmatprep.subr.bf16.mxu0 0
  %383 = vmatpush1.bf16.msra.mxu0 %v303
  %384 = vmatprep.subr.bf16.mxu0 0
  %385 = vmatpush1.bf16.msra.mxu0 %v304
  %386 = vmatprep.subr.bf16.mxu0 0
  %387 = vmatpush1.bf16.msra.mxu0 %v305
  %388 = vmatprep.subr.bf16.mxu0 0
  %389 = vmatpush1.bf16.msra.mxu0 %v306
  %390 = vmatprep.subr.bf16.mxu0 0
  %391 = vmatpush1.bf16.msra.mxu0 %v307
  %392 = vmatprep.subr.bf16.mxu0 0
  %393 = vmatpush1.bf16.msra.mxu0 %v308
  %394 = vmatprep.subr.bf16.mxu0 0
  %395 = vmatpush1.bf16.msra.mxu0 %v309
  %396 = vmatprep.subr.bf16.mxu0 0
  %397 = vmatpush1.bf16.msra.mxu0 %v310
  %398 = vmatprep.subr.bf16.mxu0 0
  %399 = vmatpush1.bf16.msra.mxu0 %v311
  %400 = vmatprep.subr.bf16.mxu0 0
  %401 = vmatpush1.bf16.msra.mxu0 %v312
  %402 = vmatprep.subr.bf16.mxu0 0
  %403 = vmatpush1.bf16.msra.mxu0 %v313
  %404 = vmatprep.subr.bf16.mxu0 0
  %405 = vmatpush1.bf16.msra.mxu0 %v314
  %406 = vmatprep.subr.bf16.mxu0 0
  %407 = vmatpush1.bf16.msra.mxu0 %v315
  %408 = vmatprep.subr.bf16.mxu0 0
  %409 = vmatpush1.bf16.msra.mxu0 %v316
  %410 = vmatprep.subr.bf16.mxu0 0
  %411 = vmatpush1.bf16.msra.mxu0 %v317
  %412 = vmatprep.subr.bf16.mxu0 0
  %413 = vmatpush1.bf16.msra.mxu0 %v318
  %414 = vmatprep.mubr.bf16.mxu0 %v142
  %415 = vmatmul.mubr.bf16.gmra.mrb[0].mxu0 %v141
  %v416 = vpop.f32.mrb[0].mxu0
  %v417 = vadd.f32 %v107, %v416
  %v418 = vpop.f32.mrb[0].mxu0
  %v419 = vpop.f32.mrb[0].mxu0
  %v420 = vadd.f32 %v107, %v419
  %v421 = vpop.f32.mrb[0].mxu0
  %422 = vmatprep.mubr.bf16.mxu0 %v147
  %423 = vmatmul.mubr.bf16.gmra.mrb[0].mxu0 %v146
  %v424 = vpop.f32.mrb[0].mxu0
  %v425 = vadd.f32 %v107, %v424
  %v426 = vpop.f32.mrb[0].mxu0
  %v427 = vpop.f32.mrb[0].mxu0
  %v428 = vadd.f32 %v107, %v427
  %v429 = vpop.f32.mrb[0].mxu0
  %430 = vdwg.mxu0
  %431 = vmatprep.subr.bf16.mxu0 0
  %432 = vmatpush1.bf16.msra.mxu0 %v319
  %433 = vmatprep.subr.bf16.mxu0 0
  %434 = vmatpush1.bf16.msra.mxu0 %v320
  %435 = vmatprep.subr.bf16.mxu0 0
  %436 = vmatpush1.bf16.msra.mxu0 %v321
  %437 = vmatprep.subr.bf16.mxu0 0
  %438 = vmatpush1.bf16.msra.mxu0 %v322
  %439 = vmatprep.subr.bf16.mxu0 0
  %440 = vmatpush1.bf16.msra.mxu0 %v323
  %441 = vmatprep.subr.bf16.mxu0 0
  %442 = vmatpush1.bf16.msra.mxu0 %v324
  %443 = vmatprep.subr.bf16.mxu0 0
  %444 = vmatpush1.bf16.msra.mxu0 %v325
  %445 = vmatprep.subr.bf16.mxu0 0
  %446 = vmatpush1.bf16.msra.mxu0 %v326
  %447 = vmatprep.subr.bf16.mxu0 0
  %448 = vmatpush1.bf16.msra.mxu0 %v327
  %449 = vmatprep.subr.bf16.mxu0 0
  %450 = vmatpush1.bf16.msra.mxu0 %v328
  %451 = vmatprep.subr.bf16.mxu0 0
  %452 = vmatpush1.bf16.msra.mxu0 %v329
  %453 = vmatprep.subr.bf16.mxu0 0
  %454 = vmatpush1.bf16.msra.mxu0 %v330
  %455 = vmatprep.subr.bf16.mxu0 0
  %456 = vmatpush1.bf16.msra.mxu0 %v331
  %457 = vmatprep.subr.bf16.mxu0 0
  %458 = vmatpush1.bf16.msra.mxu0 %v332
  %459 = vmatprep.subr.bf16.mxu0 0
  %460 = vmatpush1.bf16.msra.mxu0 %v333
  %461 = vmatprep.subr.bf16.mxu0 0
  %462 = vmatpush1.bf16.msra.mxu0 %v334
  %463 = vmatprep.mubr.bf16.mxu0 %v144
  %464 = vmatmul.mubr.bf16.gmra.mrb[0].mxu0 %v143
  %v465 = vpop.f32.mrb[0].mxu0
  %v466 = vadd.f32 %v417, %v465
  %v467 = vpop.f32.mrb[0].mxu0
  %v468 = vpop.f32.mrb[0].mxu0
  %v469 = vadd.f32 %v420, %v468
  %v470 = vpop.f32.mrb[0].mxu0
  %471 = vmatprep.mubr.bf16.mxu0 %v149
  %472 = vmatmul.mubr.bf16.gmra.mrb[0].mxu0 %v148
  %v473 = vpop.f32.mrb[0].mxu0
  %v474 = vadd.f32 %v425, %v473
  %v475 = vpop.f32.mrb[0].mxu0
  %v476 = vpop.f32.mrb[0].mxu0
  %v477 = vadd.f32 %v428, %v476
  %v478 = vpop.f32.mrb[0].mxu0
  %479 = vdwg.mxu0
  %480 = vmatprep.subr.bf16.mxu0 0
  %481 = vmatpush1.bf16.msra.mxu0 %v335
  %482 = vmatprep.subr.bf16.mxu0 0
  %483 = vmatpush1.bf16.msra.mxu0 %v336
  %484 = vmatprep.subr.bf16.mxu0 0
  %485 = vmatpush1.bf16.msra.mxu0 %v337
  %486 = vmatprep.subr.bf16.mxu0 0
  %487 = vmatpush1.bf16.msra.mxu0 %v338
  %488 = vmatprep.subr.bf16.mxu0 0
  %489 = vmatpush1.bf16.msra.mxu0 0
  %490 = vmatprep.subr.bf16.mxu0 0
  %491 = vmatpush1.bf16.msra.mxu0 0
  %492 = vmatprep.subr.bf16.mxu0 0
  %493 = vmatpush1.bf16.msra.mxu0 0
  %494 = vmatprep.subr.bf16.mxu0 0
  %495 = vmatpush1.bf16.msra.mxu0 0
  %496 = vmatprep.subr.bf16.mxu0 0
  %497 = vmatpush1.bf16.msra.mxu0 0
  %498 = vmatprep.subr.bf16.mxu0 0
  %499 = vmatpush1.bf16.msra.mxu0 0
  %500 = vmatprep.subr.bf16.mxu0 0
  %501 = vmatpush1.bf16.msra.mxu0 0
  %502 = vmatprep.subr.bf16.mxu0 0
  %503 = vmatpush1.bf16.msra.mxu0 0
  %504 = vmatprep.subr.bf16.mxu0 0
  %505 = vmatpush1.bf16.msra.mxu0 0
  %506 = vmatprep.subr.bf16.mxu0 0
  %507 = vmatpush1.bf16.msra.mxu0 0
  %508 = vmatprep.subr.bf16.mxu0 0
  %509 = vmatpush1.bf16.msra.mxu0 0
  %510 = vmatprep.subr.bf16.mxu0 0
  %511 = vmatpush1.bf16.msra.mxu0 0
  %512 = vmatprep.mubr.bf16.mxu0 0
  %513 = vmatmul.mubr.bf16.gmra.mrb[0].mxu0 %v377
  %v514 = vpop.f32.mrb[0].mxu0
  %v515 = vadd.f32 %v466, %v514
  %v516 = vpop.f32.mrb[0].mxu0
  %v517 = vpop.f32.mrb[0].mxu0
  %v518 = vadd.f32 %v469, %v517
  %v519 = vpop.f32.mrb[0].mxu0
  %520 = vmatprep.mubr.bf16.mxu0 0
  %521 = vmatmul.mubr.bf16.gmra.mrb[0].mxu0 %v380
  %v522 = vpop.f32.mrb[0].mxu0
  %v523 = vadd.f32 %v474, %v522
  %v524 = vpop.f32.mrb[0].mxu0
  %v525 = vpop.f32.mrb[0].mxu0
  %v526 = vadd.f32 %v477, %v525
  %v527 = vpop.f32.mrb[0].mxu0
  %528 = vdwg.mxu0
  %v529 = vmax.f32 %v515, 0.0
  %v530 = vmax.f32 %v518, 0.0
  %v531 = vmax.f32 %v523, 0.0
  %v532 = vmax.f32 %v526, 0.0
  %v533 = vld [vmem:[%s3] sm:$0xf]
  %vm534 = vcmask 261120
  %v536 = vsel %vm534, %v533, 0
  %538 = vmatprep.subr.mxu0 0.0
  %539 = vmatpush1.msra.mxu0 %v529
  %540 = vmatprep.subr.mxu0 0.0
  %541 = vmatpush1.msra.mxu0 %v530
  %542 = vmatprep.subr.mxu0 0.0
  %543 = vmatpush1.msra.mxu0 %v531
  %544 = vmatprep.subr.mxu0 0.0
  %545 = vmatpush1.msra.mxu0 %v532
  %546 = vmatprep.subr.mxu0 0.0
  %547 = vmatpush1.msra.mxu0 0.0
  %548 = vmatprep.subr.mxu0 0.0
  %549 = vmatpush1.msra.mxu0 0.0
  %550 = vmatprep.subr.mxu0 0.0
  %551 = vmatpush1.msra.mxu0 0.0
  %552 = vmatprep.subr.mxu0 0.0
  %553 = vmatpush1.msra.mxu0 0.0
  %554 = vmatprep.subr.mxu0 0.0
  %555 = vmatpush1.msra.mxu0 0.0
  %556 = vmatprep.subr.mxu0 0.0
  %557 = vmatpush1.msra.mxu0 0.0
  %558 = vmatprep.subr.mxu0 0.0
  %559 = vmatpush1.msra.mxu0 0.0
  %560 = vmatprep.subr.mxu0 0.0
  %561 = vmatpush1.msra.mxu0 0.0
  %562 = vmatprep.subr.mxu0 0.0
  %563 = vmatpush1.msra.mxu0 0.0
  %564 = vmatprep.subr.mxu0 0.0
  %565 = vmatpush1.msra.mxu0 0.0
  %566 = vmatprep.subr.mxu0 0.0
  %567 = vmatpush1.msra.mxu0 0.0
  %568 = vmatprep.subr.mxu0 0.0
  %569 = vmatpush1.msra.mxu0 0.0
  %570 = vmatprep.subr.mxu0 0.0
  %571 = vmatpush1.msra.mxu0 0.0
  %572 = vmatprep.subr.mxu0 0.0
  %573 = vmatpush1.msra.mxu0 0.0
  %574 = vmatprep.subr.mxu0 0.0
  %575 = vmatpush1.msra.mxu0 0.0
  %576 = vmatprep.subr.mxu0 0.0
  %577 = vmatpush1.msra.mxu0 0.0
  %578 = vmatprep.subr.mxu0 0.0
  %579 = vmatpush1.msra.mxu0 0.0
  %580 = vmatprep.subr.mxu0 0.0
  %581 = vmatpush1.msra.mxu0 0.0
  %582 = vmatprep.subr.mxu0 0.0
  %583 = vmatpush1.msra.mxu0 0.0
  %584 = vmatprep.subr.mxu0 0.0
  %585 = vmatpush1.msra.mxu0 0.0
  %586 = vmatprep.subr.mxu0 0.0
  %587 = vmatpush1.msra.mxu0 0.0
  %588 = vmatprep.subr.mxu0 0.0
  %589 = vmatpush1.msra.mxu0 0.0
  %590 = vmatprep.subr.mxu0 0.0
  %591 = vmatpush1.msra.mxu0 0.0
  %592 = vmatprep.subr.mxu0 0.0
  %593 = vmatpush1.msra.mxu0 0.0
  %594 = vmatprep.subr.mxu0 0.0
  %595 = vmatpush1.msra.mxu0 0.0
  %596 = vmatprep.subr.mxu0 0.0
  %597 = vmatpush1.msra.mxu0 0.0
  %598 = vmatprep.subr.mxu0 0.0
  %599 = vmatpush1.msra.mxu0 0.0
  %600 = vmatprep.subr.mxu0 0.0
  %601 = vmatpush1.msra.mxu0 0.0
  %602 = vmatprep.mubr.f32.mxu0 0.0
  %603 = vmatmul.mubr.f32.gmra.mrb[0].mxu0 %v536
  %v604 = vpop.f32.mrb[0].mxu0
  %v605 = vadd.f32 0.0, %v604
  %v606 = vpop.f32.mrb[0].mxu0
  %607 = vdwg.mxu0
  %608 = vst [vmem:[%s4] sm:$0xf] %v605
  // Predicated region
  $region18: #{forward.12} parent=0 // pred_check
    _
  $region19: #{forward.12} parent=0 // pred_check_branch
    %610 = sbr.rel (0) target = $region21
  $region20: #{forward.12} parent=0 // pred_region
    _
  $region21: #{forward.12} parent=0 // pred_fallthru
    _
  // Predicated region
  $region22: #{forward.12} parent=0 // pred_check
    _
  $region23: #{forward.12} parent=0 // pred_check_branch
    %612 = sbr.rel (0) target = $region25
  $region24: #{forward.12} parent=0 // pred_region
    _
  $region25: #{forward.12} parent=0 // pred_fallthru
    _

// kernel: forward.13
$region0: #{forward.13}
  #allocation0 [shape = 'u32[]', space=smem, size = 0x4, offset = 0x4, fixed_abs, tag = 'smem constant byte address 0x4 - core index']
  #allocation1 [shape = 'u32[144,128]{1,0:T(1,128)}', space=vmem, size = 0x12000, scoped, tag = 'internal scratch']
  %s0 = inlined_call_operand.vmem [shape: bf16[2,4,128,16], index: 0, kind: input, shape index: {}]
  %s1 = inlined_call_operand.vmem [shape: bf16[16,16], index: 1, kind: input, shape index: {}]
  %s2 = inlined_call_operand.vmem [shape: f32[1,16], index: 2, kind: input, shape index: {}]
  %s3 = inlined_call_operand.vmem [shape: bf16[2,128,16], index: 3, kind: output, shape index: {}]
  %s4 = sld [smem:[#allocation0]]
  $region45: #{forward.13} parent=0
    _
  %s6 = ssub.s32 1, %s4
  %s7 = scalar_select 0, %s6, %s4
  loop: start=0, step=1, limit=4
  $region2: #{forward.13} parent=0 // loop_pre_header
    _
  $region3: #{forward.13} parent=0 // loop_header
    %s9 = sphi 0, %s13
    %p10 = scmp.ge.s32.totalorder %s9, 4
    %s16 = sphi 0, %s28
    %s17 = sphi 0, %s24
    %s18 = sphi 0, %s16
    %s19 = sphi 0, %s17
    %s20 = sphi 0, %s18
    %s21 = sphi 0, %s19
    %s33 = sphi 0, %s35
    %s36 = sphi 0, %s33
    %s37 = sphi 0, %s36
    %s53 = sphi 0, %s37
    %s57 = sphi 0, %s57
    %s59 = sphi 0, %s57
    %s60 = sphi 0, %s59
    %s74 = sphi 0, %s60
    %s78 = sphi 0, %s78
    %s80 = sphi 0, %s78
    %s81 = sphi 0, %s80
    %s95 = sphi 0, %s81
    %s103 = sphi 0, %s105
    %s106 = sphi 0, %s103
    %s107 = sphi 0, %s106
    %s123 = sphi 0, %s107
  $region4: #{forward.13} parent=0 // loop_header_branch
    %12 = sbr.rel (%p10) target = $region8
  $region5: #{forward.13} parent=0 // loop_body
    %s14 = ssub.s32 %s9, 1
    %s15 = ssub.s32 %s9, 2
    %s22 = sadd.s32 1, %s17
    %p23 = scmp.ge.s32.totalorder %s22, 1
    %s24 = scalar_select %p23, 0, %s22
    %s25 = sadd.s32 1, %s16
    %s26 = scalar_select %p23, %s25, %s16
    %p27 = scmp.ge.s32.totalorder %s26, 2
    %s28 = scalar_select %p27, 0, %s26
    %s29 = ssub.s32 %s16, %s28
    %s30 = ssub.s32 %s17, %s24
    %s31 = sor.u32 %s29, %s30
    %p32 = scmp.eq.s32.totalorder %s31, 0
    %s34 = sadd.s32 %s33, 1
    %s35 = scalar_select %p32, %s33, %s34
    %p38 = pneg %p32
    %p39 = scmp.eq.s32.totalorder %s9, 1
    %p40 = por %p38, %p39
    %p41 = scmp.ne.s32.totalorder %s33, %s36
    %p42 = scmp.eq.s32.totalorder %s9, 0
    %p43 = por %p41, %p42
    %p44 = scmp.ne.s32.totalorder %s33, %s36
    %p45 = scmp.eq.s32.totalorder %s14, 1
    %p46 = por %p44, %p45
    %p47 = scmp.ne.s32.totalorder %s36, %s37
    %p48 = scmp.eq.s32.totalorder %s14, 0
    %p49 = por %p47, %p48
    %p50 = scmp.ne.s32.totalorder %s36, %s37
    %p51 = scmp.eq.s32.totalorder %s15, 1
    %p52 = por %p50, %p51
    %p54 = scmp.ne.s32.totalorder %s37, %s53
    %p55 = scmp.eq.s32.totalorder %s15, 0
    %p56 = por %p54, %p55
    %s58 = sadd.s32 %s57, 1
    %p61 = scmp.eq.s32.totalorder %s9, 1
    %p62 = scmp.ne.s32.totalorder %s57, %s59
    %p63 = scmp.eq.s32.totalorder %s9, 0
    %p64 = por %p62, %p63
    %p65 = scmp.ne.s32.totalorder %s57, %s59
    %p66 = scmp.eq.s32.totalorder %s14, 1
    %p67 = por %p65, %p66
    %p68 = scmp.ne.s32.totalorder %s59, %s60
    %p69 = scmp.eq.s32.totalorder %s14, 0
    %p70 = por %p68, %p69
    %p71 = scmp.ne.s32.totalorder %s59, %s60
    %p72 = scmp.eq.s32.totalorder %s15, 1
    %p73 = por %p71, %p72
    %p75 = scmp.ne.s32.totalorder %s60, %s74
    %p76 = scmp.eq.s32.totalorder %s15, 0
    %p77 = por %p75, %p76
    %s79 = sadd.s32 %s78, 1
    %p82 = scmp.eq.s32.totalorder %s9, 1
    %p83 = scmp.ne.s32.totalorder %s78, %s80
    %p84 = scmp.eq.s32.totalorder %s9, 0
    %p85 = por %p83, %p84
    %p86 = scmp.ne.s32.totalorder %s78, %s80
    %p87 = scmp.eq.s32.totalorder %s14, 1
    %p88 = por %p86, %p87
    %p89 = scmp.ne.s32.totalorder %s80, %s81
    %p90 = scmp.eq.s32.totalorder %s14, 0
    %p91 = por %p89, %p90
    %p92 = scmp.ne.s32.totalorder %s80, %s81
    %p93 = scmp.eq.s32.totalorder %s15, 1
    %p94 = por %p92, %p93
    %p96 = scmp.ne.s32.totalorder %s81, %s95
    %p97 = scmp.eq.s32.totalorder %s15, 0
    %p98 = por %p96, %p97
    %s99 = ssub.s32 %s16, %s28
    %s100 = ssub.s32 %s17, %s24
    %s101 = sor.u32 %s99, %s100
    %p102 = scmp.eq.s32.totalorder %s101, 0
    %s104 = sadd.s32 %s103, 1
    %s105 = scalar_select %p102, %s103, %s104
    %p108 = pneg %p102
    %p109 = scmp.eq.s32.totalorder %s9, 1
    %p110 = por %p108, %p109
    %p111 = scmp.ne.s32.totalorder %s103, %s106
    %p112 = scmp.eq.s32.totalorder %s9, 0
    %p113 = por %p111, %p112
    %p114 = scmp.ne.s32.totalorder %s103, %s106
    %p115 = scmp.eq.s32.totalorder %s14, 1
    %p116 = por %p114, %p115
    %p117 = scmp.ne.s32.totalorder %s106, %s107
    %p118 = scmp.eq.s32.totalorder %s14, 0
    %p119 = por %p117, %p118
    %p120 = scmp.ne.s32.totalorder %s106, %s107
    %p121 = scmp.eq.s32.totalorder %s15, 1
    %p122 = por %p120, %p121
    %p124 = scmp.ne.s32.totalorder %s107, %s123
    %p125 = scmp.eq.s32.totalorder %s15, 0
    %p126 = por %p124, %p125
    %p127 = scmp.le.s32.totalorder 1, %s9
    %p128 = scmp.lt.s32.totalorder %s9, 3
    %p129 = pnand %p127, %p128
    %p130 = pneg %p129
    // Predicated region
    $region9: #{forward.13} parent=5 // pred_check
      _
    $region10: #{forward.13} parent=5 // pred_check_branch
      %132 = sbr.rel (%p129) target = $region12
    $region11: #{forward.13} parent=5 // pred_region
      %s133 = ssub.s32 %s9, 1
      // Predicated region
      $region13: #{forward.13} parent=11 // pred_check
        %p134 = pneg %p70
      $region14: #{forward.13} parent=11 // pred_check_branch
        %136 = sbr.rel (%p134) target = $region16
      $region15: #{forward.13} parent=11 // pred_region
        _
      $region16: #{forward.13} parent=11 // pred_fallthru
        _
      // Predicated region
      $region17: #{forward.13} parent=11 // pred_check
        %p137 = pneg %p91
      $region18: #{forward.13} parent=11 // pred_check_branch
        %139 = sbr.rel (%p137) target = $region20
      $region19: #{forward.13} parent=11 // pred_region
        _
      $region20: #{forward.13} parent=11 // pred_fallthru
        _
    $region12: #{forward.13} parent=5 // pred_fallthru
      _
    %p140 = scmp.lt.s32.totalorder %s9, 2
    // Predicated region
    $region21: #{forward.13} parent=5 // pred_check
      %p141 = pneg %p140
    $region22: #{forward.13} parent=5 // pred_check_branch
      %143 = sbr.rel (%p141) target = $region24
    $region23: #{forward.13} parent=5 // pred_region
      // Predicated region
      $region25: #{forward.13} parent=23 // pred_check
        %p144 = pneg %p43
      $region26: #{forward.13} parent=23 // pred_check_branch
        %146 = sbr.rel (%p144) target = $region28
      $region27: #{forward.13} parent=23 // pred_region
        %s147 = smul.u32 16, %s17
        %p148 = scmp.lt.s32.totalorder %s16, 1
        %s149 = scalar_select %p148, %s16, 1
        %p150 = scmp.lt.s32.totalorder %s147, 15
        %s151 = scalar_select %p150, %s147, 15
        %s152 = smul.addr %s149, 64
        %s153 = sadd.s32 %s151, %s152
        %s154 = smul.addr %s153, 4
        %s155 = scalar_lea.vmem %s0, %s154
        %s156 = smul.u32 16, %s17
      $region28: #{forward.13} parent=23 // pred_fallthru
        _
    $region24: #{forward.13} parent=5 // pred_fallthru
      _
    %p157 = scmp.le.s32.totalorder 1, %s9
    %p158 = scmp.lt.s32.totalorder %s9, 3
    %p159 = pnand %p157, %p158
    %p160 = pneg %p159
    // Predicated region
    $region29: #{forward.13} parent=5 // pred_check
      _
    $region30: #{forward.13} parent=5 // pred_check_branch
      %162 = sbr.rel (%p159) target = $region32
    $region31: #{forward.13} parent=5 // pred_region
      %s163 = ssub.s32 %s9, 1
      %s164 = smul.u32 16, %s19
      %p165 = scmp.lt.s32.totalorder %s18, 1
      %s166 = scalar_select %p165, %s18, 1
      %p167 = scmp.lt.s32.totalorder %s164, 15
      %s168 = scalar_select %p167, %s164, 15
      %s169 = smul.addr %s166, 64
      %s170 = sadd.s32 %s168, %s169
      %s171 = smul.addr %s170, 4
      %s172 = scalar_lea.vmem %s0, %s171
      %p173 = pneg %p49
      %p174 = pneg %p46
      %p175 = pneg %p70
      %p176 = pneg %p67
      %p177 = pneg %p91
      %p178 = pneg %p88
      %p179 = pneg %p119
      %p180 = pneg %p116
      %s181 = smul.u32 16, %s19
      %p182 = scmp.lt.s32.totalorder %s18, 1
      %s183 = scalar_select %p182, %s18, 1
      %p184 = scmp.lt.s32.totalorder %s181, 15
      %s185 = scalar_select %p184, %s181, 15
      %s186 = smul.addr %s183, 16
      %s187 = sadd.s32 %s185, %s186
      %s188 = smul.addr %s187, 4
      %s189 = scalar_lea.vmem %s3, %s188
      %s190 = smul.u32 16, %s19
      %p191 = scmp.lt.s32.totalorder %s18, 1
      %s192 = scalar_select %p191, %s18, 1
      %p193 = scmp.lt.s32.totalorder %s190, 15
      %s194 = scalar_select %p193, %s190, 15
      %s195 = smul.addr %s192, 64
      %s196 = sadd.s32 %s194, %s195
      %s197 = smul.addr %s196, 4
      %s198 = scalar_lea.vmem %s0, %s197
      %s199 = smul.u32 16, %s19
      %s200 = smul.u32 16, %s19
      %p201 = scmp.lt.s32.totalorder %s18, 1
      %s202 = scalar_select %p201, %s18, 1
      %p203 = scmp.lt.s32.totalorder %s200, 15
      %s204 = scalar_select %p203, %s200, 15
      %s205 = smul.addr %s202, 16
      %s206 = sadd.s32 %s204, %s205
      %s207 = smul.addr %s206, 4
      %s208 = scalar_lea.vmem %s3, %s207
      %s209 = smul.u32 16, %s19
      %v211 = vld [vmem:[%s1] sm:$0xf]
      %v212 = vld [vmem:[%s1 + $0x4] sm:$0xf]
      %v213 = vld [vmem:[%s198] sm:$0xf]
      %v214 = vld [vmem:[%s198 + $0x4] sm:$0xf]
      %v215 = vld [vmem:[%s198 + $0x8] sm:$0xf]
      %v216 = vld [vmem:[%s198 + $0xc] sm:$0xf]
      %v217 = vld [vmem:[%s198 + $0x10] sm:$0xf]
      %v218 = vld [vmem:[%s198 + $0x14] sm:$0xf]
      %v219 = vld [vmem:[%s198 + $0x18] sm:$0xf]
      %v220 = vld [vmem:[%s198 + $0x1c] sm:$0xf]
      %v221 = vld [vmem:[%s198 + $0x20] sm:$0xf]
      %v222 = vld [vmem:[%s198 + $0x24] sm:$0xf]
      %v223 = vld [vmem:[%s198 + $0x28] sm:$0xf]
      %v224 = vld [vmem:[%s198 + $0x2c] sm:$0xf]
      %v225 = vld [vmem:[%s198 + $0x30] sm:$0xf]
      %v226 = vld [vmem:[%s198 + $0x34] sm:$0xf]
      %v227 = vld [vmem:[%s198 + $0x38] sm:$0xf]
      %v228 = vld [vmem:[%s198 + $0x3c] sm:$0xf]
      %v229 = vld [vmem:[%s198 + $0x40] sm:$0xf]
      %v230 = vld [vmem:[%s198 + $0x44] sm:$0xf]
      %v231 = vld [vmem:[%s198 + $0x48] sm:$0xf]
      %v232 = vld [vmem:[%s198 + $0x4c] sm:$0xf]
      %v233 = vld [vmem:[%s198 + $0x50] sm:$0xf]
      %v234 = vld [vmem:[%s198 + $0x54] sm:$0xf]
      %v235 = vld [vmem:[%s198 + $0x58] sm:$0xf]
      %v236 = vld [vmem:[%s198 + $0x5c] sm:$0xf]
      %v237 = vld [vmem:[%s198 + $0x60] sm:$0xf]
      %v238 = vld [vmem:[%s198 + $0x64] sm:$0xf]
      %v239 = vld [vmem:[%s198 + $0x68] sm:$0xf]
      %v240 = vld [vmem:[%s198 + $0x6c] sm:$0xf]
      %v241 = vld [vmem:[%s198 + $0x70] sm:$0xf]
      %v242 = vld [vmem:[%s198 + $0x74] sm:$0xf]
      %v243 = vld [vmem:[%s198 + $0x78] sm:$0xf]
      %v244 = vld [vmem:[%s198 + $0x7c] sm:$0xf]
      %v245 = vld [vmem:[%s198 + $0x80] sm:$0xf]
      %v246 = vld [vmem:[%s198 + $0x84] sm:$0xf]
      %v247 = vld [vmem:[%s198 + $0x88] sm:$0xf]
      %v248 = vld [vmem:[%s198 + $0x8c] sm:$0xf]
      %v249 = vld [vmem:[%s198 + $0x90] sm:$0xf]
      %v250 = vld [vmem:[%s198 + $0x94] sm:$0xf]
      %v251 = vld [vmem:[%s198 + $0x98] sm:$0xf]
      %v252 = vld [vmem:[%s198 + $0x9c] sm:$0xf]
      %v253 = vld [vmem:[%s198 + $0xa0] sm:$0xf]
      %v254 = vld [vmem:[%s198 + $0xa4] sm:$0xf]
      %v255 = vld [vmem:[%s198 + $0xa8] sm:$0xf]
      %v256 = vld [vmem:[%s198 + $0xac] sm:$0xf]
      %v257 = vld [vmem:[%s198 + $0xb0] sm:$0xf]
      %v258 = vld [vmem:[%s198 + $0xb4] sm:$0xf]
      %v259 = vld [vmem:[%s198 + $0xb8] sm:$0xf]
      %v260 = vld [vmem:[%s198 + $0xbc] sm:$0xf]
      %v261 = vld [vmem:[%s198 + $0xc0] sm:$0xf]
      %v262 = vld [vmem:[%s198 + $0xc4] sm:$0xf]
      %v263 = vld [vmem:[%s198 + $0xc8] sm:$0xf]
      %v264 = vld [vmem:[%s198 + $0xcc] sm:$0xf]
      %v265 = vld [vmem:[%s198 + $0xd0] sm:$0xf]
      %v266 = vld [vmem:[%s198 + $0xd4] sm:$0xf]
      %v267 = vld [vmem:[%s198 + $0xd8] sm:$0xf]
      %v268 = vld [vmem:[%s198 + $0xdc] sm:$0xf]
      %v269 = vld [vmem:[%s198 + $0xe0] sm:$0xf]
      %v270 = vld [vmem:[%s198 + $0xe4] sm:$0xf]
      %v271 = vld [vmem:[%s198 + $0xe8] sm:$0xf]
      %v272 = vld [vmem:[%s198 + $0xec] sm:$0xf]
      %v273 = vld [vmem:[%s198 + $0xf0] sm:$0xf]
      %v274 = vld [vmem:[%s198 + $0xf4] sm:$0xf]
      %v275 = vld [vmem:[%s198 + $0xf8] sm:$0xf]
      %v276 = vld [vmem:[%s198 + $0xfc] sm:$0xf]
      %v341 = vunpack.c.l.b16 %v213
      %v342 = vunpack.c.l.b16 %v214
      %v343 = vunpack.c.l.b16 %v215
      %v344 = vunpack.c.l.b16 %v216
      %v345 = vunpack.c.l.b16 %v217
      %v346 = vunpack.c.l.b16 %v218
      %v347 = vunpack.c.l.b16 %v219
      %v348 = vunpack.c.l.b16 %v220
      %v349 = vunpack.c.l.b16 %v221
      %v350 = vunpack.c.l.b16 %v222
      %v351 = vunpack.c.l.b16 %v223
      %v352 = vunpack.c.l.b16 %v224
      %v353 = vunpack.c.l.b16 %v225
      %v354 = vunpack.c.l.b16 %v226
      %v355 = vunpack.c.l.b16 %v227
      %v356 = vunpack.c.l.b16 %v228
      %v357 = vunpack.c.l.b16 %v229
      %v358 = vunpack.c.l.b16 %v230
      %v359 = vunpack.c.l.b16 %v231
      %v360 = vunpack.c.l.b16 %v232
      %v361 = vunpack.c.l.b16 %v233
      %v362 = vunpack.c.l.b16 %v234
      %v363 = vunpack.c.l.b16 %v235
      %v364 = vunpack.c.l.b16 %v236
      %v365 = vunpack.c.l.b16 %v237
      %v366 = vunpack.c.l.b16 %v238
      %v367 = vunpack.c.l.b16 %v239
      %v368 = vunpack.c.l.b16 %v240
      %v369 = vunpack.c.l.b16 %v241
      %v370 = vunpack.c.l.b16 %v242
      %v371 = vunpack.c.l.b16 %v243
      %v372 = vunpack.c.l.b16 %v244
      %v373 = vunpack.c.l.b16 %v245
      %v374 = vunpack.c.l.b16 %v246
      %v375 = vunpack.c.l.b16 %v247
      %v376 = vunpack.c.l.b16 %v248
      %v377 = vunpack.c.l.b16 %v249
      %v378 = vunpack.c.l.b16 %v250
      %v379 = vunpack.c.l.b16 %v251
      %v380 = vunpack.c.l.b16 %v252
      %v381 = vunpack.c.l.b16 %v253
      %v382 = vunpack.c.l.b16 %v254
      %v383 = vunpack.c.l.b16 %v255
      %v384 = vunpack.c.l.b16 %v256
      %v385 = vunpack.c.l.b16 %v257
      %v386 = vunpack.c.l.b16 %v258
      %v387 = vunpack.c.l.b16 %v259
      %v388 = vunpack.c.l.b16 %v260
      %v389 = vunpack.c.l.b16 %v261
      %v390 = vunpack.c.l.b16 %v262
      %v391 = vunpack.c.l.b16 %v263
      %v392 = vunpack.c.l.b16 %v264
      %v393 = vunpack.c.l.b16 %v265
      %v394 = vunpack.c.l.b16 %v266
      %v395 = vunpack.c.l.b16 %v267
      %v396 = vunpack.c.l.b16 %v268
      %v397 = vunpack.c.l.b16 %v269
      %v398 = vunpack.c.l.b16 %v270
      %v399 = vunpack.c.l.b16 %v271
      %v400 = vunpack.c.l.b16 %v272
      %v401 = vunpack.c.l.b16 %v273
      %v402 = vunpack.c.l.b16 %v274
      %v403 = vunpack.c.l.b16 %v275
      %v404 = vunpack.c.l.b16 %v276
      %v405 = vpack.c.b16 %v342, %v341
      %v406 = vpack.c.b16 %v344, %v343
      %v407 = vpack.c.b16 %v346, %v345
      %v408 = vpack.c.b16 %v348, %v347
      %v409 = vpack.c.b16 %v350, %v349
      %v410 = vpack.c.b16 %v352, %v351
      %v411 = vpack.c.b16 %v354, %v353
      %v412 = vpack.c.b16 %v356, %v355
      %v413 = vpack.c.b16 %v358, %v357
      %v414 = vpack.c.b16 %v360, %v359
      %v415 = vpack.c.b16 %v362, %v361
      %v416 = vpack.c.b16 %v364, %v363
      %v417 = vpack.c.b16 %v366, %v365
      %v418 = vpack.c.b16 %v368, %v367
      %v419 = vpack.c.b16 %v370, %v369
      %v420 = vpack.c.b16 %v372, %v371
      %v421 = vpack.c.b16 %v374, %v373
      %v422 = vpack.c.b16 %v376, %v375
      %v423 = vpack.c.b16 %v378, %v377
      %v424 = vpack.c.b16 %v380, %v379
      %v425 = vpack.c.b16 %v382, %v381
      %v426 = vpack.c.b16 %v384, %v383
      %v427 = vpack.c.b16 %v386, %v385
      %v428 = vpack.c.b16 %v388, %v387
      %v429 = vpack.c.b16 %v390, %v389
      %v430 = vpack.c.b16 %v392, %v391
      %v431 = vpack.c.b16 %v394, %v393
      %v432 = vpack.c.b16 %v396, %v395
      %v433 = vpack.c.b16 %v398, %v397
      %v434 = vpack.c.b16 %v400, %v399
      %v435 = vpack.c.b16 %v402, %v401
      %v436 = vpack.c.b16 %v404, %v403
      %v439 = vunpack.c.l.b16 %v211
      %v440 = vunpack.c.l.b16 %v212
      %v441 = vpack.c.b16 %v440, %v439
      %vm443 = vcmask 130048
      %v445 = vsel %vm443, %v405, 0
      %v448 = vsel %vm443, %v406, 0
      %v451 = vsel %vm443, %v407, 0
      %v454 = vsel %vm443, %v408, 0
      %v457 = vsel %vm443, %v409, 0
      %v460 = vsel %vm443, %v410, 0
      %v463 = vsel %vm443, %v411, 0
      %v466 = vsel %vm443, %v412, 0
      %v469 = vsel %vm443, %v413, 0
      %v472 = vsel %vm443, %v414, 0
      %v475 = vsel %vm443, %v415, 0
      %v478 = vsel %vm443, %v416, 0
      %v481 = vsel %vm443, %v417, 0
      %v484 = vsel %vm443, %v418, 0
      %v487 = vsel %vm443, %v419, 0
      %v490 = vsel %vm443, %v420, 0
      %v493 = vsel %vm443, %v421, 0
      %v496 = vsel %vm443, %v422, 0
      %v499 = vsel %vm443, %v423, 0
      %v502 = vsel %vm443, %v424, 0
      %v505 = vsel %vm443, %v425, 0
      %v508 = vsel %vm443, %v426, 0
      %v511 = vsel %vm443, %v427, 0
      %v514 = vsel %vm443, %v428, 0
      %v517 = vsel %vm443, %v429, 0
      %v520 = vsel %vm443, %v430, 0
      %v523 = vsel %vm443, %v431, 0
      %v526 = vsel %vm443, %v432, 0
      %v529 = vsel %vm443, %v433, 0
      %v532 = vsel %vm443, %v434, 0
      %v535 = vsel %vm443, %v435, 0
      %v538 = vsel %vm443, %v436, 0
      %540 = vmatprep.subr.bf16.mxu0 0
      %541 = vmatpush1.bf16.msra.mxu0 %v441
      %542 = vmatprep.subr.bf16.mxu0 0
      %543 = vmatpush1.bf16.msra.mxu0 0
      %544 = vmatprep.subr.bf16.mxu0 0
      %545 = vmatpush1.bf16.msra.mxu0 0
      %546 = vmatprep.subr.bf16.mxu0 0
      %547 = vmatpush1.bf16.msra.mxu0 0
      %548 = vmatprep.subr.bf16.mxu0 0
      %549 = vmatpush1.bf16.msra.mxu0 0
      %550 = vmatprep.subr.bf16.mxu0 0
      %551 = vmatpush1.bf16.msra.mxu0 0
      %552 = vmatprep.subr.bf16.mxu0 0
      %553 = vmatpush1.bf16.msra.mxu0 0
      %554 = vmatprep.subr.bf16.mxu0 0
      %555 = vmatpush1.bf16.msra.mxu0 0
      %556 = vmatprep.subr.bf16.mxu0 0
      %557 = vmatpush1.bf16.msra.mxu0 0
      %558 = vmatprep.subr.bf16.mxu0 0
      %559 = vmatpush1.bf16.msra.mxu0 0
      %560 = vmatprep.subr.bf16.mxu0 0
      %561 = vmatpush1.bf16.msra.mxu0 0
      %562 = vmatprep.subr.bf16.mxu0 0
      %563 = vmatpush1.bf16.msra.mxu0 0
      %564 = vmatprep.subr.bf16.mxu0 0
      %565 = vmatpush1.bf16.msra.mxu0 0
      %566 = vmatprep.subr.bf16.mxu0 0
      %567 = vmatpush1.bf16.msra.mxu0 0
      %568 = vmatprep.subr.bf16.mxu0 0
      %569 = vmatpush1.bf16.msra.mxu0 0
      %570 = vmatprep.subr.bf16.mxu0 0
      %571 = vmatpush1.bf16.msra.mxu0 0
      %572 = vmatprep.mubr.bf16.mxu0 0
      %573 = vmatmul.mubr.bf16.gmra.mrb[0].mxu0 %v445
      %v574 = vpop.f32.mrb[0].mxu0
      %v575 = vadd.f32 0.0, %v574
      %v576 = vpop.f32.mrb[0].mxu0
      %v577 = vpop.f32.mrb[0].mxu0
      %v578 = vadd.f32 0.0, %v577
      %v579 = vpop.f32.mrb[0].mxu0
      %580 = vmatprep.mubr.bf16.mxu0 0
      %581 = vmatmul.mubr.bf16.gmra.mrb[0].mxu0 %v448
      %v582 = vpop.f32.mrb[0].mxu0
      %v583 = vadd.f32 0.0, %v582
      %v584 = vpop.f32.mrb[0].mxu0
      %v585 = vpop.f32.mrb[0].mxu0
      %v586 = vadd.f32 0.0, %v585
      %v587 = vpop.f32.mrb[0].mxu0
      %588 = vmatprep.mubr.bf16.mxu0 0
      %589 = vmatmul.mubr.bf16.gmra.mrb[0].mxu0 %v451
      %v590 = vpop.f32.mrb[0].mxu0
      %v591 = vadd.f32 0.0, %v590
      %v592 = vpop.f32.mrb[0].mxu0
      %v593 = vpop.f32.mrb[0].mxu0
      %v594 = vadd.f32 0.0, %v593
      %v595 = vpop.f32.mrb[0].mxu0
      %596 = vmatprep.mubr.bf16.mxu0 0
      %597 = vmatmul.mubr.bf16.gmra.mrb[0].mxu0 %v454
      %v598 = vpop.f32.mrb[0].mxu0
      %v599 = vadd.f32 0.0, %v598
      %v600 = vpop.f32.mrb[0].mxu0
      %v601 = vpop.f32.mrb[0].mxu0
      %v602 = vadd.f32 0.0, %v601
      %v603 = vpop.f32.mrb[0].mxu0
      %604 = vmatprep.mubr.bf16.mxu0 0
      %605 = vmatmul.mubr.bf16.gmra.mrb[0].mxu0 %v457
      %v606 = vpop.f32.mrb[0].mxu0
      %v607 = vadd.f32 0.0, %v606
      %v608 = vpop.f32.mrb[0].mxu0
      %v609 = vpop.f32.mrb[0].mxu0
      %v610 = vadd.f32 0.0, %v609
      %v611 = vpop.f32.mrb[0].mxu0
      %612 = vmatprep.mubr.bf16.mxu0 0
      %613 = vmatmul.mubr.bf16.gmra.mrb[0].mxu0 %v460
      %v614 = vpop.f32.mrb[0].mxu0
      %v615 = vadd.f32 0.0, %v614
      %v616 = vpop.f32.mrb[0].mxu0
      %v617 = vpop.f32.mrb[0].mxu0
      %v618 = vadd.f32 0.0, %v617
      %v619 = vpop.f32.mrb[0].mxu0
      %620 = vmatprep.mubr.bf16.mxu0 0
      %621 = vmatmul.mubr.bf16.gmra.mrb[0].mxu0 %v463
      %v622 = vpop.f32.mrb[0].mxu0
      %v623 = vadd.f32 0.0, %v622
      %v624 = vpop.f32.mrb[0].mxu0
      %v625 = vpop.f32.mrb[0].mxu0
      %v626 = vadd.f32 0.0, %v625
      %v627 = vpop.f32.mrb[0].mxu0
      %628 = vmatprep.mubr.bf16.mxu0 0
      %629 = vmatmul.mubr.bf16.gmra.mrb[0].mxu0 %v466
      %v630 = vpop.f32.mrb[0].mxu0
      %v631 = vadd.f32 0.0, %v630
      %v632 = vpop.f32.mrb[0].mxu0
      %v633 = vpop.f32.mrb[0].mxu0
      %v634 = vadd.f32 0.0, %v633
      %v635 = vpop.f32.mrb[0].mxu0
      %636 = vmatprep.mubr.bf16.mxu0 0
      %637 = vmatmul.mubr.bf16.gmra.mrb[0].mxu0 %v469
      %v638 = vpop.f32.mrb[0].mxu0
      %v639 = vadd.f32 0.0, %v638
      %v640 = vpop.f32.mrb[0].mxu0
      %v641 = vpop.f32.mrb[0].mxu0
      %v642 = vadd.f32 0.0, %v641
      %v643 = vpop.f32.mrb[0].mxu0
      %644 = vmatprep.mubr.bf16.mxu0 0
      %645 = vmatmul.mubr.bf16.gmra.mrb[0].mxu0 %v472
      %v646 = vpop.f32.mrb[0].mxu0
      %v647 = vadd.f32 0.0, %v646
      %v648 = vpop.f32.mrb[0].mxu0
      %v649 = vpop.f32.mrb[0].mxu0
      %v650 = vadd.f32 0.0, %v649
      %v651 = vpop.f32.mrb[0].mxu0
      %652 = vmatprep.mubr.bf16.mxu0 0
      %653 = vmatmul.mubr.bf16.gmra.mrb[0].mxu0 %v475
      %v654 = vpop.f32.mrb[0].mxu0
      %v655 = vadd.f32 0.0, %v654
      %v656 = vpop.f32.mrb[0].mxu0
      %v657 = vpop.f32.mrb[0].mxu0
      %v658 = vadd.f32 0.0, %v657
      %v659 = vpop.f32.mrb[0].mxu0
      %660 = vmatprep.mubr.bf16.mxu0 0
      %661 = vmatmul.mubr.bf16.gmra.mrb[0].mxu0 %v478
      %v662 = vpop.f32.mrb[0].mxu0
      %v663 = vadd.f32 0.0, %v662
      %v664 = vpop.f32.mrb[0].mxu0
      %v665 = vpop.f32.mrb[0].mxu0
      %v666 = vadd.f32 0.0, %v665
      %v667 = vpop.f32.mrb[0].mxu0
      %668 = vmatprep.mubr.bf16.mxu0 0
      %669 = vmatmul.mubr.bf16.gmra.mrb[0].mxu0 %v481
      %v670 = vpop.f32.mrb[0].mxu0
      %v671 = vadd.f32 0.0, %v670
      %v672 = vpop.f32.mrb[0].mxu0
      %v673 = vpop.f32.mrb[0].mxu0
      %v674 = vadd.f32 0.0, %v673
      %v675 = vpop.f32.mrb[0].mxu0
      %676 = vmatprep.mubr.bf16.mxu0 0
      %677 = vmatmul.mubr.bf16.gmra.mrb[0].mxu0 %v484
      %v678 = vpop.f32.mrb[0].mxu0
      %v679 = vadd.f32 0.0, %v678
      %v680 = vpop.f32.mrb[0].mxu0
      %v681 = vpop.f32.mrb[0].mxu0
      %v682 = vadd.f32 0.0, %v681
      %v683 = vpop.f32.mrb[0].mxu0
      %684 = vmatprep.mubr.bf16.mxu0 0
      %685 = vmatmul.mubr.bf16.gmra.mrb[0].mxu0 %v487
      %v686 = vpop.f32.mrb[0].mxu0
      %v687 = vadd.f32 0.0, %v686
      %v688 = vpop.f32.mrb[0].mxu0
      %v689 = vpop.f32.mrb[0].mxu0
      %v690 = vadd.f32 0.0, %v689
      %v691 = vpop.f32.mrb[0].mxu0
      %692 = vmatprep.mubr.bf16.mxu0 0
      %693 = vmatmul.mubr.bf16.gmra.mrb[0].mxu0 %v490
      %v694 = vpop.f32.mrb[0].mxu0
      %v695 = vadd.f32 0.0, %v694
      %v696 = vpop.f32.mrb[0].mxu0
      %v697 = vpop.f32.mrb[0].mxu0
      %v698 = vadd.f32 0.0, %v697
      %v699 = vpop.f32.mrb[0].mxu0
      %700 = vmatprep.mubr.bf16.mxu0 0
      %701 = vmatmul.mubr.bf16.gmra.mrb[0].mxu0 %v493
      %v702 = vpop.f32.mrb[0].mxu0
      %v703 = vadd.f32 0.0, %v702
      %v704 = vpop.f32.mrb[0].mxu0
      %v705 = vpop.f32.mrb[0].mxu0
      %v706 = vadd.f32 0.0, %v705
      %v707 = vpop.f32.mrb[0].mxu0
      %708 = vmatprep.mubr.bf16.mxu0 0
      %709 = vmatmul.mubr.bf16.gmra.mrb[0].mxu0 %v496
      %v710 = vpop.f32.mrb[0].mxu0
      %v711 = vadd.f32 0.0, %v710
      %v712 = vpop.f32.mrb[0].mxu0
      %v713 = vpop.f32.mrb[0].mxu0
      %v714 = vadd.f32 0.0, %v713
      %v715 = vpop.f32.mrb[0].mxu0
      %716 = vmatprep.mubr.bf16.mxu0 0
      %717 = vmatmul.mubr.bf16.gmra.mrb[0].mxu0 %v499
      %v718 = vpop.f32.mrb[0].mxu0
      %v719 = vadd.f32 0.0, %v718
      %v720 = vpop.f32.mrb[0].mxu0
      %v721 = vpop.f32.mrb[0].mxu0
      %v722 = vadd.f32 0.0, %v721
      %v723 = vpop.f32.mrb[0].mxu0
      %724 = vmatprep.mubr.bf16.mxu0 0
      %725 = vmatmul.mubr.bf16.gmra.mrb[0].mxu0 %v502
      %v726 = vpop.f32.mrb[0].mxu0
      %v727 = vadd.f32 0.0, %v726
      %v728 = vpop.f32.mrb[0].mxu0
      %v729 = vpop.f32.mrb[0].mxu0
      %v730 = vadd.f32 0.0, %v729
      %v731 = vpop.f32.mrb[0].mxu0
      %732 = vmatprep.mubr.bf16.mxu0 0
      %733 = vmatmul.mubr.bf16.gmra.mrb[0].mxu0 %v505
      %v734 = vpop.f32.mrb[0].mxu0
      %v735 = vadd.f32 0.0, %v734
      %v736 = vpop.f32.mrb[0].mxu0
      %v737 = vpop.f32.mrb[0].mxu0
      %v738 = vadd.f32 0.0, %v737
      %v739 = vpop.f32.mrb[0].mxu0
      %740 = vmatprep.mubr.bf16.mxu0 0
      %741 = vmatmul.mubr.bf16.gmra.mrb[0].mxu0 %v508
      %v742 = vpop.f32.mrb[0].mxu0
      %v743 = vadd.f32 0.0, %v742
      %v744 = vpop.f32.mrb[0].mxu0
      %v745 = vpop.f32.mrb[0].mxu0
      %v746 = vadd.f32 0.0, %v745
      %v747 = vpop.f32.mrb[0].mxu0
      %748 = vmatprep.mubr.bf16.mxu0 0
      %749 = vmatmul.mubr.bf16.gmra.mrb[0].mxu0 %v511
      %v750 = vpop.f32.mrb[0].mxu0
      %v751 = vadd.f32 0.0, %v750
      %v752 = vpop.f32.mrb[0].mxu0
      %v753 = vpop.f32.mrb[0].mxu0
      %v754 = vadd.f32 0.0, %v753
      %v755 = vpop.f32.mrb[0].mxu0
      %756 = vmatprep.mubr.bf16.mxu0 0
      %757 = vmatmul.mubr.bf16.gmra.mrb[0].mxu0 %v514
      %v758 = vpop.f32.mrb[0].mxu0
      %v759 = vadd.f32 0.0, %v758
      %v760 = vpop.f32.mrb[0].mxu0
      %v761 = vpop.f32.mrb[0].mxu0
      %v762 = vadd.f32 0.0, %v761
      %v763 = vpop.f32.mrb[0].mxu0
      %764 = vmatprep.mubr.bf16.mxu0 0
      %765 = vmatmul.mubr.bf16.gmra.mrb[0].mxu0 %v517
      %v766 = vpop.f32.mrb[0].mxu0
      %v767 = vadd.f32 0.0, %v766
      %v768 = vpop.f32.mrb[0].mxu0
      %v769 = vpop.f32.mrb[0].mxu0
      %v770 = vadd.f32 0.0, %v769
      %v771 = vpop.f32.mrb[0].mxu0
      %772 = vmatprep.mubr.bf16.mxu0 0
      %773 = vmatmul.mubr.bf16.gmra.mrb[0].mxu0 %v520
      %v774 = vpop.f32.mrb[0].mxu0
      %v775 = vadd.f32 0.0, %v774
      %v776 = vpop.f32.mrb[0].mxu0
      %v777 = vpop.f32.mrb[0].mxu0
      %v778 = vadd.f32 0.0, %v777
      %v779 = vpop.f32.mrb[0].mxu0
      %780 = vmatprep.mubr.bf16.mxu0 0
      %781 = vmatmul.mubr.bf16.gmra.mrb[0].mxu0 %v523
      %v782 = vpop.f32.mrb[0].mxu0
      %v783 = vadd.f32 0.0, %v782
      %v784 = vpop.f32.mrb[0].mxu0
      %v785 = vpop.f32.mrb[0].mxu0
      %v786 = vadd.f32 0.0, %v785
      %v787 = vpop.f32.mrb[0].mxu0
      %788 = vmatprep.mubr.bf16.mxu0 0
      %789 = vmatmul.mubr.bf16.gmra.mrb[0].mxu0 %v526
      %v790 = vpop.f32.mrb[0].mxu0
      %v791 = vadd.f32 0.0, %v790
      %v792 = vpop.f32.mrb[0].mxu0
      %v793 = vpop.f32.mrb[0].mxu0
      %v794 = vadd.f32 0.0, %v793
      %v795 = vpop.f32.mrb[0].mxu0
      %796 = vmatprep.mubr.bf16.mxu0 0
      %797 = vmatmul.mubr.bf16.gmra.mrb[0].mxu0 %v529
      %v798 = vpop.f32.mrb[0].mxu0
      %v799 = vadd.f32 0.0, %v798
      %v800 = vpop.f32.mrb[0].mxu0
      %v801 = vpop.f32.mrb[0].mxu0
      %v802 = vadd.f32 0.0, %v801
      %v803 = vpop.f32.mrb[0].mxu0
      %804 = vmatprep.mubr.bf16.mxu0 0
      %805 = vmatmul.mubr.bf16.gmra.mrb[0].mxu0 %v532
      %v806 = vpop.f32.mrb[0].mxu0
      %v807 = vadd.f32 0.0, %v806
      %v808 = vpop.f32.mrb[0].mxu0
      %v809 = vpop.f32.mrb[0].mxu0
      %v810 = vadd.f32 0.0, %v809
      %v811 = vpop.f32.mrb[0].mxu0
      %812 = vmatprep.mubr.bf16.mxu0 0
      %813 = vmatmul.mubr.bf16.gmra.mrb[0].mxu0 %v535
      %v814 = vpop.f32.mrb[0].mxu0
      %v815 = vadd.f32 0.0, %v814
      %v816 = vpop.f32.mrb[0].mxu0
      %v817 = vpop.f32.mrb[0].mxu0
      %v818 = vadd.f32 0.0, %v817
      %v819 = vpop.f32.mrb[0].mxu0
      %820 = vmatprep.mubr.bf16.mxu0 0
      %821 = vmatmul.mubr.bf16.gmra.mrb[0].mxu0 %v538
      %v822 = vpop.f32.mrb[0].mxu0
      %v823 = vadd.f32 0.0, %v822
      %v824 = vpop.f32.mrb[0].mxu0
      %v825 = vpop.f32.mrb[0].mxu0
      %v826 = vadd.f32 0.0, %v825
      %v827 = vpop.f32.mrb[0].mxu0
      %828 = vdwg.mxu0
      %v829 = vmax.f32 %v575, %v639
      %v830 = vmax.f32 %v578, %v642
      %v831 = vmax.f32 %v583, %v647
      %v832 = vmax.f32 %v586, %v650
      %v833 = vmax.f32 %v591, %v655
      %v834 = vmax.f32 %v594, %v658
      %v835 = vmax.f32 %v599, %v663
      %v836 = vmax.f32 %v602, %v666
      %v837 = vmax.f32 %v607, %v671
      %v838 = vmax.f32 %v610, %v674
      %v839 = vmax.f32 %v615, %v679
      %v840 = vmax.f32 %v618, %v682
      %v841 = vmax.f32 %v623, %v687
      %v842 = vmax.f32 %v626, %v690
      %v843 = vmax.f32 %v631, %v695
      %v844 = vmax.f32 %v634, %v698
      %v845 = vmax.f32 %v703, %v767
      %v846 = vmax.f32 %v706, %v770
      %v847 = vmax.f32 %v711, %v775
      %v848 = vmax.f32 %v714, %v778
      %v849 = vmax.f32 %v719, %v783
      %v850 = vmax.f32 %v722, %v786
      %v851 = vmax.f32 %v727, %v791
      %v852 = vmax.f32 %v730, %v794
      %v853 = vmax.f32 %v735, %v799
      %v854 = vmax.f32 %v738, %v802
      %v855 = vmax.f32 %v743, %v807
      %v856 = vmax.f32 %v746, %v810
      %v857 = vmax.f32 %v751, %v815
      %v858 = vmax.f32 %v754, %v818
      %v859 = vmax.f32 %v759, %v823
      %v860 = vmax.f32 %v762, %v826
      %v861 = vmax.f32 %v829, %v845
      %v862 = vmax.f32 %v830, %v846
      %v863 = vmax.f32 %v831, %v847
      %v864 = vmax.f32 %v832, %v848
      %v865 = vmax.f32 %v833, %v849
      %v866 = vmax.f32 %v834, %v850
      %v867 = vmax.f32 %v835, %v851
      %v868 = vmax.f32 %v836, %v852
      %v869 = vmax.f32 %v837, %v853
      %v870 = vmax.f32 %v838, %v854
      %v871 = vmax.f32 %v839, %v855
      %v872 = vmax.f32 %v840, %v856
      %v873 = vmax.f32 %v841, %v857
      %v874 = vmax.f32 %v842, %v858
      %v875 = vmax.f32 %v843, %v859
      %v876 = vmax.f32 %v844, %v860
      %v877 = vld [vmem:[%s2] sm:$0x1]
      %v879 = vlaneseq
      %v880 = vshrl.u32 %v879, 7
      %v881 = vsub.s32 0, %v880
      %v882 = vrot.slane %v877, %v881
      %v884 = vadd.f32 %v861, %v882
      %v885 = vadd.f32 %v862, %v882
      %v886 = vadd.f32 %v863, %v882
      %v887 = vadd.f32 %v864, %v882
      %v888 = vadd.f32 %v865, %v882
      %v889 = vadd.f32 %v866, %v882
      %v890 = vadd.f32 %v867, %v882
      %v891 = vadd.f32 %v868, %v882
      %v892 = vadd.f32 %v869, %v882
      %v893 = vadd.f32 %v870, %v882
      %v894 = vadd.f32 %v871, %v882
      %v895 = vadd.f32 %v872, %v882
      %v896 = vadd.f32 %v873, %v882
      %v897 = vadd.f32 %v874, %v882
      %v898 = vadd.f32 %v875, %v882
      %v899 = vadd.f32 %v876, %v882
      %v900 = vmax.f32 %v884, 0.0
      %v901 = vmax.f32 %v885, 0.0
      %v902 = vmax.f32 %v886, 0.0
      %v903 = vmax.f32 %v887, 0.0
      %v904 = vmax.f32 %v888, 0.0
      %v905 = vmax.f32 %v889, 0.0
      %v906 = vmax.f32 %v890, 0.0
      %v907 = vmax.f32 %v891, 0.0
      %v908 = vmax.f32 %v892, 0.0
      %v909 = vmax.f32 %v893, 0.0
      %v910 = vmax.f32 %v894, 0.0
      %v911 = vmax.f32 %v895, 0.0
      %v912 = vmax.f32 %v896, 0.0
      %v913 = vmax.f32 %v897, 0.0
      %v914 = vmax.f32 %v898, 0.0
      %v915 = vmax.f32 %v899, 0.0
      %v916 = vpack.c.bf16 %v901, %v900
      %v917 = vpack.c.bf16 %v903, %v902
      %v918 = vpack.c.bf16 %v905, %v904
      %v919 = vpack.c.bf16 %v907, %v906
      %v920 = vpack.c.bf16 %v909, %v908
      %v921 = vpack.c.bf16 %v911, %v910
      %v922 = vpack.c.bf16 %v913, %v912
      %v923 = vpack.c.bf16 %v915, %v914
      %v932 = vunpack.c.l.b16 %v916
      %v933 = vunpack.c.h.b16 %v916
      %v934 = vunpack.c.l.b16 %v917
      %v935 = vunpack.c.h.b16 %v917
      %v936 = vunpack.c.l.b16 %v918
      %v937 = vunpack.c.h.b16 %v918
      %v938 = vunpack.c.l.b16 %v919
      %v939 = vunpack.c.h.b16 %v919
      %v940 = vunpack.c.l.b16 %v920
      %v941 = vunpack.c.h.b16 %v920
      %v942 = vunpack.c.l.b16 %v921
      %v943 = vunpack.c.h.b16 %v921
      %v944 = vunpack.c.l.b16 %v922
      %v945 = vunpack.c.h.b16 %v922
      %v946 = vunpack.c.l.b16 %v923
      %v947 = vunpack.c.h.b16 %v923
      %v948 = vpack.c.b16 %v932, %v932
      %v949 = vpack.c.b16 %v933, %v933
      %v950 = vpack.c.b16 %v934, %v934
      %v951 = vpack.c.b16 %v935, %v935
      %v952 = vpack.c.b16 %v936, %v936
      %v953 = vpack.c.b16 %v937, %v937
      %v954 = vpack.c.b16 %v938, %v938
      %v955 = vpack.c.b16 %v939, %v939
      %v956 = vpack.c.b16 %v940, %v940
      %v957 = vpack.c.b16 %v941, %v941
      %v958 = vpack.c.b16 %v942, %v942
      %v959 = vpack.c.b16 %v943, %v943
      %v960 = vpack.c.b16 %v944, %v944
      %v961 = vpack.c.b16 %v945, %v945
      %v962 = vpack.c.b16 %v946, %v946
      %v963 = vpack.c.b16 %v947, %v947
      %vm980 = vcmask 125952
      %981 = vst.msk [vmem:[%s208] sm:$0xf] %vm980, %v948
      %982 = vst.msk [vmem:[%s208 + $0x4] sm:$0xf] %vm980, %v949
      %983 = vst.msk [vmem:[%s208 + $0x8] sm:$0xf] %vm980, %v950
      %984 = vst.msk [vmem:[%s208 + $0xc] sm:$0xf] %vm980, %v951
      %985 = vst.msk [vmem:[%s208 + $0x10] sm:$0xf] %vm980, %v952
      %986 = vst.msk [vmem:[%s208 + $0x14] sm:$0xf] %vm980, %v953
      %987 = vst.msk [vmem:[%s208 + $0x18] sm:$0xf] %vm980, %v954
      %988 = vst.msk [vmem:[%s208 + $0x1c] sm:$0xf] %vm980, %v955
      %989 = vst.msk [vmem:[%s208 + $0x20] sm:$0xf] %vm980, %v956
      %990 = vst.msk [vmem:[%s208 + $0x24] sm:$0xf] %vm980, %v957
      %991 = vst.msk [vmem:[%s208 + $0x28] sm:$0xf] %vm980, %v958
      %992 = vst.msk [vmem:[%s208 + $0x2c] sm:$0xf] %vm980, %v959
      %993 = vst.msk [vmem:[%s208 + $0x30] sm:$0xf] %vm980, %v960
      %994 = vst.msk [vmem:[%s208 + $0x34] sm:$0xf] %vm980, %v961
      %995 = vst.msk [vmem:[%s208 + $0x38] sm:$0xf] %vm980, %v962
      %996 = vst.msk [vmem:[%s208 + $0x3c] sm:$0xf] %vm980, %v963
      %s997 = smul.u32 16, %s19
      %p998 = scmp.lt.s32.totalorder %s18, 1
      %s999 = scalar_select %p998, %s18, 1
      %p1000 = scmp.lt.s32.totalorder %s997, 15
      %s1001 = scalar_select %p1000, %s997, 15
      %s1002 = smul.addr %s999, 16
      %s1003 = sadd.s32 %s1001, %s1002
      %s1004 = smul.addr %s1003, 4
      %s1005 = scalar_lea.vmem %s3, %s1004
      // Predicated region
      $region33: #{forward.13} parent=31 // pred_check
        %p1006 = pneg %p116
      $region34: #{forward.13} parent=31 // pred_check_branch
        %1008 = sbr.rel (%p1006) target = $region36
      $region35: #{forward.13} parent=31 // pred_region
        %s1009 = smul.u32 16, %s19
      $region36: #{forward.13} parent=31 // pred_fallthru
        _
    $region32: #{forward.13} parent=5 // pred_fallthru
      _
    %p1010 = scmp.le.s32.totalorder 2, %s9
    // Predicated region
    $region37: #{forward.13} parent=5 // pred_check
      %p1011 = pneg %p1010
    $region38: #{forward.13} parent=5 // pred_check_branch
      %1013 = sbr.rel (%p1011) target = $region40
    $region39: #{forward.13} parent=5 // pred_region
      %s1014 = ssub.s32 %s9, 2
      // Predicated region
      $region41: #{forward.13} parent=39 // pred_check
        %p1015 = pneg %p122
      $region42: #{forward.13} parent=39 // pred_check_branch
        %1017 = sbr.rel (%p1015) target = $region44
      $region43: #{forward.13} parent=39 // pred_region
        %s1018 = smul.u32 16, %s21
        %p1019 = scmp.lt.s32.totalorder %s20, 1
        %s1020 = scalar_select %p1019, %s20, 1
        %p1021 = scmp.lt.s32.totalorder %s1018, 15
        %s1022 = scalar_select %p1021, %s1018, 15
        %s1023 = smul.addr %s1020, 16
        %s1024 = sadd.s32 %s1022, %s1023
        %s1025 = smul.addr %s1024, 4
        %s1026 = scalar_lea.vmem %s3, %s1025
      $region44: #{forward.13} parent=39 // pred_fallthru
        _
    $region40: #{forward.13} parent=5 // pred_fallthru
      _
  $region6: #{forward.13} parent=0 // loop_footer
    %s13 = sadd.s32 1, %s9
  $region7: #{forward.13} parent=0 // loop_footer_branch
    %8 = sbr.rel target = $region3
  $region8: #{forward.13} parent=0 // loop_exit
    _

// kernel: forward.14
$region0: #{forward.14}
  #allocation0 [shape = 'u32[]', space=smem, size = 0x4, offset = 0x4, fixed_abs, tag = 'smem constant byte address 0x4 - core index']
  #allocation1 [shape = 'u32[144,128]{1,0:T(1,128)}', space=vmem, size = 0x12000, scoped, tag = 'internal scratch']
  %s0 = inlined_call_operand.vmem [shape: bf16[2,4,32,144], index: 0, kind: input, shape index: {}]
  %s1 = inlined_call_operand.vmem [shape: bf16[144,32], index: 1, kind: input, shape index: {}]
  %s2 = inlined_call_operand.vmem [shape: f32[1,32], index: 2, kind: input, shape index: {}]
  %s3 = inlined_call_operand.vmem [shape: bf16[2,32,32], index: 3, kind: output, shape index: {}]
  %s4 = sld [smem:[#allocation0]]
  $region45: #{forward.14} parent=0
    _
  %s6 = ssub.s32 1, %s4
  %s7 = scalar_select 0, %s6, %s4
  loop: start=0, step=1, limit=4
  $region2: #{forward.14} parent=0 // loop_pre_header
    _
  $region3: #{forward.14} parent=0 // loop_header
    %s9 = sphi 0, %s13
    %p10 = scmp.ge.s32.totalorder %s9, 4
    %s16 = sphi 0, %s28
    %s17 = sphi 0, %s24
    %s18 = sphi 0, %s16
    %s19 = sphi 0, %s17
    %s20 = sphi 0, %s18
    %s21 = sphi 0, %s19
    %s33 = sphi 0, %s35
    %s36 = sphi 0, %s33
    %s37 = sphi 0, %s36
    %s53 = sphi 0, %s37
    %s57 = sphi 0, %s57
    %s59 = sphi 0, %s57
    %s60 = sphi 0, %s59
    %s74 = sphi 0, %s60
    %s78 = sphi 0, %s78
    %s80 = sphi 0, %s78
    %s81 = sphi 0, %s80
    %s95 = sphi 0, %s81
    %s103 = sphi 0, %s105
    %s106 = sphi 0, %s103
    %s107 = sphi 0, %s106
    %s123 = sphi 0, %s107
  $region4: #{forward.14} parent=0 // loop_header_branch
    %12 = sbr.rel (%p10) target = $region8
  $region5: #{forward.14} parent=0 // loop_body
    %s14 = ssub.s32 %s9, 1
    %s15 = ssub.s32 %s9, 2
    %s22 = sadd.s32 1, %s17
    %p23 = scmp.ge.s32.totalorder %s22, 1
    %s24 = scalar_select %p23, 0, %s22
    %s25 = sadd.s32 1, %s16
    %s26 = scalar_select %p23, %s25, %s16
    %p27 = scmp.ge.s32.totalorder %s26, 2
    %s28 = scalar_select %p27, 0, %s26
    %s29 = ssub.s32 %s16, %s28
    %s30 = ssub.s32 %s17, %s24
    %s31 = sor.u32 %s29, %s30
    %p32 = scmp.eq.s32.totalorder %s31, 0
    %s34 = sadd.s32 %s33, 1
    %s35 = scalar_select %p32, %s33, %s34
    %p38 = pneg %p32
    %p39 = scmp.eq.s32.totalorder %s9, 1
    %p40 = por %p38, %p39
    %p41 = scmp.ne.s32.totalorder %s33, %s36
    %p42 = scmp.eq.s32.totalorder %s9, 0
    %p43 = por %p41, %p42
    %p44 = scmp.ne.s32.totalorder %s33, %s36
    %p45 = scmp.eq.s32.totalorder %s14, 1
    %p46 = por %p44, %p45
    %p47 = scmp.ne.s32.totalorder %s36, %s37
    %p48 = scmp.eq.s32.totalorder %s14, 0
    %p49 = por %p47, %p48
    %p50 = scmp.ne.s32.totalorder %s36, %s37
    %p51 = scmp.eq.s32.totalorder %s15, 1
    %p52 = por %p50, %p51
    %p54 = scmp.ne.s32.totalorder %s37, %s53
    %p55 = scmp.eq.s32.totalorder %s15, 0
    %p56 = por %p54, %p55
    %s58 = sadd.s32 %s57, 1
    %p61 = scmp.eq.s32.totalorder %s9, 1
    %p62 = scmp.ne.s32.totalorder %s57, %s59
    %p63 = scmp.eq.s32.totalorder %s9, 0
    %p64 = por %p62, %p63
    %p65 = scmp.ne.s32.totalorder %s57, %s59
    %p66 = scmp.eq.s32.totalorder %s14, 1
    %p67 = por %p65, %p66
    %p68 = scmp.ne.s32.totalorder %s59, %s60
    %p69 = scmp.eq.s32.totalorder %s14, 0
    %p70 = por %p68, %p69
    %p71 = scmp.ne.s32.totalorder %s59, %s60
    %p72 = scmp.eq.s32.totalorder %s15, 1
    %p73 = por %p71, %p72
    %p75 = scmp.ne.s32.totalorder %s60, %s74
    %p76 = scmp.eq.s32.totalorder %s15, 0
    %p77 = por %p75, %p76
    %s79 = sadd.s32 %s78, 1
    %p82 = scmp.eq.s32.totalorder %s9, 1
    %p83 = scmp.ne.s32.totalorder %s78, %s80
    %p84 = scmp.eq.s32.totalorder %s9, 0
    %p85 = por %p83, %p84
    %p86 = scmp.ne.s32.totalorder %s78, %s80
    %p87 = scmp.eq.s32.totalorder %s14, 1
    %p88 = por %p86, %p87
    %p89 = scmp.ne.s32.totalorder %s80, %s81
    %p90 = scmp.eq.s32.totalorder %s14, 0
    %p91 = por %p89, %p90
    %p92 = scmp.ne.s32.totalorder %s80, %s81
    %p93 = scmp.eq.s32.totalorder %s15, 1
    %p94 = por %p92, %p93
    %p96 = scmp.ne.s32.totalorder %s81, %s95
    %p97 = scmp.eq.s32.totalorder %s15, 0
    %p98 = por %p96, %p97
    %s99 = ssub.s32 %s16, %s28
    %s100 = ssub.s32 %s17, %s24
    %s101 = sor.u32 %s99, %s100
    %p102 = scmp.eq.s32.totalorder %s101, 0
    %s104 = sadd.s32 %s103, 1
    %s105 = scalar_select %p102, %s103, %s104
    %p108 = pneg %p102
    %p109 = scmp.eq.s32.totalorder %s9, 1
    %p110 = por %p108, %p109
    %p111 = scmp.ne.s32.totalorder %s103, %s106
    %p112 = scmp.eq.s32.totalorder %s9, 0
    %p113 = por %p111, %p112
    %p114 = scmp.ne.s32.totalorder %s103, %s106
    %p115 = scmp.eq.s32.totalorder %s14, 1
    %p116 = por %p114, %p115
    %p117 = scmp.ne.s32.totalorder %s106, %s107
    %p118 = scmp.eq.s32.totalorder %s14, 0
    %p119 = por %p117, %p118
    %p120 = scmp.ne.s32.totalorder %s106, %s107
    %p121 = scmp.eq.s32.totalorder %s15, 1
    %p122 = por %p120, %p121
    %p124 = scmp.ne.s32.totalorder %s107, %s123
    %p125 = scmp.eq.s32.totalorder %s15, 0
    %p126 = por %p124, %p125
    %p127 = scmp.le.s32.totalorder 1, %s9
    %p128 = scmp.lt.s32.totalorder %s9, 3
    %p129 = pnand %p127, %p128
    %p130 = pneg %p129
    // Predicated region
    $region9: #{forward.14} parent=5 // pred_check
      _
    $region10: #{forward.14} parent=5 // pred_check_branch
      %132 = sbr.rel (%p129) target = $region12
    $region11: #{forward.14} parent=5 // pred_region
      %s133 = ssub.s32 %s9, 1
      // Predicated region
      $region13: #{forward.14} parent=11 // pred_check
        %p134 = pneg %p70
      $region14: #{forward.14} parent=11 // pred_check_branch
        %136 = sbr.rel (%p134) target = $region16
      $region15: #{forward.14} parent=11 // pred_region
        _
      $region16: #{forward.14} parent=11 // pred_fallthru
        _
      // Predicated region
      $region17: #{forward.14} parent=11 // pred_check
        %p137 = pneg %p91
      $region18: #{forward.14} parent=11 // pred_check_branch
        %139 = sbr.rel (%p137) target = $region20
      $region19: #{forward.14} parent=11 // pred_region
        _
      $region20: #{forward.14} parent=11 // pred_fallthru
        _
    $region12: #{forward.14} parent=5 // pred_fallthru
      _
    %p140 = scmp.lt.s32.totalorder %s9, 2
    // Predicated region
    $region21: #{forward.14} parent=5 // pred_check
      %p141 = pneg %p140
    $region22: #{forward.14} parent=5 // pred_check_branch
      %143 = sbr.rel (%p141) target = $region24
    $region23: #{forward.14} parent=5 // pred_region
      // Predicated region
      $region25: #{forward.14} parent=23 // pred_check
        %p144 = pneg %p43
      $region26: #{forward.14} parent=23 // pred_check_branch
        %146 = sbr.rel (%p144) target = $region28
      $region27: #{forward.14} parent=23 // pred_region
        %s147 = smul.u32 4, %s17
        %p148 = scmp.lt.s32.totalorder %s16, 1
        %s149 = scalar_select %p148, %s16, 1
        %p150 = scmp.lt.s32.totalorder %s147, 3
        %s151 = scalar_select %p150, %s147, 3
        %s152 = smul.addr %s151, 2
        %s153 = smul.addr %s149, 32
        %s154 = sadd.s32 %s152, %s153
        %s155 = smul.addr %s154, 4
        %s156 = scalar_lea.vmem %s0, %s155
        %s157 = smul.u32 4, %s17
      $region28: #{forward.14} parent=23 // pred_fallthru
        _
    $region24: #{forward.14} parent=5 // pred_fallthru
      _
    %p158 = scmp.le.s32.totalorder 1, %s9
    %p159 = scmp.lt.s32.totalorder %s9, 3
    %p160 = pnand %p158, %p159
    %p161 = pneg %p160
    // Predicated region
    $region29: #{forward.14} parent=5 // pred_check
      _
    $region30: #{forward.14} parent=5 // pred_check_branch
      %163 = sbr.rel (%p160) target = $region32
    $region31: #{forward.14} parent=5 // pred_region
      %s164 = ssub.s32 %s9, 1
      %s165 = smul.u32 4, %s19
      %p166 = scmp.lt.s32.totalorder %s18, 1
      %s167 = scalar_select %p166, %s18, 1
      %p168 = scmp.lt.s32.totalorder %s165, 3
      %s169 = scalar_select %p168, %s165, 3
      %s170 = smul.addr %s169, 2
      %s171 = smul.addr %s167, 32
      %s172 = sadd.s32 %s170, %s171
      %s173 = smul.addr %s172, 4
      %s174 = scalar_lea.vmem %s0, %s173
      %p175 = pneg %p49
      %p176 = pneg %p46
      %p177 = pneg %p70
      %p178 = pneg %p67
      %p179 = pneg %p91
      %p180 = pneg %p88
      %p181 = pneg %p119
      %p182 = pneg %p116
      %s183 = smul.u32 4, %s19
      %p184 = scmp.lt.s32.totalorder %s18, 1
      %s185 = scalar_select %p184, %s18, 1
      %p186 = scmp.lt.s32.totalorder %s183, 3
      %s187 = scalar_select %p186, %s183, 3
      %s188 = smul.addr %s185, 4
      %s189 = sadd.s32 %s187, %s188
      %s190 = smul.addr %s189, 4
      %s191 = scalar_lea.vmem %s3, %s190
      %s192 = smul.u32 4, %s19
      %p193 = scmp.lt.s32.totalorder %s18, 1
      %s194 = scalar_select %p193, %s18, 1
      %p195 = scmp.lt.s32.totalorder %s192, 3
      %s196 = scalar_select %p195, %s192, 3
      %s197 = smul.addr %s196, 2
      %s198 = smul.addr %s194, 32
      %s199 = sadd.s32 %s197, %s198
      %s200 = smul.addr %s199, 4
      %s201 = scalar_lea.vmem %s0, %s200
      %s202 = smul.u32 4, %s19
      %s203 = smul.u32 4, %s19
      %p204 = scmp.lt.s32.totalorder %s18, 1
      %s205 = scalar_select %p204, %s18, 1
      %p206 = scmp.lt.s32.totalorder %s203, 3
      %s207 = scalar_select %p206, %s203, 3
      %s208 = smul.addr %s205, 4
      %s209 = sadd.s32 %s207, %s208
      %s210 = smul.addr %s209, 4
      %s211 = scalar_lea.vmem %s3, %s210
      %s212 = smul.u32 4, %s19
      %v214 = vld [vmem:[%s1] sm:$0xf]
      %v215 = vld [vmem:[%s1 + $0x4] sm:$0xf]
      %v216 = vld [vmem:[%s1 + $0x8] sm:$0xf]
      %v217 = vld [vmem:[%s1 + $0xc] sm:$0xf]
      %v218 = vld [vmem:[%s1 + $0x10] sm:$0xf]
      %v219 = vld [vmem:[%s1 + $0x14] sm:$0xf]
      %v220 = vld [vmem:[%s1 + $0x18] sm:$0xf]
      %v221 = vld [vmem:[%s1 + $0x1c] sm:$0xf]
      %v222 = vld [vmem:[%s1 + $0x20] sm:$0xf]
      %v223 = vld [vmem:[%s1 + $0x24] sm:$0xf]
      %v224 = vld [vmem:[%s1 + $0x28] sm:$0xf]
      %v225 = vld [vmem:[%s1 + $0x2c] sm:$0xf]
      %v226 = vld [vmem:[%s1 + $0x30] sm:$0xf]
      %v227 = vld [vmem:[%s1 + $0x34] sm:$0xf]
      %v228 = vld [vmem:[%s1 + $0x38] sm:$0xf]
      %v229 = vld [vmem:[%s1 + $0x3c] sm:$0xf]
      %v230 = vld [vmem:[%s1 + $0x40] sm:$0xf]
      %v231 = vld [vmem:[%s1 + $0x44] sm:$0xf]
      %v232 = vld [vmem:[%s201] sm:$0xff]
      %v233 = vld [vmem:[%s201 + $0x8] sm:$0xff]
      %v234 = vld [vmem:[%s201 + $0x10] sm:$0xff]
      %v235 = vld [vmem:[%s201 + $0x18] sm:$0xff]
      %v236 = vld [vmem:[%s201 + $0x20] sm:$0xff]
      %v237 = vld [vmem:[%s201 + $0x28] sm:$0xff]
      %v238 = vld [vmem:[%s201 + $0x30] sm:$0xff]
      %v239 = vld [vmem:[%s201 + $0x38] sm:$0xff]
      %v240 = vld [vmem:[%s201 + $0x40] sm:$0xff]
      %v241 = vld [vmem:[%s201 + $0x48] sm:$0xff]
      %v242 = vld [vmem:[%s201 + $0x50] sm:$0xff]
      %v243 = vld [vmem:[%s201 + $0x58] sm:$0xff]
      %v244 = vld [vmem:[%s201 + $0x60] sm:$0xff]
      %v245 = vld [vmem:[%s201 + $0x68] sm:$0xff]
      %v246 = vld [vmem:[%s201 + $0x70] sm:$0xff]
      %v247 = vld [vmem:[%s201 + $0x78] sm:$0xff]
      %v264 = vunpack.c.l.b16 %v232
      %v265 = vunpack.c.h.b16 %v232
      %v266 = vunpack.c.l.b16 %v233
      %v267 = vunpack.c.h.b16 %v233
      %v268 = vunpack.c.l.b16 %v234
      %v269 = vunpack.c.h.b16 %v234
      %v270 = vunpack.c.l.b16 %v235
      %v271 = vunpack.c.h.b16 %v235
      %v272 = vunpack.c.l.b16 %v236
      %v273 = vunpack.c.h.b16 %v236
      %v274 = vunpack.c.l.b16 %v237
      %v275 = vunpack.c.h.b16 %v237
      %v276 = vunpack.c.l.b16 %v238
      %v277 = vunpack.c.h.b16 %v238
      %v278 = vunpack.c.l.b16 %v239
      %v279 = vunpack.c.h.b16 %v239
      %v280 = vunpack.c.l.b16 %v240
      %v281 = vunpack.c.h.b16 %v240
      %v282 = vunpack.c.l.b16 %v241
      %v283 = vunpack.c.h.b16 %v241
      %v284 = vunpack.c.l.b16 %v242
      %v285 = vunpack.c.h.b16 %v242
      %v286 = vunpack.c.l.b16 %v243
      %v287 = vunpack.c.h.b16 %v243
      %v288 = vunpack.c.l.b16 %v244
      %v289 = vunpack.c.h.b16 %v244
      %v290 = vunpack.c.l.b16 %v245
      %v291 = vunpack.c.h.b16 %v245
      %v292 = vunpack.c.l.b16 %v246
      %v293 = vunpack.c.h.b16 %v246
      %v294 = vunpack.c.l.b16 %v247
      %v295 = vunpack.c.h.b16 %v247
      %v296 = vpack.c.b16 %v266, %v264
      %v297 = vpack.c.b16 %v267, %v265
      %v298 = vpack.c.b16 %v270, %v268
      %v299 = vpack.c.b16 %v271, %v269
      %v300 = vpack.c.b16 %v274, %v272
      %v301 = vpack.c.b16 %v275, %v273
      %v302 = vpack.c.b16 %v278, %v276
      %v303 = vpack.c.b16 %v279, %v277
      %v304 = vpack.c.b16 %v282, %v280
      %v305 = vpack.c.b16 %v283, %v281
      %v306 = vpack.c.b16 %v286, %v284
      %v307 = vpack.c.b16 %v287, %v285
      %v308 = vpack.c.b16 %v290, %v288
      %v309 = vpack.c.b16 %v291, %v289
      %v310 = vpack.c.b16 %v294, %v292
      %v311 = vpack.c.b16 %v295, %v293
      %v338 = vunpack.c.l.b16 %v214
      %v339 = vunpack.c.l.b16 %v215
      %v340 = vunpack.c.l.b16 %v216
      %v341 = vunpack.c.l.b16 %v217
      %v342 = vunpack.c.l.b16 %v218
      %v343 = vunpack.c.l.b16 %v219
      %v344 = vunpack.c.l.b16 %v220
      %v345 = vunpack.c.l.b16 %v221
      %v346 = vunpack.c.l.b16 %v222
      %v347 = vunpack.c.l.b16 %v223
      %v348 = vunpack.c.l.b16 %v224
      %v349 = vunpack.c.l.b16 %v225
      %v350 = vunpack.c.l.b16 %v226
      %v351 = vunpack.c.l.b16 %v227
      %v352 = vunpack.c.l.b16 %v228
      %v353 = vunpack.c.l.b16 %v229
      %v354 = vunpack.c.l.b16 %v230
      %v355 = vunpack.c.l.b16 %v231
      %v356 = vpack.c.b16 %v339, %v338
      %v357 = vpack.c.b16 %v341, %v340
      %v358 = vpack.c.b16 %v343, %v342
      %v359 = vpack.c.b16 %v345, %v344
      %v360 = vpack.c.b16 %v347, %v346
      %v361 = vpack.c.b16 %v349, %v348
      %v362 = vpack.c.b16 %v351, %v350
      %v363 = vpack.c.b16 %v353, %v352
      %v364 = vpack.c.b16 %v355, %v354
      %vm374 = vcmask 130048
      %v376 = vsel %vm374, %v297, 0
      %v379 = vsel %vm374, %v299, 0
      %v382 = vsel %vm374, %v301, 0
      %v385 = vsel %vm374, %v303, 0
      %v388 = vsel %vm374, %v305, 0
      %v391 = vsel %vm374, %v307, 0
      %v394 = vsel %vm374, %v309, 0
      %v397 = vsel %vm374, %v311, 0
      %399 = vmatprep.subr.bf16.mxu0 0
      %400 = vmatpush1.bf16.msra.mxu0 %v356
      %401 = vmatprep.subr.bf16.mxu0 0
      %402 = vmatpush1.bf16.msra.mxu0 %v357
      %403 = vmatprep.subr.bf16.mxu0 0
      %404 = vmatpush1.bf16.msra.mxu0 %v358
      %405 = vmatprep.subr.bf16.mxu0 0
      %406 = vmatpush1.bf16.msra.mxu0 %v359
      %407 = vmatprep.subr.bf16.mxu0 0
      %408 = vmatpush1.bf16.msra.mxu0 %v360
      %409 = vmatprep.subr.bf16.mxu0 0
      %410 = vmatpush1.bf16.msra.mxu0 %v361
      %411 = vmatprep.subr.bf16.mxu0 0
      %412 = vmatpush1.bf16.msra.mxu0 %v362
      %413 = vmatprep.subr.bf16.mxu0 0
      %414 = vmatpush1.bf16.msra.mxu0 %v363
      %415 = vmatprep.subr.bf16.mxu0 0
      %416 = vmatpush1.bf16.msra.mxu0 %v364
      %417 = vmatprep.subr.bf16.mxu0 0
      %418 = vmatpush1.bf16.msra.mxu0 0
      %419 = vmatprep.subr.bf16.mxu0 0
      %420 = vmatpush1.bf16.msra.mxu0 0
      %421 = vmatprep.subr.bf16.mxu0 0
      %422 = vmatpush1.bf16.msra.mxu0 0
      %423 = vmatprep.subr.bf16.mxu0 0
      %424 = vmatpush1.bf16.msra.mxu0 0
      %425 = vmatprep.subr.bf16.mxu0 0
      %426 = vmatpush1.bf16.msra.mxu0 0
      %427 = vmatprep.subr.bf16.mxu0 0
      %428 = vmatpush1.bf16.msra.mxu0 0
      %429 = vmatprep.subr.bf16.mxu0 0
      %430 = vmatpush1.bf16.msra.mxu0 0
      %431 = vmatprep.mubr.bf16.mxu0 %v376
      %432 = vmatmul.mubr.bf16.gmra.mrb[0].mxu0 %v296
      %v433 = vpop.f32.mrb[0].mxu0
      %v434 = vadd.f32 0.0, %v433
      %v435 = vpop.f32.mrb[0].mxu0
      %v436 = vpop.f32.mrb[0].mxu0
      %v437 = vadd.f32 0.0, %v436
      %v438 = vpop.f32.mrb[0].mxu0
      %439 = vmatprep.mubr.bf16.mxu0 %v379
      %440 = vmatmul.mubr.bf16.gmra.mrb[0].mxu0 %v298
      %v441 = vpop.f32.mrb[0].mxu0
      %v442 = vadd.f32 0.0, %v441
      %v443 = vpop.f32.mrb[0].mxu0
      %v444 = vpop.f32.mrb[0].mxu0
      %v445 = vadd.f32 0.0, %v444
      %v446 = vpop.f32.mrb[0].mxu0
      %447 = vmatprep.mubr.bf16.mxu0 %v382
      %448 = vmatmul.mubr.bf16.gmra.mrb[0].mxu0 %v300
      %v449 = vpop.f32.mrb[0].mxu0
      %v450 = vadd.f32 0.0, %v449
      %v451 = vpop.f32.mrb[0].mxu0
      %v452 = vpop.f32.mrb[0].mxu0
      %v453 = vadd.f32 0.0, %v452
      %v454 = vpop.f32.mrb[0].mxu0
      %455 = vmatprep.mubr.bf16.mxu0 %v385
      %456 = vmatmul.mubr.bf16.gmra.mrb[0].mxu0 %v302
      %v457 = vpop.f32.mrb[0].mxu0
      %v458 = vadd.f32 0.0, %v457
      %v459 = vpop.f32.mrb[0].mxu0
      %v460 = vpop.f32.mrb[0].mxu0
      %v461 = vadd.f32 0.0, %v460
      %v462 = vpop.f32.mrb[0].mxu0
      %463 = vmatprep.mubr.bf16.mxu0 %v388
      %464 = vmatmul.mubr.bf16.gmra.mrb[0].mxu0 %v304
      %v465 = vpop.f32.mrb[0].mxu0
      %v466 = vadd.f32 0.0, %v465
      %v467 = vpop.f32.mrb[0].mxu0
      %v468 = vpop.f32.mrb[0].mxu0
      %v469 = vadd.f32 0.0, %v468
      %v470 = vpop.f32.mrb[0].mxu0
      %471 = vmatprep.mubr.bf16.mxu0 %v391
      %472 = vmatmul.mubr.bf16.gmra.mrb[0].mxu0 %v306
      %v473 = vpop.f32.mrb[0].mxu0
      %v474 = vadd.f32 0.0, %v473
      %v475 = vpop.f32.mrb[0].mxu0
      %v476 = vpop.f32.mrb[0].mxu0
      %v477 = vadd.f32 0.0, %v476
      %v478 = vpop.f32.mrb[0].mxu0
      %479 = vmatprep.mubr.bf16.mxu0 %v394
      %480 = vmatmul.mubr.bf16.gmra.mrb[0].mxu0 %v308
      %v481 = vpop.f32.mrb[0].mxu0
      %v482 = vadd.f32 0.0, %v481
      %v483 = vpop.f32.mrb[0].mxu0
      %v484 = vpop.f32.mrb[0].mxu0
      %v485 = vadd.f32 0.0, %v484
      %v486 = vpop.f32.mrb[0].mxu0
      %487 = vmatprep.mubr.bf16.mxu0 %v397
      %488 = vmatmul.mubr.bf16.gmra.mrb[0].mxu0 %v310
      %v489 = vpop.f32.mrb[0].mxu0
      %v490 = vadd.f32 0.0, %v489
      %v491 = vpop.f32.mrb[0].mxu0
      %v492 = vpop.f32.mrb[0].mxu0
      %v493 = vadd.f32 0.0, %v492
      %v494 = vpop.f32.mrb[0].mxu0
      %495 = vdwg.mxu0
      %v496 = vmax.f32 %v434, %v450
      %v497 = vmax.f32 %v437, %v453
      %v498 = vmax.f32 %v442, %v458
      %v499 = vmax.f32 %v445, %v461
      %v500 = vmax.f32 %v466, %v482
      %v501 = vmax.f32 %v469, %v485
      %v502 = vmax.f32 %v474, %v490
      %v503 = vmax.f32 %v477, %v493
      %v504 = vmax.f32 %v496, %v500
      %v505 = vmax.f32 %v497, %v501
      %v506 = vmax.f32 %v498, %v502
      %v507 = vmax.f32 %v499, %v503
      %v508 = vld [vmem:[%s2] sm:$0x1]
      %v510 = vlaneseq
      %v511 = vshrl.u32 %v510, 7
      %v512 = vsub.s32 0, %v511
      %v513 = vrot.slane %v508, %v512
      %v515 = vadd.f32 %v504, %v513
      %v516 = vadd.f32 %v505, %v513
      %v517 = vadd.f32 %v506, %v513
      %v518 = vadd.f32 %v507, %v513
      %v519 = vmax.f32 %v515, 0.0
      %v520 = vmax.f32 %v516, 0.0
      %v521 = vmax.f32 %v517, 0.0
      %v522 = vmax.f32 %v518, 0.0
      %v523 = vpack.c.bf16 %v520, %v519
      %v524 = vpack.c.bf16 %v522, %v521
      %v527 = vunpack.c.l.b16 %v523
      %v528 = vunpack.c.h.b16 %v523
      %v529 = vunpack.c.l.b16 %v524
      %v530 = vunpack.c.h.b16 %v524
      %v531 = vpack.c.b16 %v527, %v527
      %v532 = vpack.c.b16 %v528, %v528
      %v533 = vpack.c.b16 %v529, %v529
      %v534 = vpack.c.b16 %v530, %v530
      %vm539 = vcmask 257024
      %540 = vst.msk [vmem:[%s211] sm:$0xf] %vm539, %v531
      %541 = vst.msk [vmem:[%s211 + $0x4] sm:$0xf] %vm539, %v532
      %542 = vst.msk [vmem:[%s211 + $0x8] sm:$0xf] %vm539, %v533
      %543 = vst.msk [vmem:[%s211 + $0xc] sm:$0xf] %vm539, %v534
      %s544 = smul.u32 4, %s19
      %p545 = scmp.lt.s32.totalorder %s18, 1
      %s546 = scalar_select %p545, %s18, 1
      %p547 = scmp.lt.s32.totalorder %s544, 3
      %s548 = scalar_select %p547, %s544, 3
      %s549 = smul.addr %s546, 4
      %s550 = sadd.s32 %s548, %s549
      %s551 = smul.addr %s550, 4
      %s552 = scalar_lea.vmem %s3, %s551
      // Predicated region
      $region33: #{forward.14} parent=31 // pred_check
        %p553 = pneg %p116
      $region34: #{forward.14} parent=31 // pred_check_branch
        %555 = sbr.rel (%p553) target = $region36
      $region35: #{forward.14} parent=31 // pred_region
        %s556 = smul.u32 4, %s19
      $region36: #{forward.14} parent=31 // pred_fallthru
        _
    $region32: #{forward.14} parent=5 // pred_fallthru
      _
    %p557 = scmp.le.s32.totalorder 2, %s9
    // Predicated region
    $region37: #{forward.14} parent=5 // pred_check
      %p558 = pneg %p557
    $region38: #{forward.14} parent=5 // pred_check_branch
      %560 = sbr.rel (%p558) target = $region40
    $region39: #{forward.14} parent=5 // pred_region
      %s561 = ssub.s32 %s9, 2
      // Predicated region
      $region41: #{forward.14} parent=39 // pred_check
        %p562 = pneg %p122
      $region42: #{forward.14} parent=39 // pred_check_branch
        %564 = sbr.rel (%p562) target = $region44
      $region43: #{forward.14} parent=39 // pred_region
        %s565 = smul.u32 4, %s21
        %p566 = scmp.lt.s32.totalorder %s20, 1
        %s567 = scalar_select %p566, %s20, 1
        %p568 = scmp.lt.s32.totalorder %s565, 3
        %s569 = scalar_select %p568, %s565, 3
        %s570 = smul.addr %s567, 4
        %s571 = sadd.s32 %s569, %s570
        %s572 = smul.addr %s571, 4
        %s573 = scalar_lea.vmem %s3, %s572
      $region44: #{forward.14} parent=39 // pred_fallthru
        _
    $region40: #{forward.14} parent=5 // pred_fallthru
      _
  $region6: #{forward.14} parent=0 // loop_footer
    %s13 = sadd.s32 1, %s9
  $region7: #{forward.14} parent=0 // loop_footer_branch
    %8 = sbr.rel target = $region3
  $region8: #{forward.14} parent=0 // loop_exit
    _

// kernel: forward.15
$region0: #{forward.15}
  #allocation0 [shape = 'u32[]', space=smem, size = 0x4, offset = 0x4, fixed_abs, tag = 'smem constant byte address 0x4 - core index']
  #allocation1 [shape = 'u32[144,128]{1,0:T(1,128)}', space=vmem, size = 0x12000, scoped, tag = 'internal scratch']
  %s0 = inlined_call_operand.vmem [shape: bf16[2,4,8,288], index: 0, kind: input, shape index: {}]
  %s1 = inlined_call_operand.vmem [shape: bf16[288,64], index: 1, kind: input, shape index: {}]
  %s2 = inlined_call_operand.vmem [shape: f32[1,64], index: 2, kind: input, shape index: {}]
  %s3 = inlined_call_operand.vmem [shape: bf16[2,8,64], index: 3, kind: output, shape index: {}]
  %s4 = sld [smem:[#allocation0]]
  $region45: #{forward.15} parent=0
    _
  %s6 = ssub.s32 1, %s4
  %s7 = scalar_select 0, %s6, %s4
  loop: start=0, step=1, limit=4
  $region2: #{forward.15} parent=0 // loop_pre_header
    _
  $region3: #{forward.15} parent=0 // loop_header
    %s9 = sphi 0, %s13
    %p10 = scmp.ge.s32.totalorder %s9, 4
    %s16 = sphi 0, %s28
    %s17 = sphi 0, %s24
    %s18 = sphi 0, %s16
    %s19 = sphi 0, %s17
    %s20 = sphi 0, %s18
    %s21 = sphi 0, %s19
    %s33 = sphi 0, %s35
    %s36 = sphi 0, %s33
    %s37 = sphi 0, %s36
    %s53 = sphi 0, %s37
    %s57 = sphi 0, %s57
    %s59 = sphi 0, %s57
    %s60 = sphi 0, %s59
    %s74 = sphi 0, %s60
    %s78 = sphi 0, %s78
    %s80 = sphi 0, %s78
    %s81 = sphi 0, %s80
    %s95 = sphi 0, %s81
    %s103 = sphi 0, %s105
    %s106 = sphi 0, %s103
    %s107 = sphi 0, %s106
    %s123 = sphi 0, %s107
  $region4: #{forward.15} parent=0 // loop_header_branch
    %12 = sbr.rel (%p10) target = $region8
  $region5: #{forward.15} parent=0 // loop_body
    %s14 = ssub.s32 %s9, 1
    %s15 = ssub.s32 %s9, 2
    %s22 = sadd.s32 1, %s17
    %p23 = scmp.ge.s32.totalorder %s22, 1
    %s24 = scalar_select %p23, 0, %s22
    %s25 = sadd.s32 1, %s16
    %s26 = scalar_select %p23, %s25, %s16
    %p27 = scmp.ge.s32.totalorder %s26, 2
    %s28 = scalar_select %p27, 0, %s26
    %s29 = ssub.s32 %s16, %s28
    %s30 = ssub.s32 %s17, %s24
    %s31 = sor.u32 %s29, %s30
    %p32 = scmp.eq.s32.totalorder %s31, 0
    %s34 = sadd.s32 %s33, 1
    %s35 = scalar_select %p32, %s33, %s34
    %p38 = pneg %p32
    %p39 = scmp.eq.s32.totalorder %s9, 1
    %p40 = por %p38, %p39
    %p41 = scmp.ne.s32.totalorder %s33, %s36
    %p42 = scmp.eq.s32.totalorder %s9, 0
    %p43 = por %p41, %p42
    %p44 = scmp.ne.s32.totalorder %s33, %s36
    %p45 = scmp.eq.s32.totalorder %s14, 1
    %p46 = por %p44, %p45
    %p47 = scmp.ne.s32.totalorder %s36, %s37
    %p48 = scmp.eq.s32.totalorder %s14, 0
    %p49 = por %p47, %p48
    %p50 = scmp.ne.s32.totalorder %s36, %s37
    %p51 = scmp.eq.s32.totalorder %s15, 1
    %p52 = por %p50, %p51
    %p54 = scmp.ne.s32.totalorder %s37, %s53
    %p55 = scmp.eq.s32.totalorder %s15, 0
    %p56 = por %p54, %p55
    %s58 = sadd.s32 %s57, 1
    %p61 = scmp.eq.s32.totalorder %s9, 1
    %p62 = scmp.ne.s32.totalorder %s57, %s59
    %p63 = scmp.eq.s32.totalorder %s9, 0
    %p64 = por %p62, %p63
    %p65 = scmp.ne.s32.totalorder %s57, %s59
    %p66 = scmp.eq.s32.totalorder %s14, 1
    %p67 = por %p65, %p66
    %p68 = scmp.ne.s32.totalorder %s59, %s60
    %p69 = scmp.eq.s32.totalorder %s14, 0
    %p70 = por %p68, %p69
    %p71 = scmp.ne.s32.totalorder %s59, %s60
    %p72 = scmp.eq.s32.totalorder %s15, 1
    %p73 = por %p71, %p72
    %p75 = scmp.ne.s32.totalorder %s60, %s74
    %p76 = scmp.eq.s32.totalorder %s15, 0
    %p77 = por %p75, %p76
    %s79 = sadd.s32 %s78, 1
    %p82 = scmp.eq.s32.totalorder %s9, 1
    %p83 = scmp.ne.s32.totalorder %s78, %s80
    %p84 = scmp.eq.s32.totalorder %s9, 0
    %p85 = por %p83, %p84
    %p86 = scmp.ne.s32.totalorder %s78, %s80
    %p87 = scmp.eq.s32.totalorder %s14, 1
    %p88 = por %p86, %p87
    %p89 = scmp.ne.s32.totalorder %s80, %s81
    %p90 = scmp.eq.s32.totalorder %s14, 0
    %p91 = por %p89, %p90
    %p92 = scmp.ne.s32.totalorder %s80, %s81
    %p93 = scmp.eq.s32.totalorder %s15, 1
    %p94 = por %p92, %p93
    %p96 = scmp.ne.s32.totalorder %s81, %s95
    %p97 = scmp.eq.s32.totalorder %s15, 0
    %p98 = por %p96, %p97
    %s99 = ssub.s32 %s16, %s28
    %s100 = ssub.s32 %s17, %s24
    %s101 = sor.u32 %s99, %s100
    %p102 = scmp.eq.s32.totalorder %s101, 0
    %s104 = sadd.s32 %s103, 1
    %s105 = scalar_select %p102, %s103, %s104
    %p108 = pneg %p102
    %p109 = scmp.eq.s32.totalorder %s9, 1
    %p110 = por %p108, %p109
    %p111 = scmp.ne.s32.totalorder %s103, %s106
    %p112 = scmp.eq.s32.totalorder %s9, 0
    %p113 = por %p111, %p112
    %p114 = scmp.ne.s32.totalorder %s103, %s106
    %p115 = scmp.eq.s32.totalorder %s14, 1
    %p116 = por %p114, %p115
    %p117 = scmp.ne.s32.totalorder %s106, %s107
    %p118 = scmp.eq.s32.totalorder %s14, 0
    %p119 = por %p117, %p118
    %p120 = scmp.ne.s32.totalorder %s106, %s107
    %p121 = scmp.eq.s32.totalorder %s15, 1
    %p122 = por %p120, %p121
    %p124 = scmp.ne.s32.totalorder %s107, %s123
    %p125 = scmp.eq.s32.totalorder %s15, 0
    %p126 = por %p124, %p125
    %p127 = scmp.le.s32.totalorder 1, %s9
    %p128 = scmp.lt.s32.totalorder %s9, 3
    %p129 = pnand %p127, %p128
    %p130 = pneg %p129
    // Predicated region
    $region9: #{forward.15} parent=5 // pred_check
      _
    $region10: #{forward.15} parent=5 // pred_check_branch
      %132 = sbr.rel (%p129) target = $region12
    $region11: #{forward.15} parent=5 // pred_region
      %s133 = ssub.s32 %s9, 1
      // Predicated region
      $region13: #{forward.15} parent=11 // pred_check
        %p134 = pneg %p70
      $region14: #{forward.15} parent=11 // pred_check_branch
        %136 = sbr.rel (%p134) target = $region16
      $region15: #{forward.15} parent=11 // pred_region
        _
      $region16: #{forward.15} parent=11 // pred_fallthru
        _
      // Predicated region
      $region17: #{forward.15} parent=11 // pred_check
        %p137 = pneg %p91
      $region18: #{forward.15} parent=11 // pred_check_branch
        %139 = sbr.rel (%p137) target = $region20
      $region19: #{forward.15} parent=11 // pred_region
        _
      $region20: #{forward.15} parent=11 // pred_fallthru
        _
    $region12: #{forward.15} parent=5 // pred_fallthru
      _
    %p140 = scmp.lt.s32.totalorder %s9, 2
    // Predicated region
    $region21: #{forward.15} parent=5 // pred_check
      %p141 = pneg %p140
    $region22: #{forward.15} parent=5 // pred_check_branch
      %143 = sbr.rel (%p141) target = $region24
    $region23: #{forward.15} parent=5 // pred_region
      // Predicated region
      $region25: #{forward.15} parent=23 // pred_check
        %p144 = pneg %p43
      $region26: #{forward.15} parent=23 // pred_check_branch
        %146 = sbr.rel (%p144) target = $region28
      $region27: #{forward.15} parent=23 // pred_region
        %p147 = scmp.lt.s32.totalorder %s16, 1
        %s148 = scalar_select %p147, %s16, 1
        %p149 = scmp.lt.s32.totalorder %s17, 0
        %s150 = scalar_select %p149, %s17, 0
        %s151 = smul.addr %s150, 3
        %s152 = smul.addr %s148, 12
        %s153 = sadd.s32 %s151, %s152
        %s154 = smul.addr %s153, 4
        %s155 = scalar_lea.vmem %s0, %s154
      $region28: #{forward.15} parent=23 // pred_fallthru
        _
    $region24: #{forward.15} parent=5 // pred_fallthru
      _
    %p156 = scmp.le.s32.totalorder 1, %s9
    %p157 = scmp.lt.s32.totalorder %s9, 3
    %p158 = pnand %p156, %p157
    %p159 = pneg %p158
    // Predicated region
    $region29: #{forward.15} parent=5 // pred_check
      _
    $region30: #{forward.15} parent=5 // pred_check_branch
      %161 = sbr.rel (%p158) target = $region32
    $region31: #{forward.15} parent=5 // pred_region
      %s162 = ssub.s32 %s9, 1
      %p163 = scmp.lt.s32.totalorder %s18, 1
      %s164 = scalar_select %p163, %s18, 1
      %p165 = scmp.lt.s32.totalorder %s19, 0
      %s166 = scalar_select %p165, %s19, 0
      %s167 = smul.addr %s166, 3
      %s168 = smul.addr %s164, 12
      %s169 = sadd.s32 %s167, %s168
      %s170 = smul.addr %s169, 4
      %s171 = scalar_lea.vmem %s0, %s170
      %p172 = pneg %p49
      %p173 = pneg %p46
      %p174 = pneg %p70
      %p175 = pneg %p67
      %p176 = pneg %p91
      %p177 = pneg %p88
      %p178 = pneg %p119
      %p179 = pneg %p116
      %p180 = scmp.lt.s32.totalorder %s18, 1
      %s181 = scalar_select %p180, %s18, 1
      %p182 = scmp.lt.s32.totalorder %s19, 0
      %s183 = scalar_select %p182, %s19, 0
      %s184 = sadd.s32 %s183, %s181
      %s185 = smul.addr %s184, 4
      %s186 = scalar_lea.vmem %s3, %s185
      %p187 = scmp.lt.s32.totalorder %s18, 1
      %s188 = scalar_select %p187, %s18, 1
      %p189 = scmp.lt.s32.totalorder %s19, 0
      %s190 = scalar_select %p189, %s19, 0
      %s191 = smul.addr %s190, 3
      %s192 = smul.addr %s188, 12
      %s193 = sadd.s32 %s191, %s192
      %s194 = smul.addr %s193, 4
      %s195 = scalar_lea.vmem %s0, %s194
      %p196 = scmp.lt.s32.totalorder %s18, 1
      %s197 = scalar_select %p196, %s18, 1
      %p198 = scmp.lt.s32.totalorder %s19, 0
      %s199 = scalar_select %p198, %s19, 0
      %s200 = sadd.s32 %s199, %s197
      %s201 = smul.addr %s200, 4
      %s202 = scalar_lea.vmem %s3, %s201
      %v204 = vld [vmem:[%s1] sm:$0xf]
      %v205 = vld [vmem:[%s1 + $0x4] sm:$0xf]
      %v206 = vld [vmem:[%s1 + $0x8] sm:$0xf]
      %v207 = vld [vmem:[%s1 + $0xc] sm:$0xf]
      %v208 = vld [vmem:[%s1 + $0x10] sm:$0xf]
      %v209 = vld [vmem:[%s1 + $0x14] sm:$0xf]
      %v210 = vld [vmem:[%s1 + $0x18] sm:$0xf]
      %v211 = vld [vmem:[%s1 + $0x1c] sm:$0xf]
      %v212 = vld [vmem:[%s1 + $0x20] sm:$0xf]
      %v213 = vld [vmem:[%s1 + $0x24] sm:$0xf]
      %v214 = vld [vmem:[%s1 + $0x28] sm:$0xf]
      %v215 = vld [vmem:[%s1 + $0x2c] sm:$0xf]
      %v216 = vld [vmem:[%s1 + $0x30] sm:$0xf]
      %v217 = vld [vmem:[%s1 + $0x34] sm:$0xf]
      %v218 = vld [vmem:[%s1 + $0x38] sm:$0xf]
      %v219 = vld [vmem:[%s1 + $0x3c] sm:$0xf]
      %v220 = vld [vmem:[%s1 + $0x40] sm:$0xf]
      %v221 = vld [vmem:[%s1 + $0x44] sm:$0xf]
      %v222 = vld [vmem:[%s1 + $0x48] sm:$0xf]
      %v223 = vld [vmem:[%s1 + $0x4c] sm:$0xf]
      %v224 = vld [vmem:[%s1 + $0x50] sm:$0xf]
      %v225 = vld [vmem:[%s1 + $0x54] sm:$0xf]
      %v226 = vld [vmem:[%s1 + $0x58] sm:$0xf]
      %v227 = vld [vmem:[%s1 + $0x5c] sm:$0xf]
      %v228 = vld [vmem:[%s1 + $0x60] sm:$0xf]
      %v229 = vld [vmem:[%s1 + $0x64] sm:$0xf]
      %v230 = vld [vmem:[%s1 + $0x68] sm:$0xf]
      %v231 = vld [vmem:[%s1 + $0x6c] sm:$0xf]
      %v232 = vld [vmem:[%s1 + $0x70] sm:$0xf]
      %v233 = vld [vmem:[%s1 + $0x74] sm:$0xf]
      %v234 = vld [vmem:[%s1 + $0x78] sm:$0xf]
      %v235 = vld [vmem:[%s1 + $0x7c] sm:$0xf]
      %v236 = vld [vmem:[%s1 + $0x80] sm:$0xf]
      %v237 = vld [vmem:[%s1 + $0x84] sm:$0xf]
      %v238 = vld [vmem:[%s1 + $0x88] sm:$0xf]
      %v239 = vld [vmem:[%s1 + $0x8c] sm:$0xf]
      %v240 = vld [vmem:[%s195] sm:$0xff]
      %v241 = vld [vmem:[%s195 + $0x8] sm:$0xf]
      %v244 = vunpack.c.l.b16 %v240
      %v245 = vunpack.c.h.b16 %v240
      %v246 = vunpack.c.l.b16 %v241
      %v247 = vpack.c.b16 %v244, %v244
      %v248 = vpack.c.b16 %v245, %v245
      %v249 = vpack.c.b16 %v246, %v246
      %v288 = vunpack.c.l.b16 %v204
      %v289 = vunpack.c.l.b16 %v205
      %v290 = vunpack.c.l.b16 %v206
      %v291 = vunpack.c.l.b16 %v207
      %v292 = vunpack.c.l.b16 %v208
      %v293 = vunpack.c.l.b16 %v209
      %v294 = vunpack.c.l.b16 %v210
      %v295 = vunpack.c.l.b16 %v211
      %v296 = vunpack.c.l.b16 %v212
      %v297 = vunpack.c.l.b16 %v213
      %v298 = vunpack.c.l.b16 %v214
      %v299 = vunpack.c.l.b16 %v215
      %v300 = vunpack.c.l.b16 %v216
      %v301 = vunpack.c.l.b16 %v217
      %v302 = vunpack.c.l.b16 %v218
      %v303 = vunpack.c.l.b16 %v219
      %v304 = vunpack.c.l.b16 %v220
      %v305 = vunpack.c.l.b16 %v221
      %v306 = vunpack.c.l.b16 %v222
      %v307 = vunpack.c.l.b16 %v223
      %v308 = vunpack.c.l.b16 %v224
      %v309 = vunpack.c.l.b16 %v225
      %v310 = vunpack.c.l.b16 %v226
      %v311 = vunpack.c.l.b16 %v227
      %v312 = vunpack.c.l.b16 %v228
      %v313 = vunpack.c.l.b16 %v229
      %v314 = vunpack.c.l.b16 %v230
      %v315 = vunpack.c.l.b16 %v231
      %v316 = vunpack.c.l.b16 %v232
      %v317 = vunpack.c.l.b16 %v233
      %v318 = vunpack.c.l.b16 %v234
      %v319 = vunpack.c.l.b16 %v235
      %v320 = vunpack.c.l.b16 %v236
      %v321 = vunpack.c.l.b16 %v237
      %v322 = vunpack.c.l.b16 %v238
      %v323 = vunpack.c.l.b16 %v239
      %v324 = vpack.c.b16 %v289, %v288
      %v325 = vpack.c.b16 %v291, %v290
      %v326 = vpack.c.b16 %v293, %v292
      %v327 = vpack.c.b16 %v295, %v294
      %v328 = vpack.c.b16 %v297, %v296
      %v329 = vpack.c.b16 %v299, %v298
      %v330 = vpack.c.b16 %v301, %v300
      %v331 = vpack.c.b16 %v303, %v302
      %v332 = vpack.c.b16 %v305, %v304
      %v333 = vpack.c.b16 %v307, %v306
      %v334 = vpack.c.b16 %v309, %v308
      %v335 = vpack.c.b16 %v311, %v310
      %v336 = vpack.c.b16 %v313, %v312
      %v337 = vpack.c.b16 %v315, %v314
      %v338 = vpack.c.b16 %v317, %v316
      %v339 = vpack.c.b16 %v319, %v318
      %v340 = vpack.c.b16 %v321, %v320
      %v341 = vpack.c.b16 %v323, %v322
      %vm360 = vcmask 261120
      %v362 = vsel %vm360, %v249, 0
      %364 = vmatprep.subr.bf16.mxu0 0
      %365 = vmatpush1.bf16.msra.mxu0 %v324
      %366 = vmatprep.subr.bf16.mxu0 0
      %367 = vmatpush1.bf16.msra.mxu0 %v325
      %368 = vmatprep.subr.bf16.mxu0 0
      %369 = vmatpush1.bf16.msra.mxu0 %v326
      %370 = vmatprep.subr.bf16.mxu0 0
      %371 = vmatpush1.bf16.msra.mxu0 %v327
      %372 = vmatprep.subr.bf16.mxu0 0
      %373 = vmatpush1.bf16.msra.mxu0 %v328
      %374 = vmatprep.subr.bf16.mxu0 0
      %375 = vmatpush1.bf16.msra.mxu0 %v329
      %376 = vmatprep.subr.bf16.mxu0 0
      %377 = vmatpush1.bf16.msra.mxu0 %v330
      %378 = vmatprep.subr.bf16.mxu0 0
      %379 = vmatpush1.bf16.msra.mxu0 %v331
      %380 = vmatprep.subr.bf16.mxu0 0
      %381 = vmatpush1.bf16.msra.mxu0 %v332
      %382 = vmatprep.subr.bf16.mxu0 0
      %383 = vmatpush1.bf16.msra.mxu0 %v333
      %384 = vmatprep.subr.bf16.mxu0 0
      %385 = vmatpush1.bf16.msra.mxu0 %v334
      %386 = vmatprep.subr.bf16.mxu0 0
      %387 = vmatpush1.bf16.msra.mxu0 %v335
      %388 = vmatprep.subr.bf16.mxu0 0
      %389 = vmatpush1.bf16.msra.mxu0 %v336
      %390 = vmatprep.subr.bf16.mxu0 0
      %391 = vmatpush1.bf16.msra.mxu0 %v337
      %392 = vmatprep.subr.bf16.mxu0 0
      %393 = vmatpush1.bf16.msra.mxu0 %v338
      %394 = vmatprep.subr.bf16.mxu0 0
      %395 = vmatpush1.bf16.msra.mxu0 %v339
      %396 = vmatprep.mubr.bf16.mxu0 %v248
      %397 = vmatmul.mubr.bf16.gmra.mrb[0].mxu0 %v247
      %v398 = vpop.f32.mrb[0].mxu0
      %v399 = vadd.f32 0.0, %v398
      %v400 = vpop.f32.mrb[0].mxu0
      %v401 = vpop.f32.mrb[0].mxu0
      %v402 = vpop.f32.mrb[0].mxu0
      %403 = vdwg.mxu0
      %404 = vmatprep.subr.bf16.mxu0 0
      %405 = vmatpush1.bf16.msra.mxu0 %v340
      %406 = vmatprep.subr.bf16.mxu0 0
      %407 = vmatpush1.bf16.msra.mxu0 %v341
      %408 = vmatprep.subr.bf16.mxu0 0
      %409 = vmatpush1.bf16.msra.mxu0 0
      %410 = vmatprep.subr.bf16.mxu0 0
      %411 = vmatpush1.bf16.msra.mxu0 0
      %412 = vmatprep.subr.bf16.mxu0 0
      %413 = vmatpush1.bf16.msra.mxu0 0
      %414 = vmatprep.subr.bf16.mxu0 0
      %415 = vmatpush1.bf16.msra.mxu0 0
      %416 = vmatprep.subr.bf16.mxu0 0
      %417 = vmatpush1.bf16.msra.mxu0 0
      %418 = vmatprep.subr.bf16.mxu0 0
      %419 = vmatpush1.bf16.msra.mxu0 0
      %420 = vmatprep.subr.bf16.mxu0 0
      %421 = vmatpush1.bf16.msra.mxu0 0
      %422 = vmatprep.subr.bf16.mxu0 0
      %423 = vmatpush1.bf16.msra.mxu0 0
      %424 = vmatprep.subr.bf16.mxu0 0
      %425 = vmatpush1.bf16.msra.mxu0 0
      %426 = vmatprep.subr.bf16.mxu0 0
      %427 = vmatpush1.bf16.msra.mxu0 0
      %428 = vmatprep.subr.bf16.mxu0 0
      %429 = vmatpush1.bf16.msra.mxu0 0
      %430 = vmatprep.subr.bf16.mxu0 0
      %431 = vmatpush1.bf16.msra.mxu0 0
      %432 = vmatprep.subr.bf16.mxu0 0
      %433 = vmatpush1.bf16.msra.mxu0 0
      %434 = vmatprep.subr.bf16.mxu0 0
      %435 = vmatpush1.bf16.msra.mxu0 0
      %436 = vmatprep.mubr.bf16.mxu0 0
      %437 = vmatmul.mubr.bf16.gmra.mrb[0].mxu0 %v362
      %v438 = vpop.f32.mrb[0].mxu0
      %v439 = vadd.f32 %v399, %v438
      %v440 = vpop.f32.mrb[0].mxu0
      %v441 = vpop.f32.mrb[0].mxu0
      %v442 = vpop.f32.mrb[0].mxu0
      %443 = vdwg.mxu0
      %s444 = scalar_lea.vmem %s195, 12
      %v445 = vld [vmem:[%s444] sm:$0xff]
      %v446 = vld [vmem:[%s444 + $0x8] sm:$0xf]
      %v449 = vunpack.c.l.b16 %v445
      %v450 = vunpack.c.h.b16 %v445
      %v451 = vunpack.c.l.b16 %v446
      %v452 = vpack.c.b16 %v449, %v449
      %v453 = vpack.c.b16 %v450, %v450
      %v454 = vpack.c.b16 %v451, %v451
      %v458 = vsel %vm360, %v454, 0
      %460 = vmatprep.subr.bf16.mxu0 0
      %461 = vmatpush1.bf16.msra.mxu0 %v324
      %462 = vmatprep.subr.bf16.mxu0 0
      %463 = vmatpush1.bf16.msra.mxu0 %v325
      %464 = vmatprep.subr.bf16.mxu0 0
      %465 = vmatpush1.bf16.msra.mxu0 %v326
      %466 = vmatprep.subr.bf16.mxu0 0
      %467 = vmatpush1.bf16.msra.mxu0 %v327
      %468 = vmatprep.subr.bf16.mxu0 0
      %469 = vmatpush1.bf16.msra.mxu0 %v328
      %470 = vmatprep.subr.bf16.mxu0 0
      %471 = vmatpush1.bf16.msra.mxu0 %v329
      %472 = vmatprep.subr.bf16.mxu0 0
      %473 = vmatpush1.bf16.msra.mxu0 %v330
      %474 = vmatprep.subr.bf16.mxu0 0
      %475 = vmatpush1.bf16.msra.mxu0 %v331
      %476 = vmatprep.subr.bf16.mxu0 0
      %477 = vmatpush1.bf16.msra.mxu0 %v332
      %478 = vmatprep.subr.bf16.mxu0 0
      %479 = vmatpush1.bf16.msra.mxu0 %v333
      %480 = vmatprep.subr.bf16.mxu0 0
      %481 = vmatpush1.bf16.msra.mxu0 %v334
      %482 = vmatprep.subr.bf16.mxu0 0
      %483 = vmatpush1.bf16.msra.mxu0 %v335
      %484 = vmatprep.subr.bf16.mxu0 0
      %485 = vmatpush1.bf16.msra.mxu0 %v336
      %486 = vmatprep.subr.bf16.mxu0 0
      %487 = vmatpush1.bf16.msra.mxu0 %v337
      %488 = vmatprep.subr.bf16.mxu0 0
      %489 = vmatpush1.bf16.msra.mxu0 %v338
      %490 = vmatprep.subr.bf16.mxu0 0
      %491 = vmatpush1.bf16.msra.mxu0 %v339
      %492 = vmatprep.mubr.bf16.mxu0 %v453
      %493 = vmatmul.mubr.bf16.gmra.mrb[0].mxu0 %v452
      %v494 = vpop.f32.mrb[0].mxu0
      %v495 = vadd.f32 0.0, %v494
      %v496 = vpop.f32.mrb[0].mxu0
      %v497 = vpop.f32.mrb[0].mxu0
      %v498 = vpop.f32.mrb[0].mxu0
      %499 = vdwg.mxu0
      %500 = vmatprep.subr.bf16.mxu0 0
      %501 = vmatpush1.bf16.msra.mxu0 %v340
      %502 = vmatprep.subr.bf16.mxu0 0
      %503 = vmatpush1.bf16.msra.mxu0 %v341
      %504 = vmatprep.subr.bf16.mxu0 0
      %505 = vmatpush1.bf16.msra.mxu0 0
      %506 = vmatprep.subr.bf16.mxu0 0
      %507 = vmatpush1.bf16.msra.mxu0 0
      %508 = vmatprep.subr.bf16.mxu0 0
      %509 = vmatpush1.bf16.msra.mxu0 0
      %510 = vmatprep.subr.bf16.mxu0 0
      %511 = vmatpush1.bf16.msra.mxu0 0
      %512 = vmatprep.subr.bf16.mxu0 0
      %513 = vmatpush1.bf16.msra.mxu0 0
      %514 = vmatprep.subr.bf16.mxu0 0
      %515 = vmatpush1.bf16.msra.mxu0 0
      %516 = vmatprep.subr.bf16.mxu0 0
      %517 = vmatpush1.bf16.msra.mxu0 0
      %518 = vmatprep.subr.bf16.mxu0 0
      %519 = vmatpush1.bf16.msra.mxu0 0
      %520 = vmatprep.subr.bf16.mxu0 0
      %521 = vmatpush1.bf16.msra.mxu0 0
      %522 = vmatprep.subr.bf16.mxu0 0
      %523 = vmatpush1.bf16.msra.mxu0 0
      %524 = vmatprep.subr.bf16.mxu0 0
      %525 = vmatpush1.bf16.msra.mxu0 0
      %526 = vmatprep.subr.bf16.mxu0 0
      %527 = vmatpush1.bf16.msra.mxu0 0
      %528 = vmatprep.subr.bf16.mxu0 0
      %529 = vmatpush1.bf16.msra.mxu0 0
      %530 = vmatprep.subr.bf16.mxu0 0
      %531 = vmatpush1.bf16.msra.mxu0 0
      %532 = vmatprep.mubr.bf16.mxu0 0
      %533 = vmatmul.mubr.bf16.gmra.mrb[0].mxu0 %v458
      %v534 = vpop.f32.mrb[0].mxu0
      %v535 = vadd.f32 %v495, %v534
      %v536 = vpop.f32.mrb[0].mxu0
      %v537 = vpop.f32.mrb[0].mxu0
      %v538 = vpop.f32.mrb[0].mxu0
      %539 = vdwg.mxu0
      %v540 = vmax.f32 %v439, %v535
      %s541 = scalar_lea.vmem %s195, 24
      %v542 = vld [vmem:[%s541] sm:$0xff]
      %v543 = vld [vmem:[%s541 + $0x8] sm:$0xf]
      %v546 = vunpack.c.l.b16 %v542
      %v547 = vunpack.c.h.b16 %v542
      %v548 = vunpack.c.l.b16 %v543
      %v549 = vpack.c.b16 %v546, %v546
      %v550 = vpack.c.b16 %v547, %v547
      %v551 = vpack.c.b16 %v548, %v548
      %v555 = vsel %vm360, %v551, 0
      %557 = vmatprep.subr.bf16.mxu0 0
      %558 = vmatpush1.bf16.msra.mxu0 %v324
      %559 = vmatprep.subr.bf16.mxu0 0
      %560 = vmatpush1.bf16.msra.mxu0 %v325
      %561 = vmatprep.subr.bf16.mxu0 0
      %562 = vmatpush1.bf16.msra.mxu0 %v326
      %563 = vmatprep.subr.bf16.mxu0 0
      %564 = vmatpush1.bf16.msra.mxu0 %v327
      %565 = vmatprep.subr.bf16.mxu0 0
      %566 = vmatpush1.bf16.msra.mxu0 %v328
      %567 = vmatprep.subr.bf16.mxu0 0
      %568 = vmatpush1.bf16.msra.mxu0 %v329
      %569 = vmatprep.subr.bf16.mxu0 0
      %570 = vmatpush1.bf16.msra.mxu0 %v330
      %571 = vmatprep.subr.bf16.mxu0 0
      %572 = vmatpush1.bf16.msra.mxu0 %v331
      %573 = vmatprep.subr.bf16.mxu0 0
      %574 = vmatpush1.bf16.msra.mxu0 %v332
      %575 = vmatprep.subr.bf16.mxu0 0
      %576 = vmatpush1.bf16.msra.mxu0 %v333
      %577 = vmatprep.subr.bf16.mxu0 0
      %578 = vmatpush1.bf16.msra.mxu0 %v334
      %579 = vmatprep.subr.bf16.mxu0 0
      %580 = vmatpush1.bf16.msra.mxu0 %v335
      %581 = vmatprep.subr.bf16.mxu0 0
      %582 = vmatpush1.bf16.msra.mxu0 %v336
      %583 = vmatprep.subr.bf16.mxu0 0
      %584 = vmatpush1.bf16.msra.mxu0 %v337
      %585 = vmatprep.subr.bf16.mxu0 0
      %586 = vmatpush1.bf16.msra.mxu0 %v338
      %587 = vmatprep.subr.bf16.mxu0 0
      %588 = vmatpush1.bf16.msra.mxu0 %v339
      %589 = vmatprep.mubr.bf16.mxu0 %v550
      %590 = vmatmul.mubr.bf16.gmra.mrb[0].mxu0 %v549
      %v591 = vpop.f32.mrb[0].mxu0
      %v592 = vadd.f32 0.0, %v591
      %v593 = vpop.f32.mrb[0].mxu0
      %v594 = vpop.f32.mrb[0].mxu0
      %v595 = vpop.f32.mrb[0].mxu0
      %596 = vdwg.mxu0
      %597 = vmatprep.subr.bf16.mxu0 0
      %598 = vmatpush1.bf16.msra.mxu0 %v340
      %599 = vmatprep.subr.bf16.mxu0 0
      %600 = vmatpush1.bf16.msra.mxu0 %v341
      %601 = vmatprep.subr.bf16.mxu0 0
      %602 = vmatpush1.bf16.msra.mxu0 0
      %603 = vmatprep.subr.bf16.mxu0 0
      %604 = vmatpush1.bf16.msra.mxu0 0
      %605 = vmatprep.subr.bf16.mxu0 0
      %606 = vmatpush1.bf16.msra.mxu0 0
      %607 = vmatprep.subr.bf16.mxu0 0
      %608 = vmatpush1.bf16.msra.mxu0 0
      %609 = vmatprep.subr.bf16.mxu0 0
      %610 = vmatpush1.bf16.msra.mxu0 0
      %611 = vmatprep.subr.bf16.mxu0 0
      %612 = vmatpush1.bf16.msra.mxu0 0
      %613 = vmatprep.subr.bf16.mxu0 0
      %614 = vmatpush1.bf16.msra.mxu0 0
      %615 = vmatprep.subr.bf16.mxu0 0
      %616 = vmatpush1.bf16.msra.mxu0 0
      %617 = vmatprep.subr.bf16.mxu0 0
      %618 = vmatpush1.bf16.msra.mxu0 0
      %619 = vmatprep.subr.bf16.mxu0 0
      %620 = vmatpush1.bf16.msra.mxu0 0
      %621 = vmatprep.subr.bf16.mxu0 0
      %622 = vmatpush1.bf16.msra.mxu0 0
      %623 = vmatprep.subr.bf16.mxu0 0
      %624 = vmatpush1.bf16.msra.mxu0 0
      %625 = vmatprep.subr.bf16.mxu0 0
      %626 = vmatpush1.bf16.msra.mxu0 0
      %627 = vmatprep.subr.bf16.mxu0 0
      %628 = vmatpush1.bf16.msra.mxu0 0
      %629 = vmatprep.mubr.bf16.mxu0 0
      %630 = vmatmul.mubr.bf16.gmra.mrb[0].mxu0 %v555
      %v631 = vpop.f32.mrb[0].mxu0
      %v632 = vadd.f32 %v592, %v631
      %v633 = vpop.f32.mrb[0].mxu0
      %v634 = vpop.f32.mrb[0].mxu0
      %v635 = vpop.f32.mrb[0].mxu0
      %636 = vdwg.mxu0
      %v637 = vmax.f32 %v540, %v632
      %s638 = scalar_lea.vmem %s195, 36
      %v639 = vld [vmem:[%s638] sm:$0xff]
      %v640 = vld [vmem:[%s638 + $0x8] sm:$0xf]
      %v643 = vunpack.c.l.b16 %v639
      %v644 = vunpack.c.h.b16 %v639
      %v645 = vunpack.c.l.b16 %v640
      %v646 = vpack.c.b16 %v643, %v643
      %v647 = vpack.c.b16 %v644, %v644
      %v648 = vpack.c.b16 %v645, %v645
      %v652 = vsel %vm360, %v648, 0
      %654 = vmatprep.subr.bf16.mxu0 0
      %655 = vmatpush1.bf16.msra.mxu0 %v324
      %656 = vmatprep.subr.bf16.mxu0 0
      %657 = vmatpush1.bf16.msra.mxu0 %v325
      %658 = vmatprep.subr.bf16.mxu0 0
      %659 = vmatpush1.bf16.msra.mxu0 %v326
      %660 = vmatprep.subr.bf16.mxu0 0
      %661 = vmatpush1.bf16.msra.mxu0 %v327
      %662 = vmatprep.subr.bf16.mxu0 0
      %663 = vmatpush1.bf16.msra.mxu0 %v328
      %664 = vmatprep.subr.bf16.mxu0 0
      %665 = vmatpush1.bf16.msra.mxu0 %v329
      %666 = vmatprep.subr.bf16.mxu0 0
      %667 = vmatpush1.bf16.msra.mxu0 %v330
      %668 = vmatprep.subr.bf16.mxu0 0
      %669 = vmatpush1.bf16.msra.mxu0 %v331
      %670 = vmatprep.subr.bf16.mxu0 0
      %671 = vmatpush1.bf16.msra.mxu0 %v332
      %672 = vmatprep.subr.bf16.mxu0 0
      %673 = vmatpush1.bf16.msra.mxu0 %v333
      %674 = vmatprep.subr.bf16.mxu0 0
      %675 = vmatpush1.bf16.msra.mxu0 %v334
      %676 = vmatprep.subr.bf16.mxu0 0
      %677 = vmatpush1.bf16.msra.mxu0 %v335
      %678 = vmatprep.subr.bf16.mxu0 0
      %679 = vmatpush1.bf16.msra.mxu0 %v336
      %680 = vmatprep.subr.bf16.mxu0 0
      %681 = vmatpush1.bf16.msra.mxu0 %v337
      %682 = vmatprep.subr.bf16.mxu0 0
      %683 = vmatpush1.bf16.msra.mxu0 %v338
      %684 = vmatprep.subr.bf16.mxu0 0
      %685 = vmatpush1.bf16.msra.mxu0 %v339
      %686 = vmatprep.mubr.bf16.mxu0 %v647
      %687 = vmatmul.mubr.bf16.gmra.mrb[0].mxu0 %v646
      %v688 = vpop.f32.mrb[0].mxu0
      %v689 = vadd.f32 0.0, %v688
      %v690 = vpop.f32.mrb[0].mxu0
      %v691 = vpop.f32.mrb[0].mxu0
      %v692 = vpop.f32.mrb[0].mxu0
      %693 = vdwg.mxu0
      %694 = vmatprep.subr.bf16.mxu0 0
      %695 = vmatpush1.bf16.msra.mxu0 %v340
      %696 = vmatprep.subr.bf16.mxu0 0
      %697 = vmatpush1.bf16.msra.mxu0 %v341
      %698 = vmatprep.subr.bf16.mxu0 0
      %699 = vmatpush1.bf16.msra.mxu0 0
      %700 = vmatprep.subr.bf16.mxu0 0
      %701 = vmatpush1.bf16.msra.mxu0 0
      %702 = vmatprep.subr.bf16.mxu0 0
      %703 = vmatpush1.bf16.msra.mxu0 0
      %704 = vmatprep.subr.bf16.mxu0 0
      %705 = vmatpush1.bf16.msra.mxu0 0
      %706 = vmatprep.subr.bf16.mxu0 0
      %707 = vmatpush1.bf16.msra.mxu0 0
      %708 = vmatprep.subr.bf16.mxu0 0
      %709 = vmatpush1.bf16.msra.mxu0 0
      %710 = vmatprep.subr.bf16.mxu0 0
      %711 = vmatpush1.bf16.msra.mxu0 0
      %712 = vmatprep.subr.bf16.mxu0 0
      %713 = vmatpush1.bf16.msra.mxu0 0
      %714 = vmatprep.subr.bf16.mxu0 0
      %715 = vmatpush1.bf16.msra.mxu0 0
      %716 = vmatprep.subr.bf16.mxu0 0
      %717 = vmatpush1.bf16.msra.mxu0 0
      %718 = vmatprep.subr.bf16.mxu0 0
      %719 = vmatpush1.bf16.msra.mxu0 0
      %720 = vmatprep.subr.bf16.mxu0 0
      %721 = vmatpush1.bf16.msra.mxu0 0
      %722 = vmatprep.subr.bf16.mxu0 0
      %723 = vmatpush1.bf16.msra.mxu0 0
      %724 = vmatprep.subr.bf16.mxu0 0
      %725 = vmatpush1.bf16.msra.mxu0 0
      %726 = vmatprep.mubr.bf16.mxu0 0
      %727 = vmatmul.mubr.bf16.gmra.mrb[0].mxu0 %v652
      %v728 = vpop.f32.mrb[0].mxu0
      %v729 = vadd.f32 %v689, %v728
      %v730 = vpop.f32.mrb[0].mxu0
      %v731 = vpop.f32.mrb[0].mxu0
      %v732 = vpop.f32.mrb[0].mxu0
      %733 = vdwg.mxu0
      %v734 = vmax.f32 %v637, %v729
      %v735 = vld [vmem:[%s2] sm:$0x1]
      %v737 = vlaneseq
      %v738 = vshrl.u32 %v737, 7
      %v739 = vsub.s32 0, %v738
      %v740 = vrot.slane %v735, %v739
      %v742 = vadd.f32 %v734, %v740
      %v743 = vmax.f32 %v742, 0.0
      %v744 = vpack.c.bf16 %v743, %v743
      %vm745 = vcmask 519168
      %746 = vst.msk [vmem:[%s202] sm:$0xf] %vm745, %v744
      %p747 = scmp.lt.s32.totalorder %s18, 1
      %s748 = scalar_select %p747, %s18, 1
      %p749 = scmp.lt.s32.totalorder %s19, 0
      %s750 = scalar_select %p749, %s19, 0
      %s751 = sadd.s32 %s750, %s748
      %s752 = smul.addr %s751, 4
      %s753 = scalar_lea.vmem %s3, %s752
      // Predicated region
      $region33: #{forward.15} parent=31 // pred_check
        %p754 = pneg %p116
      $region34: #{forward.15} parent=31 // pred_check_branch
        %756 = sbr.rel (%p754) target = $region36
      $region35: #{forward.15} parent=31 // pred_region
        _
      $region36: #{forward.15} parent=31 // pred_fallthru
        _
    $region32: #{forward.15} parent=5 // pred_fallthru
      _
    %p757 = scmp.le.s32.totalorder 2, %s9
    // Predicated region
    $region37: #{forward.15} parent=5 // pred_check
      %p758 = pneg %p757
    $region38: #{forward.15} parent=5 // pred_check_branch
      %760 = sbr.rel (%p758) target = $region40
    $region39: #{forward.15} parent=5 // pred_region
      %s761 = ssub.s32 %s9, 2
      // Predicated region
      $region41: #{forward.15} parent=39 // pred_check
        %p762 = pneg %p122
      $region42: #{forward.15} parent=39 // pred_check_branch
        %764 = sbr.rel (%p762) target = $region44
      $region43: #{forward.15} parent=39 // pred_region
        %p765 = scmp.lt.s32.totalorder %s20, 1
        %s766 = scalar_select %p765, %s20, 1
        %p767 = scmp.lt.s32.totalorder %s21, 0
        %s768 = scalar_select %p767, %s21, 0
        %s769 = sadd.s32 %s768, %s766
        %s770 = smul.addr %s769, 4
        %s771 = scalar_lea.vmem %s3, %s770
      $region44: #{forward.15} parent=39 // pred_fallthru
        _
    $region40: #{forward.15} parent=5 // pred_fallthru
      _
  $region6: #{forward.15} parent=0 // loop_footer
    %s13 = sadd.s32 1, %s9
  $region7: #{forward.15} parent=0 // loop_footer_branch
    %8 = sbr.rel target = $region3
  $region8: #{forward.15} parent=0 // loop_exit
    _

// kernel: forward.16
$region0: #{forward.16}
  #allocation0 [shape = 'u32[]', space=smem, size = 0x4, offset = 0x4, fixed_abs, tag = 'smem constant byte address 0x4 - core index']
  #allocation1 [shape = 'u32[144,128]{1,0:T(1,128)}', space=vmem, size = 0x12000, scoped, tag = 'internal scratch']
  %s0 = inlined_call_operand.vmem [shape: bf16[16,576], index: 0, kind: input, shape index: {}]
  %s1 = inlined_call_operand.vmem [shape: bf16[576,128], index: 1, kind: input, shape index: {}]
  %s2 = inlined_call_operand.vmem [shape: f32[1,128], index: 2, kind: input, shape index: {}]
  %s3 = inlined_call_operand.vmem [shape: f32[2,16], index: 3, kind: input, shape index: {}]
  %s4 = inlined_call_operand.vmem [shape: f32[2,128], index: 4, kind: output, shape index: {}]
  %s5 = sld [smem:[#allocation0]]
  $region26: #{forward.16} parent=0
    _
  %s7 = ssub.s32 1, %s5
  %s8 = scalar_select 0, %s7, %s5
  // Predicated region
  $region2: #{forward.16} parent=0 // pred_check
    _
  $region3: #{forward.16} parent=0 // pred_check_branch
    %10 = sbr.rel (0) target = $region5
  $region4: #{forward.16} parent=0 // pred_region
    _
  $region5: #{forward.16} parent=0 // pred_fallthru
    _
  // Predicated region
  $region6: #{forward.16} parent=0 // pred_check
    _
  $region7: #{forward.16} parent=0 // pred_check_branch
    %12 = sbr.rel (0) target = $region9
  $region8: #{forward.16} parent=0 // pred_region
    _
  $region9: #{forward.16} parent=0 // pred_fallthru
    _
  // Predicated region
  $region10: #{forward.16} parent=0 // pred_check
    _
  $region11: #{forward.16} parent=0 // pred_check_branch
    %14 = sbr.rel (0) target = $region13
  $region12: #{forward.16} parent=0 // pred_region
    _
  $region13: #{forward.16} parent=0 // pred_fallthru
    _
  // Predicated region
  $region14: #{forward.16} parent=0 // pred_check
    _
  $region15: #{forward.16} parent=0 // pred_check_branch
    %16 = sbr.rel (0) target = $region17
  $region16: #{forward.16} parent=0 // pred_region
    _
  $region17: #{forward.16} parent=0 // pred_fallthru
    _
  %v18 = vld [vmem:[%s0] sm:$0xff]
  %v19 = vld [vmem:[%s0 + $0x8] sm:$0xff]
  %v20 = vld [vmem:[%s0 + $0x10] sm:$0xf]
  %v21 = vld [vmem:[%s0 + $0x14] sm:$0xff]
  %v22 = vld [vmem:[%s0 + $0x1c] sm:$0xff]
  %v23 = vld [vmem:[%s0 + $0x24] sm:$0xf]
  %v24 = vld [vmem:[%s1] sm:$0xf]
  %v25 = vld [vmem:[%s1 + $0x4] sm:$0xf]
  %v26 = vld [vmem:[%s1 + $0x8] sm:$0xf]
  %v27 = vld [vmem:[%s1 + $0xc] sm:$0xf]
  %v28 = vld [vmem:[%s1 + $0x10] sm:$0xf]
  %v29 = vld [vmem:[%s1 + $0x14] sm:$0xf]
  %v30 = vld [vmem:[%s1 + $0x18] sm:$0xf]
  %v31 = vld [vmem:[%s1 + $0x1c] sm:$0xf]
  %v32 = vld [vmem:[%s1 + $0x20] sm:$0xf]
  %v33 = vld [vmem:[%s1 + $0x24] sm:$0xf]
  %v34 = vld [vmem:[%s1 + $0x28] sm:$0xf]
  %v35 = vld [vmem:[%s1 + $0x2c] sm:$0xf]
  %v36 = vld [vmem:[%s1 + $0x30] sm:$0xf]
  %v37 = vld [vmem:[%s1 + $0x34] sm:$0xf]
  %v38 = vld [vmem:[%s1 + $0x38] sm:$0xf]
  %v39 = vld [vmem:[%s1 + $0x3c] sm:$0xf]
  %v40 = vld [vmem:[%s1 + $0x40] sm:$0xf]
  %v41 = vld [vmem:[%s1 + $0x44] sm:$0xf]
  %v42 = vld [vmem:[%s1 + $0x48] sm:$0xf]
  %v43 = vld [vmem:[%s1 + $0x4c] sm:$0xf]
  %v44 = vld [vmem:[%s1 + $0x50] sm:$0xf]
  %v45 = vld [vmem:[%s1 + $0x54] sm:$0xf]
  %v46 = vld [vmem:[%s1 + $0x58] sm:$0xf]
  %v47 = vld [vmem:[%s1 + $0x5c] sm:$0xf]
  %v48 = vld [vmem:[%s1 + $0x60] sm:$0xf]
  %v49 = vld [vmem:[%s1 + $0x64] sm:$0xf]
  %v50 = vld [vmem:[%s1 + $0x68] sm:$0xf]
  %v51 = vld [vmem:[%s1 + $0x6c] sm:$0xf]
  %v52 = vld [vmem:[%s1 + $0x70] sm:$0xf]
  %v53 = vld [vmem:[%s1 + $0x74] sm:$0xf]
  %v54 = vld [vmem:[%s1 + $0x78] sm:$0xf]
  %v55 = vld [vmem:[%s1 + $0x7c] sm:$0xf]
  %v56 = vld [vmem:[%s1 + $0x80] sm:$0xf]
  %v57 = vld [vmem:[%s1 + $0x84] sm:$0xf]
  %v58 = vld [vmem:[%s1 + $0x88] sm:$0xf]
  %v59 = vld [vmem:[%s1 + $0x8c] sm:$0xf]
  %v60 = vld [vmem:[%s1 + $0x90] sm:$0xf]
  %v61 = vld [vmem:[%s1 + $0x94] sm:$0xf]
  %v62 = vld [vmem:[%s1 + $0x98] sm:$0xf]
  %v63 = vld [vmem:[%s1 + $0x9c] sm:$0xf]
  %v64 = vld [vmem:[%s1 + $0xa0] sm:$0xf]
  %v65 = vld [vmem:[%s1 + $0xa4] sm:$0xf]
  %v66 = vld [vmem:[%s1 + $0xa8] sm:$0xf]
  %v67 = vld [vmem:[%s1 + $0xac] sm:$0xf]
  %v68 = vld [vmem:[%s1 + $0xb0] sm:$0xf]
  %v69 = vld [vmem:[%s1 + $0xb4] sm:$0xf]
  %v70 = vld [vmem:[%s1 + $0xb8] sm:$0xf]
  %v71 = vld [vmem:[%s1 + $0xbc] sm:$0xf]
  %v72 = vld [vmem:[%s1 + $0xc0] sm:$0xf]
  %v73 = vld [vmem:[%s1 + $0xc4] sm:$0xf]
  %v74 = vld [vmem:[%s1 + $0xc8] sm:$0xf]
  %v75 = vld [vmem:[%s1 + $0xcc] sm:$0xf]
  %v76 = vld [vmem:[%s1 + $0xd0] sm:$0xf]
  %v77 = vld [vmem:[%s1 + $0xd4] sm:$0xf]
  %v78 = vld [vmem:[%s1 + $0xd8] sm:$0xf]
  %v79 = vld [vmem:[%s1 + $0xdc] sm:$0xf]
  %v80 = vld [vmem:[%s1 + $0xe0] sm:$0xf]
  %v81 = vld [vmem:[%s1 + $0xe4] sm:$0xf]
  %v82 = vld [vmem:[%s1 + $0xe8] sm:$0xf]
  %v83 = vld [vmem:[%s1 + $0xec] sm:$0xf]
  %v84 = vld [vmem:[%s1 + $0xf0] sm:$0xf]
  %v85 = vld [vmem:[%s1 + $0xf4] sm:$0xf]
  %v86 = vld [vmem:[%s1 + $0xf8] sm:$0xf]
  %v87 = vld [vmem:[%s1 + $0xfc] sm:$0xf]
  %v88 = vld [vmem:[%s1 + $0x100] sm:$0xf]
  %v89 = vld [vmem:[%s1 + $0x104] sm:$0xf]
  %v90 = vld [vmem:[%s1 + $0x108] sm:$0xf]
  %v91 = vld [vmem:[%s1 + $0x10c] sm:$0xf]
  %v92 = vld [vmem:[%s1 + $0x110] sm:$0xf]
  %v93 = vld [vmem:[%s1 + $0x114] sm:$0xf]
  %v94 = vld [vmem:[%s1 + $0x118] sm:$0xf]
  %v95 = vld [vmem:[%s1 + $0x11c] sm:$0xf]
  %v96 = vld [vmem:[%s2] sm:$0x1]
  %v98 = vlaneseq
  %v99 = vshrl.u32 %v98, 7
  %v100 = vsub.s32 0, %v99
  %v101 = vrot.slane %v96, %v100
  %v109 = vunpack.c.l.b16 %v18
  %v110 = vunpack.c.h.b16 %v18
  %v111 = vunpack.c.l.b16 %v19
  %v112 = vunpack.c.h.b16 %v19
  %v113 = vunpack.c.l.b16 %v20
  %v114 = vunpack.c.l.b16 %v21
  %v115 = vunpack.c.h.b16 %v21
  %v116 = vunpack.c.l.b16 %v22
  %v117 = vunpack.c.h.b16 %v22
  %v118 = vunpack.c.l.b16 %v23
  %v119 = vpack.c.b16 %v114, %v109
  %v120 = vpack.c.b16 %v115, %v110
  %v121 = vpack.c.b16 %v116, %v111
  %v122 = vpack.c.b16 %v117, %v112
  %v123 = vpack.c.b16 %v118, %v113
  %v200 = vunpack.c.l.b16 %v24
  %v201 = vunpack.c.l.b16 %v25
  %v202 = vunpack.c.l.b16 %v26
  %v203 = vunpack.c.l.b16 %v27
  %v204 = vunpack.c.l.b16 %v28
  %v205 = vunpack.c.l.b16 %v29
  %v206 = vunpack.c.l.b16 %v30
  %v207 = vunpack.c.l.b16 %v31
  %v208 = vunpack.c.l.b16 %v32
  %v209 = vunpack.c.l.b16 %v33
  %v210 = vunpack.c.l.b16 %v34
  %v211 = vunpack.c.l.b16 %v35
  %v212 = vunpack.c.l.b16 %v36
  %v213 = vunpack.c.l.b16 %v37
  %v214 = vunpack.c.l.b16 %v38
  %v215 = vunpack.c.l.b16 %v39
  %v216 = vunpack.c.l.b16 %v40
  %v217 = vunpack.c.l.b16 %v41
  %v218 = vunpack.c.l.b16 %v42
  %v219 = vunpack.c.l.b16 %v43
  %v220 = vunpack.c.l.b16 %v44
  %v221 = vunpack.c.l.b16 %v45
  %v222 = vunpack.c.l.b16 %v46
  %v223 = vunpack.c.l.b16 %v47
  %v224 = vunpack.c.l.b16 %v48
  %v225 = vunpack.c.l.b16 %v49
  %v226 = vunpack.c.l.b16 %v50
  %v227 = vunpack.c.l.b16 %v51
  %v228 = vunpack.c.l.b16 %v52
  %v229 = vunpack.c.l.b16 %v53
  %v230 = vunpack.c.l.b16 %v54
  %v231 = vunpack.c.l.b16 %v55
  %v232 = vunpack.c.l.b16 %v56
  %v233 = vunpack.c.l.b16 %v57
  %v234 = vunpack.c.l.b16 %v58
  %v235 = vunpack.c.l.b16 %v59
  %v236 = vunpack.c.l.b16 %v60
  %v237 = vunpack.c.l.b16 %v61
  %v238 = vunpack.c.l.b16 %v62
  %v239 = vunpack.c.l.b16 %v63
  %v240 = vunpack.c.l.b16 %v64
  %v241 = vunpack.c.l.b16 %v65
  %v242 = vunpack.c.l.b16 %v66
  %v243 = vunpack.c.l.b16 %v67
  %v244 = vunpack.c.l.b16 %v68
  %v245 = vunpack.c.l.b16 %v69
  %v246 = vunpack.c.l.b16 %v70
  %v247 = vunpack.c.l.b16 %v71
  %v248 = vunpack.c.l.b16 %v72
  %v249 = vunpack.c.l.b16 %v73
  %v250 = vunpack.c.l.b16 %v74
  %v251 = vunpack.c.l.b16 %v75
  %v252 = vunpack.c.l.b16 %v76
  %v253 = vunpack.c.l.b16 %v77
  %v254 = vunpack.c.l.b16 %v78
  %v255 = vunpack.c.l.b16 %v79
  %v256 = vunpack.c.l.b16 %v80
  %v257 = vunpack.c.l.b16 %v81
  %v258 = vunpack.c.l.b16 %v82
  %v259 = vunpack.c.l.b16 %v83
  %v260 = vunpack.c.l.b16 %v84
  %v261 = vunpack.c.l.b16 %v85
  %v262 = vunpack.c.l.b16 %v86
  %v263 = vunpack.c.l.b16 %v87
  %v264 = vunpack.c.l.b16 %v88
  %v265 = vunpack.c.l.b16 %v89
  %v266 = vunpack.c.l.b16 %v90
  %v267 = vunpack.c.l.b16 %v91
  %v268 = vunpack.c.l.b16 %v92
  %v269 = vunpack.c.l.b16 %v93
  %v270 = vunpack.c.l.b16 %v94
  %v271 = vunpack.c.l.b16 %v95
  %v272 = vpack.c.b16 %v201, %v200
  %v273 = vpack.c.b16 %v203, %v202
  %v274 = vpack.c.b16 %v205, %v204
  %v275 = vpack.c.b16 %v207, %v206
  %v276 = vpack.c.b16 %v209, %v208
  %v277 = vpack.c.b16 %v211, %v210
  %v278 = vpack.c.b16 %v213, %v212
  %v279 = vpack.c.b16 %v215, %v214
  %v280 = vpack.c.b16 %v217, %v216
  %v281 = vpack.c.b16 %v219, %v218
  %v282 = vpack.c.b16 %v221, %v220
  %v283 = vpack.c.b16 %v223, %v222
  %v284 = vpack.c.b16 %v225, %v224
  %v285 = vpack.c.b16 %v227, %v226
  %v286 = vpack.c.b16 %v229, %v228
  %v287 = vpack.c.b16 %v231, %v230
  %v288 = vpack.c.b16 %v233, %v232
  %v289 = vpack.c.b16 %v235, %v234
  %v290 = vpack.c.b16 %v237, %v236
  %v291 = vpack.c.b16 %v239, %v238
  %v292 = vpack.c.b16 %v241, %v240
  %v293 = vpack.c.b16 %v243, %v242
  %v294 = vpack.c.b16 %v245, %v244
  %v295 = vpack.c.b16 %v247, %v246
  %v296 = vpack.c.b16 %v249, %v248
  %v297 = vpack.c.b16 %v251, %v250
  %v298 = vpack.c.b16 %v253, %v252
  %v299 = vpack.c.b16 %v255, %v254
  %v300 = vpack.c.b16 %v257, %v256
  %v301 = vpack.c.b16 %v259, %v258
  %v302 = vpack.c.b16 %v261, %v260
  %v303 = vpack.c.b16 %v263, %v262
  %v304 = vpack.c.b16 %v265, %v264
  %v305 = vpack.c.b16 %v267, %v266
  %v306 = vpack.c.b16 %v269, %v268
  %v307 = vpack.c.b16 %v271, %v270
  %vm344 = vcmask 523264
  %v346 = vsel %vm344, %v123, 0
  %348 = vmatprep.subr.bf16.mxu0 0
  %349 = vmatpush1.bf16.msra.mxu0 %v272
  %350 = vmatprep.subr.bf16.mxu0 0
  %351 = vmatpush1.bf16.msra.mxu0 %v273
  %352 = vmatprep.subr.bf16.mxu0 0
  %353 = vmatpush1.bf16.msra.mxu0 %v274
  %354 = vmatprep.subr.bf16.mxu0 0
  %355 = vmatpush1.bf16.msra.mxu0 %v275
  %356 = vmatprep.subr.bf16.mxu0 0
  %357 = vmatpush1.bf16.msra.mxu0 %v276
  %358 = vmatprep.subr.bf16.mxu0 0
  %359 = vmatpush1.bf16.msra.mxu0 %v277
  %360 = vmatprep.subr.bf16.mxu0 0
  %361 = vmatpush1.bf16.msra.mxu0 %v278
  %362 = vmatprep.subr.bf16.mxu0 0
  %363 = vmatpush1.bf16.msra.mxu0 %v279
  %364 = vmatprep.subr.bf16.mxu0 0
  %365 = vmatpush1.bf16.msra.mxu0 %v280
  %366 = vmatprep.subr.bf16.mxu0 0
  %367 = vmatpush1.bf16.msra.mxu0 %v281
  %368 = vmatprep.subr.bf16.mxu0 0
  %369 = vmatpush1.bf16.msra.mxu0 %v282
  %370 = vmatprep.subr.bf16.mxu0 0
  %371 = vmatpush1.bf16.msra.mxu0 %v283
  %372 = vmatprep.subr.bf16.mxu0 0
  %373 = vmatpush1.bf16.msra.mxu0 %v284
  %374 = vmatprep.subr.bf16.mxu0 0
  %375 = vmatpush1.bf16.msra.mxu0 %v285
  %376 = vmatprep.subr.bf16.mxu0 0
  %377 = vmatpush1.bf16.msra.mxu0 %v286
  %378 = vmatprep.subr.bf16.mxu0 0
  %379 = vmatpush1.bf16.msra.mxu0 %v287
  %380 = vmatprep.mubr.bf16.mxu0 %v120
  %381 = vmatmul.mubr.bf16.gmra.mrb[0].mxu0 %v119
  %v382 = vpop.f32.mrb[0].mxu0
  %v383 = vadd.f32 %v101, %v382
  %v384 = vpop.f32.mrb[0].mxu0
  %v385 = vpop.f32.mrb[0].mxu0
  %v386 = vadd.f32 %v101, %v385
  %v387 = vpop.f32.mrb[0].mxu0
  %388 = vdwg.mxu0
  %389 = vmatprep.subr.bf16.mxu0 0
  %390 = vmatpush1.bf16.msra.mxu0 %v288
  %391 = vmatprep.subr.bf16.mxu0 0
  %392 = vmatpush1.bf16.msra.mxu0 %v289
  %393 = vmatprep.subr.bf16.mxu0 0
  %394 = vmatpush1.bf16.msra.mxu0 %v290
  %395 = vmatprep.subr.bf16.mxu0 0
  %396 = vmatpush1.bf16.msra.mxu0 %v291
  %397 = vmatprep.subr.bf16.mxu0 0
  %398 = vmatpush1.bf16.msra.mxu0 %v292
  %399 = vmatprep.subr.bf16.mxu0 0
  %400 = vmatpush1.bf16.msra.mxu0 %v293
  %401 = vmatprep.subr.bf16.mxu0 0
  %402 = vmatpush1.bf16.msra.mxu0 %v294
  %403 = vmatprep.subr.bf16.mxu0 0
  %404 = vmatpush1.bf16.msra.mxu0 %v295
  %405 = vmatprep.subr.bf16.mxu0 0
  %406 = vmatpush1.bf16.msra.mxu0 %v296
  %407 = vmatprep.subr.bf16.mxu0 0
  %408 = vmatpush1.bf16.msra.mxu0 %v297
  %409 = vmatprep.subr.bf16.mxu0 0
  %410 = vmatpush1.bf16.msra.mxu0 %v298
  %411 = vmatprep.subr.bf16.mxu0 0
  %412 = vmatpush1.bf16.msra.mxu0 %v299
  %413 = vmatprep.subr.bf16.mxu0 0
  %414 = vmatpush1.bf16.msra.mxu0 %v300
  %415 = vmatprep.subr.bf16.mxu0 0
  %416 = vmatpush1.bf16.msra.mxu0 %v301
  %417 = vmatprep.subr.bf16.mxu0 0
  %418 = vmatpush1.bf16.msra.mxu0 %v302
  %419 = vmatprep.subr.bf16.mxu0 0
  %420 = vmatpush1.bf16.msra.mxu0 %v303
  %421 = vmatprep.mubr.bf16.mxu0 %v122
  %422 = vmatmul.mubr.bf16.gmra.mrb[0].mxu0 %v121
  %v423 = vpop.f32.mrb[0].mxu0
  %v424 = vadd.f32 %v383, %v423
  %v425 = vpop.f32.mrb[0].mxu0
  %v426 = vpop.f32.mrb[0].mxu0
  %v427 = vadd.f32 %v386, %v426
  %v428 = vpop.f32.mrb[0].mxu0
  %429 = vdwg.mxu0
  %430 = vmatprep.subr.bf16.mxu0 0
  %431 = vmatpush1.bf16.msra.mxu0 %v304
  %432 = vmatprep.subr.bf16.mxu0 0
  %433 = vmatpush1.bf16.msra.mxu0 %v305
  %434 = vmatprep.subr.bf16.mxu0 0
  %435 = vmatpush1.bf16.msra.mxu0 %v306
  %436 = vmatprep.subr.bf16.mxu0 0
  %437 = vmatpush1.bf16.msra.mxu0 %v307
  %438 = vmatprep.subr.bf16.mxu0 0
  %439 = vmatpush1.bf16.msra.mxu0 0
  %440 = vmatprep.subr.bf16.mxu0 0
  %441 = vmatpush1.bf16.msra.mxu0 0
  %442 = vmatprep.subr.bf16.mxu0 0
  %443 = vmatpush1.bf16.msra.mxu0 0
  %444 = vmatprep.subr.bf16.mxu0 0
  %445 = vmatpush1.bf16.msra.mxu0 0
  %446 = vmatprep.subr.bf16.mxu0 0
  %447 = vmatpush1.bf16.msra.mxu0 0
  %448 = vmatprep.subr.bf16.mxu0 0
  %449 = vmatpush1.bf16.msra.mxu0 0
  %450 = vmatprep.subr.bf16.mxu0 0
  %451 = vmatpush1.bf16.msra.mxu0 0
  %452 = vmatprep.subr.bf16.mxu0 0
  %453 = vmatpush1.bf16.msra.mxu0 0
  %454 = vmatprep.subr.bf16.mxu0 0
  %455 = vmatpush1.bf16.msra.mxu0 0
  %456 = vmatprep.subr.bf16.mxu0 0
  %457 = vmatpush1.bf16.msra.mxu0 0
  %458 = vmatprep.subr.bf16.mxu0 0
  %459 = vmatpush1.bf16.msra.mxu0 0
  %460 = vmatprep.subr.bf16.mxu0 0
  %461 = vmatpush1.bf16.msra.mxu0 0
  %462 = vmatprep.mubr.bf16.mxu0 0
  %463 = vmatmul.mubr.bf16.gmra.mrb[0].mxu0 %v346
  %v464 = vpop.f32.mrb[0].mxu0
  %v465 = vadd.f32 %v424, %v464
  %v466 = vpop.f32.mrb[0].mxu0
  %v467 = vpop.f32.mrb[0].mxu0
  %v468 = vadd.f32 %v427, %v467
  %v469 = vpop.f32.mrb[0].mxu0
  %470 = vdwg.mxu0
  %v471 = vmax.f32 %v465, 0.0
  %v472 = vmax.f32 %v468, 0.0
  %v473 = vld [vmem:[%s3] sm:$0x3]
  %vm474 = vcmask 130048
  %v476 = vsel %vm474, %v473, 0
  %478 = vmatprep.subr.mxu0 0.0
  %479 = vmatpush1.msra.mxu0 %v471
  %480 = vmatprep.subr.mxu0 0.0
  %481 = vmatpush1.msra.mxu0 %v472
  %482 = vmatprep.subr.mxu0 0.0
  %483 = vmatpush1.msra.mxu0 0.0
  %484 = vmatprep.subr.mxu0 0.0
  %485 = vmatpush1.msra.mxu0 0.0
  %486 = vmatprep.subr.mxu0 0.0
  %487 = vmatpush1.msra.mxu0 0.0
  %488 = vmatprep.subr.mxu0 0.0
  %489 = vmatpush1.msra.mxu0 0.0
  %490 = vmatprep.subr.mxu0 0.0
  %491 = vmatpush1.msra.mxu0 0.0
  %492 = vmatprep.subr.mxu0 0.0
  %493 = vmatpush1.msra.mxu0 0.0
  %494 = vmatprep.subr.mxu0 0.0
  %495 = vmatpush1.msra.mxu0 0.0
  %496 = vmatprep.subr.mxu0 0.0
  %497 = vmatpush1.msra.mxu0 0.0
  %498 = vmatprep.subr.mxu0 0.0
  %499 = vmatpush1.msra.mxu0 0.0
  %500 = vmatprep.subr.mxu0 0.0
  %501 = vmatpush1.msra.mxu0 0.0
  %502 = vmatprep.subr.mxu0 0.0
  %503 = vmatpush1.msra.mxu0 0.0
  %504 = vmatprep.subr.mxu0 0.0
  %505 = vmatpush1.msra.mxu0 0.0
  %506 = vmatprep.subr.mxu0 0.0
  %507 = vmatpush1.msra.mxu0 0.0
  %508 = vmatprep.subr.mxu0 0.0
  %509 = vmatpush1.msra.mxu0 0.0
  %510 = vmatprep.subr.mxu0 0.0
  %511 = vmatpush1.msra.mxu0 0.0
  %512 = vmatprep.subr.mxu0 0.0
  %513 = vmatpush1.msra.mxu0 0.0
  %514 = vmatprep.subr.mxu0 0.0
  %515 = vmatpush1.msra.mxu0 0.0
  %516 = vmatprep.subr.mxu0 0.0
  %517 = vmatpush1.msra.mxu0 0.0
  %518 = vmatprep.subr.mxu0 0.0
  %519 = vmatpush1.msra.mxu0 0.0
  %520 = vmatprep.subr.mxu0 0.0
  %521 = vmatpush1.msra.mxu0 0.0
  %522 = vmatprep.subr.mxu0 0.0
  %523 = vmatpush1.msra.mxu0 0.0
  %524 = vmatprep.subr.mxu0 0.0
  %525 = vmatpush1.msra.mxu0 0.0
  %526 = vmatprep.subr.mxu0 0.0
  %527 = vmatpush1.msra.mxu0 0.0
  %528 = vmatprep.subr.mxu0 0.0
  %529 = vmatpush1.msra.mxu0 0.0
  %530 = vmatprep.subr.mxu0 0.0
  %531 = vmatpush1.msra.mxu0 0.0
  %532 = vmatprep.subr.mxu0 0.0
  %533 = vmatpush1.msra.mxu0 0.0
  %534 = vmatprep.subr.mxu0 0.0
  %535 = vmatpush1.msra.mxu0 0.0
  %536 = vmatprep.subr.mxu0 0.0
  %537 = vmatpush1.msra.mxu0 0.0
  %538 = vmatprep.subr.mxu0 0.0
  %539 = vmatpush1.msra.mxu0 0.0
  %540 = vmatprep.subr.mxu0 0.0
  %541 = vmatpush1.msra.mxu0 0.0
  %542 = vmatprep.mubr.f32.mxu0 0.0
  %543 = vmatmul.mubr.f32.gmra.mrb[0].mxu0 %v476
  %v544 = vpop.f32.mrb[0].mxu0
  %v545 = vadd.f32 0.0, %v544
  %v546 = vpop.f32.mrb[0].mxu0
  %547 = vdwg.mxu0
  %548 = vst [vmem:[%s4] sm:$0x3] %v545
  // Predicated region
  $region18: #{forward.16} parent=0 // pred_check
    _
  $region19: #{forward.16} parent=0 // pred_check_branch
    %550 = sbr.rel (0) target = $region21
  $region20: #{forward.16} parent=0 // pred_region
    _
  $region21: #{forward.16} parent=0 // pred_fallthru
    _
  // Predicated region
  $region22: #{forward.16} parent=0 // pred_check
    _
  $region23: #{forward.16} parent=0 // pred_check_branch
    %552 = sbr.rel (0) target = $region25
  $region24: #{forward.16} parent=0 // pred_region
    _
  $region25: #{forward.16} parent=0 // pred_fallthru
    _

// kernel: forward.17
$region0: #{forward.17}
  #allocation0 [shape = 'u32[]', space=smem, size = 0x4, offset = 0x4, fixed_abs, tag = 'smem constant byte address 0x4 - core index']
  #allocation1 [shape = 'u32[144,128]{1,0:T(1,128)}', space=vmem, size = 0x12000, scoped, tag = 'internal scratch']
  %s0 = inlined_call_operand.vmem [shape: f32[2,128], index: 0, kind: input, shape index: {}]
  %s1 = inlined_call_operand.vmem [shape: f32[2,128], index: 1, kind: input, shape index: {}]
  %s2 = inlined_call_operand.vmem [shape: f32[2,128], index: 2, kind: input, shape index: {}]
  %s3 = inlined_call_operand.vmem [shape: f32[384,512], index: 3, kind: input, shape index: {}]
  %s4 = inlined_call_operand.vmem [shape: f32[1,512], index: 4, kind: input, shape index: {}]
  %s5 = inlined_call_operand.vmem [shape: f32[512,11], index: 5, kind: input, shape index: {}]
  %s6 = inlined_call_operand.vmem [shape: f32[1,11], index: 6, kind: input, shape index: {}]
  %s7 = inlined_call_operand.hbm [shape: f32[2,11], index: 7, kind: output, shape index: {}]
  %s8 = sld [smem:[#allocation0]]
  $region38: #{forward.17} parent=0
    _
  %s10 = ssub.s32 1, %s8
  %s11 = scalar_select 0, %s10, %s8
  $region1: #{forward.17} parent=0
    #allocation2 [shape = 'u8[1024]{0}', space=vmem, size = 0x400, scoped, tag = 'output window, operand 0, single buffered']
    #allocation3 [shape = 's32[1]{0}', space=sflag, size = 0x4, scoped, tag = 'scoped memory for forward.17']
    %12 = vsyncpa [#allocation3], 0
    // Predicated region
    $region2: #{forward.17} parent=1 // pred_check
      _
    $region3: #{forward.17} parent=1 // pred_check_branch
      %14 = sbr.rel (0) target = $region5
    $region4: #{forward.17} parent=1 // pred_region
      _
    $region5: #{forward.17} parent=1 // pred_fallthru
      _
    // Predicated region
    $region6: #{forward.17} parent=1 // pred_check
      _
    $region7: #{forward.17} parent=1 // pred_check_branch
      %16 = sbr.rel (0) target = $region9
    $region8: #{forward.17} parent=1 // pred_region
      _
    $region9: #{forward.17} parent=1 // pred_fallthru
      _
    // Predicated region
    $region10: #{forward.17} parent=1 // pred_check
      _
    $region11: #{forward.17} parent=1 // pred_check_branch
      %18 = sbr.rel (0) target = $region13
    $region12: #{forward.17} parent=1 // pred_region
      _
    $region13: #{forward.17} parent=1 // pred_fallthru
      _
    // Predicated region
    $region14: #{forward.17} parent=1 // pred_check
      _
    $region15: #{forward.17} parent=1 // pred_check_branch
      %20 = sbr.rel (0) target = $region17
    $region16: #{forward.17} parent=1 // pred_region
      _
    $region17: #{forward.17} parent=1 // pred_fallthru
      _
    // Predicated region
    $region18: #{forward.17} parent=1 // pred_check
      _
    $region19: #{forward.17} parent=1 // pred_check_branch
      %22 = sbr.rel (0) target = $region21
    $region20: #{forward.17} parent=1 // pred_region
      _
    $region21: #{forward.17} parent=1 // pred_fallthru
      _
    // Predicated region
    $region22: #{forward.17} parent=1 // pred_check
      _
    $region23: #{forward.17} parent=1 // pred_check_branch
      %24 = sbr.rel (0) target = $region25
    $region24: #{forward.17} parent=1 // pred_region
      _
    $region25: #{forward.17} parent=1 // pred_fallthru
      _
    // Predicated region
    $region26: #{forward.17} parent=1 // pred_check
      _
    $region27: #{forward.17} parent=1 // pred_check_branch
      %26 = sbr.rel (0) target = $region29
    $region28: #{forward.17} parent=1 // pred_region
      _
    $region29: #{forward.17} parent=1 // pred_fallthru
      _
    %v27 = vld [vmem:[%s0] sm:$0x3]
    %v28 = vld [vmem:[%s3] sm:$0xff]
    %v29 = vld [vmem:[%s3 + $0x8] sm:$0xff]
    %v30 = vld [vmem:[%s3 + $0x10] sm:$0xff]
    %v31 = vld [vmem:[%s3 + $0x18] sm:$0xff]
    %v32 = vld [vmem:[%s3 + $0x20] sm:$0xff]
    %v33 = vld [vmem:[%s3 + $0x28] sm:$0xff]
    %v34 = vld [vmem:[%s3 + $0x30] sm:$0xff]
    %v35 = vld [vmem:[%s3 + $0x38] sm:$0xff]
    %v36 = vld [vmem:[%s3 + $0x40] sm:$0xff]
    %v37 = vld [vmem:[%s3 + $0x48] sm:$0xff]
    %v38 = vld [vmem:[%s3 + $0x50] sm:$0xff]
    %v39 = vld [vmem:[%s3 + $0x58] sm:$0xff]
    %v40 = vld [vmem:[%s3 + $0x60] sm:$0xff]
    %v41 = vld [vmem:[%s3 + $0x68] sm:$0xff]
    %v42 = vld [vmem:[%s3 + $0x70] sm:$0xff]
    %v43 = vld [vmem:[%s3 + $0x78] sm:$0xff]
    %v44 = vld [vmem:[%s3 + $0x80] sm:$0xff]
    %v45 = vld [vmem:[%s3 + $0x88] sm:$0xff]
    %v46 = vld [vmem:[%s3 + $0x90] sm:$0xff]
    %v47 = vld [vmem:[%s3 + $0x98] sm:$0xff]
    %v48 = vld [vmem:[%s3 + $0xa0] sm:$0xff]
    %v49 = vld [vmem:[%s3 + $0xa8] sm:$0xff]
    %v50 = vld [vmem:[%s3 + $0xb0] sm:$0xff]
    %v51 = vld [vmem:[%s3 + $0xb8] sm:$0xff]
    %v52 = vld [vmem:[%s3 + $0xc0] sm:$0xff]
    %v53 = vld [vmem:[%s3 + $0xc8] sm:$0xff]
    %v54 = vld [vmem:[%s3 + $0xd0] sm:$0xff]
    %v55 = vld [vmem:[%s3 + $0xd8] sm:$0xff]
    %v56 = vld [vmem:[%s3 + $0xe0] sm:$0xff]
    %v57 = vld [vmem:[%s3 + $0xe8] sm:$0xff]
    %v58 = vld [vmem:[%s3 + $0xf0] sm:$0xff]
    %v59 = vld [vmem:[%s3 + $0xf8] sm:$0xff]
    %v60 = vld [vmem:[%s3 + $0x100] sm:$0xff]
    %v61 = vld [vmem:[%s3 + $0x108] sm:$0xff]
    %v62 = vld [vmem:[%s3 + $0x110] sm:$0xff]
    %v63 = vld [vmem:[%s3 + $0x118] sm:$0xff]
    %v64 = vld [vmem:[%s3 + $0x120] sm:$0xff]
    %v65 = vld [vmem:[%s3 + $0x128] sm:$0xff]
    %v66 = vld [vmem:[%s3 + $0x130] sm:$0xff]
    %v67 = vld [vmem:[%s3 + $0x138] sm:$0xff]
    %v68 = vld [vmem:[%s3 + $0x140] sm:$0xff]
    %v69 = vld [vmem:[%s3 + $0x148] sm:$0xff]
    %v70 = vld [vmem:[%s3 + $0x150] sm:$0xff]
    %v71 = vld [vmem:[%s3 + $0x158] sm:$0xff]
    %v72 = vld [vmem:[%s3 + $0x160] sm:$0xff]
    %v73 = vld [vmem:[%s3 + $0x168] sm:$0xff]
    %v74 = vld [vmem:[%s3 + $0x170] sm:$0xff]
    %v75 = vld [vmem:[%s3 + $0x178] sm:$0xff]
    %v76 = vld [vmem:[%s3 + $0x180] sm:$0xff]
    %v77 = vld [vmem:[%s3 + $0x188] sm:$0xff]
    %v78 = vld [vmem:[%s3 + $0x190] sm:$0xff]
    %v79 = vld [vmem:[%s3 + $0x198] sm:$0xff]
    %v80 = vld [vmem:[%s3 + $0x1a0] sm:$0xff]
    %v81 = vld [vmem:[%s3 + $0x1a8] sm:$0xff]
    %v82 = vld [vmem:[%s3 + $0x1b0] sm:$0xff]
    %v83 = vld [vmem:[%s3 + $0x1b8] sm:$0xff]
    %v84 = vld [vmem:[%s3 + $0x1c0] sm:$0xff]
    %v85 = vld [vmem:[%s3 + $0x1c8] sm:$0xff]
    %v86 = vld [vmem:[%s3 + $0x1d0] sm:$0xff]
    %v87 = vld [vmem:[%s3 + $0x1d8] sm:$0xff]
    %v88 = vld [vmem:[%s3 + $0x1e0] sm:$0xff]
    %v89 = vld [vmem:[%s3 + $0x1e8] sm:$0xff]
    %v90 = vld [vmem:[%s3 + $0x1f0] sm:$0xff]
    %v91 = vld [vmem:[%s3 + $0x1f8] sm:$0xff]
    %v92 = vld [vmem:[%s1] sm:$0x3]
    %v93 = vld [vmem:[%s3 + $0x200] sm:$0xff]
    %v94 = vld [vmem:[%s3 + $0x208] sm:$0xff]
    %v95 = vld [vmem:[%s3 + $0x210] sm:$0xff]
    %v96 = vld [vmem:[%s3 + $0x218] sm:$0xff]
    %v97 = vld [vmem:[%s3 + $0x220] sm:$0xff]
    %v98 = vld [vmem:[%s3 + $0x228] sm:$0xff]
    %v99 = vld [vmem:[%s3 + $0x230] sm:$0xff]
    %v100 = vld [vmem:[%s3 + $0x238] sm:$0xff]
    %v101 = vld [vmem:[%s3 + $0x240] sm:$0xff]
    %v102 = vld [vmem:[%s3 + $0x248] sm:$0xff]
    %v103 = vld [vmem:[%s3 + $0x250] sm:$0xff]
    %v104 = vld [vmem:[%s3 + $0x258] sm:$0xff]
    %v105 = vld [vmem:[%s3 + $0x260] sm:$0xff]
    %v106 = vld [vmem:[%s3 + $0x268] sm:$0xff]
    %v107 = vld [vmem:[%s3 + $0x270] sm:$0xff]
    %v108 = vld [vmem:[%s3 + $0x278] sm:$0xff]
    %v109 = vld [vmem:[%s3 + $0x280] sm:$0xff]
    %v110 = vld [vmem:[%s3 + $0x288] sm:$0xff]
    %v111 = vld [vmem:[%s3 + $0x290] sm:$0xff]
    %v112 = vld [vmem:[%s3 + $0x298] sm:$0xff]
    %v113 = vld [vmem:[%s3 + $0x2a0] sm:$0xff]
    %v114 = vld [vmem:[%s3 + $0x2a8] sm:$0xff]
    %v115 = vld [vmem:[%s3 + $0x2b0] sm:$0xff]
    %v116 = vld [vmem:[%s3 + $0x2b8] sm:$0xff]
    %v117 = vld [vmem:[%s3 + $0x2c0] sm:$0xff]
    %v118 = vld [vmem:[%s3 + $0x2c8] sm:$0xff]
    %v119 = vld [vmem:[%s3 + $0x2d0] sm:$0xff]
    %v120 = vld [vmem:[%s3 + $0x2d8] sm:$0xff]
    %v121 = vld [vmem:[%s3 + $0x2e0] sm:$0xff]
    %v122 = vld [vmem:[%s3 + $0x2e8] sm:$0xff]
    %v123 = vld [vmem:[%s3 + $0x2f0] sm:$0xff]
    %v124 = vld [vmem:[%s3 + $0x2f8] sm:$0xff]
    %v125 = vld [vmem:[%s3 + $0x300] sm:$0xff]
    %v126 = vld [vmem:[%s3 + $0x308] sm:$0xff]
    %v127 = vld [vmem:[%s3 + $0x310] sm:$0xff]
    %v128 = vld [vmem:[%s3 + $0x318] sm:$0xff]
    %v129 = vld [vmem:[%s3 + $0x320] sm:$0xff]
    %v130 = vld [vmem:[%s3 + $0x328] sm:$0xff]
    %v131 = vld [vmem:[%s3 + $0x330] sm:$0xff]
    %v132 = vld [vmem:[%s3 + $0x338] sm:$0xff]
    %v133 = vld [vmem:[%s3 + $0x340] sm:$0xff]
    %v134 = vld [vmem:[%s3 + $0x348] sm:$0xff]
    %v135 = vld [vmem:[%s3 + $0x350] sm:$0xff]
    %v136 = vld [vmem:[%s3 + $0x358] sm:$0xff]
    %v137 = vld [vmem:[%s3 + $0x360] sm:$0xff]
    %v138 = vld [vmem:[%s3 + $0x368] sm:$0xff]
    %v139 = vld [vmem:[%s3 + $0x370] sm:$0xff]
    %v140 = vld [vmem:[%s3 + $0x378] sm:$0xff]
    %v141 = vld [vmem:[%s3 + $0x380] sm:$0xff]
    %v142 = vld [vmem:[%s3 + $0x388] sm:$0xff]
    %v143 = vld [vmem:[%s3 + $0x390] sm:$0xff]
    %v144 = vld [vmem:[%s3 + $0x398] sm:$0xff]
    %v145 = vld [vmem:[%s3 + $0x3a0] sm:$0xff]
    %v146 = vld [vmem:[%s3 + $0x3a8] sm:$0xff]
    %v147 = vld [vmem:[%s3 + $0x3b0] sm:$0xff]
    %v148 = vld [vmem:[%s3 + $0x3b8] sm:$0xff]
    %v149 = vld [vmem:[%s3 + $0x3c0] sm:$0xff]
    %v150 = vld [vmem:[%s3 + $0x3c8] sm:$0xff]
    %v151 = vld [vmem:[%s3 + $0x3d0] sm:$0xff]
    %v152 = vld [vmem:[%s3 + $0x3d8] sm:$0xff]
    %v153 = vld [vmem:[%s3 + $0x3e0] sm:$0xff]
    %v154 = vld [vmem:[%s3 + $0x3e8] sm:$0xff]
    %v155 = vld [vmem:[%s3 + $0x3f0] sm:$0xff]
    %v156 = vld [vmem:[%s3 + $0x3f8] sm:$0xff]
    %157 = vmatprep.subr.mxu0 %v94
    %158 = vmatpush1.msra.mxu0 %v93
    %159 = vmatprep.subr.mxu0 %v98
    %160 = vmatpush1.msra.mxu0 %v97
    %161 = vmatprep.subr.mxu0 %v102
    %162 = vmatpush1.msra.mxu0 %v101
    %163 = vmatprep.subr.mxu0 %v106
    %164 = vmatpush1.msra.mxu0 %v105
    %165 = vmatprep.subr.mxu0 %v110
    %166 = vmatpush1.msra.mxu0 %v109
    %167 = vmatprep.subr.mxu0 %v114
    %168 = vmatpush1.msra.mxu0 %v113
    %169 = vmatprep.subr.mxu0 %v118
    %170 = vmatpush1.msra.mxu0 %v117
    %171 = vmatprep.subr.mxu0 %v122
    %172 = vmatpush1.msra.mxu0 %v121
    %173 = vmatprep.subr.mxu0 %v126
    %174 = vmatpush1.msra.mxu0 %v125
    %175 = vmatprep.subr.mxu0 %v130
    %176 = vmatpush1.msra.mxu0 %v129
    %177 = vmatprep.subr.mxu0 %v134
    %178 = vmatpush1.msra.mxu0 %v133
    %179 = vmatprep.subr.mxu0 %v138
    %180 = vmatpush1.msra.mxu0 %v137
    %181 = vmatprep.subr.mxu0 %v142
    %182 = vmatpush1.msra.mxu0 %v141
    %183 = vmatprep.subr.mxu0 %v146
    %184 = vmatpush1.msra.mxu0 %v145
    %185 = vmatprep.subr.mxu0 %v150
    %186 = vmatpush1.msra.mxu0 %v149
    %187 = vmatprep.subr.mxu0 %v154
    %188 = vmatpush1.msra.mxu0 %v153
    %189 = vmatprep.subr.mxu0 0.0
    %190 = vmatpush1.msra.mxu0 0.0
    %191 = vmatprep.subr.mxu0 0.0
    %192 = vmatpush1.msra.mxu0 0.0
    %193 = vmatprep.subr.mxu0 0.0
    %194 = vmatpush1.msra.mxu0 0.0
    %195 = vmatprep.subr.mxu0 0.0
    %196 = vmatpush1.msra.mxu0 0.0
    %197 = vmatprep.subr.mxu0 0.0
    %198 = vmatpush1.msra.mxu0 0.0
    %199 = vmatprep.subr.mxu0 0.0
    %200 = vmatpush1.msra.mxu0 0.0
    %201 = vmatprep.subr.mxu0 0.0
    %202 = vmatpush1.msra.mxu0 0.0
    %203 = vmatprep.subr.mxu0 0.0
    %204 = vmatpush1.msra.mxu0 0.0
    %205 = vmatprep.subr.mxu0 0.0
    %206 = vmatpush1.msra.mxu0 0.0
    %207 = vmatprep.subr.mxu0 0.0
    %208 = vmatpush1.msra.mxu0 0.0
    %209 = vmatprep.subr.mxu0 0.0
    %210 = vmatpush1.msra.mxu0 0.0
    %211 = vmatprep.subr.mxu0 0.0
    %212 = vmatpush1.msra.mxu0 0.0
    %213 = vmatprep.subr.mxu0 0.0
    %214 = vmatpush1.msra.mxu0 0.0
    %215 = vmatprep.subr.mxu0 0.0
    %216 = vmatpush1.msra.mxu0 0.0
    %217 = vmatprep.subr.mxu0 0.0
    %218 = vmatpush1.msra.mxu0 0.0
    %219 = vmatprep.subr.mxu0 0.0
    %220 = vmatpush1.msra.mxu0 0.0
    %221 = vmatprep.mubr.f32.mxu0 0.0
    %222 = vmatmul.mubr.f32.gmra.mrb[0].mxu0 %v92
    %v223 = vpop.f32.mrb[0].mxu0
    %v224 = vadd.f32 0.0, %v223
    %v225 = vpop.f32.mrb[0].mxu0
    %v226 = vadd.f32 0.0, %v225
    %227 = vdwg.mxu0
    %228 = vmatprep.subr.mxu0 %v96
    %229 = vmatpush1.msra.mxu0 %v95
    %230 = vmatprep.subr.mxu0 %v100
    %231 = vmatpush1.msra.mxu0 %v99
    %232 = vmatprep.subr.mxu0 %v104
    %233 = vmatpush1.msra.mxu0 %v103
    %234 = vmatprep.subr.mxu0 %v108
    %235 = vmatpush1.msra.mxu0 %v107
    %236 = vmatprep.subr.mxu0 %v112
    %237 = vmatpush1.msra.mxu0 %v111
    %238 = vmatprep.subr.mxu0 %v116
    %239 = vmatpush1.msra.mxu0 %v115
    %240 = vmatprep.subr.mxu0 %v120
    %241 = vmatpush1.msra.mxu0 %v119
    %242 = vmatprep.subr.mxu0 %v124
    %243 = vmatpush1.msra.mxu0 %v123
    %244 = vmatprep.subr.mxu0 %v128
    %245 = vmatpush1.msra.mxu0 %v127
    %246 = vmatprep.subr.mxu0 %v132
    %247 = vmatpush1.msra.mxu0 %v131
    %248 = vmatprep.subr.mxu0 %v136
    %249 = vmatpush1.msra.mxu0 %v135
    %250 = vmatprep.subr.mxu0 %v140
    %251 = vmatpush1.msra.mxu0 %v139
    %252 = vmatprep.subr.mxu0 %v144
    %253 = vmatpush1.msra.mxu0 %v143
    %254 = vmatprep.subr.mxu0 %v148
    %255 = vmatpush1.msra.mxu0 %v147
    %256 = vmatprep.subr.mxu0 %v152
    %257 = vmatpush1.msra.mxu0 %v151
    %258 = vmatprep.subr.mxu0 %v156
    %259 = vmatpush1.msra.mxu0 %v155
    %260 = vmatprep.subr.mxu0 0.0
    %261 = vmatpush1.msra.mxu0 0.0
    %262 = vmatprep.subr.mxu0 0.0
    %263 = vmatpush1.msra.mxu0 0.0
    %264 = vmatprep.subr.mxu0 0.0
    %265 = vmatpush1.msra.mxu0 0.0
    %266 = vmatprep.subr.mxu0 0.0
    %267 = vmatpush1.msra.mxu0 0.0
    %268 = vmatprep.subr.mxu0 0.0
    %269 = vmatpush1.msra.mxu0 0.0
    %270 = vmatprep.subr.mxu0 0.0
    %271 = vmatpush1.msra.mxu0 0.0
    %272 = vmatprep.subr.mxu0 0.0
    %273 = vmatpush1.msra.mxu0 0.0
    %274 = vmatprep.subr.mxu0 0.0
    %275 = vmatpush1.msra.mxu0 0.0
    %276 = vmatprep.subr.mxu0 0.0
    %277 = vmatpush1.msra.mxu0 0.0
    %278 = vmatprep.subr.mxu0 0.0
    %279 = vmatpush1.msra.mxu0 0.0
    %280 = vmatprep.subr.mxu0 0.0
    %281 = vmatpush1.msra.mxu0 0.0
    %282 = vmatprep.subr.mxu0 0.0
    %283 = vmatpush1.msra.mxu0 0.0
    %284 = vmatprep.subr.mxu0 0.0
    %285 = vmatpush1.msra.mxu0 0.0
    %286 = vmatprep.subr.mxu0 0.0
    %287 = vmatpush1.msra.mxu0 0.0
    %288 = vmatprep.subr.mxu0 0.0
    %289 = vmatpush1.msra.mxu0 0.0
    %290 = vmatprep.subr.mxu0 0.0
    %291 = vmatpush1.msra.mxu0 0.0
    %292 = vmatprep.mubr.f32.mxu0 0.0
    %293 = vmatmul.mubr.f32.gmra.mrb[0].mxu0 %v92
    %v294 = vpop.f32.mrb[0].mxu0
    %v295 = vadd.f32 0.0, %v294
    %v296 = vpop.f32.mrb[0].mxu0
    %v297 = vadd.f32 0.0, %v296
    %298 = vdwg.mxu0
    %299 = vmatprep.subr.mxu0 %v29
    %300 = vmatpush1.msra.mxu0 %v28
    %301 = vmatprep.subr.mxu0 %v33
    %302 = vmatpush1.msra.mxu0 %v32
    %303 = vmatprep.subr.mxu0 %v37
    %304 = vmatpush1.msra.mxu0 %v36
    %305 = vmatprep.subr.mxu0 %v41
    %306 = vmatpush1.msra.mxu0 %v40
    %307 = vmatprep.subr.mxu0 %v45
    %308 = vmatpush1.msra.mxu0 %v44
    %309 = vmatprep.subr.mxu0 %v49
    %310 = vmatpush1.msra.mxu0 %v48
    %311 = vmatprep.subr.mxu0 %v53
    %312 = vmatpush1.msra.mxu0 %v52
    %313 = vmatprep.subr.mxu0 %v57
    %314 = vmatpush1.msra.mxu0 %v56
    %315 = vmatprep.subr.mxu0 %v61
    %316 = vmatpush1.msra.mxu0 %v60
    %317 = vmatprep.subr.mxu0 %v65
    %318 = vmatpush1.msra.mxu0 %v64
    %319 = vmatprep.subr.mxu0 %v69
    %320 = vmatpush1.msra.mxu0 %v68
    %321 = vmatprep.subr.mxu0 %v73
    %322 = vmatpush1.msra.mxu0 %v72
    %323 = vmatprep.subr.mxu0 %v77
    %324 = vmatpush1.msra.mxu0 %v76
    %325 = vmatprep.subr.mxu0 %v81
    %326 = vmatpush1.msra.mxu0 %v80
    %327 = vmatprep.subr.mxu0 %v85
    %328 = vmatpush1.msra.mxu0 %v84
    %329 = vmatprep.subr.mxu0 %v89
    %330 = vmatpush1.msra.mxu0 %v88
    %331 = vmatprep.subr.mxu0 0.0
    %332 = vmatpush1.msra.mxu0 0.0
    %333 = vmatprep.subr.mxu0 0.0
    %334 = vmatpush1.msra.mxu0 0.0
    %335 = vmatprep.subr.mxu0 0.0
    %336 = vmatpush1.msra.mxu0 0.0
    %337 = vmatprep.subr.mxu0 0.0
    %338 = vmatpush1.msra.mxu0 0.0
    %339 = vmatprep.subr.mxu0 0.0
    %340 = vmatpush1.msra.mxu0 0.0
    %341 = vmatprep.subr.mxu0 0.0
    %342 = vmatpush1.msra.mxu0 0.0
    %343 = vmatprep.subr.mxu0 0.0
    %344 = vmatpush1.msra.mxu0 0.0
    %345 = vmatprep.subr.mxu0 0.0
    %346 = vmatpush1.msra.mxu0 0.0
    %347 = vmatprep.subr.mxu0 0.0
    %348 = vmatpush1.msra.mxu0 0.0
    %349 = vmatprep.subr.mxu0 0.0
    %350 = vmatpush1.msra.mxu0 0.0
    %351 = vmatprep.subr.mxu0 0.0
    %352 = vmatpush1.msra.mxu0 0.0
    %353 = vmatprep.subr.mxu0 0.0
    %354 = vmatpush1.msra.mxu0 0.0
    %355 = vmatprep.subr.mxu0 0.0
    %356 = vmatpush1.msra.mxu0 0.0
    %357 = vmatprep.subr.mxu0 0.0
    %358 = vmatpush1.msra.mxu0 0.0
    %359 = vmatprep.subr.mxu0 0.0
    %360 = vmatpush1.msra.mxu0 0.0
    %361 = vmatprep.subr.mxu0 0.0
    %362 = vmatpush1.msra.mxu0 0.0
    %363 = vmatprep.mubr.f32.mxu0 0.0
    %364 = vmatmul.mubr.f32.gmra.mrb[0].mxu0 %v27
    %v365 = vpop.f32.mrb[0].mxu0
    %v366 = vadd.f32 %v224, %v365
    %v367 = vpop.f32.mrb[0].mxu0
    %v368 = vadd.f32 %v226, %v367
    %369 = vdwg.mxu0
    %370 = vmatprep.subr.mxu0 %v31
    %371 = vmatpush1.msra.mxu0 %v30
    %372 = vmatprep.subr.mxu0 %v35
    %373 = vmatpush1.msra.mxu0 %v34
    %374 = vmatprep.subr.mxu0 %v39
    %375 = vmatpush1.msra.mxu0 %v38
    %376 = vmatprep.subr.mxu0 %v43
    %377 = vmatpush1.msra.mxu0 %v42
    %378 = vmatprep.subr.mxu0 %v47
    %379 = vmatpush1.msra.mxu0 %v46
    %380 = vmatprep.subr.mxu0 %v51
    %381 = vmatpush1.msra.mxu0 %v50
    %382 = vmatprep.subr.mxu0 %v55
    %383 = vmatpush1.msra.mxu0 %v54
    %384 = vmatprep.subr.mxu0 %v59
    %385 = vmatpush1.msra.mxu0 %v58
    %386 = vmatprep.subr.mxu0 %v63
    %387 = vmatpush1.msra.mxu0 %v62
    %388 = vmatprep.subr.mxu0 %v67
    %389 = vmatpush1.msra.mxu0 %v66
    %390 = vmatprep.subr.mxu0 %v71
    %391 = vmatpush1.msra.mxu0 %v70
    %392 = vmatprep.subr.mxu0 %v75
    %393 = vmatpush1.msra.mxu0 %v74
    %394 = vmatprep.subr.mxu0 %v79
    %395 = vmatpush1.msra.mxu0 %v78
    %396 = vmatprep.subr.mxu0 %v83
    %397 = vmatpush1.msra.mxu0 %v82
    %398 = vmatprep.subr.mxu0 %v87
    %399 = vmatpush1.msra.mxu0 %v86
    %400 = vmatprep.subr.mxu0 %v91
    %401 = vmatpush1.msra.mxu0 %v90
    %402 = vmatprep.subr.mxu0 0.0
    %403 = vmatpush1.msra.mxu0 0.0
    %404 = vmatprep.subr.mxu0 0.0
    %405 = vmatpush1.msra.mxu0 0.0
    %406 = vmatprep.subr.mxu0 0.0
    %407 = vmatpush1.msra.mxu0 0.0
    %408 = vmatprep.subr.mxu0 0.0
    %409 = vmatpush1.msra.mxu0 0.0
    %410 = vmatprep.subr.mxu0 0.0
    %411 = vmatpush1.msra.mxu0 0.0
    %412 = vmatprep.subr.mxu0 0.0
    %413 = vmatpush1.msra.mxu0 0.0
    %414 = vmatprep.subr.mxu0 0.0
    %415 = vmatpush1.msra.mxu0 0.0
    %416 = vmatprep.subr.mxu0 0.0
    %417 = vmatpush1.msra.mxu0 0.0
    %418 = vmatprep.subr.mxu0 0.0
    %419 = vmatpush1.msra.mxu0 0.0
    %420 = vmatprep.subr.mxu0 0.0
    %421 = vmatpush1.msra.mxu0 0.0
    %422 = vmatprep.subr.mxu0 0.0
    %423 = vmatpush1.msra.mxu0 0.0
    %424 = vmatprep.subr.mxu0 0.0
    %425 = vmatpush1.msra.mxu0 0.0
    %426 = vmatprep.subr.mxu0 0.0
    %427 = vmatpush1.msra.mxu0 0.0
    %428 = vmatprep.subr.mxu0 0.0
    %429 = vmatpush1.msra.mxu0 0.0
    %430 = vmatprep.subr.mxu0 0.0
    %431 = vmatpush1.msra.mxu0 0.0
    %432 = vmatprep.subr.mxu0 0.0
    %433 = vmatpush1.msra.mxu0 0.0
    %434 = vmatprep.mubr.f32.mxu0 0.0
    %435 = vmatmul.mubr.f32.gmra.mrb[0].mxu0 %v27
    %v436 = vpop.f32.mrb[0].mxu0
    %v437 = vadd.f32 %v295, %v436
    %v438 = vpop.f32.mrb[0].mxu0
    %v439 = vadd.f32 %v297, %v438
    %440 = vdwg.mxu0
    %v441 = vld [vmem:[%s2] sm:$0x3]
    %v442 = vld [vmem:[%s3 + $0x400] sm:$0xff]
    %v443 = vld [vmem:[%s3 + $0x408] sm:$0xff]
    %v444 = vld [vmem:[%s3 + $0x410] sm:$0xff]
    %v445 = vld [vmem:[%s3 + $0x418] sm:$0xff]
    %v446 = vld [vmem:[%s3 + $0x420] sm:$0xff]
    %v447 = vld [vmem:[%s3 + $0x428] sm:$0xff]
    %v448 = vld [vmem:[%s3 + $0x430] sm:$0xff]
    %v449 = vld [vmem:[%s3 + $0x438] sm:$0xff]
    %v450 = vld [vmem:[%s3 + $0x440] sm:$0xff]
    %v451 = vld [vmem:[%s3 + $0x448] sm:$0xff]
    %v452 = vld [vmem:[%s3 + $0x450] sm:$0xff]
    %v453 = vld [vmem:[%s3 + $0x458] sm:$0xff]
    %v454 = vld [vmem:[%s3 + $0x460] sm:$0xff]
    %v455 = vld [vmem:[%s3 + $0x468] sm:$0xff]
    %v456 = vld [vmem:[%s3 + $0x470] sm:$0xff]
    %v457 = vld [vmem:[%s3 + $0x478] sm:$0xff]
    %v458 = vld [vmem:[%s3 + $0x480] sm:$0xff]
    %v459 = vld [vmem:[%s3 + $0x488] sm:$0xff]
    %v460 = vld [vmem:[%s3 + $0x490] sm:$0xff]
    %v461 = vld [vmem:[%s3 + $0x498] sm:$0xff]
    %v462 = vld [vmem:[%s3 + $0x4a0] sm:$0xff]
    %v463 = vld [vmem:[%s3 + $0x4a8] sm:$0xff]
    %v464 = vld [vmem:[%s3 + $0x4b0] sm:$0xff]
    %v465 = vld [vmem:[%s3 + $0x4b8] sm:$0xff]
    %v466 = vld [vmem:[%s3 + $0x4c0] sm:$0xff]
    %v467 = vld [vmem:[%s3 + $0x4c8] sm:$0xff]
    %v468 = vld [vmem:[%s3 + $0x4d0] sm:$0xff]
    %v469 = vld [vmem:[%s3 + $0x4d8] sm:$0xff]
    %v470 = vld [vmem:[%s3 + $0x4e0] sm:$0xff]
    %v471 = vld [vmem:[%s3 + $0x4e8] sm:$0xff]
    %v472 = vld [vmem:[%s3 + $0x4f0] sm:$0xff]
    %v473 = vld [vmem:[%s3 + $0x4f8] sm:$0xff]
    %v474 = vld [vmem:[%s3 + $0x500] sm:$0xff]
    %v475 = vld [vmem:[%s3 + $0x508] sm:$0xff]
    %v476 = vld [vmem:[%s3 + $0x510] sm:$0xff]
    %v477 = vld [vmem:[%s3 + $0x518] sm:$0xff]
    %v478 = vld [vmem:[%s3 + $0x520] sm:$0xff]
    %v479 = vld [vmem:[%s3 + $0x528] sm:$0xff]
    %v480 = vld [vmem:[%s3 + $0x530] sm:$0xff]
    %v481 = vld [vmem:[%s3 + $0x538] sm:$0xff]
    %v482 = vld [vmem:[%s3 + $0x540] sm:$0xff]
    %v483 = vld [vmem:[%s3 + $0x548] sm:$0xff]
    %v484 = vld [vmem:[%s3 + $0x550] sm:$0xff]
    %v485 = vld [vmem:[%s3 + $0x558] sm:$0xff]
    %v486 = vld [vmem:[%s3 + $0x560] sm:$0xff]
    %v487 = vld [vmem:[%s3 + $0x568] sm:$0xff]
    %v488 = vld [vmem:[%s3 + $0x570] sm:$0xff]
    %v489 = vld [vmem:[%s3 + $0x578] sm:$0xff]
    %v490 = vld [vmem:[%s3 + $0x580] sm:$0xff]
    %v491 = vld [vmem:[%s3 + $0x588] sm:$0xff]
    %v492 = vld [vmem:[%s3 + $0x590] sm:$0xff]
    %v493 = vld [vmem:[%s3 + $0x598] sm:$0xff]
    %v494 = vld [vmem:[%s3 + $0x5a0] sm:$0xff]
    %v495 = vld [vmem:[%s3 + $0x5a8] sm:$0xff]
    %v496 = vld [vmem:[%s3 + $0x5b0] sm:$0xff]
    %v497 = vld [vmem:[%s3 + $0x5b8] sm:$0xff]
    %v498 = vld [vmem:[%s3 + $0x5c0] sm:$0xff]
    %v499 = vld [vmem:[%s3 + $0x5c8] sm:$0xff]
    %v500 = vld [vmem:[%s3 + $0x5d0] sm:$0xff]
    %v501 = vld [vmem:[%s3 + $0x5d8] sm:$0xff]
    %v502 = vld [vmem:[%s3 + $0x5e0] sm:$0xff]
    %v503 = vld [vmem:[%s3 + $0x5e8] sm:$0xff]
    %v504 = vld [vmem:[%s3 + $0x5f0] sm:$0xff]
    %v505 = vld [vmem:[%s3 + $0x5f8] sm:$0xff]
    %506 = vmatprep.subr.mxu0 %v443
    %507 = vmatpush1.msra.mxu0 %v442
    %508 = vmatprep.subr.mxu0 %v447
    %509 = vmatpush1.msra.mxu0 %v446
    %510 = vmatprep.subr.mxu0 %v451
    %511 = vmatpush1.msra.mxu0 %v450
    %512 = vmatprep.subr.mxu0 %v455
    %513 = vmatpush1.msra.mxu0 %v454
    %514 = vmatprep.subr.mxu0 %v459
    %515 = vmatpush1.msra.mxu0 %v458
    %516 = vmatprep.subr.mxu0 %v463
    %517 = vmatpush1.msra.mxu0 %v462
    %518 = vmatprep.subr.mxu0 %v467
    %519 = vmatpush1.msra.mxu0 %v466
    %520 = vmatprep.subr.mxu0 %v471
    %521 = vmatpush1.msra.mxu0 %v470
    %522 = vmatprep.subr.mxu0 %v475
    %523 = vmatpush1.msra.mxu0 %v474
    %524 = vmatprep.subr.mxu0 %v479
    %525 = vmatpush1.msra.mxu0 %v478
    %526 = vmatprep.subr.mxu0 %v483
    %527 = vmatpush1.msra.mxu0 %v482
    %528 = vmatprep.subr.mxu0 %v487
    %529 = vmatpush1.msra.mxu0 %v486
    %530 = vmatprep.subr.mxu0 %v491
    %531 = vmatpush1.msra.mxu0 %v490
    %532 = vmatprep.subr.mxu0 %v495
    %533 = vmatpush1.msra.mxu0 %v494
    %534 = vmatprep.subr.mxu0 %v499
    %535 = vmatpush1.msra.mxu0 %v498
    %536 = vmatprep.subr.mxu0 %v503
    %537 = vmatpush1.msra.mxu0 %v502
    %538 = vmatprep.subr.mxu0 0.0
    %539 = vmatpush1.msra.mxu0 0.0
    %540 = vmatprep.subr.mxu0 0.0
    %541 = vmatpush1.msra.mxu0 0.0
    %542 = vmatprep.subr.mxu0 0.0
    %543 = vmatpush1.msra.mxu0 0.0
    %544 = vmatprep.subr.mxu0 0.0
    %545 = vmatpush1.msra.mxu0 0.0
    %546 = vmatprep.subr.mxu0 0.0
    %547 = vmatpush1.msra.mxu0 0.0
    %548 = vmatprep.subr.mxu0 0.0
    %549 = vmatpush1.msra.mxu0 0.0
    %550 = vmatprep.subr.mxu0 0.0
    %551 = vmatpush1.msra.mxu0 0.0
    %552 = vmatprep.subr.mxu0 0.0
    %553 = vmatpush1.msra.mxu0 0.0
    %554 = vmatprep.subr.mxu0 0.0
    %555 = vmatpush1.msra.mxu0 0.0
    %556 = vmatprep.subr.mxu0 0.0
    %557 = vmatpush1.msra.mxu0 0.0
    %558 = vmatprep.subr.mxu0 0.0
    %559 = vmatpush1.msra.mxu0 0.0
    %560 = vmatprep.subr.mxu0 0.0
    %561 = vmatpush1.msra.mxu0 0.0
    %562 = vmatprep.subr.mxu0 0.0
    %563 = vmatpush1.msra.mxu0 0.0
    %564 = vmatprep.subr.mxu0 0.0
    %565 = vmatpush1.msra.mxu0 0.0
    %566 = vmatprep.subr.mxu0 0.0
    %567 = vmatpush1.msra.mxu0 0.0
    %568 = vmatprep.subr.mxu0 0.0
    %569 = vmatpush1.msra.mxu0 0.0
    %570 = vmatprep.mubr.f32.mxu0 0.0
    %571 = vmatmul.mubr.f32.gmra.mrb[0].mxu0 %v441
    %v572 = vpop.f32.mrb[0].mxu0
    %v573 = vadd.f32 0.0, %v572
    %v574 = vpop.f32.mrb[0].mxu0
    %v575 = vadd.f32 0.0, %v574
    %576 = vdwg.mxu0
    %577 = vmatprep.subr.mxu0 %v445
    %578 = vmatpush1.msra.mxu0 %v444
    %579 = vmatprep.subr.mxu0 %v449
    %580 = vmatpush1.msra.mxu0 %v448
    %581 = vmatprep.subr.mxu0 %v453
    %582 = vmatpush1.msra.mxu0 %v452
    %583 = vmatprep.subr.mxu0 %v457
    %584 = vmatpush1.msra.mxu0 %v456
    %585 = vmatprep.subr.mxu0 %v461
    %586 = vmatpush1.msra.mxu0 %v460
    %587 = vmatprep.subr.mxu0 %v465
    %588 = vmatpush1.msra.mxu0 %v464
    %589 = vmatprep.subr.mxu0 %v469
    %590 = vmatpush1.msra.mxu0 %v468
    %591 = vmatprep.subr.mxu0 %v473
    %592 = vmatpush1.msra.mxu0 %v472
    %593 = vmatprep.subr.mxu0 %v477
    %594 = vmatpush1.msra.mxu0 %v476
    %595 = vmatprep.subr.mxu0 %v481
    %596 = vmatpush1.msra.mxu0 %v480
    %597 = vmatprep.subr.mxu0 %v485
    %598 = vmatpush1.msra.mxu0 %v484
    %599 = vmatprep.subr.mxu0 %v489
    %600 = vmatpush1.msra.mxu0 %v488
    %601 = vmatprep.subr.mxu0 %v493
    %602 = vmatpush1.msra.mxu0 %v492
    %603 = vmatprep.subr.mxu0 %v497
    %604 = vmatpush1.msra.mxu0 %v496
    %605 = vmatprep.subr.mxu0 %v501
    %606 = vmatpush1.msra.mxu0 %v500
    %607 = vmatprep.subr.mxu0 %v505
    %608 = vmatpush1.msra.mxu0 %v504
    %609 = vmatprep.subr.mxu0 0.0
    %610 = vmatpush1.msra.mxu0 0.0
    %611 = vmatprep.subr.mxu0 0.0
    %612 = vmatpush1.msra.mxu0 0.0
    %613 = vmatprep.subr.mxu0 0.0
    %614 = vmatpush1.msra.mxu0 0.0
    %615 = vmatprep.subr.mxu0 0.0
    %616 = vmatpush1.msra.mxu0 0.0
    %617 = vmatprep.subr.mxu0 0.0
    %618 = vmatpush1.msra.mxu0 0.0
    %619 = vmatprep.subr.mxu0 0.0
    %620 = vmatpush1.msra.mxu0 0.0
    %621 = vmatprep.subr.mxu0 0.0
    %622 = vmatpush1.msra.mxu0 0.0
    %623 = vmatprep.subr.mxu0 0.0
    %624 = vmatpush1.msra.mxu0 0.0
    %625 = vmatprep.subr.mxu0 0.0
    %626 = vmatpush1.msra.mxu0 0.0
    %627 = vmatprep.subr.mxu0 0.0
    %628 = vmatpush1.msra.mxu0 0.0
    %629 = vmatprep.subr.mxu0 0.0
    %630 = vmatpush1.msra.mxu0 0.0
    %631 = vmatprep.subr.mxu0 0.0
    %632 = vmatpush1.msra.mxu0 0.0
    %633 = vmatprep.subr.mxu0 0.0
    %634 = vmatpush1.msra.mxu0 0.0
    %635 = vmatprep.subr.mxu0 0.0
    %636 = vmatpush1.msra.mxu0 0.0
    %637 = vmatprep.subr.mxu0 0.0
    %638 = vmatpush1.msra.mxu0 0.0
    %639 = vmatprep.subr.mxu0 0.0
    %640 = vmatpush1.msra.mxu0 0.0
    %641 = vmatprep.mubr.f32.mxu0 0.0
    %642 = vmatmul.mubr.f32.gmra.mrb[0].mxu0 %v441
    %v643 = vpop.f32.mrb[0].mxu0
    %v644 = vadd.f32 0.0, %v643
    %v645 = vpop.f32.mrb[0].mxu0
    %v646 = vadd.f32 0.0, %v645
    %647 = vdwg.mxu0
    %v648 = vadd.f32 %v366, %v573
    %v649 = vadd.f32 %v368, %v575
    %v650 = vadd.f32 %v437, %v644
    %v651 = vadd.f32 %v439, %v646
    %v652 = vld [vmem:[%s4] sm:$0xf]
    %v654 = vlaneseq
    %v655 = vshrl.u32 %v654, 7
    %v656 = vsub.s32 0, %v655
    %v657 = vrot.slane %v652, %v656
    %v658 = vlaneseq
    %v659 = vshrl.u32 %v658, 7
    %v660 = vsub.s32 1, %v659
    %v661 = vrot.slane %v652, %v660
    %v662 = vlaneseq
    %v663 = vshrl.u32 %v662, 7
    %v664 = vsub.s32 2, %v663
    %v665 = vrot.slane %v652, %v664
    %v666 = vlaneseq
    %v667 = vshrl.u32 %v666, 7
    %v668 = vsub.s32 3, %v667
    %v669 = vrot.slane %v652, %v668
    %v674 = vadd.f32 %v648, %v657
    %v675 = vadd.f32 %v649, %v661
    %v676 = vadd.f32 %v650, %v665
    %v677 = vadd.f32 %v651, %v669
    %v678 = vmax.f32 %v674, 0.0
    %v679 = vmax.f32 %v675, 0.0
    %v680 = vmax.f32 %v676, 0.0
    %v681 = vmax.f32 %v677, 0.0
    %v682 = vld [vmem:[%s5] sm:$0xff]
    %v683 = vld [vmem:[%s5 + $0x8] sm:$0xff]
    %v684 = vld [vmem:[%s5 + $0x10] sm:$0xff]
    %v685 = vld [vmem:[%s5 + $0x18] sm:$0xff]
    %v686 = vld [vmem:[%s5 + $0x20] sm:$0xff]
    %v687 = vld [vmem:[%s5 + $0x28] sm:$0xff]
    %v688 = vld [vmem:[%s5 + $0x30] sm:$0xff]
    %v689 = vld [vmem:[%s5 + $0x38] sm:$0xff]
    %v690 = vld [vmem:[%s5 + $0x40] sm:$0xff]
    %v691 = vld [vmem:[%s5 + $0x48] sm:$0xff]
    %v692 = vld [vmem:[%s5 + $0x50] sm:$0xff]
    %v693 = vld [vmem:[%s5 + $0x58] sm:$0xff]
    %v694 = vld [vmem:[%s5 + $0x60] sm:$0xff]
    %v695 = vld [vmem:[%s5 + $0x68] sm:$0xff]
    %v696 = vld [vmem:[%s5 + $0x70] sm:$0xff]
    %v697 = vld [vmem:[%s5 + $0x78] sm:$0xff]
    %v698 = vld [vmem:[%s5 + $0x80] sm:$0xff]
    %v699 = vld [vmem:[%s5 + $0x88] sm:$0xff]
    %v700 = vld [vmem:[%s5 + $0x90] sm:$0xff]
    %v701 = vld [vmem:[%s5 + $0x98] sm:$0xff]
    %v702 = vld [vmem:[%s5 + $0xa0] sm:$0xff]
    %v703 = vld [vmem:[%s5 + $0xa8] sm:$0xff]
    %v704 = vld [vmem:[%s5 + $0xb0] sm:$0xff]
    %v705 = vld [vmem:[%s5 + $0xb8] sm:$0xff]
    %v706 = vld [vmem:[%s5 + $0xc0] sm:$0xff]
    %v707 = vld [vmem:[%s5 + $0xc8] sm:$0xff]
    %v708 = vld [vmem:[%s5 + $0xd0] sm:$0xff]
    %v709 = vld [vmem:[%s5 + $0xd8] sm:$0xff]
    %v710 = vld [vmem:[%s5 + $0xe0] sm:$0xff]
    %v711 = vld [vmem:[%s5 + $0xe8] sm:$0xff]
    %v712 = vld [vmem:[%s5 + $0xf0] sm:$0xff]
    %v713 = vld [vmem:[%s5 + $0xf8] sm:$0xff]
    %v714 = vld [vmem:[%s5 + $0x100] sm:$0xff]
    %v715 = vld [vmem:[%s5 + $0x108] sm:$0xff]
    %v716 = vld [vmem:[%s5 + $0x110] sm:$0xff]
    %v717 = vld [vmem:[%s5 + $0x118] sm:$0xff]
    %v718 = vld [vmem:[%s5 + $0x120] sm:$0xff]
    %v719 = vld [vmem:[%s5 + $0x128] sm:$0xff]
    %v720 = vld [vmem:[%s5 + $0x130] sm:$0xff]
    %v721 = vld [vmem:[%s5 + $0x138] sm:$0xff]
    %v722 = vld [vmem:[%s5 + $0x140] sm:$0xff]
    %v723 = vld [vmem:[%s5 + $0x148] sm:$0xff]
    %v724 = vld [vmem:[%s5 + $0x150] sm:$0xff]
    %v725 = vld [vmem:[%s5 + $0x158] sm:$0xff]
    %v726 = vld [vmem:[%s5 + $0x160] sm:$0xff]
    %v727 = vld [vmem:[%s5 + $0x168] sm:$0xff]
    %v728 = vld [vmem:[%s5 + $0x170] sm:$0xff]
    %v729 = vld [vmem:[%s5 + $0x178] sm:$0xff]
    %v730 = vld [vmem:[%s5 + $0x180] sm:$0xff]
    %v731 = vld [vmem:[%s5 + $0x188] sm:$0xff]
    %v732 = vld [vmem:[%s5 + $0x190] sm:$0xff]
    %v733 = vld [vmem:[%s5 + $0x198] sm:$0xff]
    %v734 = vld [vmem:[%s5 + $0x1a0] sm:$0xff]
    %v735 = vld [vmem:[%s5 + $0x1a8] sm:$0xff]
    %v736 = vld [vmem:[%s5 + $0x1b0] sm:$0xff]
    %v737 = vld [vmem:[%s5 + $0x1b8] sm:$0xff]
    %v738 = vld [vmem:[%s5 + $0x1c0] sm:$0xff]
    %v739 = vld [vmem:[%s5 + $0x1c8] sm:$0xff]
    %v740 = vld [vmem:[%s5 + $0x1d0] sm:$0xff]
    %v741 = vld [vmem:[%s5 + $0x1d8] sm:$0xff]
    %v742 = vld [vmem:[%s5 + $0x1e0] sm:$0xff]
    %v743 = vld [vmem:[%s5 + $0x1e8] sm:$0xff]
    %v744 = vld [vmem:[%s5 + $0x1f0] sm:$0xff]
    %v745 = vld [vmem:[%s5 + $0x1f8] sm:$0xff]
    %v746 = vld [vmem:[%s6] sm:$0x1]
    %v748 = vlaneseq
    %v749 = vshrl.u32 %v748, 7
    %v750 = vsub.s32 0, %v749
    %v751 = vrot.slane %v746, %v750
    %753 = vmatprep.subr.mxu0 0.0
    %754 = vmatpush1.msra.mxu0 %v682
    %755 = vmatprep.subr.mxu0 0.0
    %756 = vmatpush1.msra.mxu0 %v683
    %757 = vmatprep.subr.mxu0 0.0
    %758 = vmatpush1.msra.mxu0 %v684
    %759 = vmatprep.subr.mxu0 0.0
    %760 = vmatpush1.msra.mxu0 %v685
    %761 = vmatprep.subr.mxu0 0.0
    %762 = vmatpush1.msra.mxu0 %v686
    %763 = vmatprep.subr.mxu0 0.0
    %764 = vmatpush1.msra.mxu0 %v687
    %765 = vmatprep.subr.mxu0 0.0
    %766 = vmatpush1.msra.mxu0 %v688
    %767 = vmatprep.subr.mxu0 0.0
    %768 = vmatpush1.msra.mxu0 %v689
    %769 = vmatprep.subr.mxu0 0.0
    %770 = vmatpush1.msra.mxu0 %v690
    %771 = vmatprep.subr.mxu0 0.0
    %772 = vmatpush1.msra.mxu0 %v691
    %773 = vmatprep.subr.mxu0 0.0
    %774 = vmatpush1.msra.mxu0 %v692
    %775 = vmatprep.subr.mxu0 0.0
    %776 = vmatpush1.msra.mxu0 %v693
    %777 = vmatprep.subr.mxu0 0.0
    %778 = vmatpush1.msra.mxu0 %v694
    %779 = vmatprep.subr.mxu0 0.0
    %780 = vmatpush1.msra.mxu0 %v695
    %781 = vmatprep.subr.mxu0 0.0
    %782 = vmatpush1.msra.mxu0 %v696
    %783 = vmatprep.subr.mxu0 0.0
    %784 = vmatpush1.msra.mxu0 %v697
    %785 = vmatprep.subr.mxu0 0.0
    %786 = vmatpush1.msra.mxu0 %v698
    %787 = vmatprep.subr.mxu0 0.0
    %788 = vmatpush1.msra.mxu0 %v699
    %789 = vmatprep.subr.mxu0 0.0
    %790 = vmatpush1.msra.mxu0 %v700
    %791 = vmatprep.subr.mxu0 0.0
    %792 = vmatpush1.msra.mxu0 %v701
    %793 = vmatprep.subr.mxu0 0.0
    %794 = vmatpush1.msra.mxu0 %v702
    %795 = vmatprep.subr.mxu0 0.0
    %796 = vmatpush1.msra.mxu0 %v703
    %797 = vmatprep.subr.mxu0 0.0
    %798 = vmatpush1.msra.mxu0 %v704
    %799 = vmatprep.subr.mxu0 0.0
    %800 = vmatpush1.msra.mxu0 %v705
    %801 = vmatprep.subr.mxu0 0.0
    %802 = vmatpush1.msra.mxu0 %v706
    %803 = vmatprep.subr.mxu0 0.0
    %804 = vmatpush1.msra.mxu0 %v707
    %805 = vmatprep.subr.mxu0 0.0
    %806 = vmatpush1.msra.mxu0 %v708
    %807 = vmatprep.subr.mxu0 0.0
    %808 = vmatpush1.msra.mxu0 %v709
    %809 = vmatprep.subr.mxu0 0.0
    %810 = vmatpush1.msra.mxu0 %v710
    %811 = vmatprep.subr.mxu0 0.0
    %812 = vmatpush1.msra.mxu0 %v711
    %813 = vmatprep.subr.mxu0 0.0
    %814 = vmatpush1.msra.mxu0 %v712
    %815 = vmatprep.subr.mxu0 0.0
    %816 = vmatpush1.msra.mxu0 %v713
    %817 = vmatprep.mubr.f32.mxu0 %v679
    %818 = vmatmul.mubr.f32.gmra.mrb[0].mxu0 %v678
    %v819 = vpop.f32.mrb[0].mxu0
    %v820 = vadd.f32 %v751, %v819
    %v821 = vpop.f32.mrb[0].mxu0
    %822 = vdwg.mxu0
    %823 = vmatprep.subr.mxu0 0.0
    %824 = vmatpush1.msra.mxu0 %v714
    %825 = vmatprep.subr.mxu0 0.0
    %826 = vmatpush1.msra.mxu0 %v715
    %827 = vmatprep.subr.mxu0 0.0
    %828 = vmatpush1.msra.mxu0 %v716
    %829 = vmatprep.subr.mxu0 0.0
    %830 = vmatpush1.msra.mxu0 %v717
    %831 = vmatprep.subr.mxu0 0.0
    %832 = vmatpush1.msra.mxu0 %v718
    %833 = vmatprep.subr.mxu0 0.0
    %834 = vmatpush1.msra.mxu0 %v719
    %835 = vmatprep.subr.mxu0 0.0
    %836 = vmatpush1.msra.mxu0 %v720
    %837 = vmatprep.subr.mxu0 0.0
    %838 = vmatpush1.msra.mxu0 %v721
    %839 = vmatprep.subr.mxu0 0.0
    %840 = vmatpush1.msra.mxu0 %v722
    %841 = vmatprep.subr.mxu0 0.0
    %842 = vmatpush1.msra.mxu0 %v723
    %843 = vmatprep.subr.mxu0 0.0
    %844 = vmatpush1.msra.mxu0 %v724
    %845 = vmatprep.subr.mxu0 0.0
    %846 = vmatpush1.msra.mxu0 %v725
    %847 = vmatprep.subr.mxu0 0.0
    %848 = vmatpush1.msra.mxu0 %v726
    %849 = vmatprep.subr.mxu0 0.0
    %850 = vmatpush1.msra.mxu0 %v727
    %851 = vmatprep.subr.mxu0 0.0
    %852 = vmatpush1.msra.mxu0 %v728
    %853 = vmatprep.subr.mxu0 0.0
    %854 = vmatpush1.msra.mxu0 %v729
    %855 = vmatprep.subr.mxu0 0.0
    %856 = vmatpush1.msra.mxu0 %v730
    %857 = vmatprep.subr.mxu0 0.0
    %858 = vmatpush1.msra.mxu0 %v731
    %859 = vmatprep.subr.mxu0 0.0
    %860 = vmatpush1.msra.mxu0 %v732
    %861 = vmatprep.subr.mxu0 0.0
    %862 = vmatpush1.msra.mxu0 %v733
    %863 = vmatprep.subr.mxu0 0.0
    %864 = vmatpush1.msra.mxu0 %v734
    %865 = vmatprep.subr.mxu0 0.0
    %866 = vmatpush1.msra.mxu0 %v735
    %867 = vmatprep.subr.mxu0 0.0
    %868 = vmatpush1.msra.mxu0 %v736
    %869 = vmatprep.subr.mxu0 0.0
    %870 = vmatpush1.msra.mxu0 %v737
    %871 = vmatprep.subr.mxu0 0.0
    %872 = vmatpush1.msra.mxu0 %v738
    %873 = vmatprep.subr.mxu0 0.0
    %874 = vmatpush1.msra.mxu0 %v739
    %875 = vmatprep.subr.mxu0 0.0
    %876 = vmatpush1.msra.mxu0 %v740
    %877 = vmatprep.subr.mxu0 0.0
    %878 = vmatpush1.msra.mxu0 %v741
    %879 = vmatprep.subr.mxu0 0.0
    %880 = vmatpush1.msra.mxu0 %v742
    %881 = vmatprep.subr.mxu0 0.0
    %882 = vmatpush1.msra.mxu0 %v743
    %883 = vmatprep.subr.mxu0 0.0
    %884 = vmatpush1.msra.mxu0 %v744
    %885 = vmatprep.subr.mxu0 0.0
    %886 = vmatpush1.msra.mxu0 %v745
    %887 = vmatprep.mubr.f32.mxu0 %v681
    %888 = vmatmul.mubr.f32.gmra.mrb[0].mxu0 %v680
    %v889 = vpop.f32.mrb[0].mxu0
    %v890 = vadd.f32 %v820, %v889
    %v891 = vpop.f32.mrb[0].mxu0
    %892 = vdwg.mxu0
    %vm893 = vcmask 82944
    %894 = vst.msk [vmem:[#allocation2] sm:$0x3] %vm893, %v890
    // Predicated region
    $region30: #{forward.17} parent=1 // pred_check
      _
    $region31: #{forward.17} parent=1 // pred_check_branch
      %896 = sbr.rel (0) target = $region33
    $region32: #{forward.17} parent=1 // pred_region
      %s898 = ssub.s32 32, 32
      %899 = vsyncadd [#allocation3], %s898
      %s901 = sshll.u32 [#allocation2], 4
      %s902 = int_to_ptr.vmem [resolvable:$true] %s901
      %904 = dma.vmem_to_hbm [thread:$0]  %s902, 32, %s7, [#allocation3]
    $region33: #{forward.17} parent=1 // pred_fallthru
      _
    // Predicated region
    $region34: #{forward.17} parent=1 // pred_check
      _
    $region35: #{forward.17} parent=1 // pred_check_branch
      %906 = sbr.rel (0) target = $region37
    $region36: #{forward.17} parent=1 // pred_region
      %907 = dma.done [#allocation3], 32
    $region37: #{forward.17} parent=1 // pred_fallthru
      _
    %908 = vsyncpa [#allocation3], 1

</llo_original>
